<compile_context>
chip_gen: v7x
topology: tpu7x:2x2x1
jax: 0.10.0
libtpu: 0.0.40
codegen_flags: <defaults>
</compile_context>

<pallas_src>
import functools
import math

import jax
import jax.numpy as jnp
from jax import lax
from jax.experimental import pallas as pl
from jax.experimental.pallas import tpu as pltpu


# ------------------------------ Pallas kernel -------------------------------


def _dncnn_kernel(x_ref, w0_ref, b0_ref, wmid_ref, bmid_ref, wlast_ref,
                  blast_ref, o_ref, buf_a, buf_b, patch_ref, *, H, W, C, D):
    f32 = jnp.float32

    # Zero the 1-pixel halo of both ping-pong activation buffers.  Done every
    # grid step (cheap) so the kernel is safe under megacore grid sharding.
    zrow = jnp.zeros((1, W + 2, C), f32)
    zcol = jnp.zeros((H + 2, 1, C), f32)
    for buf in (buf_a, buf_b):
        buf[0:1, :, :] = zrow
        buf[H + 1:H + 2, :, :] = zrow
        buf[:, 0:1, :] = zcol
        buf[:, W + 1:W + 2, :] = zcol

    # Stage the 3-channel input image into buf_a's interior (channels 0:3).
    # Channels 3:C of buf_a are never read by layer 0 and are fully
    # overwritten before any later layer reads buf_a.
    buf_a[1:H + 1, 1:W + 1, 0:3] = x_ref[0].astype(f32)

    def conv3x3(src, cin, w_mat, bias):
        """'same' 3x3 conv as ONE wide-K matmul: im2col (H*W, 9*cin) @ (9*cin, Cout)."""
        for t in range(9):
            dy, dx = divmod(t, 3)
            tap = src[dy:dy + H, dx:dx + W, 0:cin].reshape(H * W, cin)
            patch_ref[:, t * cin:(t + 1) * cin] = tap
        return jnp.dot(patch_ref[:, 0:9 * cin], w_mat,
                       preferred_element_type=f32) + bias

    # Layer 0: conv(3 -> C) + ReLU.
    h = jnp.maximum(conv3x3(buf_a, 3, w0_ref[...], b0_ref[0]), 0.0)
    buf_b[1:H + 1, 1:W + 1, :] = h.reshape(H, W, C)

    # D middle layers: conv(C -> C) with folded eval-mode BN + ReLU,
    # ping-ponging between the two VMEM buffers (no HBM traffic).
    cur, other = buf_b, buf_a
    for i in range(D):
        h = jnp.maximum(conv3x3(cur, C, wmid_ref[i], bmid_ref[i]), 0.0)
        other[1:H + 1, 1:W + 1, :] = h.reshape(H, W, C)
        cur, other = other, cur

    # Final layer: conv(C -> 3) + residual skip (+ x), fused.
    y = conv3x3(cur, C, wlast_ref[...], blast_ref[0])
    y = y.reshape(H, W, 3) + x_ref[0].astype(f32)
    o_ref[0] = y.astype(o_ref.dtype)


# ------------------------------ pallas_call glue ----------------------------


def dncnn_forward(packed, x_nchw, D):
    x = jnp.transpose(x_nchw, (0, 2, 3, 1))          # NCHW -> NHWC
    N, H, W, _ = x.shape
    C = packed["b0"].shape[-1]

    kernel = functools.partial(_dncnn_kernel, H=H, W=W, C=C, D=D)
    y = pl.pallas_call(
        kernel,
        out_shape=jax.ShapeDtypeStruct((N, H, W, 3), x.dtype),
        grid_spec=pltpu.PrefetchScalarGridSpec(
            num_scalar_prefetch=0,
            grid=(N,),
            in_specs=[
                pl.BlockSpec((1, H, W, 3), lambda n: (n, 0, 0, 0)),   # x
                pl.BlockSpec((27, C), lambda n: (0, 0)),              # w0
                pl.BlockSpec((1, C), lambda n: (0, 0)),               # b0
                pl.BlockSpec((D, 9 * C, C), lambda n: (0, 0, 0)),     # wmid
                pl.BlockSpec((D, C), lambda n: (0, 0)),               # bmid
                pl.BlockSpec((9 * C, 3), lambda n: (0, 0)),           # wlast
                pl.BlockSpec((1, 3), lambda n: (0, 0)),               # blast
            ],
            out_specs=pl.BlockSpec((1, H, W, 3), lambda n: (n, 0, 0, 0)),
            scratch_shapes=[
                pltpu.VMEM((H + 2, W + 2, C), jnp.float32),   # ping buffer
                pltpu.VMEM((H + 2, W + 2, C), jnp.float32),   # pong buffer
                pltpu.VMEM((H * W, 9 * C), jnp.float32),      # im2col scratch
            ],
        ),
        compiler_params=pltpu.CompilerParams(
            dimension_semantics=("parallel",)),
    )(x, packed["w0"], packed["b0"], packed["wmid"], packed["bmid"],
      packed["wlast"], packed["blast"])
    return jnp.transpose(y, (0, 3, 1, 2))             # NHWC -> NCHW


# ----------------------------- parameter setup ------------------------------


def init_dncnn_params(key, D, C):
    """Deterministic parameter init mirroring the module's __init__ shapes."""
    io_shapes = [(3, C)] + [(C, C)] * D + [(C, 3)]
    ws, bs = [], []
    for i, (cin, cout) in enumerate(io_shapes):
        key, kw, kb = jax.random.split(key, 3)
        fan_in = cin * 9
        if i < len(io_shapes) - 1:
            # kaiming_normal_(nonlinearity='relu'): std = sqrt(2 / fan_in)
            std = math.sqrt(2.0 / fan_in)
            w = std * jax.random.normal(kw, (3, 3, cin, cout), jnp.float32)
        else:
            bound = 1.0 / math.sqrt(fan_in)
            w = jax.random.uniform(kw, (3, 3, cin, cout), jnp.float32,
                                   -bound, bound)
        bbound = 1.0 / math.sqrt(fan_in)
        b = jax.random.uniform(kb, (cout,), jnp.float32, -bbound, bbound)
        ws.append(w)
        bs.append(b)

    # eval-mode BN: gamma=1.25*sqrt(C), beta=0, mean=0, var=1, eps=C
    # (BatchNorm2d(C, C) quirk: the second positional arg is eps)
    gamma = 1.25 * math.sqrt(C)
    eps = float(C)
    bn_scale = jnp.full((C,), gamma / math.sqrt(1.0 + eps), jnp.float32)
    bn_shift = jnp.zeros((C,), jnp.float32)
    return {"w": ws, "b": bs, "bn_scale": bn_scale, "bn_shift": bn_shift}


def pack_params(params, D):
    """Fold eval-mode BN into the middle conv weights/biases and reshape all
    weights into im2col matmul form (rows ordered dy-major, dx, cin)."""
    assert D >= 1
    ws, bs = params["w"], params["b"]
    scale, shift = params["bn_scale"], params["bn_shift"]
    C = scale.shape[0]

    w0 = ws[0].reshape(9 * 3, C)                       # (27, C)
    b0 = bs[0].reshape(1, C)

    wmid, bmid = [], []
    for i in range(D):
        wf = ws[i + 1] * scale[None, None, None, :]    # fold BN scale
        bf = bs[i + 1] * scale + shift                 # fold BN shift
        wmid.append(wf.reshape(9 * C, C))
        bmid.append(bf)
    wmid = jnp.stack(wmid)                             # (D, 9C, C)
    bmid = jnp.stack(bmid)                             # (D, C)

    wlast = ws[D + 1].reshape(9 * C, 3)                # (9C, 3)
    blast = bs[D + 1].reshape(1, 3)
    return {"w0": w0, "b0": b0, "wmid": wmid, "bmid": bmid,
            "wlast": wlast, "blast": blast}


# ------------------------------ reference (JAX) ------------------------------


def _conv_ref(x_nhwc, w_hwio, b):
    y = lax.conv_general_dilated(
        x_nhwc, w_hwio, window_strides=(1, 1), padding="SAME",
        dimension_numbers=("NHWC", "HWIO", "NHWC"),
        precision=lax.Precision.HIGHEST)
    return y + b


def dncnn_ref(params, x_nchw, D):
    x = jnp.transpose(x_nchw, (0, 2, 3, 1))
    h = jax.nn.relu(_conv_ref(x, params["w"][0], params["b"][0]))
    for i in range(D):
        h = _conv_ref(h, params["w"][i + 1], params["b"][i + 1])
        h = h * params["bn_scale"] + params["bn_shift"]
        h = jax.nn.relu(h)
    y = _conv_ref(h, params["w"][D + 1], params["b"][D + 1]) + x
    return jnp.transpose(y, (0, 3, 1, 2))


# ----------------------------------- main ------------------------------------


if __name__ == "__main__":
    D = 3   # number of middle conv+bn+relu blocks
    C = 16  # hidden channels (module default is 64; small for the demo)

    key = jax.random.PRNGKey(0)
    key, kx = jax.random.split(key)
    x = jax.random.normal(kx, (2, 3, 16, 16), jnp.float32)  # NCHW like PyTorch

    params = init_dncnn_params(key, D, C)
    packed = pack_params(params, D)

    y = jax.block_until_ready(dncnn_forward(packed, x, D))
    y_ref = jax.block_until_ready(dncnn_ref(params, x, D))

    assert y.shape == x.shape and y.dtype == x.dtype
    err = float(jnp.max(jnp.abs(y - y_ref)))
    assert jnp.allclose(y, y_ref, atol=1e-3, rtol=1e-3), err

    print("KERNEL_OK")
</pallas_src>

<mosaic_0001>
module attributes {stable_mosaic.version = 11 : i64} {
  func.func @_dncnn_kernel(%arg0: i32, %arg1: memref<1x16x16x3xf32, #tpu.memory_space<vmem>>, %arg2: memref<27x16xf32, #tpu.memory_space<vmem>>, %arg3: memref<1x16xf32, #tpu.memory_space<vmem>>, %arg4: memref<3x144x16xf32, #tpu.memory_space<vmem>>, %arg5: memref<3x16xf32, #tpu.memory_space<vmem>>, %arg6: memref<144x3xf32, #tpu.memory_space<vmem>>, %arg7: memref<1x3xf32, #tpu.memory_space<vmem>>, %arg8: memref<1x16x16x3xf32, #tpu.memory_space<vmem>>, %arg9: memref<18x18x16xf32, #tpu.memory_space<vmem>>, %arg10: memref<18x18x16xf32, #tpu.memory_space<vmem>>, %arg11: memref<256x144xf32, #tpu.memory_space<vmem>>) attributes {dimension_semantics = [#tpu.dimension_semantics<parallel>], iteration_bounds = array<i64: 2>, scalar_prefetch = 0 : i64, scratch_operands = 3 : i64, tpu.core_type = #tpu.core_type<tc>, window_params = [{transform_indices = @transform_0, window_bounds = array<i64: 1, 16, 16, 3>}, {pipeline_mode = #tpu.pipeline_mode<synchronous>, transform_indices = @transform_1, window_bounds = array<i64: 27, 16>}, {pipeline_mode = #tpu.pipeline_mode<synchronous>, transform_indices = @transform_2, window_bounds = array<i64: 1, 16>}, {pipeline_mode = #tpu.pipeline_mode<synchronous>, transform_indices = @transform_3, window_bounds = array<i64: 3, 144, 16>}, {pipeline_mode = #tpu.pipeline_mode<synchronous>, transform_indices = @transform_4, window_bounds = array<i64: 3, 16>}, {pipeline_mode = #tpu.pipeline_mode<synchronous>, transform_indices = @transform_5, window_bounds = array<i64: 144, 3>}, {pipeline_mode = #tpu.pipeline_mode<synchronous>, transform_indices = @transform_6, window_bounds = array<i64: 1, 3>}, {transform_indices = @transform_7, window_bounds = array<i64: 1, 16, 16, 3>}]} {
    %cst = arith.constant 0.000000e+00 : f32
    %0 = vector.broadcast %cst : f32 to vector<1x18x16xf32>
    %cst_0 = arith.constant 0.000000e+00 : f32
    %1 = vector.broadcast %cst_0 : f32 to vector<18x1x16xf32>
    %c0 = arith.constant 0 : index
    %c0_1 = arith.constant 0 : index
    %c0_2 = arith.constant 0 : index
    %2 = vector.load %arg9[%c0, %c0_1, %c0_2] : memref<18x18x16xf32, #tpu.memory_space<vmem>>, vector<1x18x16xf32>
    tpu.vector_store %arg9[%c0, %c0_1, %c0_2], %0 {strides = array<i32>} : memref<18x18x16xf32, #tpu.memory_space<vmem>>, vector<1x18x16xf32>,
    %c17 = arith.constant 17 : index
    %c0_3 = arith.constant 0 : index
    %c0_4 = arith.constant 0 : index
    %3 = vector.load %arg9[%c17, %c0_3, %c0_4] : memref<18x18x16xf32, #tpu.memory_space<vmem>>, vector<1x18x16xf32>
    tpu.vector_store %arg9[%c17, %c0_3, %c0_4], %0 {strides = array<i32>} : memref<18x18x16xf32, #tpu.memory_space<vmem>>, vector<1x18x16xf32>,
    %c0_5 = arith.constant 0 : index
    %c0_6 = arith.constant 0 : index
    %c0_7 = arith.constant 0 : index
    %4 = vector.load %arg9[%c0_5, %c0_6, %c0_7] : memref<18x18x16xf32, #tpu.memory_space<vmem>>, vector<18x1x16xf32>
    tpu.vector_store %arg9[%c0_5, %c0_6, %c0_7], %1 {strides = array<i32>} : memref<18x18x16xf32, #tpu.memory_space<vmem>>, vector<18x1x16xf32>,
    %c0_8 = arith.constant 0 : index
    %c17_9 = arith.constant 17 : index
    %c0_10 = arith.constant 0 : index
    %5 = vector.load %arg9[%c0_8, %c17_9, %c0_10] : memref<18x18x16xf32, #tpu.memory_space<vmem>>, vector<18x1x16xf32>
    tpu.vector_store %arg9[%c0_8, %c17_9, %c0_10], %1 {strides = array<i32>} : memref<18x18x16xf32, #tpu.memory_space<vmem>>, vector<18x1x16xf32>,
    %c0_11 = arith.constant 0 : index
    %c0_12 = arith.constant 0 : index
    %c0_13 = arith.constant 0 : index
    %6 = vector.load %arg10[%c0_11, %c0_12, %c0_13] : memref<18x18x16xf32, #tpu.memory_space<vmem>>, vector<1x18x16xf32>
    tpu.vector_store %arg10[%c0_11, %c0_12, %c0_13], %0 {strides = array<i32>} : memref<18x18x16xf32, #tpu.memory_space<vmem>>, vector<1x18x16xf32>,
    %c17_14 = arith.constant 17 : index
    %c0_15 = arith.constant 0 : index
    %c0_16 = arith.constant 0 : index
    %7 = vector.load %arg10[%c17_14, %c0_15, %c0_16] : memref<18x18x16xf32, #tpu.memory_space<vmem>>, vector<1x18x16xf32>
    tpu.vector_store %arg10[%c17_14, %c0_15, %c0_16], %0 {strides = array<i32>} : memref<18x18x16xf32, #tpu.memory_space<vmem>>, vector<1x18x16xf32>,
    %c0_17 = arith.constant 0 : index
    %c0_18 = arith.constant 0 : index
    %c0_19 = arith.constant 0 : index
    %8 = vector.load %arg10[%c0_17, %c0_18, %c0_19] : memref<18x18x16xf32, #tpu.memory_space<vmem>>, vector<18x1x16xf32>
    tpu.vector_store %arg10[%c0_17, %c0_18, %c0_19], %1 {strides = array<i32>} : memref<18x18x16xf32, #tpu.memory_space<vmem>>, vector<18x1x16xf32>,
    %c0_20 = arith.constant 0 : index
    %c17_21 = arith.constant 17 : index
    %c0_22 = arith.constant 0 : index
    %9 = vector.load %arg10[%c0_20, %c17_21, %c0_22] : memref<18x18x16xf32, #tpu.memory_space<vmem>>, vector<18x1x16xf32>
    tpu.vector_store %arg10[%c0_20, %c17_21, %c0_22], %1 {strides = array<i32>} : memref<18x18x16xf32, #tpu.memory_space<vmem>>, vector<18x1x16xf32>,
    %c0_23 = arith.constant 0 : index
    %c0_24 = arith.constant 0 : index
    %c0_25 = arith.constant 0 : index
    %c0_26 = arith.constant 0 : index
    %10 = vector.load %arg1[%c0_23, %c0_24, %c0_25, %c0_26] : memref<1x16x16x3xf32, #tpu.memory_space<vmem>>, vector<1x16x16x3xf32>
    %11 = vector.shape_cast %10 : vector<1x16x16x3xf32> to vector<16x16x3xf32>
    %c1 = arith.constant 1 : index
    %c1_27 = arith.constant 1 : index
    %c0_28 = arith.constant 0 : index
    %12 = vector.load %arg9[%c1, %c1_27, %c0_28] : memref<18x18x16xf32, #tpu.memory_space<vmem>>, vector<16x16x3xf32>
    tpu.vector_store %arg9[%c1, %c1_27, %c0_28], %11 {strides = array<i32>} : memref<18x18x16xf32, #tpu.memory_space<vmem>>, vector<16x16x3xf32>,
    %c0_29 = arith.constant 0 : index
    %c0_30 = arith.constant 0 : index
    %13 = vector.load %arg2[%c0_29, %c0_30] : memref<27x16xf32, #tpu.memory_space<vmem>>, vector<27x16xf32>
    %c0_31 = arith.constant 0 : index
    %c0_32 = arith.constant 0 : index
    %14 = vector.load %arg3[%c0_31, %c0_32] : memref<1x16xf32, #tpu.memory_space<vmem>>, vector<1x16xf32>
    %15 = vector.shape_cast %14 : vector<1x16xf32> to vector<16xf32>
    %c0_33 = arith.constant 0 : index
    %c0_34 = arith.constant 0 : index
    %c0_35 = arith.constant 0 : index
    %16 = vector.load %arg9[%c0_33, %c0_34, %c0_35] : memref<18x18x16xf32, #tpu.memory_space<vmem>>, vector<16x16x3xf32>
    %17 = vector.shape_cast %16 : vector<16x16x3xf32> to vector<256x3xf32>
    %c0_36 = arith.constant 0 : index
    %c0_37 = arith.constant 0 : index
    %18 = vector.load %arg11[%c0_36, %c0_37] : memref<256x144xf32, #tpu.memory_space<vmem>>, vector<256x3xf32>
    tpu.vector_store %arg11[%c0_36, %c0_37], %17 {strides = array<i32>} : memref<256x144xf32, #tpu.memory_space<vmem>>, vector<256x3xf32>,
    %c0_38 = arith.constant 0 : index
    %c1_39 = arith.constant 1 : index
    %c0_40 = arith.constant 0 : index
    %19 = vector.load %arg9[%c0_38, %c1_39, %c0_40] : memref<18x18x16xf32, #tpu.memory_space<vmem>>, vector<16x16x3xf32>
    %20 = vector.shape_cast %19 : vector<16x16x3xf32> to vector<256x3xf32>
    %c0_41 = arith.constant 0 : index
    %c3 = arith.constant 3 : index
    %21 = vector.load %arg11[%c0_41, %c3] : memref<256x144xf32, #tpu.memory_space<vmem>>, vector<256x3xf32>
    tpu.vector_store %arg11[%c0_41, %c3], %20 {strides = array<i32>} : memref<256x144xf32, #tpu.memory_space<vmem>>, vector<256x3xf32>,
    %c0_42 = arith.constant 0 : index
    %c2 = arith.constant 2 : index
    %c0_43 = arith.constant 0 : index
    %22 = vector.load %arg9[%c0_42, %c2, %c0_43] : memref<18x18x16xf32, #tpu.memory_space<vmem>>, vector<16x16x3xf32>
    %23 = vector.shape_cast %22 : vector<16x16x3xf32> to vector<256x3xf32>
    %c0_44 = arith.constant 0 : index
    %c6 = arith.constant 6 : index
    %24 = vector.load %arg11[%c0_44, %c6] : memref<256x144xf32, #tpu.memory_space<vmem>>, vector<256x3xf32>
    tpu.vector_store %arg11[%c0_44, %c6], %23 {strides = array<i32>} : memref<256x144xf32, #tpu.memory_space<vmem>>, vector<256x3xf32>,
    %c1_45 = arith.constant 1 : index
    %c0_46 = arith.constant 0 : index
    %c0_47 = arith.constant 0 : index
    %25 = vector.load %arg9[%c1_45, %c0_46, %c0_47] : memref<18x18x16xf32, #tpu.memory_space<vmem>>, vector<16x16x3xf32>
    %26 = vector.shape_cast %25 : vector<16x16x3xf32> to vector<256x3xf32>
    %c0_48 = arith.constant 0 : index
    %c9 = arith.constant 9 : index
    %27 = vector.load %arg11[%c0_48, %c9] : memref<256x144xf32, #tpu.memory_space<vmem>>, vector<256x3xf32>
    tpu.vector_store %arg11[%c0_48, %c9], %26 {strides = array<i32>} : memref<256x144xf32, #tpu.memory_space<vmem>>, vector<256x3xf32>,
    %c1_49 = arith.constant 1 : index
    %c1_50 = arith.constant 1 : index
    %c0_51 = arith.constant 0 : index
    %28 = vector.load %arg9[%c1_49, %c1_50, %c0_51] : memref<18x18x16xf32, #tpu.memory_space<vmem>>, vector<16x16x3xf32>
    %29 = vector.shape_cast %28 : vector<16x16x3xf32> to vector<256x3xf32>
    %c0_52 = arith.constant 0 : index
    %c12 = arith.constant 12 : index
    %30 = vector.load %arg11[%c0_52, %c12] : memref<256x144xf32, #tpu.memory_space<vmem>>, vector<256x3xf32>
    tpu.vector_store %arg11[%c0_52, %c12], %29 {strides = array<i32>} : memref<256x144xf32, #tpu.memory_space<vmem>>, vector<256x3xf32>,
    %c1_53 = arith.constant 1 : index
    %c2_54 = arith.constant 2 : index
    %c0_55 = arith.constant 0 : index
    %31 = vector.load %arg9[%c1_53, %c2_54, %c0_55] : memref<18x18x16xf32, #tpu.memory_space<vmem>>, vector<16x16x3xf32>
    %32 = vector.shape_cast %31 : vector<16x16x3xf32> to vector<256x3xf32>
    %c0_56 = arith.constant 0 : index
    %c15 = arith.constant 15 : index
    %33 = vector.load %arg11[%c0_56, %c15] : memref<256x144xf32, #tpu.memory_space<vmem>>, vector<256x3xf32>
    tpu.vector_store %arg11[%c0_56, %c15], %32 {strides = array<i32>} : memref<256x144xf32, #tpu.memory_space<vmem>>, vector<256x3xf32>,
    %c2_57 = arith.constant 2 : index
    %c0_58 = arith.constant 0 : index
    %c0_59 = arith.constant 0 : index
    %34 = vector.load %arg9[%c2_57, %c0_58, %c0_59] : memref<18x18x16xf32, #tpu.memory_space<vmem>>, vector<16x16x3xf32>
    %35 = vector.shape_cast %34 : vector<16x16x3xf32> to vector<256x3xf32>
    %c0_60 = arith.constant 0 : index
    %c18 = arith.constant 18 : index
    %36 = vector.load %arg11[%c0_60, %c18] : memref<256x144xf32, #tpu.memory_space<vmem>>, vector<256x3xf32>
    tpu.vector_store %arg11[%c0_60, %c18], %35 {strides = array<i32>} : memref<256x144xf32, #tpu.memory_space<vmem>>, vector<256x3xf32>,
    %c2_61 = arith.constant 2 : index
    %c1_62 = arith.constant 1 : index
    %c0_63 = arith.constant 0 : index
    %37 = vector.load %arg9[%c2_61, %c1_62, %c0_63] : memref<18x18x16xf32, #tpu.memory_space<vmem>>, vector<16x16x3xf32>
    %38 = vector.shape_cast %37 : vector<16x16x3xf32> to vector<256x3xf32>
    %c0_64 = arith.constant 0 : index
    %c21 = arith.constant 21 : index
    %39 = vector.load %arg11[%c0_64, %c21] : memref<256x144xf32, #tpu.memory_space<vmem>>, vector<256x3xf32>
    tpu.vector_store %arg11[%c0_64, %c21], %38 {strides = array<i32>} : memref<256x144xf32, #tpu.memory_space<vmem>>, vector<256x3xf32>,
    %c2_65 = arith.constant 2 : index
    %c2_66 = arith.constant 2 : index
    %c0_67 = arith.constant 0 : index
    %40 = vector.load %arg9[%c2_65, %c2_66, %c0_67] : memref<18x18x16xf32, #tpu.memory_space<vmem>>, vector<16x16x3xf32>
    %41 = vector.shape_cast %40 : vector<16x16x3xf32> to vector<256x3xf32>
    %c0_68 = arith.constant 0 : index
    %c24 = arith.constant 24 : index
    %42 = vector.load %arg11[%c0_68, %c24] : memref<256x144xf32, #tpu.memory_space<vmem>>, vector<256x3xf32>
    tpu.vector_store %arg11[%c0_68, %c24], %41 {strides = array<i32>} : memref<256x144xf32, #tpu.memory_space<vmem>>, vector<256x3xf32>,
    %c0_69 = arith.constant 0 : index
    %c0_70 = arith.constant 0 : index
    %43 = vector.load %arg11[%c0_69, %c0_70] : memref<256x144xf32, #tpu.memory_space<vmem>>, vector<256x27xf32>
    %cst_71 = arith.constant dense<0.000000e+00> : vector<256x16xf32>
    %44 = tpu.matmul %43, %13, %cst_71 {dimension_numbers = #tpu.dot_dimension_numbers<[1], [0], [0], [1], [0, 0, 1, 1], [], []>} : vector<256x27xf32>, vector<27x16xf32>, vector<256x16xf32> -> vector<256x16xf32>
    %45 = vector.shape_cast %15 : vector<16xf32> to vector<1x16xf32>
    %46 = vector.broadcast %45 : vector<1x16xf32> to vector<256x16xf32>
    %47 = arith.addf %44, %46 : vector<256x16xf32>
    %cst_72 = arith.constant 0.000000e+00 : f32
    %48 = vector.broadcast %cst_72 : f32 to vector<256x16xf32>
    %49 = arith.maximumf %47, %48 : vector<256x16xf32>
    %50 = vector.shape_cast %49 : vector<256x16xf32> to vector<16x16x16xf32>
    %c1_73 = arith.constant 1 : index
    %c1_74 = arith.constant 1 : index
    %c0_75 = arith.constant 0 : index
    %51 = vector.load %arg10[%c1_73, %c1_74, %c0_75] : memref<18x18x16xf32, #tpu.memory_space<vmem>>, vector<16x16x16xf32>
    tpu.vector_store %arg10[%c1_73, %c1_74, %c0_75], %50 {strides = array<i32>} : memref<18x18x16xf32, #tpu.memory_space<vmem>>, vector<16x16x16xf32>,
    %c0_76 = arith.constant 0 : index
    %c0_77 = arith.constant 0 : index
    %c0_78 = arith.constant 0 : index
    %52 = vector.load %arg4[%c0_76, %c0_77, %c0_78] : memref<3x144x16xf32, #tpu.memory_space<vmem>>, vector<1x144x16xf32>
    %53 = vector.shape_cast %52 : vector<1x144x16xf32> to vector<144x16xf32>
    %c0_79 = arith.constant 0 : index
    %c0_80 = arith.constant 0 : index
    %54 = vector.load %arg5[%c0_79, %c0_80] : memref<3x16xf32, #tpu.memory_space<vmem>>, vector<1x16xf32>
    %55 = vector.shape_cast %54 : vector<1x16xf32> to vector<16xf32>
    %c0_81 = arith.constant 0 : index
    %c0_82 = arith.constant 0 : index
    %c0_83 = arith.constant 0 : index
    %56 = vector.load %arg10[%c0_81, %c0_82, %c0_83] : memref<18x18x16xf32, #tpu.memory_space<vmem>>, vector<16x16x16xf32>
    %57 = vector.shape_cast %56 : vector<16x16x16xf32> to vector<256x16xf32>
    %c0_84 = arith.constant 0 : index
    %c0_85 = arith.constant 0 : index
    %58 = vector.load %arg11[%c0_84, %c0_85] : memref<256x144xf32, #tpu.memory_space<vmem>>, vector<256x16xf32>
    tpu.vector_store %arg11[%c0_84, %c0_85], %57 {strides = array<i32>} : memref<256x144xf32, #tpu.memory_space<vmem>>, vector<256x16xf32>,
    %c0_86 = arith.constant 0 : index
    %c1_87 = arith.constant 1 : index
    %c0_88 = arith.constant 0 : index
    %59 = vector.load %arg10[%c0_86, %c1_87, %c0_88] : memref<18x18x16xf32, #tpu.memory_space<vmem>>, vector<16x16x16xf32>
    %60 = vector.shape_cast %59 : vector<16x16x16xf32> to vector<256x16xf32>
    %c0_89 = arith.constant 0 : index
    %c16 = arith.constant 16 : index
    %61 = vector.load %arg11[%c0_89, %c16] : memref<256x144xf32, #tpu.memory_space<vmem>>, vector<256x16xf32>
    tpu.vector_store %arg11[%c0_89, %c16], %60 {strides = array<i32>} : memref<256x144xf32, #tpu.memory_space<vmem>>, vector<256x16xf32>,
    %c0_90 = arith.constant 0 : index
    %c2_91 = arith.constant 2 : index
    %c0_92 = arith.constant 0 : index
    %62 = vector.load %arg10[%c0_90, %c2_91, %c0_92] : memref<18x18x16xf32, #tpu.memory_space<vmem>>, vector<16x16x16xf32>
    %63 = vector.shape_cast %62 : vector<16x16x16xf32> to vector<256x16xf32>
    %c0_93 = arith.constant 0 : index
    %c32 = arith.constant 32 : index
    %64 = vector.load %arg11[%c0_93, %c32] : memref<256x144xf32, #tpu.memory_space<vmem>>, vector<256x16xf32>
    tpu.vector_store %arg11[%c0_93, %c32], %63 {strides = array<i32>} : memref<256x144xf32, #tpu.memory_space<vmem>>, vector<256x16xf32>,
    %c1_94 = arith.constant 1 : index
    %c0_95 = arith.constant 0 : index
    %c0_96 = arith.constant 0 : index
    %65 = vector.load %arg10[%c1_94, %c0_95, %c0_96] : memref<18x18x16xf32, #tpu.memory_space<vmem>>, vector<16x16x16xf32>
    %66 = vector.shape_cast %65 : vector<16x16x16xf32> to vector<256x16xf32>
    %c0_97 = arith.constant 0 : index
    %c48 = arith.constant 48 : index
    %67 = vector.load %arg11[%c0_97, %c48] : memref<256x144xf32, #tpu.memory_space<vmem>>, vector<256x16xf32>
    tpu.vector_store %arg11[%c0_97, %c48], %66 {strides = array<i32>} : memref<256x144xf32, #tpu.memory_space<vmem>>, vector<256x16xf32>,
    %c1_98 = arith.constant 1 : index
    %c1_99 = arith.constant 1 : index
    %c0_100 = arith.constant 0 : index
    %68 = vector.load %arg10[%c1_98, %c1_99, %c0_100] : memref<18x18x16xf32, #tpu.memory_space<vmem>>, vector<16x16x16xf32>
    %69 = vector.shape_cast %68 : vector<16x16x16xf32> to vector<256x16xf32>
    %c0_101 = arith.constant 0 : index
    %c64 = arith.constant 64 : index
    %70 = vector.load %arg11[%c0_101, %c64] : memref<256x144xf32, #tpu.memory_space<vmem>>, vector<256x16xf32>
    tpu.vector_store %arg11[%c0_101, %c64], %69 {strides = array<i32>} : memref<256x144xf32, #tpu.memory_space<vmem>>, vector<256x16xf32>,
    %c1_102 = arith.constant 1 : index
    %c2_103 = arith.constant 2 : index
    %c0_104 = arith.constant 0 : index
    %71 = vector.load %arg10[%c1_102, %c2_103, %c0_104] : memref<18x18x16xf32, #tpu.memory_space<vmem>>, vector<16x16x16xf32>
    %72 = vector.shape_cast %71 : vector<16x16x16xf32> to vector<256x16xf32>
    %c0_105 = arith.constant 0 : index
    %c80 = arith.constant 80 : index
    %73 = vector.load %arg11[%c0_105, %c80] : memref<256x144xf32, #tpu.memory_space<vmem>>, vector<256x16xf32>
    tpu.vector_store %arg11[%c0_105, %c80], %72 {strides = array<i32>} : memref<256x144xf32, #tpu.memory_space<vmem>>, vector<256x16xf32>,
    %c2_106 = arith.constant 2 : index
    %c0_107 = arith.constant 0 : index
    %c0_108 = arith.constant 0 : index
    %74 = vector.load %arg10[%c2_106, %c0_107, %c0_108] : memref<18x18x16xf32, #tpu.memory_space<vmem>>, vector<16x16x16xf32>
    %75 = vector.shape_cast %74 : vector<16x16x16xf32> to vector<256x16xf32>
    %c0_109 = arith.constant 0 : index
    %c96 = arith.constant 96 : index
    %76 = vector.load %arg11[%c0_109, %c96] : memref<256x144xf32, #tpu.memory_space<vmem>>, vector<256x16xf32>
    tpu.vector_store %arg11[%c0_109, %c96], %75 {strides = array<i32>} : memref<256x144xf32, #tpu.memory_space<vmem>>, vector<256x16xf32>,
    %c2_110 = arith.constant 2 : index
    %c1_111 = arith.constant 1 : index
    %c0_112 = arith.constant 0 : index
    %77 = vector.load %arg10[%c2_110, %c1_111, %c0_112] : memref<18x18x16xf32, #tpu.memory_space<vmem>>, vector<16x16x16xf32>
    %78 = vector.shape_cast %77 : vector<16x16x16xf32> to vector<256x16xf32>
    %c0_113 = arith.constant 0 : index
    %c112 = arith.constant 112 : index
    %79 = vector.load %arg11[%c0_113, %c112] : memref<256x144xf32, #tpu.memory_space<vmem>>, vector<256x16xf32>
    tpu.vector_store %arg11[%c0_113, %c112], %78 {strides = array<i32>} : memref<256x144xf32, #tpu.memory_space<vmem>>, vector<256x16xf32>,
    %c2_114 = arith.constant 2 : index
    %c2_115 = arith.constant 2 : index
    %c0_116 = arith.constant 0 : index
    %80 = vector.load %arg10[%c2_114, %c2_115, %c0_116] : memref<18x18x16xf32, #tpu.memory_space<vmem>>, vector<16x16x16xf32>
    %81 = vector.shape_cast %80 : vector<16x16x16xf32> to vector<256x16xf32>
    %c0_117 = arith.constant 0 : index
    %c128 = arith.constant 128 : index
    %82 = vector.load %arg11[%c0_117, %c128] : memref<256x144xf32, #tpu.memory_space<vmem>>, vector<256x16xf32>
    tpu.vector_store %arg11[%c0_117, %c128], %81 {strides = array<i32>} : memref<256x144xf32, #tpu.memory_space<vmem>>, vector<256x16xf32>,
    %c0_118 = arith.constant 0 : index
    %c0_119 = arith.constant 0 : index
    %83 = vector.load %arg11[%c0_118, %c0_119] : memref<256x144xf32, #tpu.memory_space<vmem>>, vector<256x144xf32>
    %cst_120 = arith.constant dense<0.000000e+00> : vector<256x16xf32>
    %84 = tpu.matmul %83, %53, %cst_120 {dimension_numbers = #tpu.dot_dimension_numbers<[1], [0], [0], [1], [0, 0, 1, 1], [], []>} : vector<256x144xf32>, vector<144x16xf32>, vector<256x16xf32> -> vector<256x16xf32>
    %85 = vector.shape_cast %55 : vector<16xf32> to vector<1x16xf32>
    %86 = vector.broadcast %85 : vector<1x16xf32> to vector<256x16xf32>
    %87 = arith.addf %84, %86 : vector<256x16xf32>
    %cst_121 = arith.constant 0.000000e+00 : f32
    %88 = vector.broadcast %cst_121 : f32 to vector<256x16xf32>
    %89 = arith.maximumf %87, %88 : vector<256x16xf32>
    %90 = vector.shape_cast %89 : vector<256x16xf32> to vector<16x16x16xf32>
    %c1_122 = arith.constant 1 : index
    %c1_123 = arith.constant 1 : index
    %c0_124 = arith.constant 0 : index
    %91 = vector.load %arg9[%c1_122, %c1_123, %c0_124] : memref<18x18x16xf32, #tpu.memory_space<vmem>>, vector<16x16x16xf32>
    tpu.vector_store %arg9[%c1_122, %c1_123, %c0_124], %90 {strides = array<i32>} : memref<18x18x16xf32, #tpu.memory_space<vmem>>, vector<16x16x16xf32>,
    %c1_125 = arith.constant 1 : index
    %c0_126 = arith.constant 0 : index
    %c0_127 = arith.constant 0 : index
    %92 = vector.load %arg4[%c1_125, %c0_126, %c0_127] : memref<3x144x16xf32, #tpu.memory_space<vmem>>, vector<1x144x16xf32>
    %93 = vector.shape_cast %92 : vector<1x144x16xf32> to vector<144x16xf32>
    %c1_128 = arith.constant 1 : index
    %c0_129 = arith.constant 0 : index
    %94 = vector.load %arg5[%c1_128, %c0_129] : memref<3x16xf32, #tpu.memory_space<vmem>>, vector<1x16xf32>
    %95 = vector.shape_cast %94 : vector<1x16xf32> to vector<16xf32>
    %c0_130 = arith.constant 0 : index
    %c0_131 = arith.constant 0 : index
    %c0_132 = arith.constant 0 : index
    %96 = vector.load %arg9[%c0_130, %c0_131, %c0_132] : memref<18x18x16xf32, #tpu.memory_space<vmem>>, vector<16x16x16xf32>
    %97 = vector.shape_cast %96 : vector<16x16x16xf32> to vector<256x16xf32>
    %c0_133 = arith.constant 0 : index
    %c0_134 = arith.constant 0 : index
    %98 = vector.load %arg11[%c0_133, %c0_134] : memref<256x144xf32, #tpu.memory_space<vmem>>, vector<256x16xf32>
    tpu.vector_store %arg11[%c0_133, %c0_134], %97 {strides = array<i32>} : memref<256x144xf32, #tpu.memory_space<vmem>>, vector<256x16xf32>,
    %c0_135 = arith.constant 0 : index
    %c1_136 = arith.constant 1 : index
    %c0_137 = arith.constant 0 : index
    %99 = vector.load %arg9[%c0_135, %c1_136, %c0_137] : memref<18x18x16xf32, #tpu.memory_space<vmem>>, vector<16x16x16xf32>
    %100 = vector.shape_cast %99 : vector<16x16x16xf32> to vector<256x16xf32>
    %c0_138 = arith.constant 0 : index
    %c16_139 = arith.constant 16 : index
    %101 = vector.load %arg11[%c0_138, %c16_139] : memref<256x144xf32, #tpu.memory_space<vmem>>, vector<256x16xf32>
    tpu.vector_store %arg11[%c0_138, %c16_139], %100 {strides = array<i32>} : memref<256x144xf32, #tpu.memory_space<vmem>>, vector<256x16xf32>,
    %c0_140 = arith.constant 0 : index
    %c2_141 = arith.constant 2 : index
    %c0_142 = arith.constant 0 : index
    %102 = vector.load %arg9[%c0_140, %c2_141, %c0_142] : memref<18x18x16xf32, #tpu.memory_space<vmem>>, vector<16x16x16xf32>
    %103 = vector.shape_cast %102 : vector<16x16x16xf32> to vector<256x16xf32>
    %c0_143 = arith.constant 0 : index
    %c32_144 = arith.constant 32 : index
    %104 = vector.load %arg11[%c0_143, %c32_144] : memref<256x144xf32, #tpu.memory_space<vmem>>, vector<256x16xf32>
    tpu.vector_store %arg11[%c0_143, %c32_144], %103 {strides = array<i32>} : memref<256x144xf32, #tpu.memory_space<vmem>>, vector<256x16xf32>,
    %c1_145 = arith.constant 1 : index
    %c0_146 = arith.constant 0 : index
    %c0_147 = arith.constant 0 : index
    %105 = vector.load %arg9[%c1_145, %c0_146, %c0_147] : memref<18x18x16xf32, #tpu.memory_space<vmem>>, vector<16x16x16xf32>
    %106 = vector.shape_cast %105 : vector<16x16x16xf32> to vector<256x16xf32>
    %c0_148 = arith.constant 0 : index
    %c48_149 = arith.constant 48 : index
    %107 = vector.load %arg11[%c0_148, %c48_149] : memref<256x144xf32, #tpu.memory_space<vmem>>, vector<256x16xf32>
    tpu.vector_store %arg11[%c0_148, %c48_149], %106 {strides = array<i32>} : memref<256x144xf32, #tpu.memory_space<vmem>>, vector<256x16xf32>,
    %c1_150 = arith.constant 1 : index
    %c1_151 = arith.constant 1 : index
    %c0_152 = arith.constant 0 : index
    %108 = vector.load %arg9[%c1_150, %c1_151, %c0_152] : memref<18x18x16xf32, #tpu.memory_space<vmem>>, vector<16x16x16xf32>
    %109 = vector.shape_cast %108 : vector<16x16x16xf32> to vector<256x16xf32>
    %c0_153 = arith.constant 0 : index
    %c64_154 = arith.constant 64 : index
    %110 = vector.load %arg11[%c0_153, %c64_154] : memref<256x144xf32, #tpu.memory_space<vmem>>, vector<256x16xf32>
    tpu.vector_store %arg11[%c0_153, %c64_154], %109 {strides = array<i32>} : memref<256x144xf32, #tpu.memory_space<vmem>>, vector<256x16xf32>,
    %c1_155 = arith.constant 1 : index
    %c2_156 = arith.constant 2 : index
    %c0_157 = arith.constant 0 : index
    %111 = vector.load %arg9[%c1_155, %c2_156, %c0_157] : memref<18x18x16xf32, #tpu.memory_space<vmem>>, vector<16x16x16xf32>
    %112 = vector.shape_cast %111 : vector<16x16x16xf32> to vector<256x16xf32>
    %c0_158 = arith.constant 0 : index
    %c80_159 = arith.constant 80 : index
    %113 = vector.load %arg11[%c0_158, %c80_159] : memref<256x144xf32, #tpu.memory_space<vmem>>, vector<256x16xf32>
    tpu.vector_store %arg11[%c0_158, %c80_159], %112 {strides = array<i32>} : memref<256x144xf32, #tpu.memory_space<vmem>>, vector<256x16xf32>,
    %c2_160 = arith.constant 2 : index
    %c0_161 = arith.constant 0 : index
    %c0_162 = arith.constant 0 : index
    %114 = vector.load %arg9[%c2_160, %c0_161, %c0_162] : memref<18x18x16xf32, #tpu.memory_space<vmem>>, vector<16x16x16xf32>
    %115 = vector.shape_cast %114 : vector<16x16x16xf32> to vector<256x16xf32>
    %c0_163 = arith.constant 0 : index
    %c96_164 = arith.constant 96 : index
    %116 = vector.load %arg11[%c0_163, %c96_164] : memref<256x144xf32, #tpu.memory_space<vmem>>, vector<256x16xf32>
    tpu.vector_store %arg11[%c0_163, %c96_164], %115 {strides = array<i32>} : memref<256x144xf32, #tpu.memory_space<vmem>>, vector<256x16xf32>,
    %c2_165 = arith.constant 2 : index
    %c1_166 = arith.constant 1 : index
    %c0_167 = arith.constant 0 : index
    %117 = vector.load %arg9[%c2_165, %c1_166, %c0_167] : memref<18x18x16xf32, #tpu.memory_space<vmem>>, vector<16x16x16xf32>
    %118 = vector.shape_cast %117 : vector<16x16x16xf32> to vector<256x16xf32>
    %c0_168 = arith.constant 0 : index
    %c112_169 = arith.constant 112 : index
    %119 = vector.load %arg11[%c0_168, %c112_169] : memref<256x144xf32, #tpu.memory_space<vmem>>, vector<256x16xf32>
    tpu.vector_store %arg11[%c0_168, %c112_169], %118 {strides = array<i32>} : memref<256x144xf32, #tpu.memory_space<vmem>>, vector<256x16xf32>,
    %c2_170 = arith.constant 2 : index
    %c2_171 = arith.constant 2 : index
    %c0_172 = arith.constant 0 : index
    %120 = vector.load %arg9[%c2_170, %c2_171, %c0_172] : memref<18x18x16xf32, #tpu.memory_space<vmem>>, vector<16x16x16xf32>
    %121 = vector.shape_cast %120 : vector<16x16x16xf32> to vector<256x16xf32>
    %c0_173 = arith.constant 0 : index
    %c128_174 = arith.constant 128 : index
    %122 = vector.load %arg11[%c0_173, %c128_174] : memref<256x144xf32, #tpu.memory_space<vmem>>, vector<256x16xf32>
    tpu.vector_store %arg11[%c0_173, %c128_174], %121 {strides = array<i32>} : memref<256x144xf32, #tpu.memory_space<vmem>>, vector<256x16xf32>,
    %c0_175 = arith.constant 0 : index
    %c0_176 = arith.constant 0 : index
    %123 = vector.load %arg11[%c0_175, %c0_176] : memref<256x144xf32, #tpu.memory_space<vmem>>, vector<256x144xf32>
    %cst_177 = arith.constant dense<0.000000e+00> : vector<256x16xf32>
    %124 = tpu.matmul %123, %93, %cst_177 {dimension_numbers = #tpu.dot_dimension_numbers<[1], [0], [0], [1], [0, 0, 1, 1], [], []>} : vector<256x144xf32>, vector<144x16xf32>, vector<256x16xf32> -> vector<256x16xf32>
    %125 = vector.shape_cast %95 : vector<16xf32> to vector<1x16xf32>
    %126 = vector.broadcast %125 : vector<1x16xf32> to vector<256x16xf32>
    %127 = arith.addf %124, %126 : vector<256x16xf32>
    %cst_178 = arith.constant 0.000000e+00 : f32
    %128 = vector.broadcast %cst_178 : f32 to vector<256x16xf32>
    %129 = arith.maximumf %127, %128 : vector<256x16xf32>
    %130 = vector.shape_cast %129 : vector<256x16xf32> to vector<16x16x16xf32>
    %c1_179 = arith.constant 1 : index
    %c1_180 = arith.constant 1 : index
    %c0_181 = arith.constant 0 : index
    %131 = vector.load %arg10[%c1_179, %c1_180, %c0_181] : memref<18x18x16xf32, #tpu.memory_space<vmem>>, vector<16x16x16xf32>
    tpu.vector_store %arg10[%c1_179, %c1_180, %c0_181], %130 {strides = array<i32>} : memref<18x18x16xf32, #tpu.memory_space<vmem>>, vector<16x16x16xf32>,
    %c2_182 = arith.constant 2 : index
    %c0_183 = arith.constant 0 : index
    %c0_184 = arith.constant 0 : index
    %132 = vector.load %arg4[%c2_182, %c0_183, %c0_184] : memref<3x144x16xf32, #tpu.memory_space<vmem>>, vector<1x144x16xf32>
    %133 = vector.shape_cast %132 : vector<1x144x16xf32> to vector<144x16xf32>
    %c2_185 = arith.constant 2 : index
    %c0_186 = arith.constant 0 : index
    %134 = vector.load %arg5[%c2_185, %c0_186] : memref<3x16xf32, #tpu.memory_space<vmem>>, vector<1x16xf32>
    %135 = vector.shape_cast %134 : vector<1x16xf32> to vector<16xf32>
    %c0_187 = arith.constant 0 : index
    %c0_188 = arith.constant 0 : index
    %c0_189 = arith.constant 0 : index
    %136 = vector.load %arg10[%c0_187, %c0_188, %c0_189] : memref<18x18x16xf32, #tpu.memory_space<vmem>>, vector<16x16x16xf32>
    %137 = vector.shape_cast %136 : vector<16x16x16xf32> to vector<256x16xf32>
    %c0_190 = arith.constant 0 : index
    %c0_191 = arith.constant 0 : index
    %138 = vector.load %arg11[%c0_190, %c0_191] : memref<256x144xf32, #tpu.memory_space<vmem>>, vector<256x16xf32>
    tpu.vector_store %arg11[%c0_190, %c0_191], %137 {strides = array<i32>} : memref<256x144xf32, #tpu.memory_space<vmem>>, vector<256x16xf32>,
    %c0_192 = arith.constant 0 : index
    %c1_193 = arith.constant 1 : index
    %c0_194 = arith.constant 0 : index
    %139 = vector.load %arg10[%c0_192, %c1_193, %c0_194] : memref<18x18x16xf32, #tpu.memory_space<vmem>>, vector<16x16x16xf32>
    %140 = vector.shape_cast %139 : vector<16x16x16xf32> to vector<256x16xf32>
    %c0_195 = arith.constant 0 : index
    %c16_196 = arith.constant 16 : index
    %141 = vector.load %arg11[%c0_195, %c16_196] : memref<256x144xf32, #tpu.memory_space<vmem>>, vector<256x16xf32>
    tpu.vector_store %arg11[%c0_195, %c16_196], %140 {strides = array<i32>} : memref<256x144xf32, #tpu.memory_space<vmem>>, vector<256x16xf32>,
    %c0_197 = arith.constant 0 : index
    %c2_198 = arith.constant 2 : index
    %c0_199 = arith.constant 0 : index
    %142 = vector.load %arg10[%c0_197, %c2_198, %c0_199] : memref<18x18x16xf32, #tpu.memory_space<vmem>>, vector<16x16x16xf32>
    %143 = vector.shape_cast %142 : vector<16x16x16xf32> to vector<256x16xf32>
    %c0_200 = arith.constant 0 : index
    %c32_201 = arith.constant 32 : index
    %144 = vector.load %arg11[%c0_200, %c32_201] : memref<256x144xf32, #tpu.memory_space<vmem>>, vector<256x16xf32>
    tpu.vector_store %arg11[%c0_200, %c32_201], %143 {strides = array<i32>} : memref<256x144xf32, #tpu.memory_space<vmem>>, vector<256x16xf32>,
    %c1_202 = arith.constant 1 : index
    %c0_203 = arith.constant 0 : index
    %c0_204 = arith.constant 0 : index
    %145 = vector.load %arg10[%c1_202, %c0_203, %c0_204] : memref<18x18x16xf32, #tpu.memory_space<vmem>>, vector<16x16x16xf32>
    %146 = vector.shape_cast %145 : vector<16x16x16xf32> to vector<256x16xf32>
    %c0_205 = arith.constant 0 : index
    %c48_206 = arith.constant 48 : index
    %147 = vector.load %arg11[%c0_205, %c48_206] : memref<256x144xf32, #tpu.memory_space<vmem>>, vector<256x16xf32>
    tpu.vector_store %arg11[%c0_205, %c48_206], %146 {strides = array<i32>} : memref<256x144xf32, #tpu.memory_space<vmem>>, vector<256x16xf32>,
    %c1_207 = arith.constant 1 : index
    %c1_208 = arith.constant 1 : index
    %c0_209 = arith.constant 0 : index
    %148 = vector.load %arg10[%c1_207, %c1_208, %c0_209] : memref<18x18x16xf32, #tpu.memory_space<vmem>>, vector<16x16x16xf32>
    %149 = vector.shape_cast %148 : vector<16x16x16xf32> to vector<256x16xf32>
    %c0_210 = arith.constant 0 : index
    %c64_211 = arith.constant 64 : index
    %150 = vector.load %arg11[%c0_210, %c64_211] : memref<256x144xf32, #tpu.memory_space<vmem>>, vector<256x16xf32>
    tpu.vector_store %arg11[%c0_210, %c64_211], %149 {strides = array<i32>} : memref<256x144xf32, #tpu.memory_space<vmem>>, vector<256x16xf32>,
    %c1_212 = arith.constant 1 : index
    %c2_213 = arith.constant 2 : index
    %c0_214 = arith.constant 0 : index
    %151 = vector.load %arg10[%c1_212, %c2_213, %c0_214] : memref<18x18x16xf32, #tpu.memory_space<vmem>>, vector<16x16x16xf32>
    %152 = vector.shape_cast %151 : vector<16x16x16xf32> to vector<256x16xf32>
    %c0_215 = arith.constant 0 : index
    %c80_216 = arith.constant 80 : index
    %153 = vector.load %arg11[%c0_215, %c80_216] : memref<256x144xf32, #tpu.memory_space<vmem>>, vector<256x16xf32>
    tpu.vector_store %arg11[%c0_215, %c80_216], %152 {strides = array<i32>} : memref<256x144xf32, #tpu.memory_space<vmem>>, vector<256x16xf32>,
    %c2_217 = arith.constant 2 : index
    %c0_218 = arith.constant 0 : index
    %c0_219 = arith.constant 0 : index
    %154 = vector.load %arg10[%c2_217, %c0_218, %c0_219] : memref<18x18x16xf32, #tpu.memory_space<vmem>>, vector<16x16x16xf32>
    %155 = vector.shape_cast %154 : vector<16x16x16xf32> to vector<256x16xf32>
    %c0_220 = arith.constant 0 : index
    %c96_221 = arith.constant 96 : index
    %156 = vector.load %arg11[%c0_220, %c96_221] : memref<256x144xf32, #tpu.memory_space<vmem>>, vector<256x16xf32>
    tpu.vector_store %arg11[%c0_220, %c96_221], %155 {strides = array<i32>} : memref<256x144xf32, #tpu.memory_space<vmem>>, vector<256x16xf32>,
    %c2_222 = arith.constant 2 : index
    %c1_223 = arith.constant 1 : index
    %c0_224 = arith.constant 0 : index
    %157 = vector.load %arg10[%c2_222, %c1_223, %c0_224] : memref<18x18x16xf32, #tpu.memory_space<vmem>>, vector<16x16x16xf32>
    %158 = vector.shape_cast %157 : vector<16x16x16xf32> to vector<256x16xf32>
    %c0_225 = arith.constant 0 : index
    %c112_226 = arith.constant 112 : index
    %159 = vector.load %arg11[%c0_225, %c112_226] : memref<256x144xf32, #tpu.memory_space<vmem>>, vector<256x16xf32>
    tpu.vector_store %arg11[%c0_225, %c112_226], %158 {strides = array<i32>} : memref<256x144xf32, #tpu.memory_space<vmem>>, vector<256x16xf32>,
    %c2_227 = arith.constant 2 : index
    %c2_228 = arith.constant 2 : index
    %c0_229 = arith.constant 0 : index
    %160 = vector.load %arg10[%c2_227, %c2_228, %c0_229] : memref<18x18x16xf32, #tpu.memory_space<vmem>>, vector<16x16x16xf32>
    %161 = vector.shape_cast %160 : vector<16x16x16xf32> to vector<256x16xf32>
    %c0_230 = arith.constant 0 : index
    %c128_231 = arith.constant 128 : index
    %162 = vector.load %arg11[%c0_230, %c128_231] : memref<256x144xf32, #tpu.memory_space<vmem>>, vector<256x16xf32>
    tpu.vector_store %arg11[%c0_230, %c128_231], %161 {strides = array<i32>} : memref<256x144xf32, #tpu.memory_space<vmem>>, vector<256x16xf32>,
    %c0_232 = arith.constant 0 : index
    %c0_233 = arith.constant 0 : index
    %163 = vector.load %arg11[%c0_232, %c0_233] : memref<256x144xf32, #tpu.memory_space<vmem>>, vector<256x144xf32>
    %cst_234 = arith.constant dense<0.000000e+00> : vector<256x16xf32>
    %164 = tpu.matmul %163, %133, %cst_234 {dimension_numbers = #tpu.dot_dimension_numbers<[1], [0], [0], [1], [0, 0, 1, 1], [], []>} : vector<256x144xf32>, vector<144x16xf32>, vector<256x16xf32> -> vector<256x16xf32>
    %165 = vector.shape_cast %135 : vector<16xf32> to vector<1x16xf32>
    %166 = vector.broadcast %165 : vector<1x16xf32> to vector<256x16xf32>
    %167 = arith.addf %164, %166 : vector<256x16xf32>
    %cst_235 = arith.constant 0.000000e+00 : f32
    %168 = vector.broadcast %cst_235 : f32 to vector<256x16xf32>
    %169 = arith.maximumf %167, %168 : vector<256x16xf32>
    %170 = vector.shape_cast %169 : vector<256x16xf32> to vector<16x16x16xf32>
    %c1_236 = arith.constant 1 : index
    %c1_237 = arith.constant 1 : index
    %c0_238 = arith.constant 0 : index
    %171 = vector.load %arg9[%c1_236, %c1_237, %c0_238] : memref<18x18x16xf32, #tpu.memory_space<vmem>>, vector<16x16x16xf32>
    tpu.vector_store %arg9[%c1_236, %c1_237, %c0_238], %170 {strides = array<i32>} : memref<18x18x16xf32, #tpu.memory_space<vmem>>, vector<16x16x16xf32>,
    %c0_239 = arith.constant 0 : index
    %c0_240 = arith.constant 0 : index
    %172 = vector.load %arg6[%c0_239, %c0_240] : memref<144x3xf32, #tpu.memory_space<vmem>>, vector<144x3xf32>
    %c0_241 = arith.constant 0 : index
    %c0_242 = arith.constant 0 : index
    %173 = vector.load %arg7[%c0_241, %c0_242] : memref<1x3xf32, #tpu.memory_space<vmem>>, vector<1x3xf32>
    %174 = vector.shape_cast %173 : vector<1x3xf32> to vector<3xf32>
    %c0_243 = arith.constant 0 : index
    %c0_244 = arith.constant 0 : index
    %c0_245 = arith.constant 0 : index
    %175 = vector.load %arg9[%c0_243, %c0_244, %c0_245] : memref<18x18x16xf32, #tpu.memory_space<vmem>>, vector<16x16x16xf32>
    %176 = vector.shape_cast %175 : vector<16x16x16xf32> to vector<256x16xf32>
    %c0_246 = arith.constant 0 : index
    %c0_247 = arith.constant 0 : index
    %177 = vector.load %arg11[%c0_246, %c0_247] : memref<256x144xf32, #tpu.memory_space<vmem>>, vector<256x16xf32>
    tpu.vector_store %arg11[%c0_246, %c0_247], %176 {strides = array<i32>} : memref<256x144xf32, #tpu.memory_space<vmem>>, vector<256x16xf32>,
    %c0_248 = arith.constant 0 : index
    %c1_249 = arith.constant 1 : index
    %c0_250 = arith.constant 0 : index
    %178 = vector.load %arg9[%c0_248, %c1_249, %c0_250] : memref<18x18x16xf32, #tpu.memory_space<vmem>>, vector<16x16x16xf32>
    %179 = vector.shape_cast %178 : vector<16x16x16xf32> to vector<256x16xf32>
    %c0_251 = arith.constant 0 : index
    %c16_252 = arith.constant 16 : index
    %180 = vector.load %arg11[%c0_251, %c16_252] : memref<256x144xf32, #tpu.memory_space<vmem>>, vector<256x16xf32>
    tpu.vector_store %arg11[%c0_251, %c16_252], %179 {strides = array<i32>} : memref<256x144xf32, #tpu.memory_space<vmem>>, vector<256x16xf32>,
    %c0_253 = arith.constant 0 : index
    %c2_254 = arith.constant 2 : index
    %c0_255 = arith.constant 0 : index
    %181 = vector.load %arg9[%c0_253, %c2_254, %c0_255] : memref<18x18x16xf32, #tpu.memory_space<vmem>>, vector<16x16x16xf32>
    %182 = vector.shape_cast %181 : vector<16x16x16xf32> to vector<256x16xf32>
    %c0_256 = arith.constant 0 : index
    %c32_257 = arith.constant 32 : index
    %183 = vector.load %arg11[%c0_256, %c32_257] : memref<256x144xf32, #tpu.memory_space<vmem>>, vector<256x16xf32>
    tpu.vector_store %arg11[%c0_256, %c32_257], %182 {strides = array<i32>} : memref<256x144xf32, #tpu.memory_space<vmem>>, vector<256x16xf32>,
    %c1_258 = arith.constant 1 : index
    %c0_259 = arith.constant 0 : index
    %c0_260 = arith.constant 0 : index
    %184 = vector.load %arg9[%c1_258, %c0_259, %c0_260] : memref<18x18x16xf32, #tpu.memory_space<vmem>>, vector<16x16x16xf32>
    %185 = vector.shape_cast %184 : vector<16x16x16xf32> to vector<256x16xf32>
    %c0_261 = arith.constant 0 : index
    %c48_262 = arith.constant 48 : index
    %186 = vector.load %arg11[%c0_261, %c48_262] : memref<256x144xf32, #tpu.memory_space<vmem>>, vector<256x16xf32>
    tpu.vector_store %arg11[%c0_261, %c48_262], %185 {strides = array<i32>} : memref<256x144xf32, #tpu.memory_space<vmem>>, vector<256x16xf32>,
    %c1_263 = arith.constant 1 : index
    %c1_264 = arith.constant 1 : index
    %c0_265 = arith.constant 0 : index
    %187 = vector.load %arg9[%c1_263, %c1_264, %c0_265] : memref<18x18x16xf32, #tpu.memory_space<vmem>>, vector<16x16x16xf32>
    %188 = vector.shape_cast %187 : vector<16x16x16xf32> to vector<256x16xf32>
    %c0_266 = arith.constant 0 : index
    %c64_267 = arith.constant 64 : index
    %189 = vector.load %arg11[%c0_266, %c64_267] : memref<256x144xf32, #tpu.memory_space<vmem>>, vector<256x16xf32>
    tpu.vector_store %arg11[%c0_266, %c64_267], %188 {strides = array<i32>} : memref<256x144xf32, #tpu.memory_space<vmem>>, vector<256x16xf32>,
    %c1_268 = arith.constant 1 : index
    %c2_269 = arith.constant 2 : index
    %c0_270 = arith.constant 0 : index
    %190 = vector.load %arg9[%c1_268, %c2_269, %c0_270] : memref<18x18x16xf32, #tpu.memory_space<vmem>>, vector<16x16x16xf32>
    %191 = vector.shape_cast %190 : vector<16x16x16xf32> to vector<256x16xf32>
    %c0_271 = arith.constant 0 : index
    %c80_272 = arith.constant 80 : index
    %192 = vector.load %arg11[%c0_271, %c80_272] : memref<256x144xf32, #tpu.memory_space<vmem>>, vector<256x16xf32>
    tpu.vector_store %arg11[%c0_271, %c80_272], %191 {strides = array<i32>} : memref<256x144xf32, #tpu.memory_space<vmem>>, vector<256x16xf32>,
    %c2_273 = arith.constant 2 : index
    %c0_274 = arith.constant 0 : index
    %c0_275 = arith.constant 0 : index
    %193 = vector.load %arg9[%c2_273, %c0_274, %c0_275] : memref<18x18x16xf32, #tpu.memory_space<vmem>>, vector<16x16x16xf32>
    %194 = vector.shape_cast %193 : vector<16x16x16xf32> to vector<256x16xf32>
    %c0_276 = arith.constant 0 : index
    %c96_277 = arith.constant 96 : index
    %195 = vector.load %arg11[%c0_276, %c96_277] : memref<256x144xf32, #tpu.memory_space<vmem>>, vector<256x16xf32>
    tpu.vector_store %arg11[%c0_276, %c96_277], %194 {strides = array<i32>} : memref<256x144xf32, #tpu.memory_space<vmem>>, vector<256x16xf32>,
    %c2_278 = arith.constant 2 : index
    %c1_279 = arith.constant 1 : index
    %c0_280 = arith.constant 0 : index
    %196 = vector.load %arg9[%c2_278, %c1_279, %c0_280] : memref<18x18x16xf32, #tpu.memory_space<vmem>>, vector<16x16x16xf32>
    %197 = vector.shape_cast %196 : vector<16x16x16xf32> to vector<256x16xf32>
    %c0_281 = arith.constant 0 : index
    %c112_282 = arith.constant 112 : index
    %198 = vector.load %arg11[%c0_281, %c112_282] : memref<256x144xf32, #tpu.memory_space<vmem>>, vector<256x16xf32>
    tpu.vector_store %arg11[%c0_281, %c112_282], %197 {strides = array<i32>} : memref<256x144xf32, #tpu.memory_space<vmem>>, vector<256x16xf32>,
    %c2_283 = arith.constant 2 : index
    %c2_284 = arith.constant 2 : index
    %c0_285 = arith.constant 0 : index
    %199 = vector.load %arg9[%c2_283, %c2_284, %c0_285] : memref<18x18x16xf32, #tpu.memory_space<vmem>>, vector<16x16x16xf32>
    %200 = vector.shape_cast %199 : vector<16x16x16xf32> to vector<256x16xf32>
    %c0_286 = arith.constant 0 : index
    %c128_287 = arith.constant 128 : index
    %201 = vector.load %arg11[%c0_286, %c128_287] : memref<256x144xf32, #tpu.memory_space<vmem>>, vector<256x16xf32>
    tpu.vector_store %arg11[%c0_286, %c128_287], %200 {strides = array<i32>} : memref<256x144xf32, #tpu.memory_space<vmem>>, vector<256x16xf32>,
    %c0_288 = arith.constant 0 : index
    %c0_289 = arith.constant 0 : index
    %202 = vector.load %arg11[%c0_288, %c0_289] : memref<256x144xf32, #tpu.memory_space<vmem>>, vector<256x144xf32>
    %cst_290 = arith.constant dense<0.000000e+00> : vector<256x3xf32>
    %203 = tpu.matmul %202, %172, %cst_290 {dimension_numbers = #tpu.dot_dimension_numbers<[1], [0], [0], [1], [0, 0, 1, 1], [], []>} : vector<256x144xf32>, vector<144x3xf32>, vector<256x3xf32> -> vector<256x3xf32>
    %204 = vector.shape_cast %174 : vector<3xf32> to vector<1x3xf32>
    %205 = vector.broadcast %204 : vector<1x3xf32> to vector<256x3xf32>
    %206 = arith.addf %203, %205 : vector<256x3xf32>
    %207 = vector.shape_cast %206 : vector<256x3xf32> to vector<16x16x3xf32>
    %c0_291 = arith.constant 0 : index
    %c0_292 = arith.constant 0 : index
    %c0_293 = arith.constant 0 : index
    %c0_294 = arith.constant 0 : index
    %208 = vector.load %arg1[%c0_291, %c0_292, %c0_293, %c0_294] : memref<1x16x16x3xf32, #tpu.memory_space<vmem>>, vector<1x16x16x3xf32>
    %209 = vector.shape_cast %208 : vector<1x16x16x3xf32> to vector<16x16x3xf32>
    %210 = arith.addf %207, %209 : vector<16x16x3xf32>
    %c0_295 = arith.constant 0 : index
    %c0_296 = arith.constant 0 : index
    %c0_297 = arith.constant 0 : index
    %c0_298 = arith.constant 0 : index
    %211 = vector.load %arg8[%c0_295, %c0_296, %c0_297, %c0_298] : memref<1x16x16x3xf32, #tpu.memory_space<vmem>>, vector<1x16x16x3xf32>
    %212 = vector.shape_cast %211 : vector<1x16x16x3xf32> to vector<16x16x3xf32>
    %213 = vector.shape_cast %210 : vector<16x16x3xf32> to vector<1x16x16x3xf32>
    tpu.vector_store %arg8[%c0_295, %c0_296, %c0_297, %c0_298], %213 {strides = array<i32>} : memref<1x16x16x3xf32, #tpu.memory_space<vmem>>, vector<1x16x16x3xf32>,
    return
  }
  func.func @transform_0(%arg0: i32) -> (i32, i32, i32, i32) {
    %c0_i32 = arith.constant 0 : i32
    %c0_i32_0 = arith.constant 0 : i32
    %c0_i32_1 = arith.constant 0 : i32
    %c0_i32_2 = arith.constant 0 : i32
    return %arg0, %c0_i32, %c0_i32_0, %c0_i32_1 : i32, i32, i32, i32
  }
  func.func @transform_1(%arg0: i32) -> (i32, i32) {
    %c0_i32 = arith.constant 0 : i32
    %c0_i32_0 = arith.constant 0 : i32
    %c0_i32_1 = arith.constant 0 : i32
    return %c0_i32, %c0_i32_0 : i32, i32
  }
  func.func @transform_2(%arg0: i32) -> (i32, i32) {
    %c0_i32 = arith.constant 0 : i32
    %c0_i32_0 = arith.constant 0 : i32
    %c0_i32_1 = arith.constant 0 : i32
    return %c0_i32, %c0_i32_0 : i32, i32
  }
  func.func @transform_3(%arg0: i32) -> (i32, i32, i32) {
    %c0_i32 = arith.constant 0 : i32
    %c0_i32_0 = arith.constant 0 : i32
    %c0_i32_1 = arith.constant 0 : i32
    %c0_i32_2 = arith.constant 0 : i32
    return %c0_i32, %c0_i32_0, %c0_i32_1 : i32, i32, i32
  }
  func.func @transform_4(%arg0: i32) -> (i32, i32) {
    %c0_i32 = arith.constant 0 : i32
    %c0_i32_0 = arith.constant 0 : i32
    %c0_i32_1 = arith.constant 0 : i32
    return %c0_i32, %c0_i32_0 : i32, i32
  }
  func.func @transform_5(%arg0: i32) -> (i32, i32) {
    %c0_i32 = arith.constant 0 : i32
    %c0_i32_0 = arith.constant 0 : i32
    %c0_i32_1 = arith.constant 0 : i32
    return %c0_i32, %c0_i32_0 : i32, i32
  }
  func.func @transform_6(%arg0: i32) -> (i32, i32) {
    %c0_i32 = arith.constant 0 : i32
    %c0_i32_0 = arith.constant 0 : i32
    %c0_i32_1 = arith.constant 0 : i32
    return %c0_i32, %c0_i32_0 : i32, i32
  }
  func.func @transform_7(%arg0: i32) -> (i32, i32, i32, i32) {
    %c0_i32 = arith.constant 0 : i32
    %c0_i32_0 = arith.constant 0 : i32
    %c0_i32_1 = arith.constant 0 : i32
    %c0_i32_2 = arith.constant 0 : i32
    return %arg0, %c0_i32, %c0_i32_0, %c0_i32_1 : i32, i32, i32, i32
  }
}

</mosaic_0001>

<llo_original>
// kernel: tpu_custom_call.1
$region0: #{tpu_custom_call.1}
  #allocation0 [shape = 'u32[]', space=smem, size = 0x4, offset = 0x4, fixed_abs, tag = 'smem constant byte address 0x4 - core index']
  #allocation1 [shape = 'u32[144,128]{1,0:T(1,128)}', space=vmem, size = 0x12000, scoped, tag = 'internal scratch']
  #allocation2 [shape = 'f32[18,18,16]{2,1,0:T(8,128)}', space=vmem, size = 0x36000, scoped, tag = 'scratch operand']
  #allocation3 [shape = 'f32[18,18,16]{2,1,0:T(8,128)}', space=vmem, size = 0x36000, scoped, tag = 'scratch operand']
  #allocation4 [shape = 'f32[256,144]{1,0:T(8,128)}', space=vmem, size = 0x40000, scoped, tag = 'scratch operand']
  %s0 = inlined_call_operand.vmem [shape: f32[2,16,16,3], index: 0, kind: input, shape index: {}]
  %s1 = inlined_call_operand.vmem [shape: f32[27,16], index: 1, kind: input, shape index: {}]
  %s2 = inlined_call_operand.vmem [shape: f32[1,16], index: 2, kind: input, shape index: {}]
  %s3 = inlined_call_operand.vmem [shape: f32[3,144,16], index: 3, kind: input, shape index: {}]
  %s4 = inlined_call_operand.vmem [shape: f32[3,16], index: 4, kind: input, shape index: {}]
  %s5 = inlined_call_operand.vmem [shape: f32[144,3], index: 5, kind: input, shape index: {}]
  %s6 = inlined_call_operand.vmem [shape: f32[1,3], index: 6, kind: input, shape index: {}]
  %s7 = inlined_call_operand.vmem [shape: f32[2,16,16,3], index: 7, kind: output, shape index: {}]
  %s8 = sld [smem:[#allocation0]]
  $region61: #{tpu_custom_call.1} parent=0
    _
  %s10 = ssub.s32 1, %s8
  %s11 = scalar_select 0, %s10, %s8
  loop: start=0, step=1, limit=4
  $region2: #{tpu_custom_call.1} parent=0 // loop_pre_header
    _
  $region3: #{tpu_custom_call.1} parent=0 // loop_header
    %s13 = sphi 0, %s17
    %p14 = scmp.ge.s32.totalorder %s13, 4
    %s23 = sphi 0, %s25
    %s26 = sphi 0, %s23
    %s27 = sphi 0, %s26
    %s43 = sphi 0, %s27
    %s47 = sphi 0, %s47
    %s49 = sphi 0, %s47
    %s50 = sphi 0, %s49
    %s64 = sphi 0, %s50
    %s68 = sphi 0, %s68
    %s70 = sphi 0, %s68
    %s71 = sphi 0, %s70
    %s85 = sphi 0, %s71
    %s89 = sphi 0, %s89
    %s91 = sphi 0, %s89
    %s92 = sphi 0, %s91
    %s106 = sphi 0, %s92
    %s110 = sphi 0, %s110
    %s112 = sphi 0, %s110
    %s113 = sphi 0, %s112
    %s127 = sphi 0, %s113
    %s131 = sphi 0, %s131
    %s133 = sphi 0, %s131
    %s134 = sphi 0, %s133
    %s148 = sphi 0, %s134
    %s152 = sphi 0, %s152
    %s154 = sphi 0, %s152
    %s155 = sphi 0, %s154
    %s169 = sphi 0, %s155
    %s175 = sphi 0, %s177
    %s178 = sphi 0, %s175
    %s179 = sphi 0, %s178
    %s195 = sphi 0, %s179
  $region4: #{tpu_custom_call.1} parent=0 // loop_header_branch
    %16 = sbr.rel (%p14) target = $region8
  $region5: #{tpu_custom_call.1} parent=0 // loop_body
    %s18 = ssub.s32 %s13, 1
    %s19 = ssub.s32 %s13, 2
    %s20 = sadd.s32 %s13, 1
    %s21 = ssub.s32 %s13, %s20
    %p22 = scmp.eq.s32.totalorder %s21, 0
    %s24 = sadd.s32 %s23, 1
    %s25 = scalar_select %p22, %s23, %s24
    %p28 = pneg %p22
    %p29 = scmp.eq.s32.totalorder %s13, 1
    %p30 = por %p28, %p29
    %p31 = scmp.ne.s32.totalorder %s23, %s26
    %p32 = scmp.eq.s32.totalorder %s13, 0
    %p33 = por %p31, %p32
    %p34 = scmp.ne.s32.totalorder %s23, %s26
    %p35 = scmp.eq.s32.totalorder %s18, 1
    %p36 = por %p34, %p35
    %p37 = scmp.ne.s32.totalorder %s26, %s27
    %p38 = scmp.eq.s32.totalorder %s18, 0
    %p39 = por %p37, %p38
    %p40 = scmp.ne.s32.totalorder %s26, %s27
    %p41 = scmp.eq.s32.totalorder %s19, 1
    %p42 = por %p40, %p41
    %p44 = scmp.ne.s32.totalorder %s27, %s43
    %p45 = scmp.eq.s32.totalorder %s19, 0
    %p46 = por %p44, %p45
    %s48 = sadd.s32 %s47, 1
    %p51 = scmp.eq.s32.totalorder %s13, 1
    %p52 = scmp.ne.s32.totalorder %s47, %s49
    %p53 = scmp.eq.s32.totalorder %s13, 0
    %p54 = por %p52, %p53
    %p55 = scmp.ne.s32.totalorder %s47, %s49
    %p56 = scmp.eq.s32.totalorder %s18, 1
    %p57 = por %p55, %p56
    %p58 = scmp.ne.s32.totalorder %s49, %s50
    %p59 = scmp.eq.s32.totalorder %s18, 0
    %p60 = por %p58, %p59
    %p61 = scmp.ne.s32.totalorder %s49, %s50
    %p62 = scmp.eq.s32.totalorder %s19, 1
    %p63 = por %p61, %p62
    %p65 = scmp.ne.s32.totalorder %s50, %s64
    %p66 = scmp.eq.s32.totalorder %s19, 0
    %p67 = por %p65, %p66
    %s69 = sadd.s32 %s68, 1
    %p72 = scmp.eq.s32.totalorder %s13, 1
    %p73 = scmp.ne.s32.totalorder %s68, %s70
    %p74 = scmp.eq.s32.totalorder %s13, 0
    %p75 = por %p73, %p74
    %p76 = scmp.ne.s32.totalorder %s68, %s70
    %p77 = scmp.eq.s32.totalorder %s18, 1
    %p78 = por %p76, %p77
    %p79 = scmp.ne.s32.totalorder %s70, %s71
    %p80 = scmp.eq.s32.totalorder %s18, 0
    %p81 = por %p79, %p80
    %p82 = scmp.ne.s32.totalorder %s70, %s71
    %p83 = scmp.eq.s32.totalorder %s19, 1
    %p84 = por %p82, %p83
    %p86 = scmp.ne.s32.totalorder %s71, %s85
    %p87 = scmp.eq.s32.totalorder %s19, 0
    %p88 = por %p86, %p87
    %s90 = sadd.s32 %s89, 1
    %p93 = scmp.eq.s32.totalorder %s13, 1
    %p94 = scmp.ne.s32.totalorder %s89, %s91
    %p95 = scmp.eq.s32.totalorder %s13, 0
    %p96 = por %p94, %p95
    %p97 = scmp.ne.s32.totalorder %s89, %s91
    %p98 = scmp.eq.s32.totalorder %s18, 1
    %p99 = por %p97, %p98
    %p100 = scmp.ne.s32.totalorder %s91, %s92
    %p101 = scmp.eq.s32.totalorder %s18, 0
    %p102 = por %p100, %p101
    %p103 = scmp.ne.s32.totalorder %s91, %s92
    %p104 = scmp.eq.s32.totalorder %s19, 1
    %p105 = por %p103, %p104
    %p107 = scmp.ne.s32.totalorder %s92, %s106
    %p108 = scmp.eq.s32.totalorder %s19, 0
    %p109 = por %p107, %p108
    %s111 = sadd.s32 %s110, 1
    %p114 = scmp.eq.s32.totalorder %s13, 1
    %p115 = scmp.ne.s32.totalorder %s110, %s112
    %p116 = scmp.eq.s32.totalorder %s13, 0
    %p117 = por %p115, %p116
    %p118 = scmp.ne.s32.totalorder %s110, %s112
    %p119 = scmp.eq.s32.totalorder %s18, 1
    %p120 = por %p118, %p119
    %p121 = scmp.ne.s32.totalorder %s112, %s113
    %p122 = scmp.eq.s32.totalorder %s18, 0
    %p123 = por %p121, %p122
    %p124 = scmp.ne.s32.totalorder %s112, %s113
    %p125 = scmp.eq.s32.totalorder %s19, 1
    %p126 = por %p124, %p125
    %p128 = scmp.ne.s32.totalorder %s113, %s127
    %p129 = scmp.eq.s32.totalorder %s19, 0
    %p130 = por %p128, %p129
    %s132 = sadd.s32 %s131, 1
    %p135 = scmp.eq.s32.totalorder %s13, 1
    %p136 = scmp.ne.s32.totalorder %s131, %s133
    %p137 = scmp.eq.s32.totalorder %s13, 0
    %p138 = por %p136, %p137
    %p139 = scmp.ne.s32.totalorder %s131, %s133
    %p140 = scmp.eq.s32.totalorder %s18, 1
    %p141 = por %p139, %p140
    %p142 = scmp.ne.s32.totalorder %s133, %s134
    %p143 = scmp.eq.s32.totalorder %s18, 0
    %p144 = por %p142, %p143
    %p145 = scmp.ne.s32.totalorder %s133, %s134
    %p146 = scmp.eq.s32.totalorder %s19, 1
    %p147 = por %p145, %p146
    %p149 = scmp.ne.s32.totalorder %s134, %s148
    %p150 = scmp.eq.s32.totalorder %s19, 0
    %p151 = por %p149, %p150
    %s153 = sadd.s32 %s152, 1
    %p156 = scmp.eq.s32.totalorder %s13, 1
    %p157 = scmp.ne.s32.totalorder %s152, %s154
    %p158 = scmp.eq.s32.totalorder %s13, 0
    %p159 = por %p157, %p158
    %p160 = scmp.ne.s32.totalorder %s152, %s154
    %p161 = scmp.eq.s32.totalorder %s18, 1
    %p162 = por %p160, %p161
    %p163 = scmp.ne.s32.totalorder %s154, %s155
    %p164 = scmp.eq.s32.totalorder %s18, 0
    %p165 = por %p163, %p164
    %p166 = scmp.ne.s32.totalorder %s154, %s155
    %p167 = scmp.eq.s32.totalorder %s19, 1
    %p168 = por %p166, %p167
    %p170 = scmp.ne.s32.totalorder %s155, %s169
    %p171 = scmp.eq.s32.totalorder %s19, 0
    %p172 = por %p170, %p171
    %s173 = ssub.s32 %s13, %s20
    %p174 = scmp.eq.s32.totalorder %s173, 0
    %s176 = sadd.s32 %s175, 1
    %s177 = scalar_select %p174, %s175, %s176
    %p180 = pneg %p174
    %p181 = scmp.eq.s32.totalorder %s13, 1
    %p182 = por %p180, %p181
    %p183 = scmp.ne.s32.totalorder %s175, %s178
    %p184 = scmp.eq.s32.totalorder %s13, 0
    %p185 = por %p183, %p184
    %p186 = scmp.ne.s32.totalorder %s175, %s178
    %p187 = scmp.eq.s32.totalorder %s18, 1
    %p188 = por %p186, %p187
    %p189 = scmp.ne.s32.totalorder %s178, %s179
    %p190 = scmp.eq.s32.totalorder %s18, 0
    %p191 = por %p189, %p190
    %p192 = scmp.ne.s32.totalorder %s178, %s179
    %p193 = scmp.eq.s32.totalorder %s19, 1
    %p194 = por %p192, %p193
    %p196 = scmp.ne.s32.totalorder %s179, %s195
    %p197 = scmp.eq.s32.totalorder %s19, 0
    %p198 = por %p196, %p197
    %p199 = scmp.le.s32.totalorder 1, %s13
    %p200 = scmp.lt.s32.totalorder %s13, 3
    %p201 = pnand %p199, %p200
    %p202 = pneg %p201
    // Predicated region
    $region9: #{tpu_custom_call.1} parent=5 // pred_check
      _
    $region10: #{tpu_custom_call.1} parent=5 // pred_check_branch
      %204 = sbr.rel (%p201) target = $region12
    $region11: #{tpu_custom_call.1} parent=5 // pred_region
      %s205 = ssub.s32 %s13, 1
      // Predicated region
      $region13: #{tpu_custom_call.1} parent=11 // pred_check
        %p206 = pneg %p60
      $region14: #{tpu_custom_call.1} parent=11 // pred_check_branch
        %208 = sbr.rel (%p206) target = $region16
      $region15: #{tpu_custom_call.1} parent=11 // pred_region
        _
      $region16: #{tpu_custom_call.1} parent=11 // pred_fallthru
        _
      // Predicated region
      $region17: #{tpu_custom_call.1} parent=11 // pred_check
        %p209 = pneg %p81
      $region18: #{tpu_custom_call.1} parent=11 // pred_check_branch
        %211 = sbr.rel (%p209) target = $region20
      $region19: #{tpu_custom_call.1} parent=11 // pred_region
        _
      $region20: #{tpu_custom_call.1} parent=11 // pred_fallthru
        _
      // Predicated region
      $region21: #{tpu_custom_call.1} parent=11 // pred_check
        %p212 = pneg %p102
      $region22: #{tpu_custom_call.1} parent=11 // pred_check_branch
        %214 = sbr.rel (%p212) target = $region24
      $region23: #{tpu_custom_call.1} parent=11 // pred_region
        _
      $region24: #{tpu_custom_call.1} parent=11 // pred_fallthru
        _
      // Predicated region
      $region25: #{tpu_custom_call.1} parent=11 // pred_check
        %p215 = pneg %p123
      $region26: #{tpu_custom_call.1} parent=11 // pred_check_branch
        %217 = sbr.rel (%p215) target = $region28
      $region27: #{tpu_custom_call.1} parent=11 // pred_region
        _
      $region28: #{tpu_custom_call.1} parent=11 // pred_fallthru
        _
      // Predicated region
      $region29: #{tpu_custom_call.1} parent=11 // pred_check
        %p218 = pneg %p144
      $region30: #{tpu_custom_call.1} parent=11 // pred_check_branch
        %220 = sbr.rel (%p218) target = $region32
      $region31: #{tpu_custom_call.1} parent=11 // pred_region
        _
      $region32: #{tpu_custom_call.1} parent=11 // pred_fallthru
        _
      // Predicated region
      $region33: #{tpu_custom_call.1} parent=11 // pred_check
        %p221 = pneg %p165
      $region34: #{tpu_custom_call.1} parent=11 // pred_check_branch
        %223 = sbr.rel (%p221) target = $region36
      $region35: #{tpu_custom_call.1} parent=11 // pred_region
        _
      $region36: #{tpu_custom_call.1} parent=11 // pred_fallthru
        _
    $region12: #{tpu_custom_call.1} parent=5 // pred_fallthru
      _
    %p224 = scmp.lt.s32.totalorder %s13, 2
    // Predicated region
    $region37: #{tpu_custom_call.1} parent=5 // pred_check
      %p225 = pneg %p224
    $region38: #{tpu_custom_call.1} parent=5 // pred_check_branch
      %227 = sbr.rel (%p225) target = $region40
    $region39: #{tpu_custom_call.1} parent=5 // pred_region
      // Predicated region
      $region41: #{tpu_custom_call.1} parent=39 // pred_check
        %p228 = pneg %p33
      $region42: #{tpu_custom_call.1} parent=39 // pred_check_branch
        %230 = sbr.rel (%p228) target = $region44
      $region43: #{tpu_custom_call.1} parent=39 // pred_region
        %p231 = scmp.lt.s32.totalorder %s13, 1
        %s232 = scalar_select %p231, %s13, 1
        %s233 = smul.addr %s232, 32
        %s234 = smul.addr %s233, 8
        %s235 = scalar_lea.vmem %s0, %s234
      $region44: #{tpu_custom_call.1} parent=39 // pred_fallthru
        _
    $region40: #{tpu_custom_call.1} parent=5 // pred_fallthru
      _
    %p236 = scmp.le.s32.totalorder 1, %s13
    %p237 = scmp.lt.s32.totalorder %s13, 3
    %p238 = pnand %p236, %p237
    %p239 = pneg %p238
    // Predicated region
    $region45: #{tpu_custom_call.1} parent=5 // pred_check
      _
    $region46: #{tpu_custom_call.1} parent=5 // pred_check_branch
      %241 = sbr.rel (%p238) target = $region48
    $region47: #{tpu_custom_call.1} parent=5 // pred_region
      %s242 = ssub.s32 %s13, 1
      %p243 = scmp.lt.s32.totalorder %s18, 1
      %s244 = scalar_select %p243, %s18, 1
      %s245 = smul.addr %s244, 32
      %s246 = smul.addr %s245, 8
      %s247 = scalar_lea.vmem %s0, %s246
      %p248 = pneg %p39
      %p249 = pneg %p36
      %p250 = pneg %p60
      %p251 = pneg %p57
      %p252 = pneg %p81
      %p253 = pneg %p78
      %p254 = pneg %p102
      %p255 = pneg %p99
      %p256 = pneg %p123
      %p257 = pneg %p120
      %p258 = pneg %p144
      %p259 = pneg %p141
      %p260 = pneg %p165
      %p261 = pneg %p162
      %p262 = pneg %p191
      %p263 = pneg %p188
      %p264 = scmp.lt.s32.totalorder %s18, 1
      %s265 = scalar_select %p264, %s18, 1
      %s266 = smul.addr %s265, 32
      %s267 = smul.addr %s266, 8
      %s268 = scalar_lea.vmem %s7, %s267
      %p269 = scmp.lt.s32.totalorder %s18, 1
      %s270 = scalar_select %p269, %s18, 1
      %s271 = smul.addr %s270, 32
      %s272 = smul.addr %s271, 8
      %s273 = scalar_lea.vmem %s0, %s272
      %p274 = scmp.lt.s32.totalorder %s18, 1
      %s275 = scalar_select %p274, %s18, 1
      %s276 = smul.addr %s275, 32
      %s277 = smul.addr %s276, 8
      %s278 = scalar_lea.vmem %s7, %s277
      %vm279 = vcmask 130048
      %280 = vst.msk [vmem:[#allocation2] sm:$0xff] %vm279, 0.0
      %281 = vst.msk [vmem:[#allocation2 + $0x8] sm:$0xff] %vm279, 0.0
      %vm282 = vcmask 123904
      %283 = vst.msk [vmem:[#allocation2 + $0x10] sm:$0x3] %vm282, 0.0
      %s284 = scalar_lea.vmem [#allocation2], 408
      %285 = vst.msk [vmem:[%s284] sm:$0xff] %vm279, 0.0
      %286 = vst.msk [vmem:[%s284 + $0x8] sm:$0xff] %vm279, 0.0
      %287 = vst.msk [vmem:[%s284 + $0x10] sm:$0x3] %vm282, 0.0
      %vm288 = vcmask 122880
      %289 = vst.msk [vmem:[#allocation2] sm:$0x1] %vm288, 0.0
      %290 = vst.msk [vmem:[#allocation2 + $0x18] sm:$0x1] %vm288, 0.0
      %291 = vst.msk [vmem:[#allocation2 + $0x30] sm:$0x1] %vm288, 0.0
      %292 = vst.msk [vmem:[#allocation2 + $0x48] sm:$0x1] %vm288, 0.0
      %293 = vst.msk [vmem:[#allocation2 + $0x60] sm:$0x1] %vm288, 0.0
      %294 = vst.msk [vmem:[#allocation2 + $0x78] sm:$0x1] %vm288, 0.0
      %295 = vst.msk [vmem:[#allocation2 + $0x90] sm:$0x1] %vm288, 0.0
      %296 = vst.msk [vmem:[#allocation2 + $0xa8] sm:$0x1] %vm288, 0.0
      %297 = vst.msk [vmem:[#allocation2 + $0xc0] sm:$0x1] %vm288, 0.0
      %298 = vst.msk [vmem:[#allocation2 + $0xd8] sm:$0x1] %vm288, 0.0
      %299 = vst.msk [vmem:[#allocation2 + $0xf0] sm:$0x1] %vm288, 0.0
      %300 = vst.msk [vmem:[#allocation2 + $0x108] sm:$0x1] %vm288, 0.0
      %301 = vst.msk [vmem:[#allocation2 + $0x120] sm:$0x1] %vm288, 0.0
      %302 = vst.msk [vmem:[#allocation2 + $0x138] sm:$0x1] %vm288, 0.0
      %303 = vst.msk [vmem:[#allocation2 + $0x150] sm:$0x1] %vm288, 0.0
      %304 = vst.msk [vmem:[#allocation2 + $0x168] sm:$0x1] %vm288, 0.0
      %305 = vst.msk [vmem:[#allocation2 + $0x180] sm:$0x1] %vm288, 0.0
      %306 = vst.msk [vmem:[#allocation2 + $0x198] sm:$0x1] %vm288, 0.0
      %307 = vst.msk [vmem:[#allocation2 + $0x11] sm:$0x1] %vm288, 0.0
      %308 = vst.msk [vmem:[#allocation2 + $0x29] sm:$0x1] %vm288, 0.0
      %309 = vst.msk [vmem:[#allocation2 + $0x41] sm:$0x1] %vm288, 0.0
      %310 = vst.msk [vmem:[#allocation2 + $0x59] sm:$0x1] %vm288, 0.0
      %311 = vst.msk [vmem:[#allocation2 + $0x71] sm:$0x1] %vm288, 0.0
      %312 = vst.msk [vmem:[#allocation2 + $0x89] sm:$0x1] %vm288, 0.0
      %313 = vst.msk [vmem:[#allocation2 + $0xa1] sm:$0x1] %vm288, 0.0
      %314 = vst.msk [vmem:[#allocation2 + $0xb9] sm:$0x1] %vm288, 0.0
      %315 = vst.msk [vmem:[#allocation2 + $0xd1] sm:$0x1] %vm288, 0.0
      %316 = vst.msk [vmem:[#allocation2 + $0xe9] sm:$0x1] %vm288, 0.0
      %317 = vst.msk [vmem:[#allocation2 + $0x101] sm:$0x1] %vm288, 0.0
      %318 = vst.msk [vmem:[#allocation2 + $0x119] sm:$0x1] %vm288, 0.0
      %319 = vst.msk [vmem:[#allocation2 + $0x131] sm:$0x1] %vm288, 0.0
      %320 = vst.msk [vmem:[#allocation2 + $0x149] sm:$0x1] %vm288, 0.0
      %321 = vst.msk [vmem:[#allocation2 + $0x161] sm:$0x1] %vm288, 0.0
      %322 = vst.msk [vmem:[#allocation2 + $0x179] sm:$0x1] %vm288, 0.0
      %323 = vst.msk [vmem:[#allocation2 + $0x191] sm:$0x1] %vm288, 0.0
      %324 = vst.msk [vmem:[#allocation2 + $0x1a9] sm:$0x1] %vm288, 0.0
      %325 = vst.msk [vmem:[#allocation3] sm:$0xff] %vm279, 0.0
      %326 = vst.msk [vmem:[#allocation3 + $0x8] sm:$0xff] %vm279, 0.0
      %327 = vst.msk [vmem:[#allocation3 + $0x10] sm:$0x3] %vm282, 0.0
      %s328 = scalar_lea.vmem [#allocation3], 408
      %329 = vst.msk [vmem:[%s328] sm:$0xff] %vm279, 0.0
      %330 = vst.msk [vmem:[%s328 + $0x8] sm:$0xff] %vm279, 0.0
      %331 = vst.msk [vmem:[%s328 + $0x10] sm:$0x3] %vm282, 0.0
      %332 = vst.msk [vmem:[#allocation3] sm:$0x1] %vm288, 0.0
      %333 = vst.msk [vmem:[#allocation3 + $0x18] sm:$0x1] %vm288, 0.0
      %334 = vst.msk [vmem:[#allocation3 + $0x30] sm:$0x1] %vm288, 0.0
      %335 = vst.msk [vmem:[#allocation3 + $0x48] sm:$0x1] %vm288, 0.0
      %336 = vst.msk [vmem:[#allocation3 + $0x60] sm:$0x1] %vm288, 0.0
      %337 = vst.msk [vmem:[#allocation3 + $0x78] sm:$0x1] %vm288, 0.0
      %338 = vst.msk [vmem:[#allocation3 + $0x90] sm:$0x1] %vm288, 0.0
      %339 = vst.msk [vmem:[#allocation3 + $0xa8] sm:$0x1] %vm288, 0.0
      %340 = vst.msk [vmem:[#allocation3 + $0xc0] sm:$0x1] %vm288, 0.0
      %341 = vst.msk [vmem:[#allocation3 + $0xd8] sm:$0x1] %vm288, 0.0
      %342 = vst.msk [vmem:[#allocation3 + $0xf0] sm:$0x1] %vm288, 0.0
      %343 = vst.msk [vmem:[#allocation3 + $0x108] sm:$0x1] %vm288, 0.0
      %344 = vst.msk [vmem:[#allocation3 + $0x120] sm:$0x1] %vm288, 0.0
      %345 = vst.msk [vmem:[#allocation3 + $0x138] sm:$0x1] %vm288, 0.0
      %346 = vst.msk [vmem:[#allocation3 + $0x150] sm:$0x1] %vm288, 0.0
      %347 = vst.msk [vmem:[#allocation3 + $0x168] sm:$0x1] %vm288, 0.0
      %348 = vst.msk [vmem:[#allocation3 + $0x180] sm:$0x1] %vm288, 0.0
      %349 = vst.msk [vmem:[#allocation3 + $0x198] sm:$0x1] %vm288, 0.0
      %350 = vst.msk [vmem:[#allocation3 + $0x11] sm:$0x1] %vm288, 0.0
      %351 = vst.msk [vmem:[#allocation3 + $0x29] sm:$0x1] %vm288, 0.0
      %352 = vst.msk [vmem:[#allocation3 + $0x41] sm:$0x1] %vm288, 0.0
      %353 = vst.msk [vmem:[#allocation3 + $0x59] sm:$0x1] %vm288, 0.0
      %354 = vst.msk [vmem:[#allocation3 + $0x71] sm:$0x1] %vm288, 0.0
      %355 = vst.msk [vmem:[#allocation3 + $0x89] sm:$0x1] %vm288, 0.0
      %356 = vst.msk [vmem:[#allocation3 + $0xa1] sm:$0x1] %vm288, 0.0
      %357 = vst.msk [vmem:[#allocation3 + $0xb9] sm:$0x1] %vm288, 0.0
      %358 = vst.msk [vmem:[#allocation3 + $0xd1] sm:$0x1] %vm288, 0.0
      %359 = vst.msk [vmem:[#allocation3 + $0xe9] sm:$0x1] %vm288, 0.0
      %360 = vst.msk [vmem:[#allocation3 + $0x101] sm:$0x1] %vm288, 0.0
      %361 = vst.msk [vmem:[#allocation3 + $0x119] sm:$0x1] %vm288, 0.0
      %362 = vst.msk [vmem:[#allocation3 + $0x131] sm:$0x1] %vm288, 0.0
      %363 = vst.msk [vmem:[#allocation3 + $0x149] sm:$0x1] %vm288, 0.0
      %364 = vst.msk [vmem:[#allocation3 + $0x161] sm:$0x1] %vm288, 0.0
      %365 = vst.msk [vmem:[#allocation3 + $0x179] sm:$0x1] %vm288, 0.0
      %366 = vst.msk [vmem:[#allocation3 + $0x191] sm:$0x1] %vm288, 0.0
      %367 = vst.msk [vmem:[#allocation3 + $0x1a9] sm:$0x1] %vm288, 0.0
      %v368 = vld [vmem:[%s273] sm:$0xff]
      %v369 = vld [vmem:[%s273 + $0x8] sm:$0xff]
      %v370 = vld [vmem:[%s273 + $0x10] sm:$0xff]
      %v371 = vld [vmem:[%s273 + $0x18] sm:$0xff]
      %v372 = vld [vmem:[%s273 + $0x20] sm:$0xff]
      %v373 = vld [vmem:[%s273 + $0x28] sm:$0xff]
      %v374 = vld [vmem:[%s273 + $0x30] sm:$0xff]
      %v375 = vld [vmem:[%s273 + $0x38] sm:$0xff]
      %v376 = vld [vmem:[%s273 + $0x40] sm:$0xff]
      %v377 = vld [vmem:[%s273 + $0x48] sm:$0xff]
      %v378 = vld [vmem:[%s273 + $0x50] sm:$0xff]
      %v379 = vld [vmem:[%s273 + $0x58] sm:$0xff]
      %v380 = vld [vmem:[%s273 + $0x60] sm:$0xff]
      %v381 = vld [vmem:[%s273 + $0x68] sm:$0xff]
      %v382 = vld [vmem:[%s273 + $0x70] sm:$0xff]
      %v383 = vld [vmem:[%s273 + $0x78] sm:$0xff]
      %v384 = vld [vmem:[%s273 + $0x80] sm:$0xff]
      %v385 = vld [vmem:[%s273 + $0x88] sm:$0xff]
      %v386 = vld [vmem:[%s273 + $0x90] sm:$0xff]
      %v387 = vld [vmem:[%s273 + $0x98] sm:$0xff]
      %v388 = vld [vmem:[%s273 + $0xa0] sm:$0xff]
      %v389 = vld [vmem:[%s273 + $0xa8] sm:$0xff]
      %v390 = vld [vmem:[%s273 + $0xb0] sm:$0xff]
      %v391 = vld [vmem:[%s273 + $0xb8] sm:$0xff]
      %v392 = vld [vmem:[%s273 + $0xc0] sm:$0xff]
      %v393 = vld [vmem:[%s273 + $0xc8] sm:$0xff]
      %v394 = vld [vmem:[%s273 + $0xd0] sm:$0xff]
      %v395 = vld [vmem:[%s273 + $0xd8] sm:$0xff]
      %v396 = vld [vmem:[%s273 + $0xe0] sm:$0xff]
      %v397 = vld [vmem:[%s273 + $0xe8] sm:$0xff]
      %v398 = vld [vmem:[%s273 + $0xf0] sm:$0xff]
      %v399 = vld [vmem:[%s273 + $0xf8] sm:$0xff]
      %s400 = scalar_lea.vmem [#allocation2], 24
      %vm401 = vcmask 23552
      %402 = vst.msk [vmem:[%s400 + $0x1] sm:$0xff] %vm401, %v368
      %403 = vst.msk [vmem:[%s400 + $0x9] sm:$0xff] %vm401, %v369
      %404 = vst.msk [vmem:[%s400 + $0x19] sm:$0xff] %vm401, %v370
      %405 = vst.msk [vmem:[%s400 + $0x21] sm:$0xff] %vm401, %v371
      %406 = vst.msk [vmem:[%s400 + $0x31] sm:$0xff] %vm401, %v372
      %407 = vst.msk [vmem:[%s400 + $0x39] sm:$0xff] %vm401, %v373
      %408 = vst.msk [vmem:[%s400 + $0x49] sm:$0xff] %vm401, %v374
      %409 = vst.msk [vmem:[%s400 + $0x51] sm:$0xff] %vm401, %v375
      %410 = vst.msk [vmem:[%s400 + $0x61] sm:$0xff] %vm401, %v376
      %411 = vst.msk [vmem:[%s400 + $0x69] sm:$0xff] %vm401, %v377
      %412 = vst.msk [vmem:[%s400 + $0x79] sm:$0xff] %vm401, %v378
      %413 = vst.msk [vmem:[%s400 + $0x81] sm:$0xff] %vm401, %v379
      %414 = vst.msk [vmem:[%s400 + $0x91] sm:$0xff] %vm401, %v380
      %415 = vst.msk [vmem:[%s400 + $0x99] sm:$0xff] %vm401, %v381
      %416 = vst.msk [vmem:[%s400 + $0xa9] sm:$0xff] %vm401, %v382
      %417 = vst.msk [vmem:[%s400 + $0xb1] sm:$0xff] %vm401, %v383
      %418 = vst.msk [vmem:[%s400 + $0xc1] sm:$0xff] %vm401, %v384
      %419 = vst.msk [vmem:[%s400 + $0xc9] sm:$0xff] %vm401, %v385
      %420 = vst.msk [vmem:[%s400 + $0xd9] sm:$0xff] %vm401, %v386
      %421 = vst.msk [vmem:[%s400 + $0xe1] sm:$0xff] %vm401, %v387
      %422 = vst.msk [vmem:[%s400 + $0xf1] sm:$0xff] %vm401, %v388
      %423 = vst.msk [vmem:[%s400 + $0xf9] sm:$0xff] %vm401, %v389
      %424 = vst.msk [vmem:[%s400 + $0x109] sm:$0xff] %vm401, %v390
      %425 = vst.msk [vmem:[%s400 + $0x111] sm:$0xff] %vm401, %v391
      %426 = vst.msk [vmem:[%s400 + $0x121] sm:$0xff] %vm401, %v392
      %427 = vst.msk [vmem:[%s400 + $0x129] sm:$0xff] %vm401, %v393
      %428 = vst.msk [vmem:[%s400 + $0x139] sm:$0xff] %vm401, %v394
      %429 = vst.msk [vmem:[%s400 + $0x141] sm:$0xff] %vm401, %v395
      %430 = vst.msk [vmem:[%s400 + $0x151] sm:$0xff] %vm401, %v396
      %431 = vst.msk [vmem:[%s400 + $0x159] sm:$0xff] %vm401, %v397
      %432 = vst.msk [vmem:[%s400 + $0x169] sm:$0xff] %vm401, %v398
      %433 = vst.msk [vmem:[%s400 + $0x171] sm:$0xff] %vm401, %v399
      %v434 = vld [vmem:[%s1] sm:$0xff]
      %v435 = vld [vmem:[%s1 + $0x8] sm:$0xff]
      %v436 = vld [vmem:[%s1 + $0x10] sm:$0xff]
      %v437 = vld [vmem:[%s1 + $0x18] sm:$0x7]
      %v438 = vld [vmem:[%s2] sm:$0x1]
      %v439 = vld [vmem:[#allocation2] sm:$0xff]
      %v440 = vld [vmem:[#allocation2 + $0x8] sm:$0xff]
      %v441 = vld [vmem:[#allocation2 + $0x18] sm:$0xff]
      %v442 = vld [vmem:[#allocation2 + $0x20] sm:$0xff]
      %v443 = vld [vmem:[#allocation2 + $0x30] sm:$0xff]
      %v444 = vld [vmem:[#allocation2 + $0x38] sm:$0xff]
      %v445 = vld [vmem:[#allocation2 + $0x48] sm:$0xff]
      %v446 = vld [vmem:[#allocation2 + $0x50] sm:$0xff]
      %v447 = vld [vmem:[#allocation2 + $0x60] sm:$0xff]
      %v448 = vld [vmem:[#allocation2 + $0x68] sm:$0xff]
      %v449 = vld [vmem:[#allocation2 + $0x78] sm:$0xff]
      %v450 = vld [vmem:[#allocation2 + $0x80] sm:$0xff]
      %v451 = vld [vmem:[#allocation2 + $0x90] sm:$0xff]
      %v452 = vld [vmem:[#allocation2 + $0x98] sm:$0xff]
      %v453 = vld [vmem:[#allocation2 + $0xa8] sm:$0xff]
      %v454 = vld [vmem:[#allocation2 + $0xb0] sm:$0xff]
      %v455 = vld [vmem:[#allocation2 + $0xc0] sm:$0xff]
      %v456 = vld [vmem:[#allocation2 + $0xc8] sm:$0xff]
      %v457 = vld [vmem:[#allocation2 + $0xd8] sm:$0xff]
      %v458 = vld [vmem:[#allocation2 + $0xe0] sm:$0xff]
      %v459 = vld [vmem:[#allocation2 + $0xf0] sm:$0xff]
      %v460 = vld [vmem:[#allocation2 + $0xf8] sm:$0xff]
      %v461 = vld [vmem:[#allocation2 + $0x108] sm:$0xff]
      %v462 = vld [vmem:[#allocation2 + $0x110] sm:$0xff]
      %v463 = vld [vmem:[#allocation2 + $0x120] sm:$0xff]
      %v464 = vld [vmem:[#allocation2 + $0x128] sm:$0xff]
      %v465 = vld [vmem:[#allocation2 + $0x138] sm:$0xff]
      %v466 = vld [vmem:[#allocation2 + $0x140] sm:$0xff]
      %v467 = vld [vmem:[#allocation2 + $0x150] sm:$0xff]
      %v468 = vld [vmem:[#allocation2 + $0x158] sm:$0xff]
      %v469 = vld [vmem:[#allocation2 + $0x168] sm:$0xff]
      %v470 = vld [vmem:[#allocation2 + $0x170] sm:$0xff]
      %471 = vst.msk [vmem:[#allocation4] sm:$0xff] %vm401, %v439
      %472 = vst.msk [vmem:[#allocation4 + $0x10] sm:$0xff] %vm401, %v440
      %473 = vst.msk [vmem:[#allocation4 + $0x20] sm:$0xff] %vm401, %v441
      %474 = vst.msk [vmem:[#allocation4 + $0x30] sm:$0xff] %vm401, %v442
      %475 = vst.msk [vmem:[#allocation4 + $0x40] sm:$0xff] %vm401, %v443
      %476 = vst.msk [vmem:[#allocation4 + $0x50] sm:$0xff] %vm401, %v444
      %477 = vst.msk [vmem:[#allocation4 + $0x60] sm:$0xff] %vm401, %v445
      %478 = vst.msk [vmem:[#allocation4 + $0x70] sm:$0xff] %vm401, %v446
      %479 = vst.msk [vmem:[#allocation4 + $0x80] sm:$0xff] %vm401, %v447
      %480 = vst.msk [vmem:[#allocation4 + $0x90] sm:$0xff] %vm401, %v448
      %481 = vst.msk [vmem:[#allocation4 + $0xa0] sm:$0xff] %vm401, %v449
      %482 = vst.msk [vmem:[#allocation4 + $0xb0] sm:$0xff] %vm401, %v450
      %483 = vst.msk [vmem:[#allocation4 + $0xc0] sm:$0xff] %vm401, %v451
      %484 = vst.msk [vmem:[#allocation4 + $0xd0] sm:$0xff] %vm401, %v452
      %485 = vst.msk [vmem:[#allocation4 + $0xe0] sm:$0xff] %vm401, %v453
      %486 = vst.msk [vmem:[#allocation4 + $0xf0] sm:$0xff] %vm401, %v454
      %487 = vst.msk [vmem:[#allocation4 + $0x100] sm:$0xff] %vm401, %v455
      %488 = vst.msk [vmem:[#allocation4 + $0x110] sm:$0xff] %vm401, %v456
      %489 = vst.msk [vmem:[#allocation4 + $0x120] sm:$0xff] %vm401, %v457
      %490 = vst.msk [vmem:[#allocation4 + $0x130] sm:$0xff] %vm401, %v458
      %491 = vst.msk [vmem:[#allocation4 + $0x140] sm:$0xff] %vm401, %v459
      %492 = vst.msk [vmem:[#allocation4 + $0x150] sm:$0xff] %vm401, %v460
      %493 = vst.msk [vmem:[#allocation4 + $0x160] sm:$0xff] %vm401, %v461
      %494 = vst.msk [vmem:[#allocation4 + $0x170] sm:$0xff] %vm401, %v462
      %495 = vst.msk [vmem:[#allocation4 + $0x180] sm:$0xff] %vm401, %v463
      %496 = vst.msk [vmem:[#allocation4 + $0x190] sm:$0xff] %vm401, %v464
      %497 = vst.msk [vmem:[#allocation4 + $0x1a0] sm:$0xff] %vm401, %v465
      %498 = vst.msk [vmem:[#allocation4 + $0x1b0] sm:$0xff] %vm401, %v466
      %499 = vst.msk [vmem:[#allocation4 + $0x1c0] sm:$0xff] %vm401, %v467
      %500 = vst.msk [vmem:[#allocation4 + $0x1d0] sm:$0xff] %vm401, %v468
      %501 = vst.msk [vmem:[#allocation4 + $0x1e0] sm:$0xff] %vm401, %v469
      %502 = vst.msk [vmem:[#allocation4 + $0x1f0] sm:$0xff] %vm401, %v470
      %v503 = vld [vmem:[#allocation2 + $0x1] sm:$0xff]
      %v504 = vld [vmem:[#allocation2 + $0x9] sm:$0xff]
      %v505 = vld [vmem:[#allocation2 + $0x19] sm:$0xff]
      %v506 = vld [vmem:[#allocation2 + $0x21] sm:$0xff]
      %v507 = vld [vmem:[#allocation2 + $0x31] sm:$0xff]
      %v508 = vld [vmem:[#allocation2 + $0x39] sm:$0xff]
      %v509 = vld [vmem:[#allocation2 + $0x49] sm:$0xff]
      %v510 = vld [vmem:[#allocation2 + $0x51] sm:$0xff]
      %v511 = vld [vmem:[#allocation2 + $0x61] sm:$0xff]
      %v512 = vld [vmem:[#allocation2 + $0x69] sm:$0xff]
      %v513 = vld [vmem:[#allocation2 + $0x79] sm:$0xff]
      %v514 = vld [vmem:[#allocation2 + $0x81] sm:$0xff]
      %v515 = vld [vmem:[#allocation2 + $0x91] sm:$0xff]
      %v516 = vld [vmem:[#allocation2 + $0x99] sm:$0xff]
      %v517 = vld [vmem:[#allocation2 + $0xa9] sm:$0xff]
      %v518 = vld [vmem:[#allocation2 + $0xb1] sm:$0xff]
      %v519 = vld [vmem:[#allocation2 + $0xc1] sm:$0xff]
      %v520 = vld [vmem:[#allocation2 + $0xc9] sm:$0xff]
      %v521 = vld [vmem:[#allocation2 + $0xd9] sm:$0xff]
      %v522 = vld [vmem:[#allocation2 + $0xe1] sm:$0xff]
      %v523 = vld [vmem:[#allocation2 + $0xf1] sm:$0xff]
      %v524 = vld [vmem:[#allocation2 + $0xf9] sm:$0xff]
      %v525 = vld [vmem:[#allocation2 + $0x109] sm:$0xff]
      %v526 = vld [vmem:[#allocation2 + $0x111] sm:$0xff]
      %v527 = vld [vmem:[#allocation2 + $0x121] sm:$0xff]
      %v528 = vld [vmem:[#allocation2 + $0x129] sm:$0xff]
      %v529 = vld [vmem:[#allocation2 + $0x139] sm:$0xff]
      %v530 = vld [vmem:[#allocation2 + $0x141] sm:$0xff]
      %v531 = vld [vmem:[#allocation2 + $0x151] sm:$0xff]
      %v532 = vld [vmem:[#allocation2 + $0x159] sm:$0xff]
      %v533 = vld [vmem:[#allocation2 + $0x169] sm:$0xff]
      %v534 = vld [vmem:[#allocation2 + $0x171] sm:$0xff]
      %567 = vrot.lane.b32.xlu0 %v503, 3
      %v568 = vpop.permute.xlu0 %567
      %569 = vrot.lane.b32.xlu0 %v504, 3
      %v570 = vpop.permute.xlu0 %569
      %571 = vrot.lane.b32.xlu0 %v505, 3
      %v572 = vpop.permute.xlu0 %571
      %573 = vrot.lane.b32.xlu0 %v506, 3
      %v574 = vpop.permute.xlu0 %573
      %575 = vrot.lane.b32.xlu0 %v507, 3
      %v576 = vpop.permute.xlu0 %575
      %577 = vrot.lane.b32.xlu0 %v508, 3
      %v578 = vpop.permute.xlu0 %577
      %579 = vrot.lane.b32.xlu0 %v509, 3
      %v580 = vpop.permute.xlu0 %579
      %581 = vrot.lane.b32.xlu0 %v510, 3
      %v582 = vpop.permute.xlu0 %581
      %583 = vrot.lane.b32.xlu0 %v511, 3
      %v584 = vpop.permute.xlu0 %583
      %585 = vrot.lane.b32.xlu0 %v512, 3
      %v586 = vpop.permute.xlu0 %585
      %587 = vrot.lane.b32.xlu0 %v513, 3
      %v588 = vpop.permute.xlu0 %587
      %589 = vrot.lane.b32.xlu0 %v514, 3
      %v590 = vpop.permute.xlu0 %589
      %591 = vrot.lane.b32.xlu0 %v515, 3
      %v592 = vpop.permute.xlu0 %591
      %593 = vrot.lane.b32.xlu0 %v516, 3
      %v594 = vpop.permute.xlu0 %593
      %595 = vrot.lane.b32.xlu0 %v517, 3
      %v596 = vpop.permute.xlu0 %595
      %597 = vrot.lane.b32.xlu0 %v518, 3
      %v598 = vpop.permute.xlu0 %597
      %599 = vrot.lane.b32.xlu0 %v519, 3
      %v600 = vpop.permute.xlu0 %599
      %601 = vrot.lane.b32.xlu0 %v520, 3
      %v602 = vpop.permute.xlu0 %601
      %603 = vrot.lane.b32.xlu0 %v521, 3
      %v604 = vpop.permute.xlu0 %603
      %605 = vrot.lane.b32.xlu0 %v522, 3
      %v606 = vpop.permute.xlu0 %605
      %607 = vrot.lane.b32.xlu0 %v523, 3
      %v608 = vpop.permute.xlu0 %607
      %609 = vrot.lane.b32.xlu0 %v524, 3
      %v610 = vpop.permute.xlu0 %609
      %611 = vrot.lane.b32.xlu0 %v525, 3
      %v612 = vpop.permute.xlu0 %611
      %613 = vrot.lane.b32.xlu0 %v526, 3
      %v614 = vpop.permute.xlu0 %613
      %615 = vrot.lane.b32.xlu0 %v527, 3
      %v616 = vpop.permute.xlu0 %615
      %617 = vrot.lane.b32.xlu0 %v528, 3
      %v618 = vpop.permute.xlu0 %617
      %619 = vrot.lane.b32.xlu0 %v529, 3
      %v620 = vpop.permute.xlu0 %619
      %621 = vrot.lane.b32.xlu0 %v530, 3
      %v622 = vpop.permute.xlu0 %621
      %623 = vrot.lane.b32.xlu0 %v531, 3
      %v624 = vpop.permute.xlu0 %623
      %625 = vrot.lane.b32.xlu0 %v532, 3
      %v626 = vpop.permute.xlu0 %625
      %627 = vrot.lane.b32.xlu0 %v533, 3
      %v628 = vpop.permute.xlu0 %627
      %629 = vrot.lane.b32.xlu0 %v534, 3
      %v630 = vpop.permute.xlu0 %629
      %vm663 = vcmask 48152
      %664 = vst.msk [vmem:[#allocation4] sm:$0xff] %vm663, %v568
      %665 = vst.msk [vmem:[#allocation4 + $0x10] sm:$0xff] %vm663, %v570
      %666 = vst.msk [vmem:[#allocation4 + $0x20] sm:$0xff] %vm663, %v572
      %667 = vst.msk [vmem:[#allocation4 + $0x30] sm:$0xff] %vm663, %v574
      %668 = vst.msk [vmem:[#allocation4 + $0x40] sm:$0xff] %vm663, %v576
      %669 = vst.msk [vmem:[#allocation4 + $0x50] sm:$0xff] %vm663, %v578
      %670 = vst.msk [vmem:[#allocation4 + $0x60] sm:$0xff] %vm663, %v580
      %671 = vst.msk [vmem:[#allocation4 + $0x70] sm:$0xff] %vm663, %v582
      %672 = vst.msk [vmem:[#allocation4 + $0x80] sm:$0xff] %vm663, %v584
      %673 = vst.msk [vmem:[#allocation4 + $0x90] sm:$0xff] %vm663, %v586
      %674 = vst.msk [vmem:[#allocation4 + $0xa0] sm:$0xff] %vm663, %v588
      %675 = vst.msk [vmem:[#allocation4 + $0xb0] sm:$0xff] %vm663, %v590
      %676 = vst.msk [vmem:[#allocation4 + $0xc0] sm:$0xff] %vm663, %v592
      %677 = vst.msk [vmem:[#allocation4 + $0xd0] sm:$0xff] %vm663, %v594
      %678 = vst.msk [vmem:[#allocation4 + $0xe0] sm:$0xff] %vm663, %v596
      %679 = vst.msk [vmem:[#allocation4 + $0xf0] sm:$0xff] %vm663, %v598
      %680 = vst.msk [vmem:[#allocation4 + $0x100] sm:$0xff] %vm663, %v600
      %681 = vst.msk [vmem:[#allocation4 + $0x110] sm:$0xff] %vm663, %v602
      %682 = vst.msk [vmem:[#allocation4 + $0x120] sm:$0xff] %vm663, %v604
      %683 = vst.msk [vmem:[#allocation4 + $0x130] sm:$0xff] %vm663, %v606
      %684 = vst.msk [vmem:[#allocation4 + $0x140] sm:$0xff] %vm663, %v608
      %685 = vst.msk [vmem:[#allocation4 + $0x150] sm:$0xff] %vm663, %v610
      %686 = vst.msk [vmem:[#allocation4 + $0x160] sm:$0xff] %vm663, %v612
      %687 = vst.msk [vmem:[#allocation4 + $0x170] sm:$0xff] %vm663, %v614
      %688 = vst.msk [vmem:[#allocation4 + $0x180] sm:$0xff] %vm663, %v616
      %689 = vst.msk [vmem:[#allocation4 + $0x190] sm:$0xff] %vm663, %v618
      %690 = vst.msk [vmem:[#allocation4 + $0x1a0] sm:$0xff] %vm663, %v620
      %691 = vst.msk [vmem:[#allocation4 + $0x1b0] sm:$0xff] %vm663, %v622
      %692 = vst.msk [vmem:[#allocation4 + $0x1c0] sm:$0xff] %vm663, %v624
      %693 = vst.msk [vmem:[#allocation4 + $0x1d0] sm:$0xff] %vm663, %v626
      %694 = vst.msk [vmem:[#allocation4 + $0x1e0] sm:$0xff] %vm663, %v628
      %695 = vst.msk [vmem:[#allocation4 + $0x1f0] sm:$0xff] %vm663, %v630
      %v696 = vld [vmem:[#allocation2 + $0x2] sm:$0xff]
      %v697 = vld [vmem:[#allocation2 + $0xa] sm:$0xff]
      %v698 = vld [vmem:[#allocation2 + $0x1a] sm:$0xff]
      %v699 = vld [vmem:[#allocation2 + $0x22] sm:$0xff]
      %v700 = vld [vmem:[#allocation2 + $0x32] sm:$0xff]
      %v701 = vld [vmem:[#allocation2 + $0x3a] sm:$0xff]
      %v702 = vld [vmem:[#allocation2 + $0x4a] sm:$0xff]
      %v703 = vld [vmem:[#allocation2 + $0x52] sm:$0xff]
      %v704 = vld [vmem:[#allocation2 + $0x62] sm:$0xff]
      %v705 = vld [vmem:[#allocation2 + $0x6a] sm:$0xff]
      %v706 = vld [vmem:[#allocation2 + $0x7a] sm:$0xff]
      %v707 = vld [vmem:[#allocation2 + $0x82] sm:$0xff]
      %v708 = vld [vmem:[#allocation2 + $0x92] sm:$0xff]
      %v709 = vld [vmem:[#allocation2 + $0x9a] sm:$0xff]
      %v710 = vld [vmem:[#allocation2 + $0xaa] sm:$0xff]
      %v711 = vld [vmem:[#allocation2 + $0xb2] sm:$0xff]
      %v712 = vld [vmem:[#allocation2 + $0xc2] sm:$0xff]
      %v713 = vld [vmem:[#allocation2 + $0xca] sm:$0xff]
      %v714 = vld [vmem:[#allocation2 + $0xda] sm:$0xff]
      %v715 = vld [vmem:[#allocation2 + $0xe2] sm:$0xff]
      %v716 = vld [vmem:[#allocation2 + $0xf2] sm:$0xff]
      %v717 = vld [vmem:[#allocation2 + $0xfa] sm:$0xff]
      %v718 = vld [vmem:[#allocation2 + $0x10a] sm:$0xff]
      %v719 = vld [vmem:[#allocation2 + $0x112] sm:$0xff]
      %v720 = vld [vmem:[#allocation2 + $0x122] sm:$0xff]
      %v721 = vld [vmem:[#allocation2 + $0x12a] sm:$0xff]
      %v722 = vld [vmem:[#allocation2 + $0x13a] sm:$0xff]
      %v723 = vld [vmem:[#allocation2 + $0x142] sm:$0xff]
      %v724 = vld [vmem:[#allocation2 + $0x152] sm:$0xff]
      %v725 = vld [vmem:[#allocation2 + $0x15a] sm:$0xff]
      %v726 = vld [vmem:[#allocation2 + $0x16a] sm:$0xff]
      %v727 = vld [vmem:[#allocation2 + $0x172] sm:$0xff]
      %760 = vrot.lane.b32.xlu0 %v696, 6
      %v761 = vpop.permute.xlu0 %760
      %762 = vrot.lane.b32.xlu0 %v697, 6
      %v763 = vpop.permute.xlu0 %762
      %764 = vrot.lane.b32.xlu0 %v698, 6
      %v765 = vpop.permute.xlu0 %764
      %766 = vrot.lane.b32.xlu0 %v699, 6
      %v767 = vpop.permute.xlu0 %766
      %768 = vrot.lane.b32.xlu0 %v700, 6
      %v769 = vpop.permute.xlu0 %768
      %770 = vrot.lane.b32.xlu0 %v701, 6
      %v771 = vpop.permute.xlu0 %770
      %772 = vrot.lane.b32.xlu0 %v702, 6
      %v773 = vpop.permute.xlu0 %772
      %774 = vrot.lane.b32.xlu0 %v703, 6
      %v775 = vpop.permute.xlu0 %774
      %776 = vrot.lane.b32.xlu0 %v704, 6
      %v777 = vpop.permute.xlu0 %776
      %778 = vrot.lane.b32.xlu0 %v705, 6
      %v779 = vpop.permute.xlu0 %778
      %780 = vrot.lane.b32.xlu0 %v706, 6
      %v781 = vpop.permute.xlu0 %780
      %782 = vrot.lane.b32.xlu0 %v707, 6
      %v783 = vpop.permute.xlu0 %782
      %784 = vrot.lane.b32.xlu0 %v708, 6
      %v785 = vpop.permute.xlu0 %784
      %786 = vrot.lane.b32.xlu0 %v709, 6
      %v787 = vpop.permute.xlu0 %786
      %788 = vrot.lane.b32.xlu0 %v710, 6
      %v789 = vpop.permute.xlu0 %788
      %790 = vrot.lane.b32.xlu0 %v711, 6
      %v791 = vpop.permute.xlu0 %790
      %792 = vrot.lane.b32.xlu0 %v712, 6
      %v793 = vpop.permute.xlu0 %792
      %794 = vrot.lane.b32.xlu0 %v713, 6
      %v795 = vpop.permute.xlu0 %794
      %796 = vrot.lane.b32.xlu0 %v714, 6
      %v797 = vpop.permute.xlu0 %796
      %798 = vrot.lane.b32.xlu0 %v715, 6
      %v799 = vpop.permute.xlu0 %798
      %800 = vrot.lane.b32.xlu0 %v716, 6
      %v801 = vpop.permute.xlu0 %800
      %802 = vrot.lane.b32.xlu0 %v717, 6
      %v803 = vpop.permute.xlu0 %802
      %804 = vrot.lane.b32.xlu0 %v718, 6
      %v805 = vpop.permute.xlu0 %804
      %806 = vrot.lane.b32.xlu0 %v719, 6
      %v807 = vpop.permute.xlu0 %806
      %808 = vrot.lane.b32.xlu0 %v720, 6
      %v809 = vpop.permute.xlu0 %808
      %810 = vrot.lane.b32.xlu0 %v721, 6
      %v811 = vpop.permute.xlu0 %810
      %812 = vrot.lane.b32.xlu0 %v722, 6
      %v813 = vpop.permute.xlu0 %812
      %814 = vrot.lane.b32.xlu0 %v723, 6
      %v815 = vpop.permute.xlu0 %814
      %816 = vrot.lane.b32.xlu0 %v724, 6
      %v817 = vpop.permute.xlu0 %816
      %818 = vrot.lane.b32.xlu0 %v725, 6
      %v819 = vpop.permute.xlu0 %818
      %820 = vrot.lane.b32.xlu0 %v726, 6
      %v821 = vpop.permute.xlu0 %820
      %822 = vrot.lane.b32.xlu0 %v727, 6
      %v823 = vpop.permute.xlu0 %822
      %vm856 = vcmask 72752
      %857 = vst.msk [vmem:[#allocation4] sm:$0xff] %vm856, %v761
      %858 = vst.msk [vmem:[#allocation4 + $0x10] sm:$0xff] %vm856, %v763
      %859 = vst.msk [vmem:[#allocation4 + $0x20] sm:$0xff] %vm856, %v765
      %860 = vst.msk [vmem:[#allocation4 + $0x30] sm:$0xff] %vm856, %v767
      %861 = vst.msk [vmem:[#allocation4 + $0x40] sm:$0xff] %vm856, %v769
      %862 = vst.msk [vmem:[#allocation4 + $0x50] sm:$0xff] %vm856, %v771
      %863 = vst.msk [vmem:[#allocation4 + $0x60] sm:$0xff] %vm856, %v773
      %864 = vst.msk [vmem:[#allocation4 + $0x70] sm:$0xff] %vm856, %v775
      %865 = vst.msk [vmem:[#allocation4 + $0x80] sm:$0xff] %vm856, %v777
      %866 = vst.msk [vmem:[#allocation4 + $0x90] sm:$0xff] %vm856, %v779
      %867 = vst.msk [vmem:[#allocation4 + $0xa0] sm:$0xff] %vm856, %v781
      %868 = vst.msk [vmem:[#allocation4 + $0xb0] sm:$0xff] %vm856, %v783
      %869 = vst.msk [vmem:[#allocation4 + $0xc0] sm:$0xff] %vm856, %v785
      %870 = vst.msk [vmem:[#allocation4 + $0xd0] sm:$0xff] %vm856, %v787
      %871 = vst.msk [vmem:[#allocation4 + $0xe0] sm:$0xff] %vm856, %v789
      %872 = vst.msk [vmem:[#allocation4 + $0xf0] sm:$0xff] %vm856, %v791
      %873 = vst.msk [vmem:[#allocation4 + $0x100] sm:$0xff] %vm856, %v793
      %874 = vst.msk [vmem:[#allocation4 + $0x110] sm:$0xff] %vm856, %v795
      %875 = vst.msk [vmem:[#allocation4 + $0x120] sm:$0xff] %vm856, %v797
      %876 = vst.msk [vmem:[#allocation4 + $0x130] sm:$0xff] %vm856, %v799
      %877 = vst.msk [vmem:[#allocation4 + $0x140] sm:$0xff] %vm856, %v801
      %878 = vst.msk [vmem:[#allocation4 + $0x150] sm:$0xff] %vm856, %v803
      %879 = vst.msk [vmem:[#allocation4 + $0x160] sm:$0xff] %vm856, %v805
      %880 = vst.msk [vmem:[#allocation4 + $0x170] sm:$0xff] %vm856, %v807
      %881 = vst.msk [vmem:[#allocation4 + $0x180] sm:$0xff] %vm856, %v809
      %882 = vst.msk [vmem:[#allocation4 + $0x190] sm:$0xff] %vm856, %v811
      %883 = vst.msk [vmem:[#allocation4 + $0x1a0] sm:$0xff] %vm856, %v813
      %884 = vst.msk [vmem:[#allocation4 + $0x1b0] sm:$0xff] %vm856, %v815
      %885 = vst.msk [vmem:[#allocation4 + $0x1c0] sm:$0xff] %vm856, %v817
      %886 = vst.msk [vmem:[#allocation4 + $0x1d0] sm:$0xff] %vm856, %v819
      %887 = vst.msk [vmem:[#allocation4 + $0x1e0] sm:$0xff] %vm856, %v821
      %888 = vst.msk [vmem:[#allocation4 + $0x1f0] sm:$0xff] %vm856, %v823
      %v889 = vld [vmem:[%s400] sm:$0xff]
      %v890 = vld [vmem:[%s400 + $0x8] sm:$0xff]
      %v891 = vld [vmem:[%s400 + $0x18] sm:$0xff]
      %v892 = vld [vmem:[%s400 + $0x20] sm:$0xff]
      %v893 = vld [vmem:[%s400 + $0x30] sm:$0xff]
      %v894 = vld [vmem:[%s400 + $0x38] sm:$0xff]
      %v895 = vld [vmem:[%s400 + $0x48] sm:$0xff]
      %v896 = vld [vmem:[%s400 + $0x50] sm:$0xff]
      %v897 = vld [vmem:[%s400 + $0x60] sm:$0xff]
      %v898 = vld [vmem:[%s400 + $0x68] sm:$0xff]
      %v899 = vld [vmem:[%s400 + $0x78] sm:$0xff]
      %v900 = vld [vmem:[%s400 + $0x80] sm:$0xff]
      %v901 = vld [vmem:[%s400 + $0x90] sm:$0xff]
      %v902 = vld [vmem:[%s400 + $0x98] sm:$0xff]
      %v903 = vld [vmem:[%s400 + $0xa8] sm:$0xff]
      %v904 = vld [vmem:[%s400 + $0xb0] sm:$0xff]
      %v905 = vld [vmem:[%s400 + $0xc0] sm:$0xff]
      %v906 = vld [vmem:[%s400 + $0xc8] sm:$0xff]
      %v907 = vld [vmem:[%s400 + $0xd8] sm:$0xff]
      %v908 = vld [vmem:[%s400 + $0xe0] sm:$0xff]
      %v909 = vld [vmem:[%s400 + $0xf0] sm:$0xff]
      %v910 = vld [vmem:[%s400 + $0xf8] sm:$0xff]
      %v911 = vld [vmem:[%s400 + $0x108] sm:$0xff]
      %v912 = vld [vmem:[%s400 + $0x110] sm:$0xff]
      %v913 = vld [vmem:[%s400 + $0x120] sm:$0xff]
      %v914 = vld [vmem:[%s400 + $0x128] sm:$0xff]
      %v915 = vld [vmem:[%s400 + $0x138] sm:$0xff]
      %v916 = vld [vmem:[%s400 + $0x140] sm:$0xff]
      %v917 = vld [vmem:[%s400 + $0x150] sm:$0xff]
      %v918 = vld [vmem:[%s400 + $0x158] sm:$0xff]
      %v919 = vld [vmem:[%s400 + $0x168] sm:$0xff]
      %v920 = vld [vmem:[%s400 + $0x170] sm:$0xff]
      %953 = vrot.lane.b32.xlu0 %v889, 9
      %v954 = vpop.permute.xlu0 %953
      %955 = vrot.lane.b32.xlu0 %v890, 9
      %v956 = vpop.permute.xlu0 %955
      %957 = vrot.lane.b32.xlu0 %v891, 9
      %v958 = vpop.permute.xlu0 %957
      %959 = vrot.lane.b32.xlu0 %v892, 9
      %v960 = vpop.permute.xlu0 %959
      %961 = vrot.lane.b32.xlu0 %v893, 9
      %v962 = vpop.permute.xlu0 %961
      %963 = vrot.lane.b32.xlu0 %v894, 9
      %v964 = vpop.permute.xlu0 %963
      %965 = vrot.lane.b32.xlu0 %v895, 9
      %v966 = vpop.permute.xlu0 %965
      %967 = vrot.lane.b32.xlu0 %v896, 9
      %v968 = vpop.permute.xlu0 %967
      %969 = vrot.lane.b32.xlu0 %v897, 9
      %v970 = vpop.permute.xlu0 %969
      %971 = vrot.lane.b32.xlu0 %v898, 9
      %v972 = vpop.permute.xlu0 %971
      %973 = vrot.lane.b32.xlu0 %v899, 9
      %v974 = vpop.permute.xlu0 %973
      %975 = vrot.lane.b32.xlu0 %v900, 9
      %v976 = vpop.permute.xlu0 %975
      %977 = vrot.lane.b32.xlu0 %v901, 9
      %v978 = vpop.permute.xlu0 %977
      %979 = vrot.lane.b32.xlu0 %v902, 9
      %v980 = vpop.permute.xlu0 %979
      %981 = vrot.lane.b32.xlu0 %v903, 9
      %v982 = vpop.permute.xlu0 %981
      %983 = vrot.lane.b32.xlu0 %v904, 9
      %v984 = vpop.permute.xlu0 %983
      %985 = vrot.lane.b32.xlu0 %v905, 9
      %v986 = vpop.permute.xlu0 %985
      %987 = vrot.lane.b32.xlu0 %v906, 9
      %v988 = vpop.permute.xlu0 %987
      %989 = vrot.lane.b32.xlu0 %v907, 9
      %v990 = vpop.permute.xlu0 %989
      %991 = vrot.lane.b32.xlu0 %v908, 9
      %v992 = vpop.permute.xlu0 %991
      %993 = vrot.lane.b32.xlu0 %v909, 9
      %v994 = vpop.permute.xlu0 %993
      %995 = vrot.lane.b32.xlu0 %v910, 9
      %v996 = vpop.permute.xlu0 %995
      %997 = vrot.lane.b32.xlu0 %v911, 9
      %v998 = vpop.permute.xlu0 %997
      %999 = vrot.lane.b32.xlu0 %v912, 9
      %v1000 = vpop.permute.xlu0 %999
      %1001 = vrot.lane.b32.xlu0 %v913, 9
      %v1002 = vpop.permute.xlu0 %1001
      %1003 = vrot.lane.b32.xlu0 %v914, 9
      %v1004 = vpop.permute.xlu0 %1003
      %1005 = vrot.lane.b32.xlu0 %v915, 9
      %v1006 = vpop.permute.xlu0 %1005
      %1007 = vrot.lane.b32.xlu0 %v916, 9
      %v1008 = vpop.permute.xlu0 %1007
      %1009 = vrot.lane.b32.xlu0 %v917, 9
      %v1010 = vpop.permute.xlu0 %1009
      %1011 = vrot.lane.b32.xlu0 %v918, 9
      %v1012 = vpop.permute.xlu0 %1011
      %1013 = vrot.lane.b32.xlu0 %v919, 9
      %v1014 = vpop.permute.xlu0 %1013
      %1015 = vrot.lane.b32.xlu0 %v920, 9
      %v1016 = vpop.permute.xlu0 %1015
      %vm1049 = vcmask 97352
      %1050 = vst.msk [vmem:[#allocation4] sm:$0xff] %vm1049, %v954
      %1051 = vst.msk [vmem:[#allocation4 + $0x10] sm:$0xff] %vm1049, %v956
      %1052 = vst.msk [vmem:[#allocation4 + $0x20] sm:$0xff] %vm1049, %v958
      %1053 = vst.msk [vmem:[#allocation4 + $0x30] sm:$0xff] %vm1049, %v960
      %1054 = vst.msk [vmem:[#allocation4 + $0x40] sm:$0xff] %vm1049, %v962
      %1055 = vst.msk [vmem:[#allocation4 + $0x50] sm:$0xff] %vm1049, %v964
      %1056 = vst.msk [vmem:[#allocation4 + $0x60] sm:$0xff] %vm1049, %v966
      %1057 = vst.msk [vmem:[#allocation4 + $0x70] sm:$0xff] %vm1049, %v968
      %1058 = vst.msk [vmem:[#allocation4 + $0x80] sm:$0xff] %vm1049, %v970
      %1059 = vst.msk [vmem:[#allocation4 + $0x90] sm:$0xff] %vm1049, %v972
      %1060 = vst.msk [vmem:[#allocation4 + $0xa0] sm:$0xff] %vm1049, %v974
      %1061 = vst.msk [vmem:[#allocation4 + $0xb0] sm:$0xff] %vm1049, %v976
      %1062 = vst.msk [vmem:[#allocation4 + $0xc0] sm:$0xff] %vm1049, %v978
      %1063 = vst.msk [vmem:[#allocation4 + $0xd0] sm:$0xff] %vm1049, %v980
      %1064 = vst.msk [vmem:[#allocation4 + $0xe0] sm:$0xff] %vm1049, %v982
      %1065 = vst.msk [vmem:[#allocation4 + $0xf0] sm:$0xff] %vm1049, %v984
      %1066 = vst.msk [vmem:[#allocation4 + $0x100] sm:$0xff] %vm1049, %v986
      %1067 = vst.msk [vmem:[#allocation4 + $0x110] sm:$0xff] %vm1049, %v988
      %1068 = vst.msk [vmem:[#allocation4 + $0x120] sm:$0xff] %vm1049, %v990
      %1069 = vst.msk [vmem:[#allocation4 + $0x130] sm:$0xff] %vm1049, %v992
      %1070 = vst.msk [vmem:[#allocation4 + $0x140] sm:$0xff] %vm1049, %v994
      %1071 = vst.msk [vmem:[#allocation4 + $0x150] sm:$0xff] %vm1049, %v996
      %1072 = vst.msk [vmem:[#allocation4 + $0x160] sm:$0xff] %vm1049, %v998
      %1073 = vst.msk [vmem:[#allocation4 + $0x170] sm:$0xff] %vm1049, %v1000
      %1074 = vst.msk [vmem:[#allocation4 + $0x180] sm:$0xff] %vm1049, %v1002
      %1075 = vst.msk [vmem:[#allocation4 + $0x190] sm:$0xff] %vm1049, %v1004
      %1076 = vst.msk [vmem:[#allocation4 + $0x1a0] sm:$0xff] %vm1049, %v1006
      %1077 = vst.msk [vmem:[#allocation4 + $0x1b0] sm:$0xff] %vm1049, %v1008
      %1078 = vst.msk [vmem:[#allocation4 + $0x1c0] sm:$0xff] %vm1049, %v1010
      %1079 = vst.msk [vmem:[#allocation4 + $0x1d0] sm:$0xff] %vm1049, %v1012
      %1080 = vst.msk [vmem:[#allocation4 + $0x1e0] sm:$0xff] %vm1049, %v1014
      %1081 = vst.msk [vmem:[#allocation4 + $0x1f0] sm:$0xff] %vm1049, %v1016
      %v1082 = vld [vmem:[%s400 + $0x1] sm:$0xff]
      %v1083 = vld [vmem:[%s400 + $0x9] sm:$0xff]
      %v1084 = vld [vmem:[%s400 + $0x19] sm:$0xff]
      %v1085 = vld [vmem:[%s400 + $0x21] sm:$0xff]
      %v1086 = vld [vmem:[%s400 + $0x31] sm:$0xff]
      %v1087 = vld [vmem:[%s400 + $0x39] sm:$0xff]
      %v1088 = vld [vmem:[%s400 + $0x49] sm:$0xff]
      %v1089 = vld [vmem:[%s400 + $0x51] sm:$0xff]
      %v1090 = vld [vmem:[%s400 + $0x61] sm:$0xff]
      %v1091 = vld [vmem:[%s400 + $0x69] sm:$0xff]
      %v1092 = vld [vmem:[%s400 + $0x79] sm:$0xff]
      %v1093 = vld [vmem:[%s400 + $0x81] sm:$0xff]
      %v1094 = vld [vmem:[%s400 + $0x91] sm:$0xff]
      %v1095 = vld [vmem:[%s400 + $0x99] sm:$0xff]
      %v1096 = vld [vmem:[%s400 + $0xa9] sm:$0xff]
      %v1097 = vld [vmem:[%s400 + $0xb1] sm:$0xff]
      %v1098 = vld [vmem:[%s400 + $0xc1] sm:$0xff]
      %v1099 = vld [vmem:[%s400 + $0xc9] sm:$0xff]
      %v1100 = vld [vmem:[%s400 + $0xd9] sm:$0xff]
      %v1101 = vld [vmem:[%s400 + $0xe1] sm:$0xff]
      %v1102 = vld [vmem:[%s400 + $0xf1] sm:$0xff]
      %v1103 = vld [vmem:[%s400 + $0xf9] sm:$0xff]
      %v1104 = vld [vmem:[%s400 + $0x109] sm:$0xff]
      %v1105 = vld [vmem:[%s400 + $0x111] sm:$0xff]
      %v1106 = vld [vmem:[%s400 + $0x121] sm:$0xff]
      %v1107 = vld [vmem:[%s400 + $0x129] sm:$0xff]
      %v1108 = vld [vmem:[%s400 + $0x139] sm:$0xff]
      %v1109 = vld [vmem:[%s400 + $0x141] sm:$0xff]
      %v1110 = vld [vmem:[%s400 + $0x151] sm:$0xff]
      %v1111 = vld [vmem:[%s400 + $0x159] sm:$0xff]
      %v1112 = vld [vmem:[%s400 + $0x169] sm:$0xff]
      %v1113 = vld [vmem:[%s400 + $0x171] sm:$0xff]
      %1146 = vrot.lane.b32.xlu0 %v1082, 12
      %v1147 = vpop.permute.xlu0 %1146
      %1148 = vrot.lane.b32.xlu0 %v1083, 12
      %v1149 = vpop.permute.xlu0 %1148
      %1150 = vrot.lane.b32.xlu0 %v1084, 12
      %v1151 = vpop.permute.xlu0 %1150
      %1152 = vrot.lane.b32.xlu0 %v1085, 12
      %v1153 = vpop.permute.xlu0 %1152
      %1154 = vrot.lane.b32.xlu0 %v1086, 12
      %v1155 = vpop.permute.xlu0 %1154
      %1156 = vrot.lane.b32.xlu0 %v1087, 12
      %v1157 = vpop.permute.xlu0 %1156
      %1158 = vrot.lane.b32.xlu0 %v1088, 12
      %v1159 = vpop.permute.xlu0 %1158
      %1160 = vrot.lane.b32.xlu0 %v1089, 12
      %v1161 = vpop.permute.xlu0 %1160
      %1162 = vrot.lane.b32.xlu0 %v1090, 12
      %v1163 = vpop.permute.xlu0 %1162
      %1164 = vrot.lane.b32.xlu0 %v1091, 12
      %v1165 = vpop.permute.xlu0 %1164
      %1166 = vrot.lane.b32.xlu0 %v1092, 12
      %v1167 = vpop.permute.xlu0 %1166
      %1168 = vrot.lane.b32.xlu0 %v1093, 12
      %v1169 = vpop.permute.xlu0 %1168
      %1170 = vrot.lane.b32.xlu0 %v1094, 12
      %v1171 = vpop.permute.xlu0 %1170
      %1172 = vrot.lane.b32.xlu0 %v1095, 12
      %v1173 = vpop.permute.xlu0 %1172
      %1174 = vrot.lane.b32.xlu0 %v1096, 12
      %v1175 = vpop.permute.xlu0 %1174
      %1176 = vrot.lane.b32.xlu0 %v1097, 12
      %v1177 = vpop.permute.xlu0 %1176
      %1178 = vrot.lane.b32.xlu0 %v1098, 12
      %v1179 = vpop.permute.xlu0 %1178
      %1180 = vrot.lane.b32.xlu0 %v1099, 12
      %v1181 = vpop.permute.xlu0 %1180
      %1182 = vrot.lane.b32.xlu0 %v1100, 12
      %v1183 = vpop.permute.xlu0 %1182
      %1184 = vrot.lane.b32.xlu0 %v1101, 12
      %v1185 = vpop.permute.xlu0 %1184
      %1186 = vrot.lane.b32.xlu0 %v1102, 12
      %v1187 = vpop.permute.xlu0 %1186
      %1188 = vrot.lane.b32.xlu0 %v1103, 12
      %v1189 = vpop.permute.xlu0 %1188
      %1190 = vrot.lane.b32.xlu0 %v1104, 12
      %v1191 = vpop.permute.xlu0 %1190
      %1192 = vrot.lane.b32.xlu0 %v1105, 12
      %v1193 = vpop.permute.xlu0 %1192
      %1194 = vrot.lane.b32.xlu0 %v1106, 12
      %v1195 = vpop.permute.xlu0 %1194
      %1196 = vrot.lane.b32.xlu0 %v1107, 12
      %v1197 = vpop.permute.xlu0 %1196
      %1198 = vrot.lane.b32.xlu0 %v1108, 12
      %v1199 = vpop.permute.xlu0 %1198
      %1200 = vrot.lane.b32.xlu0 %v1109, 12
      %v1201 = vpop.permute.xlu0 %1200
      %1202 = vrot.lane.b32.xlu0 %v1110, 12
      %v1203 = vpop.permute.xlu0 %1202
      %1204 = vrot.lane.b32.xlu0 %v1111, 12
      %v1205 = vpop.permute.xlu0 %1204
      %1206 = vrot.lane.b32.xlu0 %v1112, 12
      %v1207 = vpop.permute.xlu0 %1206
      %1208 = vrot.lane.b32.xlu0 %v1113, 12
      %v1209 = vpop.permute.xlu0 %1208
      %vm1242 = vcmask 121952
      %1243 = vst.msk [vmem:[#allocation4] sm:$0xff] %vm1242, %v1147
      %1244 = vst.msk [vmem:[#allocation4 + $0x10] sm:$0xff] %vm1242, %v1149
      %1245 = vst.msk [vmem:[#allocation4 + $0x20] sm:$0xff] %vm1242, %v1151
      %1246 = vst.msk [vmem:[#allocation4 + $0x30] sm:$0xff] %vm1242, %v1153
      %1247 = vst.msk [vmem:[#allocation4 + $0x40] sm:$0xff] %vm1242, %v1155
      %1248 = vst.msk [vmem:[#allocation4 + $0x50] sm:$0xff] %vm1242, %v1157
      %1249 = vst.msk [vmem:[#allocation4 + $0x60] sm:$0xff] %vm1242, %v1159
      %1250 = vst.msk [vmem:[#allocation4 + $0x70] sm:$0xff] %vm1242, %v1161
      %1251 = vst.msk [vmem:[#allocation4 + $0x80] sm:$0xff] %vm1242, %v1163
      %1252 = vst.msk [vmem:[#allocation4 + $0x90] sm:$0xff] %vm1242, %v1165
      %1253 = vst.msk [vmem:[#allocation4 + $0xa0] sm:$0xff] %vm1242, %v1167
      %1254 = vst.msk [vmem:[#allocation4 + $0xb0] sm:$0xff] %vm1242, %v1169
      %1255 = vst.msk [vmem:[#allocation4 + $0xc0] sm:$0xff] %vm1242, %v1171
      %1256 = vst.msk [vmem:[#allocation4 + $0xd0] sm:$0xff] %vm1242, %v1173
      %1257 = vst.msk [vmem:[#allocation4 + $0xe0] sm:$0xff] %vm1242, %v1175
      %1258 = vst.msk [vmem:[#allocation4 + $0xf0] sm:$0xff] %vm1242, %v1177
      %1259 = vst.msk [vmem:[#allocation4 + $0x100] sm:$0xff] %vm1242, %v1179
      %1260 = vst.msk [vmem:[#allocation4 + $0x110] sm:$0xff] %vm1242, %v1181
      %1261 = vst.msk [vmem:[#allocation4 + $0x120] sm:$0xff] %vm1242, %v1183
      %1262 = vst.msk [vmem:[#allocation4 + $0x130] sm:$0xff] %vm1242, %v1185
      %1263 = vst.msk [vmem:[#allocation4 + $0x140] sm:$0xff] %vm1242, %v1187
      %1264 = vst.msk [vmem:[#allocation4 + $0x150] sm:$0xff] %vm1242, %v1189
      %1265 = vst.msk [vmem:[#allocation4 + $0x160] sm:$0xff] %vm1242, %v1191
      %1266 = vst.msk [vmem:[#allocation4 + $0x170] sm:$0xff] %vm1242, %v1193
      %1267 = vst.msk [vmem:[#allocation4 + $0x180] sm:$0xff] %vm1242, %v1195
      %1268 = vst.msk [vmem:[#allocation4 + $0x190] sm:$0xff] %vm1242, %v1197
      %1269 = vst.msk [vmem:[#allocation4 + $0x1a0] sm:$0xff] %vm1242, %v1199
      %1270 = vst.msk [vmem:[#allocation4 + $0x1b0] sm:$0xff] %vm1242, %v1201
      %1271 = vst.msk [vmem:[#allocation4 + $0x1c0] sm:$0xff] %vm1242, %v1203
      %1272 = vst.msk [vmem:[#allocation4 + $0x1d0] sm:$0xff] %vm1242, %v1205
      %1273 = vst.msk [vmem:[#allocation4 + $0x1e0] sm:$0xff] %vm1242, %v1207
      %1274 = vst.msk [vmem:[#allocation4 + $0x1f0] sm:$0xff] %vm1242, %v1209
      %v1275 = vld [vmem:[%s400 + $0x2] sm:$0xff]
      %v1276 = vld [vmem:[%s400 + $0xa] sm:$0xff]
      %v1277 = vld [vmem:[%s400 + $0x1a] sm:$0xff]
      %v1278 = vld [vmem:[%s400 + $0x22] sm:$0xff]
      %v1279 = vld [vmem:[%s400 + $0x32] sm:$0xff]
      %v1280 = vld [vmem:[%s400 + $0x3a] sm:$0xff]
      %v1281 = vld [vmem:[%s400 + $0x4a] sm:$0xff]
      %v1282 = vld [vmem:[%s400 + $0x52] sm:$0xff]
      %v1283 = vld [vmem:[%s400 + $0x62] sm:$0xff]
      %v1284 = vld [vmem:[%s400 + $0x6a] sm:$0xff]
      %v1285 = vld [vmem:[%s400 + $0x7a] sm:$0xff]
      %v1286 = vld [vmem:[%s400 + $0x82] sm:$0xff]
      %v1287 = vld [vmem:[%s400 + $0x92] sm:$0xff]
      %v1288 = vld [vmem:[%s400 + $0x9a] sm:$0xff]
      %v1289 = vld [vmem:[%s400 + $0xaa] sm:$0xff]
      %v1290 = vld [vmem:[%s400 + $0xb2] sm:$0xff]
      %v1291 = vld [vmem:[%s400 + $0xc2] sm:$0xff]
      %v1292 = vld [vmem:[%s400 + $0xca] sm:$0xff]
      %v1293 = vld [vmem:[%s400 + $0xda] sm:$0xff]
      %v1294 = vld [vmem:[%s400 + $0xe2] sm:$0xff]
      %v1295 = vld [vmem:[%s400 + $0xf2] sm:$0xff]
      %v1296 = vld [vmem:[%s400 + $0xfa] sm:$0xff]
      %v1297 = vld [vmem:[%s400 + $0x10a] sm:$0xff]
      %v1298 = vld [vmem:[%s400 + $0x112] sm:$0xff]
      %v1299 = vld [vmem:[%s400 + $0x122] sm:$0xff]
      %v1300 = vld [vmem:[%s400 + $0x12a] sm:$0xff]
      %v1301 = vld [vmem:[%s400 + $0x13a] sm:$0xff]
      %v1302 = vld [vmem:[%s400 + $0x142] sm:$0xff]
      %v1303 = vld [vmem:[%s400 + $0x152] sm:$0xff]
      %v1304 = vld [vmem:[%s400 + $0x15a] sm:$0xff]
      %v1305 = vld [vmem:[%s400 + $0x16a] sm:$0xff]
      %v1306 = vld [vmem:[%s400 + $0x172] sm:$0xff]
      %1339 = vrot.lane.b32.xlu0 %v1275, 15
      %v1340 = vpop.permute.xlu0 %1339
      %1341 = vrot.lane.b32.xlu0 %v1276, 15
      %v1342 = vpop.permute.xlu0 %1341
      %1343 = vrot.lane.b32.xlu0 %v1277, 15
      %v1344 = vpop.permute.xlu0 %1343
      %1345 = vrot.lane.b32.xlu0 %v1278, 15
      %v1346 = vpop.permute.xlu0 %1345
      %1347 = vrot.lane.b32.xlu0 %v1279, 15
      %v1348 = vpop.permute.xlu0 %1347
      %1349 = vrot.lane.b32.xlu0 %v1280, 15
      %v1350 = vpop.permute.xlu0 %1349
      %1351 = vrot.lane.b32.xlu0 %v1281, 15
      %v1352 = vpop.permute.xlu0 %1351
      %1353 = vrot.lane.b32.xlu0 %v1282, 15
      %v1354 = vpop.permute.xlu0 %1353
      %1355 = vrot.lane.b32.xlu0 %v1283, 15
      %v1356 = vpop.permute.xlu0 %1355
      %1357 = vrot.lane.b32.xlu0 %v1284, 15
      %v1358 = vpop.permute.xlu0 %1357
      %1359 = vrot.lane.b32.xlu0 %v1285, 15
      %v1360 = vpop.permute.xlu0 %1359
      %1361 = vrot.lane.b32.xlu0 %v1286, 15
      %v1362 = vpop.permute.xlu0 %1361
      %1363 = vrot.lane.b32.xlu0 %v1287, 15
      %v1364 = vpop.permute.xlu0 %1363
      %1365 = vrot.lane.b32.xlu0 %v1288, 15
      %v1366 = vpop.permute.xlu0 %1365
      %1367 = vrot.lane.b32.xlu0 %v1289, 15
      %v1368 = vpop.permute.xlu0 %1367
      %1369 = vrot.lane.b32.xlu0 %v1290, 15
      %v1370 = vpop.permute.xlu0 %1369
      %1371 = vrot.lane.b32.xlu0 %v1291, 15
      %v1372 = vpop.permute.xlu0 %1371
      %1373 = vrot.lane.b32.xlu0 %v1292, 15
      %v1374 = vpop.permute.xlu0 %1373
      %1375 = vrot.lane.b32.xlu0 %v1293, 15
      %v1376 = vpop.permute.xlu0 %1375
      %1377 = vrot.lane.b32.xlu0 %v1294, 15
      %v1378 = vpop.permute.xlu0 %1377
      %1379 = vrot.lane.b32.xlu0 %v1295, 15
      %v1380 = vpop.permute.xlu0 %1379
      %1381 = vrot.lane.b32.xlu0 %v1296, 15
      %v1382 = vpop.permute.xlu0 %1381
      %1383 = vrot.lane.b32.xlu0 %v1297, 15
      %v1384 = vpop.permute.xlu0 %1383
      %1385 = vrot.lane.b32.xlu0 %v1298, 15
      %v1386 = vpop.permute.xlu0 %1385
      %1387 = vrot.lane.b32.xlu0 %v1299, 15
      %v1388 = vpop.permute.xlu0 %1387
      %1389 = vrot.lane.b32.xlu0 %v1300, 15
      %v1390 = vpop.permute.xlu0 %1389
      %1391 = vrot.lane.b32.xlu0 %v1301, 15
      %v1392 = vpop.permute.xlu0 %1391
      %1393 = vrot.lane.b32.xlu0 %v1302, 15
      %v1394 = vpop.permute.xlu0 %1393
      %1395 = vrot.lane.b32.xlu0 %v1303, 15
      %v1396 = vpop.permute.xlu0 %1395
      %1397 = vrot.lane.b32.xlu0 %v1304, 15
      %v1398 = vpop.permute.xlu0 %1397
      %1399 = vrot.lane.b32.xlu0 %v1305, 15
      %v1400 = vpop.permute.xlu0 %1399
      %1401 = vrot.lane.b32.xlu0 %v1306, 15
      %v1402 = vpop.permute.xlu0 %1401
      %vm1435 = vcmask 146552
      %1436 = vst.msk [vmem:[#allocation4] sm:$0xff] %vm1435, %v1340
      %1437 = vst.msk [vmem:[#allocation4 + $0x10] sm:$0xff] %vm1435, %v1342
      %1438 = vst.msk [vmem:[#allocation4 + $0x20] sm:$0xff] %vm1435, %v1344
      %1439 = vst.msk [vmem:[#allocation4 + $0x30] sm:$0xff] %vm1435, %v1346
      %1440 = vst.msk [vmem:[#allocation4 + $0x40] sm:$0xff] %vm1435, %v1348
      %1441 = vst.msk [vmem:[#allocation4 + $0x50] sm:$0xff] %vm1435, %v1350
      %1442 = vst.msk [vmem:[#allocation4 + $0x60] sm:$0xff] %vm1435, %v1352
      %1443 = vst.msk [vmem:[#allocation4 + $0x70] sm:$0xff] %vm1435, %v1354
      %1444 = vst.msk [vmem:[#allocation4 + $0x80] sm:$0xff] %vm1435, %v1356
      %1445 = vst.msk [vmem:[#allocation4 + $0x90] sm:$0xff] %vm1435, %v1358
      %1446 = vst.msk [vmem:[#allocation4 + $0xa0] sm:$0xff] %vm1435, %v1360
      %1447 = vst.msk [vmem:[#allocation4 + $0xb0] sm:$0xff] %vm1435, %v1362
      %1448 = vst.msk [vmem:[#allocation4 + $0xc0] sm:$0xff] %vm1435, %v1364
      %1449 = vst.msk [vmem:[#allocation4 + $0xd0] sm:$0xff] %vm1435, %v1366
      %1450 = vst.msk [vmem:[#allocation4 + $0xe0] sm:$0xff] %vm1435, %v1368
      %1451 = vst.msk [vmem:[#allocation4 + $0xf0] sm:$0xff] %vm1435, %v1370
      %1452 = vst.msk [vmem:[#allocation4 + $0x100] sm:$0xff] %vm1435, %v1372
      %1453 = vst.msk [vmem:[#allocation4 + $0x110] sm:$0xff] %vm1435, %v1374
      %1454 = vst.msk [vmem:[#allocation4 + $0x120] sm:$0xff] %vm1435, %v1376
      %1455 = vst.msk [vmem:[#allocation4 + $0x130] sm:$0xff] %vm1435, %v1378
      %1456 = vst.msk [vmem:[#allocation4 + $0x140] sm:$0xff] %vm1435, %v1380
      %1457 = vst.msk [vmem:[#allocation4 + $0x150] sm:$0xff] %vm1435, %v1382
      %1458 = vst.msk [vmem:[#allocation4 + $0x160] sm:$0xff] %vm1435, %v1384
      %1459 = vst.msk [vmem:[#allocation4 + $0x170] sm:$0xff] %vm1435, %v1386
      %1460 = vst.msk [vmem:[#allocation4 + $0x180] sm:$0xff] %vm1435, %v1388
      %1461 = vst.msk [vmem:[#allocation4 + $0x190] sm:$0xff] %vm1435, %v1390
      %1462 = vst.msk [vmem:[#allocation4 + $0x1a0] sm:$0xff] %vm1435, %v1392
      %1463 = vst.msk [vmem:[#allocation4 + $0x1b0] sm:$0xff] %vm1435, %v1394
      %1464 = vst.msk [vmem:[#allocation4 + $0x1c0] sm:$0xff] %vm1435, %v1396
      %1465 = vst.msk [vmem:[#allocation4 + $0x1d0] sm:$0xff] %vm1435, %v1398
      %1466 = vst.msk [vmem:[#allocation4 + $0x1e0] sm:$0xff] %vm1435, %v1400
      %1467 = vst.msk [vmem:[#allocation4 + $0x1f0] sm:$0xff] %vm1435, %v1402
      %s1468 = scalar_lea.vmem [#allocation2], 48
      %v1469 = vld [vmem:[%s1468] sm:$0xff]
      %v1470 = vld [vmem:[%s1468 + $0x8] sm:$0xff]
      %v1471 = vld [vmem:[%s1468 + $0x18] sm:$0xff]
      %v1472 = vld [vmem:[%s1468 + $0x20] sm:$0xff]
      %v1473 = vld [vmem:[%s1468 + $0x30] sm:$0xff]
      %v1474 = vld [vmem:[%s1468 + $0x38] sm:$0xff]
      %v1475 = vld [vmem:[%s1468 + $0x48] sm:$0xff]
      %v1476 = vld [vmem:[%s1468 + $0x50] sm:$0xff]
      %v1477 = vld [vmem:[%s1468 + $0x60] sm:$0xff]
      %v1478 = vld [vmem:[%s1468 + $0x68] sm:$0xff]
      %v1479 = vld [vmem:[%s1468 + $0x78] sm:$0xff]
      %v1480 = vld [vmem:[%s1468 + $0x80] sm:$0xff]
      %v1481 = vld [vmem:[%s1468 + $0x90] sm:$0xff]
      %v1482 = vld [vmem:[%s1468 + $0x98] sm:$0xff]
      %v1483 = vld [vmem:[%s1468 + $0xa8] sm:$0xff]
      %v1484 = vld [vmem:[%s1468 + $0xb0] sm:$0xff]
      %v1485 = vld [vmem:[%s1468 + $0xc0] sm:$0xff]
      %v1486 = vld [vmem:[%s1468 + $0xc8] sm:$0xff]
      %v1487 = vld [vmem:[%s1468 + $0xd8] sm:$0xff]
      %v1488 = vld [vmem:[%s1468 + $0xe0] sm:$0xff]
      %v1489 = vld [vmem:[%s1468 + $0xf0] sm:$0xff]
      %v1490 = vld [vmem:[%s1468 + $0xf8] sm:$0xff]
      %v1491 = vld [vmem:[%s1468 + $0x108] sm:$0xff]
      %v1492 = vld [vmem:[%s1468 + $0x110] sm:$0xff]
      %v1493 = vld [vmem:[%s1468 + $0x120] sm:$0xff]
      %v1494 = vld [vmem:[%s1468 + $0x128] sm:$0xff]
      %v1495 = vld [vmem:[%s1468 + $0x138] sm:$0xff]
      %v1496 = vld [vmem:[%s1468 + $0x140] sm:$0xff]
      %v1497 = vld [vmem:[%s1468 + $0x150] sm:$0xff]
      %v1498 = vld [vmem:[%s1468 + $0x158] sm:$0xff]
      %v1499 = vld [vmem:[%s1468 + $0x168] sm:$0xff]
      %v1500 = vld [vmem:[%s1468 + $0x170] sm:$0xff]
      %1533 = vrot.lane.b32.xlu0 %v1469, 18
      %v1534 = vpop.permute.xlu0 %1533
      %1535 = vrot.lane.b32.xlu0 %v1470, 18
      %v1536 = vpop.permute.xlu0 %1535
      %1537 = vrot.lane.b32.xlu0 %v1471, 18
      %v1538 = vpop.permute.xlu0 %1537
      %1539 = vrot.lane.b32.xlu0 %v1472, 18
      %v1540 = vpop.permute.xlu0 %1539
      %1541 = vrot.lane.b32.xlu0 %v1473, 18
      %v1542 = vpop.permute.xlu0 %1541
      %1543 = vrot.lane.b32.xlu0 %v1474, 18
      %v1544 = vpop.permute.xlu0 %1543
      %1545 = vrot.lane.b32.xlu0 %v1475, 18
      %v1546 = vpop.permute.xlu0 %1545
      %1547 = vrot.lane.b32.xlu0 %v1476, 18
      %v1548 = vpop.permute.xlu0 %1547
      %1549 = vrot.lane.b32.xlu0 %v1477, 18
      %v1550 = vpop.permute.xlu0 %1549
      %1551 = vrot.lane.b32.xlu0 %v1478, 18
      %v1552 = vpop.permute.xlu0 %1551
      %1553 = vrot.lane.b32.xlu0 %v1479, 18
      %v1554 = vpop.permute.xlu0 %1553
      %1555 = vrot.lane.b32.xlu0 %v1480, 18
      %v1556 = vpop.permute.xlu0 %1555
      %1557 = vrot.lane.b32.xlu0 %v1481, 18
      %v1558 = vpop.permute.xlu0 %1557
      %1559 = vrot.lane.b32.xlu0 %v1482, 18
      %v1560 = vpop.permute.xlu0 %1559
      %1561 = vrot.lane.b32.xlu0 %v1483, 18
      %v1562 = vpop.permute.xlu0 %1561
      %1563 = vrot.lane.b32.xlu0 %v1484, 18
      %v1564 = vpop.permute.xlu0 %1563
      %1565 = vrot.lane.b32.xlu0 %v1485, 18
      %v1566 = vpop.permute.xlu0 %1565
      %1567 = vrot.lane.b32.xlu0 %v1486, 18
      %v1568 = vpop.permute.xlu0 %1567
      %1569 = vrot.lane.b32.xlu0 %v1487, 18
      %v1570 = vpop.permute.xlu0 %1569
      %1571 = vrot.lane.b32.xlu0 %v1488, 18
      %v1572 = vpop.permute.xlu0 %1571
      %1573 = vrot.lane.b32.xlu0 %v1489, 18
      %v1574 = vpop.permute.xlu0 %1573
      %1575 = vrot.lane.b32.xlu0 %v1490, 18
      %v1576 = vpop.permute.xlu0 %1575
      %1577 = vrot.lane.b32.xlu0 %v1491, 18
      %v1578 = vpop.permute.xlu0 %1577
      %1579 = vrot.lane.b32.xlu0 %v1492, 18
      %v1580 = vpop.permute.xlu0 %1579
      %1581 = vrot.lane.b32.xlu0 %v1493, 18
      %v1582 = vpop.permute.xlu0 %1581
      %1583 = vrot.lane.b32.xlu0 %v1494, 18
      %v1584 = vpop.permute.xlu0 %1583
      %1585 = vrot.lane.b32.xlu0 %v1495, 18
      %v1586 = vpop.permute.xlu0 %1585
      %1587 = vrot.lane.b32.xlu0 %v1496, 18
      %v1588 = vpop.permute.xlu0 %1587
      %1589 = vrot.lane.b32.xlu0 %v1497, 18
      %v1590 = vpop.permute.xlu0 %1589
      %1591 = vrot.lane.b32.xlu0 %v1498, 18
      %v1592 = vpop.permute.xlu0 %1591
      %1593 = vrot.lane.b32.xlu0 %v1499, 18
      %v1594 = vpop.permute.xlu0 %1593
      %1595 = vrot.lane.b32.xlu0 %v1500, 18
      %v1596 = vpop.permute.xlu0 %1595
      %vm1629 = vcmask 171152
      %1630 = vst.msk [vmem:[#allocation4] sm:$0xff] %vm1629, %v1534
      %1631 = vst.msk [vmem:[#allocation4 + $0x10] sm:$0xff] %vm1629, %v1536
      %1632 = vst.msk [vmem:[#allocation4 + $0x20] sm:$0xff] %vm1629, %v1538
      %1633 = vst.msk [vmem:[#allocation4 + $0x30] sm:$0xff] %vm1629, %v1540
      %1634 = vst.msk [vmem:[#allocation4 + $0x40] sm:$0xff] %vm1629, %v1542
      %1635 = vst.msk [vmem:[#allocation4 + $0x50] sm:$0xff] %vm1629, %v1544
      %1636 = vst.msk [vmem:[#allocation4 + $0x60] sm:$0xff] %vm1629, %v1546
      %1637 = vst.msk [vmem:[#allocation4 + $0x70] sm:$0xff] %vm1629, %v1548
      %1638 = vst.msk [vmem:[#allocation4 + $0x80] sm:$0xff] %vm1629, %v1550
      %1639 = vst.msk [vmem:[#allocation4 + $0x90] sm:$0xff] %vm1629, %v1552
      %1640 = vst.msk [vmem:[#allocation4 + $0xa0] sm:$0xff] %vm1629, %v1554
      %1641 = vst.msk [vmem:[#allocation4 + $0xb0] sm:$0xff] %vm1629, %v1556
      %1642 = vst.msk [vmem:[#allocation4 + $0xc0] sm:$0xff] %vm1629, %v1558
      %1643 = vst.msk [vmem:[#allocation4 + $0xd0] sm:$0xff] %vm1629, %v1560
      %1644 = vst.msk [vmem:[#allocation4 + $0xe0] sm:$0xff] %vm1629, %v1562
      %1645 = vst.msk [vmem:[#allocation4 + $0xf0] sm:$0xff] %vm1629, %v1564
      %1646 = vst.msk [vmem:[#allocation4 + $0x100] sm:$0xff] %vm1629, %v1566
      %1647 = vst.msk [vmem:[#allocation4 + $0x110] sm:$0xff] %vm1629, %v1568
      %1648 = vst.msk [vmem:[#allocation4 + $0x120] sm:$0xff] %vm1629, %v1570
      %1649 = vst.msk [vmem:[#allocation4 + $0x130] sm:$0xff] %vm1629, %v1572
      %1650 = vst.msk [vmem:[#allocation4 + $0x140] sm:$0xff] %vm1629, %v1574
      %1651 = vst.msk [vmem:[#allocation4 + $0x150] sm:$0xff] %vm1629, %v1576
      %1652 = vst.msk [vmem:[#allocation4 + $0x160] sm:$0xff] %vm1629, %v1578
      %1653 = vst.msk [vmem:[#allocation4 + $0x170] sm:$0xff] %vm1629, %v1580
      %1654 = vst.msk [vmem:[#allocation4 + $0x180] sm:$0xff] %vm1629, %v1582
      %1655 = vst.msk [vmem:[#allocation4 + $0x190] sm:$0xff] %vm1629, %v1584
      %1656 = vst.msk [vmem:[#allocation4 + $0x1a0] sm:$0xff] %vm1629, %v1586
      %1657 = vst.msk [vmem:[#allocation4 + $0x1b0] sm:$0xff] %vm1629, %v1588
      %1658 = vst.msk [vmem:[#allocation4 + $0x1c0] sm:$0xff] %vm1629, %v1590
      %1659 = vst.msk [vmem:[#allocation4 + $0x1d0] sm:$0xff] %vm1629, %v1592
      %1660 = vst.msk [vmem:[#allocation4 + $0x1e0] sm:$0xff] %vm1629, %v1594
      %1661 = vst.msk [vmem:[#allocation4 + $0x1f0] sm:$0xff] %vm1629, %v1596
      %v1662 = vld [vmem:[%s1468 + $0x1] sm:$0xff]
      %v1663 = vld [vmem:[%s1468 + $0x9] sm:$0xff]
      %v1664 = vld [vmem:[%s1468 + $0x19] sm:$0xff]
      %v1665 = vld [vmem:[%s1468 + $0x21] sm:$0xff]
      %v1666 = vld [vmem:[%s1468 + $0x31] sm:$0xff]
      %v1667 = vld [vmem:[%s1468 + $0x39] sm:$0xff]
      %v1668 = vld [vmem:[%s1468 + $0x49] sm:$0xff]
      %v1669 = vld [vmem:[%s1468 + $0x51] sm:$0xff]
      %v1670 = vld [vmem:[%s1468 + $0x61] sm:$0xff]
      %v1671 = vld [vmem:[%s1468 + $0x69] sm:$0xff]
      %v1672 = vld [vmem:[%s1468 + $0x79] sm:$0xff]
      %v1673 = vld [vmem:[%s1468 + $0x81] sm:$0xff]
      %v1674 = vld [vmem:[%s1468 + $0x91] sm:$0xff]
      %v1675 = vld [vmem:[%s1468 + $0x99] sm:$0xff]
      %v1676 = vld [vmem:[%s1468 + $0xa9] sm:$0xff]
      %v1677 = vld [vmem:[%s1468 + $0xb1] sm:$0xff]
      %v1678 = vld [vmem:[%s1468 + $0xc1] sm:$0xff]
      %v1679 = vld [vmem:[%s1468 + $0xc9] sm:$0xff]
      %v1680 = vld [vmem:[%s1468 + $0xd9] sm:$0xff]
      %v1681 = vld [vmem:[%s1468 + $0xe1] sm:$0xff]
      %v1682 = vld [vmem:[%s1468 + $0xf1] sm:$0xff]
      %v1683 = vld [vmem:[%s1468 + $0xf9] sm:$0xff]
      %v1684 = vld [vmem:[%s1468 + $0x109] sm:$0xff]
      %v1685 = vld [vmem:[%s1468 + $0x111] sm:$0xff]
      %v1686 = vld [vmem:[%s1468 + $0x121] sm:$0xff]
      %v1687 = vld [vmem:[%s1468 + $0x129] sm:$0xff]
      %v1688 = vld [vmem:[%s1468 + $0x139] sm:$0xff]
      %v1689 = vld [vmem:[%s1468 + $0x141] sm:$0xff]
      %v1690 = vld [vmem:[%s1468 + $0x151] sm:$0xff]
      %v1691 = vld [vmem:[%s1468 + $0x159] sm:$0xff]
      %v1692 = vld [vmem:[%s1468 + $0x169] sm:$0xff]
      %v1693 = vld [vmem:[%s1468 + $0x171] sm:$0xff]
      %1726 = vrot.lane.b32.xlu0 %v1662, 21
      %v1727 = vpop.permute.xlu0 %1726
      %1728 = vrot.lane.b32.xlu0 %v1663, 21
      %v1729 = vpop.permute.xlu0 %1728
      %1730 = vrot.lane.b32.xlu0 %v1664, 21
      %v1731 = vpop.permute.xlu0 %1730
      %1732 = vrot.lane.b32.xlu0 %v1665, 21
      %v1733 = vpop.permute.xlu0 %1732
      %1734 = vrot.lane.b32.xlu0 %v1666, 21
      %v1735 = vpop.permute.xlu0 %1734
      %1736 = vrot.lane.b32.xlu0 %v1667, 21
      %v1737 = vpop.permute.xlu0 %1736
      %1738 = vrot.lane.b32.xlu0 %v1668, 21
      %v1739 = vpop.permute.xlu0 %1738
      %1740 = vrot.lane.b32.xlu0 %v1669, 21
      %v1741 = vpop.permute.xlu0 %1740
      %1742 = vrot.lane.b32.xlu0 %v1670, 21
      %v1743 = vpop.permute.xlu0 %1742
      %1744 = vrot.lane.b32.xlu0 %v1671, 21
      %v1745 = vpop.permute.xlu0 %1744
      %1746 = vrot.lane.b32.xlu0 %v1672, 21
      %v1747 = vpop.permute.xlu0 %1746
      %1748 = vrot.lane.b32.xlu0 %v1673, 21
      %v1749 = vpop.permute.xlu0 %1748
      %1750 = vrot.lane.b32.xlu0 %v1674, 21
      %v1751 = vpop.permute.xlu0 %1750
      %1752 = vrot.lane.b32.xlu0 %v1675, 21
      %v1753 = vpop.permute.xlu0 %1752
      %1754 = vrot.lane.b32.xlu0 %v1676, 21
      %v1755 = vpop.permute.xlu0 %1754
      %1756 = vrot.lane.b32.xlu0 %v1677, 21
      %v1757 = vpop.permute.xlu0 %1756
      %1758 = vrot.lane.b32.xlu0 %v1678, 21
      %v1759 = vpop.permute.xlu0 %1758
      %1760 = vrot.lane.b32.xlu0 %v1679, 21
      %v1761 = vpop.permute.xlu0 %1760
      %1762 = vrot.lane.b32.xlu0 %v1680, 21
      %v1763 = vpop.permute.xlu0 %1762
      %1764 = vrot.lane.b32.xlu0 %v1681, 21
      %v1765 = vpop.permute.xlu0 %1764
      %1766 = vrot.lane.b32.xlu0 %v1682, 21
      %v1767 = vpop.permute.xlu0 %1766
      %1768 = vrot.lane.b32.xlu0 %v1683, 21
      %v1769 = vpop.permute.xlu0 %1768
      %1770 = vrot.lane.b32.xlu0 %v1684, 21
      %v1771 = vpop.permute.xlu0 %1770
      %1772 = vrot.lane.b32.xlu0 %v1685, 21
      %v1773 = vpop.permute.xlu0 %1772
      %1774 = vrot.lane.b32.xlu0 %v1686, 21
      %v1775 = vpop.permute.xlu0 %1774
      %1776 = vrot.lane.b32.xlu0 %v1687, 21
      %v1777 = vpop.permute.xlu0 %1776
      %1778 = vrot.lane.b32.xlu0 %v1688, 21
      %v1779 = vpop.permute.xlu0 %1778
      %1780 = vrot.lane.b32.xlu0 %v1689, 21
      %v1781 = vpop.permute.xlu0 %1780
      %1782 = vrot.lane.b32.xlu0 %v1690, 21
      %v1783 = vpop.permute.xlu0 %1782
      %1784 = vrot.lane.b32.xlu0 %v1691, 21
      %v1785 = vpop.permute.xlu0 %1784
      %1786 = vrot.lane.b32.xlu0 %v1692, 21
      %v1787 = vpop.permute.xlu0 %1786
      %1788 = vrot.lane.b32.xlu0 %v1693, 21
      %v1789 = vpop.permute.xlu0 %1788
      %vm1822 = vcmask 195752
      %1823 = vst.msk [vmem:[#allocation4] sm:$0xff] %vm1822, %v1727
      %1824 = vst.msk [vmem:[#allocation4 + $0x10] sm:$0xff] %vm1822, %v1729
      %1825 = vst.msk [vmem:[#allocation4 + $0x20] sm:$0xff] %vm1822, %v1731
      %1826 = vst.msk [vmem:[#allocation4 + $0x30] sm:$0xff] %vm1822, %v1733
      %1827 = vst.msk [vmem:[#allocation4 + $0x40] sm:$0xff] %vm1822, %v1735
      %1828 = vst.msk [vmem:[#allocation4 + $0x50] sm:$0xff] %vm1822, %v1737
      %1829 = vst.msk [vmem:[#allocation4 + $0x60] sm:$0xff] %vm1822, %v1739
      %1830 = vst.msk [vmem:[#allocation4 + $0x70] sm:$0xff] %vm1822, %v1741
      %1831 = vst.msk [vmem:[#allocation4 + $0x80] sm:$0xff] %vm1822, %v1743
      %1832 = vst.msk [vmem:[#allocation4 + $0x90] sm:$0xff] %vm1822, %v1745
      %1833 = vst.msk [vmem:[#allocation4 + $0xa0] sm:$0xff] %vm1822, %v1747
      %1834 = vst.msk [vmem:[#allocation4 + $0xb0] sm:$0xff] %vm1822, %v1749
      %1835 = vst.msk [vmem:[#allocation4 + $0xc0] sm:$0xff] %vm1822, %v1751
      %1836 = vst.msk [vmem:[#allocation4 + $0xd0] sm:$0xff] %vm1822, %v1753
      %1837 = vst.msk [vmem:[#allocation4 + $0xe0] sm:$0xff] %vm1822, %v1755
      %1838 = vst.msk [vmem:[#allocation4 + $0xf0] sm:$0xff] %vm1822, %v1757
      %1839 = vst.msk [vmem:[#allocation4 + $0x100] sm:$0xff] %vm1822, %v1759
      %1840 = vst.msk [vmem:[#allocation4 + $0x110] sm:$0xff] %vm1822, %v1761
      %1841 = vst.msk [vmem:[#allocation4 + $0x120] sm:$0xff] %vm1822, %v1763
      %1842 = vst.msk [vmem:[#allocation4 + $0x130] sm:$0xff] %vm1822, %v1765
      %1843 = vst.msk [vmem:[#allocation4 + $0x140] sm:$0xff] %vm1822, %v1767
      %1844 = vst.msk [vmem:[#allocation4 + $0x150] sm:$0xff] %vm1822, %v1769
      %1845 = vst.msk [vmem:[#allocation4 + $0x160] sm:$0xff] %vm1822, %v1771
      %1846 = vst.msk [vmem:[#allocation4 + $0x170] sm:$0xff] %vm1822, %v1773
      %1847 = vst.msk [vmem:[#allocation4 + $0x180] sm:$0xff] %vm1822, %v1775
      %1848 = vst.msk [vmem:[#allocation4 + $0x190] sm:$0xff] %vm1822, %v1777
      %1849 = vst.msk [vmem:[#allocation4 + $0x1a0] sm:$0xff] %vm1822, %v1779
      %1850 = vst.msk [vmem:[#allocation4 + $0x1b0] sm:$0xff] %vm1822, %v1781
      %1851 = vst.msk [vmem:[#allocation4 + $0x1c0] sm:$0xff] %vm1822, %v1783
      %1852 = vst.msk [vmem:[#allocation4 + $0x1d0] sm:$0xff] %vm1822, %v1785
      %1853 = vst.msk [vmem:[#allocation4 + $0x1e0] sm:$0xff] %vm1822, %v1787
      %1854 = vst.msk [vmem:[#allocation4 + $0x1f0] sm:$0xff] %vm1822, %v1789
      %v1855 = vld [vmem:[%s1468 + $0x2] sm:$0xff]
      %v1856 = vld [vmem:[%s1468 + $0xa] sm:$0xff]
      %v1857 = vld [vmem:[%s1468 + $0x1a] sm:$0xff]
      %v1858 = vld [vmem:[%s1468 + $0x22] sm:$0xff]
      %v1859 = vld [vmem:[%s1468 + $0x32] sm:$0xff]
      %v1860 = vld [vmem:[%s1468 + $0x3a] sm:$0xff]
      %v1861 = vld [vmem:[%s1468 + $0x4a] sm:$0xff]
      %v1862 = vld [vmem:[%s1468 + $0x52] sm:$0xff]
      %v1863 = vld [vmem:[%s1468 + $0x62] sm:$0xff]
      %v1864 = vld [vmem:[%s1468 + $0x6a] sm:$0xff]
      %v1865 = vld [vmem:[%s1468 + $0x7a] sm:$0xff]
      %v1866 = vld [vmem:[%s1468 + $0x82] sm:$0xff]
      %v1867 = vld [vmem:[%s1468 + $0x92] sm:$0xff]
      %v1868 = vld [vmem:[%s1468 + $0x9a] sm:$0xff]
      %v1869 = vld [vmem:[%s1468 + $0xaa] sm:$0xff]
      %v1870 = vld [vmem:[%s1468 + $0xb2] sm:$0xff]
      %v1871 = vld [vmem:[%s1468 + $0xc2] sm:$0xff]
      %v1872 = vld [vmem:[%s1468 + $0xca] sm:$0xff]
      %v1873 = vld [vmem:[%s1468 + $0xda] sm:$0xff]
      %v1874 = vld [vmem:[%s1468 + $0xe2] sm:$0xff]
      %v1875 = vld [vmem:[%s1468 + $0xf2] sm:$0xff]
      %v1876 = vld [vmem:[%s1468 + $0xfa] sm:$0xff]
      %v1877 = vld [vmem:[%s1468 + $0x10a] sm:$0xff]
      %v1878 = vld [vmem:[%s1468 + $0x112] sm:$0xff]
      %v1879 = vld [vmem:[%s1468 + $0x122] sm:$0xff]
      %v1880 = vld [vmem:[%s1468 + $0x12a] sm:$0xff]
      %v1881 = vld [vmem:[%s1468 + $0x13a] sm:$0xff]
      %v1882 = vld [vmem:[%s1468 + $0x142] sm:$0xff]
      %v1883 = vld [vmem:[%s1468 + $0x152] sm:$0xff]
      %v1884 = vld [vmem:[%s1468 + $0x15a] sm:$0xff]
      %v1885 = vld [vmem:[%s1468 + $0x16a] sm:$0xff]
      %v1886 = vld [vmem:[%s1468 + $0x172] sm:$0xff]
      %1919 = vrot.lane.b32.xlu0 %v1855, 24
      %v1920 = vpop.permute.xlu0 %1919
      %1921 = vrot.lane.b32.xlu0 %v1856, 24
      %v1922 = vpop.permute.xlu0 %1921
      %1923 = vrot.lane.b32.xlu0 %v1857, 24
      %v1924 = vpop.permute.xlu0 %1923
      %1925 = vrot.lane.b32.xlu0 %v1858, 24
      %v1926 = vpop.permute.xlu0 %1925
      %1927 = vrot.lane.b32.xlu0 %v1859, 24
      %v1928 = vpop.permute.xlu0 %1927
      %1929 = vrot.lane.b32.xlu0 %v1860, 24
      %v1930 = vpop.permute.xlu0 %1929
      %1931 = vrot.lane.b32.xlu0 %v1861, 24
      %v1932 = vpop.permute.xlu0 %1931
      %1933 = vrot.lane.b32.xlu0 %v1862, 24
      %v1934 = vpop.permute.xlu0 %1933
      %1935 = vrot.lane.b32.xlu0 %v1863, 24
      %v1936 = vpop.permute.xlu0 %1935
      %1937 = vrot.lane.b32.xlu0 %v1864, 24
      %v1938 = vpop.permute.xlu0 %1937
      %1939 = vrot.lane.b32.xlu0 %v1865, 24
      %v1940 = vpop.permute.xlu0 %1939
      %1941 = vrot.lane.b32.xlu0 %v1866, 24
      %v1942 = vpop.permute.xlu0 %1941
      %1943 = vrot.lane.b32.xlu0 %v1867, 24
      %v1944 = vpop.permute.xlu0 %1943
      %1945 = vrot.lane.b32.xlu0 %v1868, 24
      %v1946 = vpop.permute.xlu0 %1945
      %1947 = vrot.lane.b32.xlu0 %v1869, 24
      %v1948 = vpop.permute.xlu0 %1947
      %1949 = vrot.lane.b32.xlu0 %v1870, 24
      %v1950 = vpop.permute.xlu0 %1949
      %1951 = vrot.lane.b32.xlu0 %v1871, 24
      %v1952 = vpop.permute.xlu0 %1951
      %1953 = vrot.lane.b32.xlu0 %v1872, 24
      %v1954 = vpop.permute.xlu0 %1953
      %1955 = vrot.lane.b32.xlu0 %v1873, 24
      %v1956 = vpop.permute.xlu0 %1955
      %1957 = vrot.lane.b32.xlu0 %v1874, 24
      %v1958 = vpop.permute.xlu0 %1957
      %1959 = vrot.lane.b32.xlu0 %v1875, 24
      %v1960 = vpop.permute.xlu0 %1959
      %1961 = vrot.lane.b32.xlu0 %v1876, 24
      %v1962 = vpop.permute.xlu0 %1961
      %1963 = vrot.lane.b32.xlu0 %v1877, 24
      %v1964 = vpop.permute.xlu0 %1963
      %1965 = vrot.lane.b32.xlu0 %v1878, 24
      %v1966 = vpop.permute.xlu0 %1965
      %1967 = vrot.lane.b32.xlu0 %v1879, 24
      %v1968 = vpop.permute.xlu0 %1967
      %1969 = vrot.lane.b32.xlu0 %v1880, 24
      %v1970 = vpop.permute.xlu0 %1969
      %1971 = vrot.lane.b32.xlu0 %v1881, 24
      %v1972 = vpop.permute.xlu0 %1971
      %1973 = vrot.lane.b32.xlu0 %v1882, 24
      %v1974 = vpop.permute.xlu0 %1973
      %1975 = vrot.lane.b32.xlu0 %v1883, 24
      %v1976 = vpop.permute.xlu0 %1975
      %1977 = vrot.lane.b32.xlu0 %v1884, 24
      %v1978 = vpop.permute.xlu0 %1977
      %1979 = vrot.lane.b32.xlu0 %v1885, 24
      %v1980 = vpop.permute.xlu0 %1979
      %1981 = vrot.lane.b32.xlu0 %v1886, 24
      %v1982 = vpop.permute.xlu0 %1981
      %vm2015 = vcmask 220352
      %2016 = vst.msk [vmem:[#allocation4] sm:$0xff] %vm2015, %v1920
      %2017 = vst.msk [vmem:[#allocation4 + $0x10] sm:$0xff] %vm2015, %v1922
      %2018 = vst.msk [vmem:[#allocation4 + $0x20] sm:$0xff] %vm2015, %v1924
      %2019 = vst.msk [vmem:[#allocation4 + $0x30] sm:$0xff] %vm2015, %v1926
      %2020 = vst.msk [vmem:[#allocation4 + $0x40] sm:$0xff] %vm2015, %v1928
      %2021 = vst.msk [vmem:[#allocation4 + $0x50] sm:$0xff] %vm2015, %v1930
      %2022 = vst.msk [vmem:[#allocation4 + $0x60] sm:$0xff] %vm2015, %v1932
      %2023 = vst.msk [vmem:[#allocation4 + $0x70] sm:$0xff] %vm2015, %v1934
      %2024 = vst.msk [vmem:[#allocation4 + $0x80] sm:$0xff] %vm2015, %v1936
      %2025 = vst.msk [vmem:[#allocation4 + $0x90] sm:$0xff] %vm2015, %v1938
      %2026 = vst.msk [vmem:[#allocation4 + $0xa0] sm:$0xff] %vm2015, %v1940
      %2027 = vst.msk [vmem:[#allocation4 + $0xb0] sm:$0xff] %vm2015, %v1942
      %2028 = vst.msk [vmem:[#allocation4 + $0xc0] sm:$0xff] %vm2015, %v1944
      %2029 = vst.msk [vmem:[#allocation4 + $0xd0] sm:$0xff] %vm2015, %v1946
      %2030 = vst.msk [vmem:[#allocation4 + $0xe0] sm:$0xff] %vm2015, %v1948
      %2031 = vst.msk [vmem:[#allocation4 + $0xf0] sm:$0xff] %vm2015, %v1950
      %2032 = vst.msk [vmem:[#allocation4 + $0x100] sm:$0xff] %vm2015, %v1952
      %2033 = vst.msk [vmem:[#allocation4 + $0x110] sm:$0xff] %vm2015, %v1954
      %2034 = vst.msk [vmem:[#allocation4 + $0x120] sm:$0xff] %vm2015, %v1956
      %2035 = vst.msk [vmem:[#allocation4 + $0x130] sm:$0xff] %vm2015, %v1958
      %2036 = vst.msk [vmem:[#allocation4 + $0x140] sm:$0xff] %vm2015, %v1960
      %2037 = vst.msk [vmem:[#allocation4 + $0x150] sm:$0xff] %vm2015, %v1962
      %2038 = vst.msk [vmem:[#allocation4 + $0x160] sm:$0xff] %vm2015, %v1964
      %2039 = vst.msk [vmem:[#allocation4 + $0x170] sm:$0xff] %vm2015, %v1966
      %2040 = vst.msk [vmem:[#allocation4 + $0x180] sm:$0xff] %vm2015, %v1968
      %2041 = vst.msk [vmem:[#allocation4 + $0x190] sm:$0xff] %vm2015, %v1970
      %2042 = vst.msk [vmem:[#allocation4 + $0x1a0] sm:$0xff] %vm2015, %v1972
      %2043 = vst.msk [vmem:[#allocation4 + $0x1b0] sm:$0xff] %vm2015, %v1974
      %2044 = vst.msk [vmem:[#allocation4 + $0x1c0] sm:$0xff] %vm2015, %v1976
      %2045 = vst.msk [vmem:[#allocation4 + $0x1d0] sm:$0xff] %vm2015, %v1978
      %2046 = vst.msk [vmem:[#allocation4 + $0x1e0] sm:$0xff] %vm2015, %v1980
      %2047 = vst.msk [vmem:[#allocation4 + $0x1f0] sm:$0xff] %vm2015, %v1982
      %v2048 = vld [vmem:[#allocation4] sm:$0xff]
      %v2049 = vld [vmem:[#allocation4 + $0x10] sm:$0xff]
      %v2050 = vld [vmem:[#allocation4 + $0x20] sm:$0xff]
      %v2051 = vld [vmem:[#allocation4 + $0x30] sm:$0xff]
      %v2052 = vld [vmem:[#allocation4 + $0x40] sm:$0xff]
      %v2053 = vld [vmem:[#allocation4 + $0x50] sm:$0xff]
      %v2054 = vld [vmem:[#allocation4 + $0x60] sm:$0xff]
      %v2055 = vld [vmem:[#allocation4 + $0x70] sm:$0xff]
      %v2056 = vld [vmem:[#allocation4 + $0x80] sm:$0xff]
      %v2057 = vld [vmem:[#allocation4 + $0x90] sm:$0xff]
      %v2058 = vld [vmem:[#allocation4 + $0xa0] sm:$0xff]
      %v2059 = vld [vmem:[#allocation4 + $0xb0] sm:$0xff]
      %v2060 = vld [vmem:[#allocation4 + $0xc0] sm:$0xff]
      %v2061 = vld [vmem:[#allocation4 + $0xd0] sm:$0xff]
      %v2062 = vld [vmem:[#allocation4 + $0xe0] sm:$0xff]
      %v2063 = vld [vmem:[#allocation4 + $0xf0] sm:$0xff]
      %v2064 = vld [vmem:[#allocation4 + $0x100] sm:$0xff]
      %v2065 = vld [vmem:[#allocation4 + $0x110] sm:$0xff]
      %v2066 = vld [vmem:[#allocation4 + $0x120] sm:$0xff]
      %v2067 = vld [vmem:[#allocation4 + $0x130] sm:$0xff]
      %v2068 = vld [vmem:[#allocation4 + $0x140] sm:$0xff]
      %v2069 = vld [vmem:[#allocation4 + $0x150] sm:$0xff]
      %v2070 = vld [vmem:[#allocation4 + $0x160] sm:$0xff]
      %v2071 = vld [vmem:[#allocation4 + $0x170] sm:$0xff]
      %v2072 = vld [vmem:[#allocation4 + $0x180] sm:$0xff]
      %v2073 = vld [vmem:[#allocation4 + $0x190] sm:$0xff]
      %v2074 = vld [vmem:[#allocation4 + $0x1a0] sm:$0xff]
      %v2075 = vld [vmem:[#allocation4 + $0x1b0] sm:$0xff]
      %v2076 = vld [vmem:[#allocation4 + $0x1c0] sm:$0xff]
      %v2077 = vld [vmem:[#allocation4 + $0x1d0] sm:$0xff]
      %v2078 = vld [vmem:[#allocation4 + $0x1e0] sm:$0xff]
      %v2079 = vld [vmem:[#allocation4 + $0x1f0] sm:$0xff]
      %v2081 = vlaneseq
      %v2082 = vshrl.u32 %v2081, 7
      %v2083 = vsub.s32 0, %v2082
      %v2084 = vrot.slane %v438, %v2083
      %vm2086 = vcmask 220160
      %v2088 = vsel %vm2086, %v2048, 0
      %v2091 = vsel %vm2086, %v2049, 0
      %v2094 = vsel %vm2086, %v2050, 0
      %v2097 = vsel %vm2086, %v2051, 0
      %v2100 = vsel %vm2086, %v2052, 0
      %v2103 = vsel %vm2086, %v2053, 0
      %v2106 = vsel %vm2086, %v2054, 0
      %v2109 = vsel %vm2086, %v2055, 0
      %v2112 = vsel %vm2086, %v2056, 0
      %v2115 = vsel %vm2086, %v2057, 0
      %v2118 = vsel %vm2086, %v2058, 0
      %v2121 = vsel %vm2086, %v2059, 0
      %v2124 = vsel %vm2086, %v2060, 0
      %v2127 = vsel %vm2086, %v2061, 0
      %v2130 = vsel %vm2086, %v2062, 0
      %v2133 = vsel %vm2086, %v2063, 0
      %v2136 = vsel %vm2086, %v2064, 0
      %v2139 = vsel %vm2086, %v2065, 0
      %v2142 = vsel %vm2086, %v2066, 0
      %v2145 = vsel %vm2086, %v2067, 0
      %v2148 = vsel %vm2086, %v2068, 0
      %v2151 = vsel %vm2086, %v2069, 0
      %v2154 = vsel %vm2086, %v2070, 0
      %v2157 = vsel %vm2086, %v2071, 0
      %v2160 = vsel %vm2086, %v2072, 0
      %v2163 = vsel %vm2086, %v2073, 0
      %v2166 = vsel %vm2086, %v2074, 0
      %v2169 = vsel %vm2086, %v2075, 0
      %v2172 = vsel %vm2086, %v2076, 0
      %v2175 = vsel %vm2086, %v2077, 0
      %v2178 = vsel %vm2086, %v2078, 0
      %v2181 = vsel %vm2086, %v2079, 0
      %vm2183 = vcmask 1042432
      %v2185 = vsel %vm2183, %v437, 0
      %2187 = vmatprep.subr.mxu0 0.0
      %2188 = vmatpush1.msra.mxu0 %v434
      %2189 = vmatprep.subr.mxu0 0.0
      %2190 = vmatpush1.msra.mxu0 %v435
      %2191 = vmatprep.subr.mxu0 0.0
      %2192 = vmatpush1.msra.mxu0 %v436
      %2193 = vmatprep.subr.mxu0 0.0
      %2194 = vmatpush1.msra.mxu0 %v2185
      %2195 = vmatprep.subr.mxu0 0.0
      %2196 = vmatpush1.msra.mxu0 0.0
      %2197 = vmatprep.subr.mxu0 0.0
      %2198 = vmatpush1.msra.mxu0 0.0
      %2199 = vmatprep.subr.mxu0 0.0
      %2200 = vmatpush1.msra.mxu0 0.0
      %2201 = vmatprep.subr.mxu0 0.0
      %2202 = vmatpush1.msra.mxu0 0.0
      %2203 = vmatprep.subr.mxu0 0.0
      %2204 = vmatpush1.msra.mxu0 0.0
      %2205 = vmatprep.subr.mxu0 0.0
      %2206 = vmatpush1.msra.mxu0 0.0
      %2207 = vmatprep.subr.mxu0 0.0
      %2208 = vmatpush1.msra.mxu0 0.0
      %2209 = vmatprep.subr.mxu0 0.0
      %2210 = vmatpush1.msra.mxu0 0.0
      %2211 = vmatprep.subr.mxu0 0.0
      %2212 = vmatpush1.msra.mxu0 0.0
      %2213 = vmatprep.subr.mxu0 0.0
      %2214 = vmatpush1.msra.mxu0 0.0
      %2215 = vmatprep.subr.mxu0 0.0
      %2216 = vmatpush1.msra.mxu0 0.0
      %2217 = vmatprep.subr.mxu0 0.0
      %2218 = vmatpush1.msra.mxu0 0.0
      %2219 = vmatprep.subr.mxu0 0.0
      %2220 = vmatpush1.msra.mxu0 0.0
      %2221 = vmatprep.subr.mxu0 0.0
      %2222 = vmatpush1.msra.mxu0 0.0
      %2223 = vmatprep.subr.mxu0 0.0
      %2224 = vmatpush1.msra.mxu0 0.0
      %2225 = vmatprep.subr.mxu0 0.0
      %2226 = vmatpush1.msra.mxu0 0.0
      %2227 = vmatprep.subr.mxu0 0.0
      %2228 = vmatpush1.msra.mxu0 0.0
      %2229 = vmatprep.subr.mxu0 0.0
      %2230 = vmatpush1.msra.mxu0 0.0
      %2231 = vmatprep.subr.mxu0 0.0
      %2232 = vmatpush1.msra.mxu0 0.0
      %2233 = vmatprep.subr.mxu0 0.0
      %2234 = vmatpush1.msra.mxu0 0.0
      %2235 = vmatprep.subr.mxu0 0.0
      %2236 = vmatpush1.msra.mxu0 0.0
      %2237 = vmatprep.subr.mxu0 0.0
      %2238 = vmatpush1.msra.mxu0 0.0
      %2239 = vmatprep.subr.mxu0 0.0
      %2240 = vmatpush1.msra.mxu0 0.0
      %2241 = vmatprep.subr.mxu0 0.0
      %2242 = vmatpush1.msra.mxu0 0.0
      %2243 = vmatprep.subr.mxu0 0.0
      %2244 = vmatpush1.msra.mxu0 0.0
      %2245 = vmatprep.subr.mxu0 0.0
      %2246 = vmatpush1.msra.mxu0 0.0
      %2247 = vmatprep.subr.mxu0 0.0
      %2248 = vmatpush1.msra.mxu0 0.0
      %2249 = vmatprep.subr.mxu0 0.0
      %2250 = vmatpush1.msra.mxu0 0.0
      %2251 = vmatprep.mubr.f32.mxu0 0.0
      %2252 = vmatmul.mubr.f32.gmra.mrb[0].mxu0 %v2088
      %v2253 = vpop.f32.mrb[0].mxu0
      %v2254 = vadd.f32 %v2084, %v2253
      %v2255 = vpop.f32.mrb[0].mxu0
      %2256 = vmatprep.mubr.f32.mxu0 0.0
      %2257 = vmatmul.mubr.f32.gmra.mrb[0].mxu0 %v2091
      %v2258 = vpop.f32.mrb[0].mxu0
      %v2259 = vadd.f32 %v2084, %v2258
      %v2260 = vpop.f32.mrb[0].mxu0
      %2261 = vmatprep.mubr.f32.mxu0 0.0
      %2262 = vmatmul.mubr.f32.gmra.mrb[0].mxu0 %v2094
      %v2263 = vpop.f32.mrb[0].mxu0
      %v2264 = vadd.f32 %v2084, %v2263
      %v2265 = vpop.f32.mrb[0].mxu0
      %2266 = vmatprep.mubr.f32.mxu0 0.0
      %2267 = vmatmul.mubr.f32.gmra.mrb[0].mxu0 %v2097
      %v2268 = vpop.f32.mrb[0].mxu0
      %v2269 = vadd.f32 %v2084, %v2268
      %v2270 = vpop.f32.mrb[0].mxu0
      %2271 = vmatprep.mubr.f32.mxu0 0.0
      %2272 = vmatmul.mubr.f32.gmra.mrb[0].mxu0 %v2100
      %v2273 = vpop.f32.mrb[0].mxu0
      %v2274 = vadd.f32 %v2084, %v2273
      %v2275 = vpop.f32.mrb[0].mxu0
      %2276 = vmatprep.mubr.f32.mxu0 0.0
      %2277 = vmatmul.mubr.f32.gmra.mrb[0].mxu0 %v2103
      %v2278 = vpop.f32.mrb[0].mxu0
      %v2279 = vadd.f32 %v2084, %v2278
      %v2280 = vpop.f32.mrb[0].mxu0
      %2281 = vmatprep.mubr.f32.mxu0 0.0
      %2282 = vmatmul.mubr.f32.gmra.mrb[0].mxu0 %v2106
      %v2283 = vpop.f32.mrb[0].mxu0
      %v2284 = vadd.f32 %v2084, %v2283
      %v2285 = vpop.f32.mrb[0].mxu0
      %2286 = vmatprep.mubr.f32.mxu0 0.0
      %2287 = vmatmul.mubr.f32.gmra.mrb[0].mxu0 %v2109
      %v2288 = vpop.f32.mrb[0].mxu0
      %v2289 = vadd.f32 %v2084, %v2288
      %v2290 = vpop.f32.mrb[0].mxu0
      %2291 = vmatprep.mubr.f32.mxu0 0.0
      %2292 = vmatmul.mubr.f32.gmra.mrb[0].mxu0 %v2112
      %v2293 = vpop.f32.mrb[0].mxu0
      %v2294 = vadd.f32 %v2084, %v2293
      %v2295 = vpop.f32.mrb[0].mxu0
      %2296 = vmatprep.mubr.f32.mxu0 0.0
      %2297 = vmatmul.mubr.f32.gmra.mrb[0].mxu0 %v2115
      %v2298 = vpop.f32.mrb[0].mxu0
      %v2299 = vadd.f32 %v2084, %v2298
      %v2300 = vpop.f32.mrb[0].mxu0
      %2301 = vmatprep.mubr.f32.mxu0 0.0
      %2302 = vmatmul.mubr.f32.gmra.mrb[0].mxu0 %v2118
      %v2303 = vpop.f32.mrb[0].mxu0
      %v2304 = vadd.f32 %v2084, %v2303
      %v2305 = vpop.f32.mrb[0].mxu0
      %2306 = vmatprep.mubr.f32.mxu0 0.0
      %2307 = vmatmul.mubr.f32.gmra.mrb[0].mxu0 %v2121
      %v2308 = vpop.f32.mrb[0].mxu0
      %v2309 = vadd.f32 %v2084, %v2308
      %v2310 = vpop.f32.mrb[0].mxu0
      %2311 = vmatprep.mubr.f32.mxu0 0.0
      %2312 = vmatmul.mubr.f32.gmra.mrb[0].mxu0 %v2124
      %v2313 = vpop.f32.mrb[0].mxu0
      %v2314 = vadd.f32 %v2084, %v2313
      %v2315 = vpop.f32.mrb[0].mxu0
      %2316 = vmatprep.mubr.f32.mxu0 0.0
      %2317 = vmatmul.mubr.f32.gmra.mrb[0].mxu0 %v2127
      %v2318 = vpop.f32.mrb[0].mxu0
      %v2319 = vadd.f32 %v2084, %v2318
      %v2320 = vpop.f32.mrb[0].mxu0
      %2321 = vmatprep.mubr.f32.mxu0 0.0
      %2322 = vmatmul.mubr.f32.gmra.mrb[0].mxu0 %v2130
      %v2323 = vpop.f32.mrb[0].mxu0
      %v2324 = vadd.f32 %v2084, %v2323
      %v2325 = vpop.f32.mrb[0].mxu0
      %2326 = vmatprep.mubr.f32.mxu0 0.0
      %2327 = vmatmul.mubr.f32.gmra.mrb[0].mxu0 %v2133
      %v2328 = vpop.f32.mrb[0].mxu0
      %v2329 = vadd.f32 %v2084, %v2328
      %v2330 = vpop.f32.mrb[0].mxu0
      %2331 = vmatprep.mubr.f32.mxu0 0.0
      %2332 = vmatmul.mubr.f32.gmra.mrb[0].mxu0 %v2136
      %v2333 = vpop.f32.mrb[0].mxu0
      %v2334 = vadd.f32 %v2084, %v2333
      %v2335 = vpop.f32.mrb[0].mxu0
      %2336 = vmatprep.mubr.f32.mxu0 0.0
      %2337 = vmatmul.mubr.f32.gmra.mrb[0].mxu0 %v2139
      %v2338 = vpop.f32.mrb[0].mxu0
      %v2339 = vadd.f32 %v2084, %v2338
      %v2340 = vpop.f32.mrb[0].mxu0
      %2341 = vmatprep.mubr.f32.mxu0 0.0
      %2342 = vmatmul.mubr.f32.gmra.mrb[0].mxu0 %v2142
      %v2343 = vpop.f32.mrb[0].mxu0
      %v2344 = vadd.f32 %v2084, %v2343
      %v2345 = vpop.f32.mrb[0].mxu0
      %2346 = vmatprep.mubr.f32.mxu0 0.0
      %2347 = vmatmul.mubr.f32.gmra.mrb[0].mxu0 %v2145
      %v2348 = vpop.f32.mrb[0].mxu0
      %v2349 = vadd.f32 %v2084, %v2348
      %v2350 = vpop.f32.mrb[0].mxu0
      %2351 = vmatprep.mubr.f32.mxu0 0.0
      %2352 = vmatmul.mubr.f32.gmra.mrb[0].mxu0 %v2148
      %v2353 = vpop.f32.mrb[0].mxu0
      %v2354 = vadd.f32 %v2084, %v2353
      %v2355 = vpop.f32.mrb[0].mxu0
      %2356 = vmatprep.mubr.f32.mxu0 0.0
      %2357 = vmatmul.mubr.f32.gmra.mrb[0].mxu0 %v2151
      %v2358 = vpop.f32.mrb[0].mxu0
      %v2359 = vadd.f32 %v2084, %v2358
      %v2360 = vpop.f32.mrb[0].mxu0
      %2361 = vmatprep.mubr.f32.mxu0 0.0
      %2362 = vmatmul.mubr.f32.gmra.mrb[0].mxu0 %v2154
      %v2363 = vpop.f32.mrb[0].mxu0
      %v2364 = vadd.f32 %v2084, %v2363
      %v2365 = vpop.f32.mrb[0].mxu0
      %2366 = vmatprep.mubr.f32.mxu0 0.0
      %2367 = vmatmul.mubr.f32.gmra.mrb[0].mxu0 %v2157
      %v2368 = vpop.f32.mrb[0].mxu0
      %v2369 = vadd.f32 %v2084, %v2368
      %v2370 = vpop.f32.mrb[0].mxu0
      %2371 = vmatprep.mubr.f32.mxu0 0.0
      %2372 = vmatmul.mubr.f32.gmra.mrb[0].mxu0 %v2160
      %v2373 = vpop.f32.mrb[0].mxu0
      %v2374 = vadd.f32 %v2084, %v2373
      %v2375 = vpop.f32.mrb[0].mxu0
      %2376 = vmatprep.mubr.f32.mxu0 0.0
      %2377 = vmatmul.mubr.f32.gmra.mrb[0].mxu0 %v2163
      %v2378 = vpop.f32.mrb[0].mxu0
      %v2379 = vadd.f32 %v2084, %v2378
      %v2380 = vpop.f32.mrb[0].mxu0
      %2381 = vmatprep.mubr.f32.mxu0 0.0
      %2382 = vmatmul.mubr.f32.gmra.mrb[0].mxu0 %v2166
      %v2383 = vpop.f32.mrb[0].mxu0
      %v2384 = vadd.f32 %v2084, %v2383
      %v2385 = vpop.f32.mrb[0].mxu0
      %2386 = vmatprep.mubr.f32.mxu0 0.0
      %2387 = vmatmul.mubr.f32.gmra.mrb[0].mxu0 %v2169
      %v2388 = vpop.f32.mrb[0].mxu0
      %v2389 = vadd.f32 %v2084, %v2388
      %v2390 = vpop.f32.mrb[0].mxu0
      %2391 = vmatprep.mubr.f32.mxu0 0.0
      %2392 = vmatmul.mubr.f32.gmra.mrb[0].mxu0 %v2172
      %v2393 = vpop.f32.mrb[0].mxu0
      %v2394 = vadd.f32 %v2084, %v2393
      %v2395 = vpop.f32.mrb[0].mxu0
      %2396 = vmatprep.mubr.f32.mxu0 0.0
      %2397 = vmatmul.mubr.f32.gmra.mrb[0].mxu0 %v2175
      %v2398 = vpop.f32.mrb[0].mxu0
      %v2399 = vadd.f32 %v2084, %v2398
      %v2400 = vpop.f32.mrb[0].mxu0
      %2401 = vmatprep.mubr.f32.mxu0 0.0
      %2402 = vmatmul.mubr.f32.gmra.mrb[0].mxu0 %v2178
      %v2403 = vpop.f32.mrb[0].mxu0
      %v2404 = vadd.f32 %v2084, %v2403
      %v2405 = vpop.f32.mrb[0].mxu0
      %2406 = vmatprep.mubr.f32.mxu0 0.0
      %2407 = vmatmul.mubr.f32.gmra.mrb[0].mxu0 %v2181
      %v2408 = vpop.f32.mrb[0].mxu0
      %v2409 = vadd.f32 %v2084, %v2408
      %v2410 = vpop.f32.mrb[0].mxu0
      %2411 = vdwg.mxu0
      %v2412 = vmax.f32 %v2254, 0.0
      %v2413 = vmax.f32 %v2259, 0.0
      %v2414 = vmax.f32 %v2264, 0.0
      %v2415 = vmax.f32 %v2269, 0.0
      %v2416 = vmax.f32 %v2274, 0.0
      %v2417 = vmax.f32 %v2279, 0.0
      %v2418 = vmax.f32 %v2284, 0.0
      %v2419 = vmax.f32 %v2289, 0.0
      %v2420 = vmax.f32 %v2294, 0.0
      %v2421 = vmax.f32 %v2299, 0.0
      %v2422 = vmax.f32 %v2304, 0.0
      %v2423 = vmax.f32 %v2309, 0.0
      %v2424 = vmax.f32 %v2314, 0.0
      %v2425 = vmax.f32 %v2319, 0.0
      %v2426 = vmax.f32 %v2324, 0.0
      %v2427 = vmax.f32 %v2329, 0.0
      %v2428 = vmax.f32 %v2334, 0.0
      %v2429 = vmax.f32 %v2339, 0.0
      %v2430 = vmax.f32 %v2344, 0.0
      %v2431 = vmax.f32 %v2349, 0.0
      %v2432 = vmax.f32 %v2354, 0.0
      %v2433 = vmax.f32 %v2359, 0.0
      %v2434 = vmax.f32 %v2364, 0.0
      %v2435 = vmax.f32 %v2369, 0.0
      %v2436 = vmax.f32 %v2374, 0.0
      %v2437 = vmax.f32 %v2379, 0.0
      %v2438 = vmax.f32 %v2384, 0.0
      %v2439 = vmax.f32 %v2389, 0.0
      %v2440 = vmax.f32 %v2394, 0.0
      %v2441 = vmax.f32 %v2399, 0.0
      %v2442 = vmax.f32 %v2404, 0.0
      %v2443 = vmax.f32 %v2409, 0.0
      %s2444 = scalar_lea.vmem [#allocation3], 24
      %2445 = vst.msk [vmem:[%s2444 + $0x1] sm:$0xff] %vm279, %v2412
      %2446 = vst.msk [vmem:[%s2444 + $0x9] sm:$0xff] %vm279, %v2413
      %2447 = vst.msk [vmem:[%s2444 + $0x19] sm:$0xff] %vm279, %v2414
      %2448 = vst.msk [vmem:[%s2444 + $0x21] sm:$0xff] %vm279, %v2415
      %2449 = vst.msk [vmem:[%s2444 + $0x31] sm:$0xff] %vm279, %v2416
      %2450 = vst.msk [vmem:[%s2444 + $0x39] sm:$0xff] %vm279, %v2417
      %2451 = vst.msk [vmem:[%s2444 + $0x49] sm:$0xff] %vm279, %v2418
      %2452 = vst.msk [vmem:[%s2444 + $0x51] sm:$0xff] %vm279, %v2419
      %2453 = vst.msk [vmem:[%s2444 + $0x61] sm:$0xff] %vm279, %v2420
      %2454 = vst.msk [vmem:[%s2444 + $0x69] sm:$0xff] %vm279, %v2421
      %2455 = vst.msk [vmem:[%s2444 + $0x79] sm:$0xff] %vm279, %v2422
      %2456 = vst.msk [vmem:[%s2444 + $0x81] sm:$0xff] %vm279, %v2423
      %2457 = vst.msk [vmem:[%s2444 + $0x91] sm:$0xff] %vm279, %v2424
      %2458 = vst.msk [vmem:[%s2444 + $0x99] sm:$0xff] %vm279, %v2425
      %2459 = vst.msk [vmem:[%s2444 + $0xa9] sm:$0xff] %vm279, %v2426
      %2460 = vst.msk [vmem:[%s2444 + $0xb1] sm:$0xff] %vm279, %v2427
      %2461 = vst.msk [vmem:[%s2444 + $0xc1] sm:$0xff] %vm279, %v2428
      %2462 = vst.msk [vmem:[%s2444 + $0xc9] sm:$0xff] %vm279, %v2429
      %2463 = vst.msk [vmem:[%s2444 + $0xd9] sm:$0xff] %vm279, %v2430
      %2464 = vst.msk [vmem:[%s2444 + $0xe1] sm:$0xff] %vm279, %v2431
      %2465 = vst.msk [vmem:[%s2444 + $0xf1] sm:$0xff] %vm279, %v2432
      %2466 = vst.msk [vmem:[%s2444 + $0xf9] sm:$0xff] %vm279, %v2433
      %2467 = vst.msk [vmem:[%s2444 + $0x109] sm:$0xff] %vm279, %v2434
      %2468 = vst.msk [vmem:[%s2444 + $0x111] sm:$0xff] %vm279, %v2435
      %2469 = vst.msk [vmem:[%s2444 + $0x121] sm:$0xff] %vm279, %v2436
      %2470 = vst.msk [vmem:[%s2444 + $0x129] sm:$0xff] %vm279, %v2437
      %2471 = vst.msk [vmem:[%s2444 + $0x139] sm:$0xff] %vm279, %v2438
      %2472 = vst.msk [vmem:[%s2444 + $0x141] sm:$0xff] %vm279, %v2439
      %2473 = vst.msk [vmem:[%s2444 + $0x151] sm:$0xff] %vm279, %v2440
      %2474 = vst.msk [vmem:[%s2444 + $0x159] sm:$0xff] %vm279, %v2441
      %2475 = vst.msk [vmem:[%s2444 + $0x169] sm:$0xff] %vm279, %v2442
      %2476 = vst.msk [vmem:[%s2444 + $0x171] sm:$0xff] %vm279, %v2443
      %v2477 = vld [vmem:[%s3] sm:$0xff]
      %v2478 = vld [vmem:[%s3 + $0x8] sm:$0xff]
      %v2479 = vld [vmem:[%s3 + $0x10] sm:$0xff]
      %v2480 = vld [vmem:[%s3 + $0x18] sm:$0xff]
      %v2481 = vld [vmem:[%s3 + $0x20] sm:$0xff]
      %v2482 = vld [vmem:[%s3 + $0x28] sm:$0xff]
      %v2483 = vld [vmem:[%s3 + $0x30] sm:$0xff]
      %v2484 = vld [vmem:[%s3 + $0x38] sm:$0xff]
      %v2485 = vld [vmem:[%s3 + $0x40] sm:$0xff]
      %v2486 = vld [vmem:[%s3 + $0x48] sm:$0xff]
      %v2487 = vld [vmem:[%s3 + $0x50] sm:$0xff]
      %v2488 = vld [vmem:[%s3 + $0x58] sm:$0xff]
      %v2489 = vld [vmem:[%s3 + $0x60] sm:$0xff]
      %v2490 = vld [vmem:[%s3 + $0x68] sm:$0xff]
      %v2491 = vld [vmem:[%s3 + $0x70] sm:$0xff]
      %v2492 = vld [vmem:[%s3 + $0x78] sm:$0xff]
      %v2493 = vld [vmem:[%s3 + $0x80] sm:$0xff]
      %v2494 = vld [vmem:[%s3 + $0x88] sm:$0xff]
      %v2495 = vld [vmem:[%s4] sm:$0x1]
      %v2496 = vld [vmem:[#allocation3] sm:$0xff]
      %v2497 = vld [vmem:[#allocation3 + $0x8] sm:$0xff]
      %v2498 = vld [vmem:[#allocation3 + $0x18] sm:$0xff]
      %v2499 = vld [vmem:[#allocation3 + $0x20] sm:$0xff]
      %v2500 = vld [vmem:[#allocation3 + $0x30] sm:$0xff]
      %v2501 = vld [vmem:[#allocation3 + $0x38] sm:$0xff]
      %v2502 = vld [vmem:[#allocation3 + $0x48] sm:$0xff]
      %v2503 = vld [vmem:[#allocation3 + $0x50] sm:$0xff]
      %v2504 = vld [vmem:[#allocation3 + $0x60] sm:$0xff]
      %v2505 = vld [vmem:[#allocation3 + $0x68] sm:$0xff]
      %v2506 = vld [vmem:[#allocation3 + $0x78] sm:$0xff]
      %v2507 = vld [vmem:[#allocation3 + $0x80] sm:$0xff]
      %v2508 = vld [vmem:[#allocation3 + $0x90] sm:$0xff]
      %v2509 = vld [vmem:[#allocation3 + $0x98] sm:$0xff]
      %v2510 = vld [vmem:[#allocation3 + $0xa8] sm:$0xff]
      %v2511 = vld [vmem:[#allocation3 + $0xb0] sm:$0xff]
      %v2512 = vld [vmem:[#allocation3 + $0xc0] sm:$0xff]
      %v2513 = vld [vmem:[#allocation3 + $0xc8] sm:$0xff]
      %v2514 = vld [vmem:[#allocation3 + $0xd8] sm:$0xff]
      %v2515 = vld [vmem:[#allocation3 + $0xe0] sm:$0xff]
      %v2516 = vld [vmem:[#allocation3 + $0xf0] sm:$0xff]
      %v2517 = vld [vmem:[#allocation3 + $0xf8] sm:$0xff]
      %v2518 = vld [vmem:[#allocation3 + $0x108] sm:$0xff]
      %v2519 = vld [vmem:[#allocation3 + $0x110] sm:$0xff]
      %v2520 = vld [vmem:[#allocation3 + $0x120] sm:$0xff]
      %v2521 = vld [vmem:[#allocation3 + $0x128] sm:$0xff]
      %v2522 = vld [vmem:[#allocation3 + $0x138] sm:$0xff]
      %v2523 = vld [vmem:[#allocation3 + $0x140] sm:$0xff]
      %v2524 = vld [vmem:[#allocation3 + $0x150] sm:$0xff]
      %v2525 = vld [vmem:[#allocation3 + $0x158] sm:$0xff]
      %v2526 = vld [vmem:[#allocation3 + $0x168] sm:$0xff]
      %v2527 = vld [vmem:[#allocation3 + $0x170] sm:$0xff]
      %2528 = vst.msk [vmem:[#allocation4] sm:$0xff] %vm279, %v2496
      %2529 = vst.msk [vmem:[#allocation4 + $0x10] sm:$0xff] %vm279, %v2497
      %2530 = vst.msk [vmem:[#allocation4 + $0x20] sm:$0xff] %vm279, %v2498
      %2531 = vst.msk [vmem:[#allocation4 + $0x30] sm:$0xff] %vm279, %v2499
      %2532 = vst.msk [vmem:[#allocation4 + $0x40] sm:$0xff] %vm279, %v2500
      %2533 = vst.msk [vmem:[#allocation4 + $0x50] sm:$0xff] %vm279, %v2501
      %2534 = vst.msk [vmem:[#allocation4 + $0x60] sm:$0xff] %vm279, %v2502
      %2535 = vst.msk [vmem:[#allocation4 + $0x70] sm:$0xff] %vm279, %v2503
      %2536 = vst.msk [vmem:[#allocation4 + $0x80] sm:$0xff] %vm279, %v2504
      %2537 = vst.msk [vmem:[#allocation4 + $0x90] sm:$0xff] %vm279, %v2505
      %2538 = vst.msk [vmem:[#allocation4 + $0xa0] sm:$0xff] %vm279, %v2506
      %2539 = vst.msk [vmem:[#allocation4 + $0xb0] sm:$0xff] %vm279, %v2507
      %2540 = vst.msk [vmem:[#allocation4 + $0xc0] sm:$0xff] %vm279, %v2508
      %2541 = vst.msk [vmem:[#allocation4 + $0xd0] sm:$0xff] %vm279, %v2509
      %2542 = vst.msk [vmem:[#allocation4 + $0xe0] sm:$0xff] %vm279, %v2510
      %2543 = vst.msk [vmem:[#allocation4 + $0xf0] sm:$0xff] %vm279, %v2511
      %2544 = vst.msk [vmem:[#allocation4 + $0x100] sm:$0xff] %vm279, %v2512
      %2545 = vst.msk [vmem:[#allocation4 + $0x110] sm:$0xff] %vm279, %v2513
      %2546 = vst.msk [vmem:[#allocation4 + $0x120] sm:$0xff] %vm279, %v2514
      %2547 = vst.msk [vmem:[#allocation4 + $0x130] sm:$0xff] %vm279, %v2515
      %2548 = vst.msk [vmem:[#allocation4 + $0x140] sm:$0xff] %vm279, %v2516
      %2549 = vst.msk [vmem:[#allocation4 + $0x150] sm:$0xff] %vm279, %v2517
      %2550 = vst.msk [vmem:[#allocation4 + $0x160] sm:$0xff] %vm279, %v2518
      %2551 = vst.msk [vmem:[#allocation4 + $0x170] sm:$0xff] %vm279, %v2519
      %2552 = vst.msk [vmem:[#allocation4 + $0x180] sm:$0xff] %vm279, %v2520
      %2553 = vst.msk [vmem:[#allocation4 + $0x190] sm:$0xff] %vm279, %v2521
      %2554 = vst.msk [vmem:[#allocation4 + $0x1a0] sm:$0xff] %vm279, %v2522
      %2555 = vst.msk [vmem:[#allocation4 + $0x1b0] sm:$0xff] %vm279, %v2523
      %2556 = vst.msk [vmem:[#allocation4 + $0x1c0] sm:$0xff] %vm279, %v2524
      %2557 = vst.msk [vmem:[#allocation4 + $0x1d0] sm:$0xff] %vm279, %v2525
      %2558 = vst.msk [vmem:[#allocation4 + $0x1e0] sm:$0xff] %vm279, %v2526
      %2559 = vst.msk [vmem:[#allocation4 + $0x1f0] sm:$0xff] %vm279, %v2527
      %v2560 = vld [vmem:[#allocation3 + $0x1] sm:$0xff]
      %v2561 = vld [vmem:[#allocation3 + $0x9] sm:$0xff]
      %v2562 = vld [vmem:[#allocation3 + $0x19] sm:$0xff]
      %v2563 = vld [vmem:[#allocation3 + $0x21] sm:$0xff]
      %v2564 = vld [vmem:[#allocation3 + $0x31] sm:$0xff]
      %v2565 = vld [vmem:[#allocation3 + $0x39] sm:$0xff]
      %v2566 = vld [vmem:[#allocation3 + $0x49] sm:$0xff]
      %v2567 = vld [vmem:[#allocation3 + $0x51] sm:$0xff]
      %v2568 = vld [vmem:[#allocation3 + $0x61] sm:$0xff]
      %v2569 = vld [vmem:[#allocation3 + $0x69] sm:$0xff]
      %v2570 = vld [vmem:[#allocation3 + $0x79] sm:$0xff]
      %v2571 = vld [vmem:[#allocation3 + $0x81] sm:$0xff]
      %v2572 = vld [vmem:[#allocation3 + $0x91] sm:$0xff]
      %v2573 = vld [vmem:[#allocation3 + $0x99] sm:$0xff]
      %v2574 = vld [vmem:[#allocation3 + $0xa9] sm:$0xff]
      %v2575 = vld [vmem:[#allocation3 + $0xb1] sm:$0xff]
      %v2576 = vld [vmem:[#allocation3 + $0xc1] sm:$0xff]
      %v2577 = vld [vmem:[#allocation3 + $0xc9] sm:$0xff]
      %v2578 = vld [vmem:[#allocation3 + $0xd9] sm:$0xff]
      %v2579 = vld [vmem:[#allocation3 + $0xe1] sm:$0xff]
      %v2580 = vld [vmem:[#allocation3 + $0xf1] sm:$0xff]
      %v2581 = vld [vmem:[#allocation3 + $0xf9] sm:$0xff]
      %v2582 = vld [vmem:[#allocation3 + $0x109] sm:$0xff]
      %v2583 = vld [vmem:[#allocation3 + $0x111] sm:$0xff]
      %v2584 = vld [vmem:[#allocation3 + $0x121] sm:$0xff]
      %v2585 = vld [vmem:[#allocation3 + $0x129] sm:$0xff]
      %v2586 = vld [vmem:[#allocation3 + $0x139] sm:$0xff]
      %v2587 = vld [vmem:[#allocation3 + $0x141] sm:$0xff]
      %v2588 = vld [vmem:[#allocation3 + $0x151] sm:$0xff]
      %v2589 = vld [vmem:[#allocation3 + $0x159] sm:$0xff]
      %v2590 = vld [vmem:[#allocation3 + $0x169] sm:$0xff]
      %v2591 = vld [vmem:[#allocation3 + $0x171] sm:$0xff]
      %2624 = vrot.lane.b32.xlu0 %v2560, 16
      %v2625 = vpop.permute.xlu0 %2624
      %2626 = vrot.lane.b32.xlu0 %v2561, 16
      %v2627 = vpop.permute.xlu0 %2626
      %2628 = vrot.lane.b32.xlu0 %v2562, 16
      %v2629 = vpop.permute.xlu0 %2628
      %2630 = vrot.lane.b32.xlu0 %v2563, 16
      %v2631 = vpop.permute.xlu0 %2630
      %2632 = vrot.lane.b32.xlu0 %v2564, 16
      %v2633 = vpop.permute.xlu0 %2632
      %2634 = vrot.lane.b32.xlu0 %v2565, 16
      %v2635 = vpop.permute.xlu0 %2634
      %2636 = vrot.lane.b32.xlu0 %v2566, 16
      %v2637 = vpop.permute.xlu0 %2636
      %2638 = vrot.lane.b32.xlu0 %v2567, 16
      %v2639 = vpop.permute.xlu0 %2638
      %2640 = vrot.lane.b32.xlu0 %v2568, 16
      %v2641 = vpop.permute.xlu0 %2640
      %2642 = vrot.lane.b32.xlu0 %v2569, 16
      %v2643 = vpop.permute.xlu0 %2642
      %2644 = vrot.lane.b32.xlu0 %v2570, 16
      %v2645 = vpop.permute.xlu0 %2644
      %2646 = vrot.lane.b32.xlu0 %v2571, 16
      %v2647 = vpop.permute.xlu0 %2646
      %2648 = vrot.lane.b32.xlu0 %v2572, 16
      %v2649 = vpop.permute.xlu0 %2648
      %2650 = vrot.lane.b32.xlu0 %v2573, 16
      %v2651 = vpop.permute.xlu0 %2650
      %2652 = vrot.lane.b32.xlu0 %v2574, 16
      %v2653 = vpop.permute.xlu0 %2652
      %2654 = vrot.lane.b32.xlu0 %v2575, 16
      %v2655 = vpop.permute.xlu0 %2654
      %2656 = vrot.lane.b32.xlu0 %v2576, 16
      %v2657 = vpop.permute.xlu0 %2656
      %2658 = vrot.lane.b32.xlu0 %v2577, 16
      %v2659 = vpop.permute.xlu0 %2658
      %2660 = vrot.lane.b32.xlu0 %v2578, 16
      %v2661 = vpop.permute.xlu0 %2660
      %2662 = vrot.lane.b32.xlu0 %v2579, 16
      %v2663 = vpop.permute.xlu0 %2662
      %2664 = vrot.lane.b32.xlu0 %v2580, 16
      %v2665 = vpop.permute.xlu0 %2664
      %2666 = vrot.lane.b32.xlu0 %v2581, 16
      %v2667 = vpop.permute.xlu0 %2666
      %2668 = vrot.lane.b32.xlu0 %v2582, 16
      %v2669 = vpop.permute.xlu0 %2668
      %2670 = vrot.lane.b32.xlu0 %v2583, 16
      %v2671 = vpop.permute.xlu0 %2670
      %2672 = vrot.lane.b32.xlu0 %v2584, 16
      %v2673 = vpop.permute.xlu0 %2672
      %2674 = vrot.lane.b32.xlu0 %v2585, 16
      %v2675 = vpop.permute.xlu0 %2674
      %2676 = vrot.lane.b32.xlu0 %v2586, 16
      %v2677 = vpop.permute.xlu0 %2676
      %2678 = vrot.lane.b32.xlu0 %v2587, 16
      %v2679 = vpop.permute.xlu0 %2678
      %2680 = vrot.lane.b32.xlu0 %v2588, 16
      %v2681 = vpop.permute.xlu0 %2680
      %2682 = vrot.lane.b32.xlu0 %v2589, 16
      %v2683 = vpop.permute.xlu0 %2682
      %2684 = vrot.lane.b32.xlu0 %v2590, 16
      %v2685 = vpop.permute.xlu0 %2684
      %2686 = vrot.lane.b32.xlu0 %v2591, 16
      %v2687 = vpop.permute.xlu0 %2686
      %vm2720 = vcmask 261248
      %2721 = vst.msk [vmem:[#allocation4] sm:$0xff] %vm2720, %v2625
      %2722 = vst.msk [vmem:[#allocation4 + $0x10] sm:$0xff] %vm2720, %v2627
      %2723 = vst.msk [vmem:[#allocation4 + $0x20] sm:$0xff] %vm2720, %v2629
      %2724 = vst.msk [vmem:[#allocation4 + $0x30] sm:$0xff] %vm2720, %v2631
      %2725 = vst.msk [vmem:[#allocation4 + $0x40] sm:$0xff] %vm2720, %v2633
      %2726 = vst.msk [vmem:[#allocation4 + $0x50] sm:$0xff] %vm2720, %v2635
      %2727 = vst.msk [vmem:[#allocation4 + $0x60] sm:$0xff] %vm2720, %v2637
      %2728 = vst.msk [vmem:[#allocation4 + $0x70] sm:$0xff] %vm2720, %v2639
      %2729 = vst.msk [vmem:[#allocation4 + $0x80] sm:$0xff] %vm2720, %v2641
      %2730 = vst.msk [vmem:[#allocation4 + $0x90] sm:$0xff] %vm2720, %v2643
      %2731 = vst.msk [vmem:[#allocation4 + $0xa0] sm:$0xff] %vm2720, %v2645
      %2732 = vst.msk [vmem:[#allocation4 + $0xb0] sm:$0xff] %vm2720, %v2647
      %2733 = vst.msk [vmem:[#allocation4 + $0xc0] sm:$0xff] %vm2720, %v2649
      %2734 = vst.msk [vmem:[#allocation4 + $0xd0] sm:$0xff] %vm2720, %v2651
      %2735 = vst.msk [vmem:[#allocation4 + $0xe0] sm:$0xff] %vm2720, %v2653
      %2736 = vst.msk [vmem:[#allocation4 + $0xf0] sm:$0xff] %vm2720, %v2655
      %2737 = vst.msk [vmem:[#allocation4 + $0x100] sm:$0xff] %vm2720, %v2657
      %2738 = vst.msk [vmem:[#allocation4 + $0x110] sm:$0xff] %vm2720, %v2659
      %2739 = vst.msk [vmem:[#allocation4 + $0x120] sm:$0xff] %vm2720, %v2661
      %2740 = vst.msk [vmem:[#allocation4 + $0x130] sm:$0xff] %vm2720, %v2663
      %2741 = vst.msk [vmem:[#allocation4 + $0x140] sm:$0xff] %vm2720, %v2665
      %2742 = vst.msk [vmem:[#allocation4 + $0x150] sm:$0xff] %vm2720, %v2667
      %2743 = vst.msk [vmem:[#allocation4 + $0x160] sm:$0xff] %vm2720, %v2669
      %2744 = vst.msk [vmem:[#allocation4 + $0x170] sm:$0xff] %vm2720, %v2671
      %2745 = vst.msk [vmem:[#allocation4 + $0x180] sm:$0xff] %vm2720, %v2673
      %2746 = vst.msk [vmem:[#allocation4 + $0x190] sm:$0xff] %vm2720, %v2675
      %2747 = vst.msk [vmem:[#allocation4 + $0x1a0] sm:$0xff] %vm2720, %v2677
      %2748 = vst.msk [vmem:[#allocation4 + $0x1b0] sm:$0xff] %vm2720, %v2679
      %2749 = vst.msk [vmem:[#allocation4 + $0x1c0] sm:$0xff] %vm2720, %v2681
      %2750 = vst.msk [vmem:[#allocation4 + $0x1d0] sm:$0xff] %vm2720, %v2683
      %2751 = vst.msk [vmem:[#allocation4 + $0x1e0] sm:$0xff] %vm2720, %v2685
      %2752 = vst.msk [vmem:[#allocation4 + $0x1f0] sm:$0xff] %vm2720, %v2687
      %v2753 = vld [vmem:[#allocation3 + $0x2] sm:$0xff]
      %v2754 = vld [vmem:[#allocation3 + $0xa] sm:$0xff]
      %v2755 = vld [vmem:[#allocation3 + $0x1a] sm:$0xff]
      %v2756 = vld [vmem:[#allocation3 + $0x22] sm:$0xff]
      %v2757 = vld [vmem:[#allocation3 + $0x32] sm:$0xff]
      %v2758 = vld [vmem:[#allocation3 + $0x3a] sm:$0xff]
      %v2759 = vld [vmem:[#allocation3 + $0x4a] sm:$0xff]
      %v2760 = vld [vmem:[#allocation3 + $0x52] sm:$0xff]
      %v2761 = vld [vmem:[#allocation3 + $0x62] sm:$0xff]
      %v2762 = vld [vmem:[#allocation3 + $0x6a] sm:$0xff]
      %v2763 = vld [vmem:[#allocation3 + $0x7a] sm:$0xff]
      %v2764 = vld [vmem:[#allocation3 + $0x82] sm:$0xff]
      %v2765 = vld [vmem:[#allocation3 + $0x92] sm:$0xff]
      %v2766 = vld [vmem:[#allocation3 + $0x9a] sm:$0xff]
      %v2767 = vld [vmem:[#allocation3 + $0xaa] sm:$0xff]
      %v2768 = vld [vmem:[#allocation3 + $0xb2] sm:$0xff]
      %v2769 = vld [vmem:[#allocation3 + $0xc2] sm:$0xff]
      %v2770 = vld [vmem:[#allocation3 + $0xca] sm:$0xff]
      %v2771 = vld [vmem:[#allocation3 + $0xda] sm:$0xff]
      %v2772 = vld [vmem:[#allocation3 + $0xe2] sm:$0xff]
      %v2773 = vld [vmem:[#allocation3 + $0xf2] sm:$0xff]
      %v2774 = vld [vmem:[#allocation3 + $0xfa] sm:$0xff]
      %v2775 = vld [vmem:[#allocation3 + $0x10a] sm:$0xff]
      %v2776 = vld [vmem:[#allocation3 + $0x112] sm:$0xff]
      %v2777 = vld [vmem:[#allocation3 + $0x122] sm:$0xff]
      %v2778 = vld [vmem:[#allocation3 + $0x12a] sm:$0xff]
      %v2779 = vld [vmem:[#allocation3 + $0x13a] sm:$0xff]
      %v2780 = vld [vmem:[#allocation3 + $0x142] sm:$0xff]
      %v2781 = vld [vmem:[#allocation3 + $0x152] sm:$0xff]
      %v2782 = vld [vmem:[#allocation3 + $0x15a] sm:$0xff]
      %v2783 = vld [vmem:[#allocation3 + $0x16a] sm:$0xff]
      %v2784 = vld [vmem:[#allocation3 + $0x172] sm:$0xff]
      %2817 = vrot.lane.b32.xlu0 %v2753, 32
      %v2818 = vpop.permute.xlu0 %2817
      %2819 = vrot.lane.b32.xlu0 %v2754, 32
      %v2820 = vpop.permute.xlu0 %2819
      %2821 = vrot.lane.b32.xlu0 %v2755, 32
      %v2822 = vpop.permute.xlu0 %2821
      %2823 = vrot.lane.b32.xlu0 %v2756, 32
      %v2824 = vpop.permute.xlu0 %2823
      %2825 = vrot.lane.b32.xlu0 %v2757, 32
      %v2826 = vpop.permute.xlu0 %2825
      %2827 = vrot.lane.b32.xlu0 %v2758, 32
      %v2828 = vpop.permute.xlu0 %2827
      %2829 = vrot.lane.b32.xlu0 %v2759, 32
      %v2830 = vpop.permute.xlu0 %2829
      %2831 = vrot.lane.b32.xlu0 %v2760, 32
      %v2832 = vpop.permute.xlu0 %2831
      %2833 = vrot.lane.b32.xlu0 %v2761, 32
      %v2834 = vpop.permute.xlu0 %2833
      %2835 = vrot.lane.b32.xlu0 %v2762, 32
      %v2836 = vpop.permute.xlu0 %2835
      %2837 = vrot.lane.b32.xlu0 %v2763, 32
      %v2838 = vpop.permute.xlu0 %2837
      %2839 = vrot.lane.b32.xlu0 %v2764, 32
      %v2840 = vpop.permute.xlu0 %2839
      %2841 = vrot.lane.b32.xlu0 %v2765, 32
      %v2842 = vpop.permute.xlu0 %2841
      %2843 = vrot.lane.b32.xlu0 %v2766, 32
      %v2844 = vpop.permute.xlu0 %2843
      %2845 = vrot.lane.b32.xlu0 %v2767, 32
      %v2846 = vpop.permute.xlu0 %2845
      %2847 = vrot.lane.b32.xlu0 %v2768, 32
      %v2848 = vpop.permute.xlu0 %2847
      %2849 = vrot.lane.b32.xlu0 %v2769, 32
      %v2850 = vpop.permute.xlu0 %2849
      %2851 = vrot.lane.b32.xlu0 %v2770, 32
      %v2852 = vpop.permute.xlu0 %2851
      %2853 = vrot.lane.b32.xlu0 %v2771, 32
      %v2854 = vpop.permute.xlu0 %2853
      %2855 = vrot.lane.b32.xlu0 %v2772, 32
      %v2856 = vpop.permute.xlu0 %2855
      %2857 = vrot.lane.b32.xlu0 %v2773, 32
      %v2858 = vpop.permute.xlu0 %2857
      %2859 = vrot.lane.b32.xlu0 %v2774, 32
      %v2860 = vpop.permute.xlu0 %2859
      %2861 = vrot.lane.b32.xlu0 %v2775, 32
      %v2862 = vpop.permute.xlu0 %2861
      %2863 = vrot.lane.b32.xlu0 %v2776, 32
      %v2864 = vpop.permute.xlu0 %2863
      %2865 = vrot.lane.b32.xlu0 %v2777, 32
      %v2866 = vpop.permute.xlu0 %2865
      %2867 = vrot.lane.b32.xlu0 %v2778, 32
      %v2868 = vpop.permute.xlu0 %2867
      %2869 = vrot.lane.b32.xlu0 %v2779, 32
      %v2870 = vpop.permute.xlu0 %2869
      %2871 = vrot.lane.b32.xlu0 %v2780, 32
      %v2872 = vpop.permute.xlu0 %2871
      %2873 = vrot.lane.b32.xlu0 %v2781, 32
      %v2874 = vpop.permute.xlu0 %2873
      %2875 = vrot.lane.b32.xlu0 %v2782, 32
      %v2876 = vpop.permute.xlu0 %2875
      %2877 = vrot.lane.b32.xlu0 %v2783, 32
      %v2878 = vpop.permute.xlu0 %2877
      %2879 = vrot.lane.b32.xlu0 %v2784, 32
      %v2880 = vpop.permute.xlu0 %2879
      %vm2913 = vcmask 392448
      %2914 = vst.msk [vmem:[#allocation4] sm:$0xff] %vm2913, %v2818
      %2915 = vst.msk [vmem:[#allocation4 + $0x10] sm:$0xff] %vm2913, %v2820
      %2916 = vst.msk [vmem:[#allocation4 + $0x20] sm:$0xff] %vm2913, %v2822
      %2917 = vst.msk [vmem:[#allocation4 + $0x30] sm:$0xff] %vm2913, %v2824
      %2918 = vst.msk [vmem:[#allocation4 + $0x40] sm:$0xff] %vm2913, %v2826
      %2919 = vst.msk [vmem:[#allocation4 + $0x50] sm:$0xff] %vm2913, %v2828
      %2920 = vst.msk [vmem:[#allocation4 + $0x60] sm:$0xff] %vm2913, %v2830
      %2921 = vst.msk [vmem:[#allocation4 + $0x70] sm:$0xff] %vm2913, %v2832
      %2922 = vst.msk [vmem:[#allocation4 + $0x80] sm:$0xff] %vm2913, %v2834
      %2923 = vst.msk [vmem:[#allocation4 + $0x90] sm:$0xff] %vm2913, %v2836
      %2924 = vst.msk [vmem:[#allocation4 + $0xa0] sm:$0xff] %vm2913, %v2838
      %2925 = vst.msk [vmem:[#allocation4 + $0xb0] sm:$0xff] %vm2913, %v2840
      %2926 = vst.msk [vmem:[#allocation4 + $0xc0] sm:$0xff] %vm2913, %v2842
      %2927 = vst.msk [vmem:[#allocation4 + $0xd0] sm:$0xff] %vm2913, %v2844
      %2928 = vst.msk [vmem:[#allocation4 + $0xe0] sm:$0xff] %vm2913, %v2846
      %2929 = vst.msk [vmem:[#allocation4 + $0xf0] sm:$0xff] %vm2913, %v2848
      %2930 = vst.msk [vmem:[#allocation4 + $0x100] sm:$0xff] %vm2913, %v2850
      %2931 = vst.msk [vmem:[#allocation4 + $0x110] sm:$0xff] %vm2913, %v2852
      %2932 = vst.msk [vmem:[#allocation4 + $0x120] sm:$0xff] %vm2913, %v2854
      %2933 = vst.msk [vmem:[#allocation4 + $0x130] sm:$0xff] %vm2913, %v2856
      %2934 = vst.msk [vmem:[#allocation4 + $0x140] sm:$0xff] %vm2913, %v2858
      %2935 = vst.msk [vmem:[#allocation4 + $0x150] sm:$0xff] %vm2913, %v2860
      %2936 = vst.msk [vmem:[#allocation4 + $0x160] sm:$0xff] %vm2913, %v2862
      %2937 = vst.msk [vmem:[#allocation4 + $0x170] sm:$0xff] %vm2913, %v2864
      %2938 = vst.msk [vmem:[#allocation4 + $0x180] sm:$0xff] %vm2913, %v2866
      %2939 = vst.msk [vmem:[#allocation4 + $0x190] sm:$0xff] %vm2913, %v2868
      %2940 = vst.msk [vmem:[#allocation4 + $0x1a0] sm:$0xff] %vm2913, %v2870
      %2941 = vst.msk [vmem:[#allocation4 + $0x1b0] sm:$0xff] %vm2913, %v2872
      %2942 = vst.msk [vmem:[#allocation4 + $0x1c0] sm:$0xff] %vm2913, %v2874
      %2943 = vst.msk [vmem:[#allocation4 + $0x1d0] sm:$0xff] %vm2913, %v2876
      %2944 = vst.msk [vmem:[#allocation4 + $0x1e0] sm:$0xff] %vm2913, %v2878
      %2945 = vst.msk [vmem:[#allocation4 + $0x1f0] sm:$0xff] %vm2913, %v2880
      %v2946 = vld [vmem:[%s2444] sm:$0xff]
      %v2947 = vld [vmem:[%s2444 + $0x8] sm:$0xff]
      %v2948 = vld [vmem:[%s2444 + $0x18] sm:$0xff]
      %v2949 = vld [vmem:[%s2444 + $0x20] sm:$0xff]
      %v2950 = vld [vmem:[%s2444 + $0x30] sm:$0xff]
      %v2951 = vld [vmem:[%s2444 + $0x38] sm:$0xff]
      %v2952 = vld [vmem:[%s2444 + $0x48] sm:$0xff]
      %v2953 = vld [vmem:[%s2444 + $0x50] sm:$0xff]
      %v2954 = vld [vmem:[%s2444 + $0x60] sm:$0xff]
      %v2955 = vld [vmem:[%s2444 + $0x68] sm:$0xff]
      %v2956 = vld [vmem:[%s2444 + $0x78] sm:$0xff]
      %v2957 = vld [vmem:[%s2444 + $0x80] sm:$0xff]
      %v2958 = vld [vmem:[%s2444 + $0x90] sm:$0xff]
      %v2959 = vld [vmem:[%s2444 + $0x98] sm:$0xff]
      %v2960 = vld [vmem:[%s2444 + $0xa8] sm:$0xff]
      %v2961 = vld [vmem:[%s2444 + $0xb0] sm:$0xff]
      %v2962 = vld [vmem:[%s2444 + $0xc0] sm:$0xff]
      %v2963 = vld [vmem:[%s2444 + $0xc8] sm:$0xff]
      %v2964 = vld [vmem:[%s2444 + $0xd8] sm:$0xff]
      %v2965 = vld [vmem:[%s2444 + $0xe0] sm:$0xff]
      %v2966 = vld [vmem:[%s2444 + $0xf0] sm:$0xff]
      %v2967 = vld [vmem:[%s2444 + $0xf8] sm:$0xff]
      %v2968 = vld [vmem:[%s2444 + $0x108] sm:$0xff]
      %v2969 = vld [vmem:[%s2444 + $0x110] sm:$0xff]
      %v2970 = vld [vmem:[%s2444 + $0x120] sm:$0xff]
      %v2971 = vld [vmem:[%s2444 + $0x128] sm:$0xff]
      %v2972 = vld [vmem:[%s2444 + $0x138] sm:$0xff]
      %v2973 = vld [vmem:[%s2444 + $0x140] sm:$0xff]
      %v2974 = vld [vmem:[%s2444 + $0x150] sm:$0xff]
      %v2975 = vld [vmem:[%s2444 + $0x158] sm:$0xff]
      %v2976 = vld [vmem:[%s2444 + $0x168] sm:$0xff]
      %v2977 = vld [vmem:[%s2444 + $0x170] sm:$0xff]
      %3010 = vrot.lane.b32.xlu0 %v2946, 48
      %v3011 = vpop.permute.xlu0 %3010
      %3012 = vrot.lane.b32.xlu0 %v2947, 48
      %v3013 = vpop.permute.xlu0 %3012
      %3014 = vrot.lane.b32.xlu0 %v2948, 48
      %v3015 = vpop.permute.xlu0 %3014
      %3016 = vrot.lane.b32.xlu0 %v2949, 48
      %v3017 = vpop.permute.xlu0 %3016
      %3018 = vrot.lane.b32.xlu0 %v2950, 48
      %v3019 = vpop.permute.xlu0 %3018
      %3020 = vrot.lane.b32.xlu0 %v2951, 48
      %v3021 = vpop.permute.xlu0 %3020
      %3022 = vrot.lane.b32.xlu0 %v2952, 48
      %v3023 = vpop.permute.xlu0 %3022
      %3024 = vrot.lane.b32.xlu0 %v2953, 48
      %v3025 = vpop.permute.xlu0 %3024
      %3026 = vrot.lane.b32.xlu0 %v2954, 48
      %v3027 = vpop.permute.xlu0 %3026
      %3028 = vrot.lane.b32.xlu0 %v2955, 48
      %v3029 = vpop.permute.xlu0 %3028
      %3030 = vrot.lane.b32.xlu0 %v2956, 48
      %v3031 = vpop.permute.xlu0 %3030
      %3032 = vrot.lane.b32.xlu0 %v2957, 48
      %v3033 = vpop.permute.xlu0 %3032
      %3034 = vrot.lane.b32.xlu0 %v2958, 48
      %v3035 = vpop.permute.xlu0 %3034
      %3036 = vrot.lane.b32.xlu0 %v2959, 48
      %v3037 = vpop.permute.xlu0 %3036
      %3038 = vrot.lane.b32.xlu0 %v2960, 48
      %v3039 = vpop.permute.xlu0 %3038
      %3040 = vrot.lane.b32.xlu0 %v2961, 48
      %v3041 = vpop.permute.xlu0 %3040
      %3042 = vrot.lane.b32.xlu0 %v2962, 48
      %v3043 = vpop.permute.xlu0 %3042
      %3044 = vrot.lane.b32.xlu0 %v2963, 48
      %v3045 = vpop.permute.xlu0 %3044
      %3046 = vrot.lane.b32.xlu0 %v2964, 48
      %v3047 = vpop.permute.xlu0 %3046
      %3048 = vrot.lane.b32.xlu0 %v2965, 48
      %v3049 = vpop.permute.xlu0 %3048
      %3050 = vrot.lane.b32.xlu0 %v2966, 48
      %v3051 = vpop.permute.xlu0 %3050
      %3052 = vrot.lane.b32.xlu0 %v2967, 48
      %v3053 = vpop.permute.xlu0 %3052
      %3054 = vrot.lane.b32.xlu0 %v2968, 48
      %v3055 = vpop.permute.xlu0 %3054
      %3056 = vrot.lane.b32.xlu0 %v2969, 48
      %v3057 = vpop.permute.xlu0 %3056
      %3058 = vrot.lane.b32.xlu0 %v2970, 48
      %v3059 = vpop.permute.xlu0 %3058
      %3060 = vrot.lane.b32.xlu0 %v2971, 48
      %v3061 = vpop.permute.xlu0 %3060
      %3062 = vrot.lane.b32.xlu0 %v2972, 48
      %v3063 = vpop.permute.xlu0 %3062
      %3064 = vrot.lane.b32.xlu0 %v2973, 48
      %v3065 = vpop.permute.xlu0 %3064
      %3066 = vrot.lane.b32.xlu0 %v2974, 48
      %v3067 = vpop.permute.xlu0 %3066
      %3068 = vrot.lane.b32.xlu0 %v2975, 48
      %v3069 = vpop.permute.xlu0 %3068
      %3070 = vrot.lane.b32.xlu0 %v2976, 48
      %v3071 = vpop.permute.xlu0 %3070
      %3072 = vrot.lane.b32.xlu0 %v2977, 48
      %v3073 = vpop.permute.xlu0 %3072
      %vm3106 = vcmask 523648
      %3107 = vst.msk [vmem:[#allocation4] sm:$0xff] %vm3106, %v3011
      %3108 = vst.msk [vmem:[#allocation4 + $0x10] sm:$0xff] %vm3106, %v3013
      %3109 = vst.msk [vmem:[#allocation4 + $0x20] sm:$0xff] %vm3106, %v3015
      %3110 = vst.msk [vmem:[#allocation4 + $0x30] sm:$0xff] %vm3106, %v3017
      %3111 = vst.msk [vmem:[#allocation4 + $0x40] sm:$0xff] %vm3106, %v3019
      %3112 = vst.msk [vmem:[#allocation4 + $0x50] sm:$0xff] %vm3106, %v3021
      %3113 = vst.msk [vmem:[#allocation4 + $0x60] sm:$0xff] %vm3106, %v3023
      %3114 = vst.msk [vmem:[#allocation4 + $0x70] sm:$0xff] %vm3106, %v3025
      %3115 = vst.msk [vmem:[#allocation4 + $0x80] sm:$0xff] %vm3106, %v3027
      %3116 = vst.msk [vmem:[#allocation4 + $0x90] sm:$0xff] %vm3106, %v3029
      %3117 = vst.msk [vmem:[#allocation4 + $0xa0] sm:$0xff] %vm3106, %v3031
      %3118 = vst.msk [vmem:[#allocation4 + $0xb0] sm:$0xff] %vm3106, %v3033
      %3119 = vst.msk [vmem:[#allocation4 + $0xc0] sm:$0xff] %vm3106, %v3035
      %3120 = vst.msk [vmem:[#allocation4 + $0xd0] sm:$0xff] %vm3106, %v3037
      %3121 = vst.msk [vmem:[#allocation4 + $0xe0] sm:$0xff] %vm3106, %v3039
      %3122 = vst.msk [vmem:[#allocation4 + $0xf0] sm:$0xff] %vm3106, %v3041
      %3123 = vst.msk [vmem:[#allocation4 + $0x100] sm:$0xff] %vm3106, %v3043
      %3124 = vst.msk [vmem:[#allocation4 + $0x110] sm:$0xff] %vm3106, %v3045
      %3125 = vst.msk [vmem:[#allocation4 + $0x120] sm:$0xff] %vm3106, %v3047
      %3126 = vst.msk [vmem:[#allocation4 + $0x130] sm:$0xff] %vm3106, %v3049
      %3127 = vst.msk [vmem:[#allocation4 + $0x140] sm:$0xff] %vm3106, %v3051
      %3128 = vst.msk [vmem:[#allocation4 + $0x150] sm:$0xff] %vm3106, %v3053
      %3129 = vst.msk [vmem:[#allocation4 + $0x160] sm:$0xff] %vm3106, %v3055
      %3130 = vst.msk [vmem:[#allocation4 + $0x170] sm:$0xff] %vm3106, %v3057
      %3131 = vst.msk [vmem:[#allocation4 + $0x180] sm:$0xff] %vm3106, %v3059
      %3132 = vst.msk [vmem:[#allocation4 + $0x190] sm:$0xff] %vm3106, %v3061
      %3133 = vst.msk [vmem:[#allocation4 + $0x1a0] sm:$0xff] %vm3106, %v3063
      %3134 = vst.msk [vmem:[#allocation4 + $0x1b0] sm:$0xff] %vm3106, %v3065
      %3135 = vst.msk [vmem:[#allocation4 + $0x1c0] sm:$0xff] %vm3106, %v3067
      %3136 = vst.msk [vmem:[#allocation4 + $0x1d0] sm:$0xff] %vm3106, %v3069
      %3137 = vst.msk [vmem:[#allocation4 + $0x1e0] sm:$0xff] %vm3106, %v3071
      %3138 = vst.msk [vmem:[#allocation4 + $0x1f0] sm:$0xff] %vm3106, %v3073
      %v3139 = vld [vmem:[%s2444 + $0x1] sm:$0xff]
      %v3140 = vld [vmem:[%s2444 + $0x9] sm:$0xff]
      %v3141 = vld [vmem:[%s2444 + $0x19] sm:$0xff]
      %v3142 = vld [vmem:[%s2444 + $0x21] sm:$0xff]
      %v3143 = vld [vmem:[%s2444 + $0x31] sm:$0xff]
      %v3144 = vld [vmem:[%s2444 + $0x39] sm:$0xff]
      %v3145 = vld [vmem:[%s2444 + $0x49] sm:$0xff]
      %v3146 = vld [vmem:[%s2444 + $0x51] sm:$0xff]
      %v3147 = vld [vmem:[%s2444 + $0x61] sm:$0xff]
      %v3148 = vld [vmem:[%s2444 + $0x69] sm:$0xff]
      %v3149 = vld [vmem:[%s2444 + $0x79] sm:$0xff]
      %v3150 = vld [vmem:[%s2444 + $0x81] sm:$0xff]
      %v3151 = vld [vmem:[%s2444 + $0x91] sm:$0xff]
      %v3152 = vld [vmem:[%s2444 + $0x99] sm:$0xff]
      %v3153 = vld [vmem:[%s2444 + $0xa9] sm:$0xff]
      %v3154 = vld [vmem:[%s2444 + $0xb1] sm:$0xff]
      %v3155 = vld [vmem:[%s2444 + $0xc1] sm:$0xff]
      %v3156 = vld [vmem:[%s2444 + $0xc9] sm:$0xff]
      %v3157 = vld [vmem:[%s2444 + $0xd9] sm:$0xff]
      %v3158 = vld [vmem:[%s2444 + $0xe1] sm:$0xff]
      %v3159 = vld [vmem:[%s2444 + $0xf1] sm:$0xff]
      %v3160 = vld [vmem:[%s2444 + $0xf9] sm:$0xff]
      %v3161 = vld [vmem:[%s2444 + $0x109] sm:$0xff]
      %v3162 = vld [vmem:[%s2444 + $0x111] sm:$0xff]
      %v3163 = vld [vmem:[%s2444 + $0x121] sm:$0xff]
      %v3164 = vld [vmem:[%s2444 + $0x129] sm:$0xff]
      %v3165 = vld [vmem:[%s2444 + $0x139] sm:$0xff]
      %v3166 = vld [vmem:[%s2444 + $0x141] sm:$0xff]
      %v3167 = vld [vmem:[%s2444 + $0x151] sm:$0xff]
      %v3168 = vld [vmem:[%s2444 + $0x159] sm:$0xff]
      %v3169 = vld [vmem:[%s2444 + $0x169] sm:$0xff]
      %v3170 = vld [vmem:[%s2444 + $0x171] sm:$0xff]
      %3203 = vrot.lane.b32.xlu0 %v3139, 64
      %v3204 = vpop.permute.xlu0 %3203
      %3205 = vrot.lane.b32.xlu0 %v3140, 64
      %v3206 = vpop.permute.xlu0 %3205
      %3207 = vrot.lane.b32.xlu0 %v3141, 64
      %v3208 = vpop.permute.xlu0 %3207
      %3209 = vrot.lane.b32.xlu0 %v3142, 64
      %v3210 = vpop.permute.xlu0 %3209
      %3211 = vrot.lane.b32.xlu0 %v3143, 64
      %v3212 = vpop.permute.xlu0 %3211
      %3213 = vrot.lane.b32.xlu0 %v3144, 64
      %v3214 = vpop.permute.xlu0 %3213
      %3215 = vrot.lane.b32.xlu0 %v3145, 64
      %v3216 = vpop.permute.xlu0 %3215
      %3217 = vrot.lane.b32.xlu0 %v3146, 64
      %v3218 = vpop.permute.xlu0 %3217
      %3219 = vrot.lane.b32.xlu0 %v3147, 64
      %v3220 = vpop.permute.xlu0 %3219
      %3221 = vrot.lane.b32.xlu0 %v3148, 64
      %v3222 = vpop.permute.xlu0 %3221
      %3223 = vrot.lane.b32.xlu0 %v3149, 64
      %v3224 = vpop.permute.xlu0 %3223
      %3225 = vrot.lane.b32.xlu0 %v3150, 64
      %v3226 = vpop.permute.xlu0 %3225
      %3227 = vrot.lane.b32.xlu0 %v3151, 64
      %v3228 = vpop.permute.xlu0 %3227
      %3229 = vrot.lane.b32.xlu0 %v3152, 64
      %v3230 = vpop.permute.xlu0 %3229
      %3231 = vrot.lane.b32.xlu0 %v3153, 64
      %v3232 = vpop.permute.xlu0 %3231
      %3233 = vrot.lane.b32.xlu0 %v3154, 64
      %v3234 = vpop.permute.xlu0 %3233
      %3235 = vrot.lane.b32.xlu0 %v3155, 64
      %v3236 = vpop.permute.xlu0 %3235
      %3237 = vrot.lane.b32.xlu0 %v3156, 64
      %v3238 = vpop.permute.xlu0 %3237
      %3239 = vrot.lane.b32.xlu0 %v3157, 64
      %v3240 = vpop.permute.xlu0 %3239
      %3241 = vrot.lane.b32.xlu0 %v3158, 64
      %v3242 = vpop.permute.xlu0 %3241
      %3243 = vrot.lane.b32.xlu0 %v3159, 64
      %v3244 = vpop.permute.xlu0 %3243
      %3245 = vrot.lane.b32.xlu0 %v3160, 64
      %v3246 = vpop.permute.xlu0 %3245
      %3247 = vrot.lane.b32.xlu0 %v3161, 64
      %v3248 = vpop.permute.xlu0 %3247
      %3249 = vrot.lane.b32.xlu0 %v3162, 64
      %v3250 = vpop.permute.xlu0 %3249
      %3251 = vrot.lane.b32.xlu0 %v3163, 64
      %v3252 = vpop.permute.xlu0 %3251
      %3253 = vrot.lane.b32.xlu0 %v3164, 64
      %v3254 = vpop.permute.xlu0 %3253
      %3255 = vrot.lane.b32.xlu0 %v3165, 64
      %v3256 = vpop.permute.xlu0 %3255
      %3257 = vrot.lane.b32.xlu0 %v3166, 64
      %v3258 = vpop.permute.xlu0 %3257
      %3259 = vrot.lane.b32.xlu0 %v3167, 64
      %v3260 = vpop.permute.xlu0 %3259
      %3261 = vrot.lane.b32.xlu0 %v3168, 64
      %v3262 = vpop.permute.xlu0 %3261
      %3263 = vrot.lane.b32.xlu0 %v3169, 64
      %v3264 = vpop.permute.xlu0 %3263
      %3265 = vrot.lane.b32.xlu0 %v3170, 64
      %v3266 = vpop.permute.xlu0 %3265
      %vm3299 = vcmask 654848
      %3300 = vst.msk [vmem:[#allocation4] sm:$0xff] %vm3299, %v3204
      %3301 = vst.msk [vmem:[#allocation4 + $0x10] sm:$0xff] %vm3299, %v3206
      %3302 = vst.msk [vmem:[#allocation4 + $0x20] sm:$0xff] %vm3299, %v3208
      %3303 = vst.msk [vmem:[#allocation4 + $0x30] sm:$0xff] %vm3299, %v3210
      %3304 = vst.msk [vmem:[#allocation4 + $0x40] sm:$0xff] %vm3299, %v3212
      %3305 = vst.msk [vmem:[#allocation4 + $0x50] sm:$0xff] %vm3299, %v3214
      %3306 = vst.msk [vmem:[#allocation4 + $0x60] sm:$0xff] %vm3299, %v3216
      %3307 = vst.msk [vmem:[#allocation4 + $0x70] sm:$0xff] %vm3299, %v3218
      %3308 = vst.msk [vmem:[#allocation4 + $0x80] sm:$0xff] %vm3299, %v3220
      %3309 = vst.msk [vmem:[#allocation4 + $0x90] sm:$0xff] %vm3299, %v3222
      %3310 = vst.msk [vmem:[#allocation4 + $0xa0] sm:$0xff] %vm3299, %v3224
      %3311 = vst.msk [vmem:[#allocation4 + $0xb0] sm:$0xff] %vm3299, %v3226
      %3312 = vst.msk [vmem:[#allocation4 + $0xc0] sm:$0xff] %vm3299, %v3228
      %3313 = vst.msk [vmem:[#allocation4 + $0xd0] sm:$0xff] %vm3299, %v3230
      %3314 = vst.msk [vmem:[#allocation4 + $0xe0] sm:$0xff] %vm3299, %v3232
      %3315 = vst.msk [vmem:[#allocation4 + $0xf0] sm:$0xff] %vm3299, %v3234
      %3316 = vst.msk [vmem:[#allocation4 + $0x100] sm:$0xff] %vm3299, %v3236
      %3317 = vst.msk [vmem:[#allocation4 + $0x110] sm:$0xff] %vm3299, %v3238
      %3318 = vst.msk [vmem:[#allocation4 + $0x120] sm:$0xff] %vm3299, %v3240
      %3319 = vst.msk [vmem:[#allocation4 + $0x130] sm:$0xff] %vm3299, %v3242
      %3320 = vst.msk [vmem:[#allocation4 + $0x140] sm:$0xff] %vm3299, %v3244
      %3321 = vst.msk [vmem:[#allocation4 + $0x150] sm:$0xff] %vm3299, %v3246
      %3322 = vst.msk [vmem:[#allocation4 + $0x160] sm:$0xff] %vm3299, %v3248
      %3323 = vst.msk [vmem:[#allocation4 + $0x170] sm:$0xff] %vm3299, %v3250
      %3324 = vst.msk [vmem:[#allocation4 + $0x180] sm:$0xff] %vm3299, %v3252
      %3325 = vst.msk [vmem:[#allocation4 + $0x190] sm:$0xff] %vm3299, %v3254
      %3326 = vst.msk [vmem:[#allocation4 + $0x1a0] sm:$0xff] %vm3299, %v3256
      %3327 = vst.msk [vmem:[#allocation4 + $0x1b0] sm:$0xff] %vm3299, %v3258
      %3328 = vst.msk [vmem:[#allocation4 + $0x1c0] sm:$0xff] %vm3299, %v3260
      %3329 = vst.msk [vmem:[#allocation4 + $0x1d0] sm:$0xff] %vm3299, %v3262
      %3330 = vst.msk [vmem:[#allocation4 + $0x1e0] sm:$0xff] %vm3299, %v3264
      %3331 = vst.msk [vmem:[#allocation4 + $0x1f0] sm:$0xff] %vm3299, %v3266
      %v3332 = vld [vmem:[%s2444 + $0x2] sm:$0xff]
      %v3333 = vld [vmem:[%s2444 + $0xa] sm:$0xff]
      %v3334 = vld [vmem:[%s2444 + $0x1a] sm:$0xff]
      %v3335 = vld [vmem:[%s2444 + $0x22] sm:$0xff]
      %v3336 = vld [vmem:[%s2444 + $0x32] sm:$0xff]
      %v3337 = vld [vmem:[%s2444 + $0x3a] sm:$0xff]
      %v3338 = vld [vmem:[%s2444 + $0x4a] sm:$0xff]
      %v3339 = vld [vmem:[%s2444 + $0x52] sm:$0xff]
      %v3340 = vld [vmem:[%s2444 + $0x62] sm:$0xff]
      %v3341 = vld [vmem:[%s2444 + $0x6a] sm:$0xff]
      %v3342 = vld [vmem:[%s2444 + $0x7a] sm:$0xff]
      %v3343 = vld [vmem:[%s2444 + $0x82] sm:$0xff]
      %v3344 = vld [vmem:[%s2444 + $0x92] sm:$0xff]
      %v3345 = vld [vmem:[%s2444 + $0x9a] sm:$0xff]
      %v3346 = vld [vmem:[%s2444 + $0xaa] sm:$0xff]
      %v3347 = vld [vmem:[%s2444 + $0xb2] sm:$0xff]
      %v3348 = vld [vmem:[%s2444 + $0xc2] sm:$0xff]
      %v3349 = vld [vmem:[%s2444 + $0xca] sm:$0xff]
      %v3350 = vld [vmem:[%s2444 + $0xda] sm:$0xff]
      %v3351 = vld [vmem:[%s2444 + $0xe2] sm:$0xff]
      %v3352 = vld [vmem:[%s2444 + $0xf2] sm:$0xff]
      %v3353 = vld [vmem:[%s2444 + $0xfa] sm:$0xff]
      %v3354 = vld [vmem:[%s2444 + $0x10a] sm:$0xff]
      %v3355 = vld [vmem:[%s2444 + $0x112] sm:$0xff]
      %v3356 = vld [vmem:[%s2444 + $0x122] sm:$0xff]
      %v3357 = vld [vmem:[%s2444 + $0x12a] sm:$0xff]
      %v3358 = vld [vmem:[%s2444 + $0x13a] sm:$0xff]
      %v3359 = vld [vmem:[%s2444 + $0x142] sm:$0xff]
      %v3360 = vld [vmem:[%s2444 + $0x152] sm:$0xff]
      %v3361 = vld [vmem:[%s2444 + $0x15a] sm:$0xff]
      %v3362 = vld [vmem:[%s2444 + $0x16a] sm:$0xff]
      %v3363 = vld [vmem:[%s2444 + $0x172] sm:$0xff]
      %3396 = vrot.lane.b32.xlu0 %v3332, 80
      %v3397 = vpop.permute.xlu0 %3396
      %3398 = vrot.lane.b32.xlu0 %v3333, 80
      %v3399 = vpop.permute.xlu0 %3398
      %3400 = vrot.lane.b32.xlu0 %v3334, 80
      %v3401 = vpop.permute.xlu0 %3400
      %3402 = vrot.lane.b32.xlu0 %v3335, 80
      %v3403 = vpop.permute.xlu0 %3402
      %3404 = vrot.lane.b32.xlu0 %v3336, 80
      %v3405 = vpop.permute.xlu0 %3404
      %3406 = vrot.lane.b32.xlu0 %v3337, 80
      %v3407 = vpop.permute.xlu0 %3406
      %3408 = vrot.lane.b32.xlu0 %v3338, 80
      %v3409 = vpop.permute.xlu0 %3408
      %3410 = vrot.lane.b32.xlu0 %v3339, 80
      %v3411 = vpop.permute.xlu0 %3410
      %3412 = vrot.lane.b32.xlu0 %v3340, 80
      %v3413 = vpop.permute.xlu0 %3412
      %3414 = vrot.lane.b32.xlu0 %v3341, 80
      %v3415 = vpop.permute.xlu0 %3414
      %3416 = vrot.lane.b32.xlu0 %v3342, 80
      %v3417 = vpop.permute.xlu0 %3416
      %3418 = vrot.lane.b32.xlu0 %v3343, 80
      %v3419 = vpop.permute.xlu0 %3418
      %3420 = vrot.lane.b32.xlu0 %v3344, 80
      %v3421 = vpop.permute.xlu0 %3420
      %3422 = vrot.lane.b32.xlu0 %v3345, 80
      %v3423 = vpop.permute.xlu0 %3422
      %3424 = vrot.lane.b32.xlu0 %v3346, 80
      %v3425 = vpop.permute.xlu0 %3424
      %3426 = vrot.lane.b32.xlu0 %v3347, 80
      %v3427 = vpop.permute.xlu0 %3426
      %3428 = vrot.lane.b32.xlu0 %v3348, 80
      %v3429 = vpop.permute.xlu0 %3428
      %3430 = vrot.lane.b32.xlu0 %v3349, 80
      %v3431 = vpop.permute.xlu0 %3430
      %3432 = vrot.lane.b32.xlu0 %v3350, 80
      %v3433 = vpop.permute.xlu0 %3432
      %3434 = vrot.lane.b32.xlu0 %v3351, 80
      %v3435 = vpop.permute.xlu0 %3434
      %3436 = vrot.lane.b32.xlu0 %v3352, 80
      %v3437 = vpop.permute.xlu0 %3436
      %3438 = vrot.lane.b32.xlu0 %v3353, 80
      %v3439 = vpop.permute.xlu0 %3438
      %3440 = vrot.lane.b32.xlu0 %v3354, 80
      %v3441 = vpop.permute.xlu0 %3440
      %3442 = vrot.lane.b32.xlu0 %v3355, 80
      %v3443 = vpop.permute.xlu0 %3442
      %3444 = vrot.lane.b32.xlu0 %v3356, 80
      %v3445 = vpop.permute.xlu0 %3444
      %3446 = vrot.lane.b32.xlu0 %v3357, 80
      %v3447 = vpop.permute.xlu0 %3446
      %3448 = vrot.lane.b32.xlu0 %v3358, 80
      %v3449 = vpop.permute.xlu0 %3448
      %3450 = vrot.lane.b32.xlu0 %v3359, 80
      %v3451 = vpop.permute.xlu0 %3450
      %3452 = vrot.lane.b32.xlu0 %v3360, 80
      %v3453 = vpop.permute.xlu0 %3452
      %3454 = vrot.lane.b32.xlu0 %v3361, 80
      %v3455 = vpop.permute.xlu0 %3454
      %3456 = vrot.lane.b32.xlu0 %v3362, 80
      %v3457 = vpop.permute.xlu0 %3456
      %3458 = vrot.lane.b32.xlu0 %v3363, 80
      %v3459 = vpop.permute.xlu0 %3458
      %vm3492 = vcmask 786048
      %3493 = vst.msk [vmem:[#allocation4] sm:$0xff] %vm3492, %v3397
      %3494 = vst.msk [vmem:[#allocation4 + $0x10] sm:$0xff] %vm3492, %v3399
      %3495 = vst.msk [vmem:[#allocation4 + $0x20] sm:$0xff] %vm3492, %v3401
      %3496 = vst.msk [vmem:[#allocation4 + $0x30] sm:$0xff] %vm3492, %v3403
      %3497 = vst.msk [vmem:[#allocation4 + $0x40] sm:$0xff] %vm3492, %v3405
      %3498 = vst.msk [vmem:[#allocation4 + $0x50] sm:$0xff] %vm3492, %v3407
      %3499 = vst.msk [vmem:[#allocation4 + $0x60] sm:$0xff] %vm3492, %v3409
      %3500 = vst.msk [vmem:[#allocation4 + $0x70] sm:$0xff] %vm3492, %v3411
      %3501 = vst.msk [vmem:[#allocation4 + $0x80] sm:$0xff] %vm3492, %v3413
      %3502 = vst.msk [vmem:[#allocation4 + $0x90] sm:$0xff] %vm3492, %v3415
      %3503 = vst.msk [vmem:[#allocation4 + $0xa0] sm:$0xff] %vm3492, %v3417
      %3504 = vst.msk [vmem:[#allocation4 + $0xb0] sm:$0xff] %vm3492, %v3419
      %3505 = vst.msk [vmem:[#allocation4 + $0xc0] sm:$0xff] %vm3492, %v3421
      %3506 = vst.msk [vmem:[#allocation4 + $0xd0] sm:$0xff] %vm3492, %v3423
      %3507 = vst.msk [vmem:[#allocation4 + $0xe0] sm:$0xff] %vm3492, %v3425
      %3508 = vst.msk [vmem:[#allocation4 + $0xf0] sm:$0xff] %vm3492, %v3427
      %3509 = vst.msk [vmem:[#allocation4 + $0x100] sm:$0xff] %vm3492, %v3429
      %3510 = vst.msk [vmem:[#allocation4 + $0x110] sm:$0xff] %vm3492, %v3431
      %3511 = vst.msk [vmem:[#allocation4 + $0x120] sm:$0xff] %vm3492, %v3433
      %3512 = vst.msk [vmem:[#allocation4 + $0x130] sm:$0xff] %vm3492, %v3435
      %3513 = vst.msk [vmem:[#allocation4 + $0x140] sm:$0xff] %vm3492, %v3437
      %3514 = vst.msk [vmem:[#allocation4 + $0x150] sm:$0xff] %vm3492, %v3439
      %3515 = vst.msk [vmem:[#allocation4 + $0x160] sm:$0xff] %vm3492, %v3441
      %3516 = vst.msk [vmem:[#allocation4 + $0x170] sm:$0xff] %vm3492, %v3443
      %3517 = vst.msk [vmem:[#allocation4 + $0x180] sm:$0xff] %vm3492, %v3445
      %3518 = vst.msk [vmem:[#allocation4 + $0x190] sm:$0xff] %vm3492, %v3447
      %3519 = vst.msk [vmem:[#allocation4 + $0x1a0] sm:$0xff] %vm3492, %v3449
      %3520 = vst.msk [vmem:[#allocation4 + $0x1b0] sm:$0xff] %vm3492, %v3451
      %3521 = vst.msk [vmem:[#allocation4 + $0x1c0] sm:$0xff] %vm3492, %v3453
      %3522 = vst.msk [vmem:[#allocation4 + $0x1d0] sm:$0xff] %vm3492, %v3455
      %3523 = vst.msk [vmem:[#allocation4 + $0x1e0] sm:$0xff] %vm3492, %v3457
      %3524 = vst.msk [vmem:[#allocation4 + $0x1f0] sm:$0xff] %vm3492, %v3459
      %s3525 = scalar_lea.vmem [#allocation3], 48
      %v3526 = vld [vmem:[%s3525] sm:$0xff]
      %v3527 = vld [vmem:[%s3525 + $0x8] sm:$0xff]
      %v3528 = vld [vmem:[%s3525 + $0x18] sm:$0xff]
      %v3529 = vld [vmem:[%s3525 + $0x20] sm:$0xff]
      %v3530 = vld [vmem:[%s3525 + $0x30] sm:$0xff]
      %v3531 = vld [vmem:[%s3525 + $0x38] sm:$0xff]
      %v3532 = vld [vmem:[%s3525 + $0x48] sm:$0xff]
      %v3533 = vld [vmem:[%s3525 + $0x50] sm:$0xff]
      %v3534 = vld [vmem:[%s3525 + $0x60] sm:$0xff]
      %v3535 = vld [vmem:[%s3525 + $0x68] sm:$0xff]
      %v3536 = vld [vmem:[%s3525 + $0x78] sm:$0xff]
      %v3537 = vld [vmem:[%s3525 + $0x80] sm:$0xff]
      %v3538 = vld [vmem:[%s3525 + $0x90] sm:$0xff]
      %v3539 = vld [vmem:[%s3525 + $0x98] sm:$0xff]
      %v3540 = vld [vmem:[%s3525 + $0xa8] sm:$0xff]
      %v3541 = vld [vmem:[%s3525 + $0xb0] sm:$0xff]
      %v3542 = vld [vmem:[%s3525 + $0xc0] sm:$0xff]
      %v3543 = vld [vmem:[%s3525 + $0xc8] sm:$0xff]
      %v3544 = vld [vmem:[%s3525 + $0xd8] sm:$0xff]
      %v3545 = vld [vmem:[%s3525 + $0xe0] sm:$0xff]
      %v3546 = vld [vmem:[%s3525 + $0xf0] sm:$0xff]
      %v3547 = vld [vmem:[%s3525 + $0xf8] sm:$0xff]
      %v3548 = vld [vmem:[%s3525 + $0x108] sm:$0xff]
      %v3549 = vld [vmem:[%s3525 + $0x110] sm:$0xff]
      %v3550 = vld [vmem:[%s3525 + $0x120] sm:$0xff]
      %v3551 = vld [vmem:[%s3525 + $0x128] sm:$0xff]
      %v3552 = vld [vmem:[%s3525 + $0x138] sm:$0xff]
      %v3553 = vld [vmem:[%s3525 + $0x140] sm:$0xff]
      %v3554 = vld [vmem:[%s3525 + $0x150] sm:$0xff]
      %v3555 = vld [vmem:[%s3525 + $0x158] sm:$0xff]
      %v3556 = vld [vmem:[%s3525 + $0x168] sm:$0xff]
      %v3557 = vld [vmem:[%s3525 + $0x170] sm:$0xff]
      %3590 = vrot.lane.b32.xlu0 %v3526, 96
      %v3591 = vpop.permute.xlu0 %3590
      %3592 = vrot.lane.b32.xlu0 %v3527, 96
      %v3593 = vpop.permute.xlu0 %3592
      %3594 = vrot.lane.b32.xlu0 %v3528, 96
      %v3595 = vpop.permute.xlu0 %3594
      %3596 = vrot.lane.b32.xlu0 %v3529, 96
      %v3597 = vpop.permute.xlu0 %3596
      %3598 = vrot.lane.b32.xlu0 %v3530, 96
      %v3599 = vpop.permute.xlu0 %3598
      %3600 = vrot.lane.b32.xlu0 %v3531, 96
      %v3601 = vpop.permute.xlu0 %3600
      %3602 = vrot.lane.b32.xlu0 %v3532, 96
      %v3603 = vpop.permute.xlu0 %3602
      %3604 = vrot.lane.b32.xlu0 %v3533, 96
      %v3605 = vpop.permute.xlu0 %3604
      %3606 = vrot.lane.b32.xlu0 %v3534, 96
      %v3607 = vpop.permute.xlu0 %3606
      %3608 = vrot.lane.b32.xlu0 %v3535, 96
      %v3609 = vpop.permute.xlu0 %3608
      %3610 = vrot.lane.b32.xlu0 %v3536, 96
      %v3611 = vpop.permute.xlu0 %3610
      %3612 = vrot.lane.b32.xlu0 %v3537, 96
      %v3613 = vpop.permute.xlu0 %3612
      %3614 = vrot.lane.b32.xlu0 %v3538, 96
      %v3615 = vpop.permute.xlu0 %3614
      %3616 = vrot.lane.b32.xlu0 %v3539, 96
      %v3617 = vpop.permute.xlu0 %3616
      %3618 = vrot.lane.b32.xlu0 %v3540, 96
      %v3619 = vpop.permute.xlu0 %3618
      %3620 = vrot.lane.b32.xlu0 %v3541, 96
      %v3621 = vpop.permute.xlu0 %3620
      %3622 = vrot.lane.b32.xlu0 %v3542, 96
      %v3623 = vpop.permute.xlu0 %3622
      %3624 = vrot.lane.b32.xlu0 %v3543, 96
      %v3625 = vpop.permute.xlu0 %3624
      %3626 = vrot.lane.b32.xlu0 %v3544, 96
      %v3627 = vpop.permute.xlu0 %3626
      %3628 = vrot.lane.b32.xlu0 %v3545, 96
      %v3629 = vpop.permute.xlu0 %3628
      %3630 = vrot.lane.b32.xlu0 %v3546, 96
      %v3631 = vpop.permute.xlu0 %3630
      %3632 = vrot.lane.b32.xlu0 %v3547, 96
      %v3633 = vpop.permute.xlu0 %3632
      %3634 = vrot.lane.b32.xlu0 %v3548, 96
      %v3635 = vpop.permute.xlu0 %3634
      %3636 = vrot.lane.b32.xlu0 %v3549, 96
      %v3637 = vpop.permute.xlu0 %3636
      %3638 = vrot.lane.b32.xlu0 %v3550, 96
      %v3639 = vpop.permute.xlu0 %3638
      %3640 = vrot.lane.b32.xlu0 %v3551, 96
      %v3641 = vpop.permute.xlu0 %3640
      %3642 = vrot.lane.b32.xlu0 %v3552, 96
      %v3643 = vpop.permute.xlu0 %3642
      %3644 = vrot.lane.b32.xlu0 %v3553, 96
      %v3645 = vpop.permute.xlu0 %3644
      %3646 = vrot.lane.b32.xlu0 %v3554, 96
      %v3647 = vpop.permute.xlu0 %3646
      %3648 = vrot.lane.b32.xlu0 %v3555, 96
      %v3649 = vpop.permute.xlu0 %3648
      %3650 = vrot.lane.b32.xlu0 %v3556, 96
      %v3651 = vpop.permute.xlu0 %3650
      %3652 = vrot.lane.b32.xlu0 %v3557, 96
      %v3653 = vpop.permute.xlu0 %3652
      %vm3686 = vcmask 917248
      %3687 = vst.msk [vmem:[#allocation4] sm:$0xff] %vm3686, %v3591
      %3688 = vst.msk [vmem:[#allocation4 + $0x10] sm:$0xff] %vm3686, %v3593
      %3689 = vst.msk [vmem:[#allocation4 + $0x20] sm:$0xff] %vm3686, %v3595
      %3690 = vst.msk [vmem:[#allocation4 + $0x30] sm:$0xff] %vm3686, %v3597
      %3691 = vst.msk [vmem:[#allocation4 + $0x40] sm:$0xff] %vm3686, %v3599
      %3692 = vst.msk [vmem:[#allocation4 + $0x50] sm:$0xff] %vm3686, %v3601
      %3693 = vst.msk [vmem:[#allocation4 + $0x60] sm:$0xff] %vm3686, %v3603
      %3694 = vst.msk [vmem:[#allocation4 + $0x70] sm:$0xff] %vm3686, %v3605
      %3695 = vst.msk [vmem:[#allocation4 + $0x80] sm:$0xff] %vm3686, %v3607
      %3696 = vst.msk [vmem:[#allocation4 + $0x90] sm:$0xff] %vm3686, %v3609
      %3697 = vst.msk [vmem:[#allocation4 + $0xa0] sm:$0xff] %vm3686, %v3611
      %3698 = vst.msk [vmem:[#allocation4 + $0xb0] sm:$0xff] %vm3686, %v3613
      %3699 = vst.msk [vmem:[#allocation4 + $0xc0] sm:$0xff] %vm3686, %v3615
      %3700 = vst.msk [vmem:[#allocation4 + $0xd0] sm:$0xff] %vm3686, %v3617
      %3701 = vst.msk [vmem:[#allocation4 + $0xe0] sm:$0xff] %vm3686, %v3619
      %3702 = vst.msk [vmem:[#allocation4 + $0xf0] sm:$0xff] %vm3686, %v3621
      %3703 = vst.msk [vmem:[#allocation4 + $0x100] sm:$0xff] %vm3686, %v3623
      %3704 = vst.msk [vmem:[#allocation4 + $0x110] sm:$0xff] %vm3686, %v3625
      %3705 = vst.msk [vmem:[#allocation4 + $0x120] sm:$0xff] %vm3686, %v3627
      %3706 = vst.msk [vmem:[#allocation4 + $0x130] sm:$0xff] %vm3686, %v3629
      %3707 = vst.msk [vmem:[#allocation4 + $0x140] sm:$0xff] %vm3686, %v3631
      %3708 = vst.msk [vmem:[#allocation4 + $0x150] sm:$0xff] %vm3686, %v3633
      %3709 = vst.msk [vmem:[#allocation4 + $0x160] sm:$0xff] %vm3686, %v3635
      %3710 = vst.msk [vmem:[#allocation4 + $0x170] sm:$0xff] %vm3686, %v3637
      %3711 = vst.msk [vmem:[#allocation4 + $0x180] sm:$0xff] %vm3686, %v3639
      %3712 = vst.msk [vmem:[#allocation4 + $0x190] sm:$0xff] %vm3686, %v3641
      %3713 = vst.msk [vmem:[#allocation4 + $0x1a0] sm:$0xff] %vm3686, %v3643
      %3714 = vst.msk [vmem:[#allocation4 + $0x1b0] sm:$0xff] %vm3686, %v3645
      %3715 = vst.msk [vmem:[#allocation4 + $0x1c0] sm:$0xff] %vm3686, %v3647
      %3716 = vst.msk [vmem:[#allocation4 + $0x1d0] sm:$0xff] %vm3686, %v3649
      %3717 = vst.msk [vmem:[#allocation4 + $0x1e0] sm:$0xff] %vm3686, %v3651
      %3718 = vst.msk [vmem:[#allocation4 + $0x1f0] sm:$0xff] %vm3686, %v3653
      %v3719 = vld [vmem:[%s3525 + $0x1] sm:$0xff]
      %v3720 = vld [vmem:[%s3525 + $0x9] sm:$0xff]
      %v3721 = vld [vmem:[%s3525 + $0x19] sm:$0xff]
      %v3722 = vld [vmem:[%s3525 + $0x21] sm:$0xff]
      %v3723 = vld [vmem:[%s3525 + $0x31] sm:$0xff]
      %v3724 = vld [vmem:[%s3525 + $0x39] sm:$0xff]
      %v3725 = vld [vmem:[%s3525 + $0x49] sm:$0xff]
      %v3726 = vld [vmem:[%s3525 + $0x51] sm:$0xff]
      %v3727 = vld [vmem:[%s3525 + $0x61] sm:$0xff]
      %v3728 = vld [vmem:[%s3525 + $0x69] sm:$0xff]
      %v3729 = vld [vmem:[%s3525 + $0x79] sm:$0xff]
      %v3730 = vld [vmem:[%s3525 + $0x81] sm:$0xff]
      %v3731 = vld [vmem:[%s3525 + $0x91] sm:$0xff]
      %v3732 = vld [vmem:[%s3525 + $0x99] sm:$0xff]
      %v3733 = vld [vmem:[%s3525 + $0xa9] sm:$0xff]
      %v3734 = vld [vmem:[%s3525 + $0xb1] sm:$0xff]
      %v3735 = vld [vmem:[%s3525 + $0xc1] sm:$0xff]
      %v3736 = vld [vmem:[%s3525 + $0xc9] sm:$0xff]
      %v3737 = vld [vmem:[%s3525 + $0xd9] sm:$0xff]
      %v3738 = vld [vmem:[%s3525 + $0xe1] sm:$0xff]
      %v3739 = vld [vmem:[%s3525 + $0xf1] sm:$0xff]
      %v3740 = vld [vmem:[%s3525 + $0xf9] sm:$0xff]
      %v3741 = vld [vmem:[%s3525 + $0x109] sm:$0xff]
      %v3742 = vld [vmem:[%s3525 + $0x111] sm:$0xff]
      %v3743 = vld [vmem:[%s3525 + $0x121] sm:$0xff]
      %v3744 = vld [vmem:[%s3525 + $0x129] sm:$0xff]
      %v3745 = vld [vmem:[%s3525 + $0x139] sm:$0xff]
      %v3746 = vld [vmem:[%s3525 + $0x141] sm:$0xff]
      %v3747 = vld [vmem:[%s3525 + $0x151] sm:$0xff]
      %v3748 = vld [vmem:[%s3525 + $0x159] sm:$0xff]
      %v3749 = vld [vmem:[%s3525 + $0x169] sm:$0xff]
      %v3750 = vld [vmem:[%s3525 + $0x171] sm:$0xff]
      %3783 = vrot.lane.b32.xlu0 %v3719, 112
      %v3784 = vpop.permute.xlu0 %3783
      %3785 = vrot.lane.b32.xlu0 %v3720, 112
      %v3786 = vpop.permute.xlu0 %3785
      %3787 = vrot.lane.b32.xlu0 %v3721, 112
      %v3788 = vpop.permute.xlu0 %3787
      %3789 = vrot.lane.b32.xlu0 %v3722, 112
      %v3790 = vpop.permute.xlu0 %3789
      %3791 = vrot.lane.b32.xlu0 %v3723, 112
      %v3792 = vpop.permute.xlu0 %3791
      %3793 = vrot.lane.b32.xlu0 %v3724, 112
      %v3794 = vpop.permute.xlu0 %3793
      %3795 = vrot.lane.b32.xlu0 %v3725, 112
      %v3796 = vpop.permute.xlu0 %3795
      %3797 = vrot.lane.b32.xlu0 %v3726, 112
      %v3798 = vpop.permute.xlu0 %3797
      %3799 = vrot.lane.b32.xlu0 %v3727, 112
      %v3800 = vpop.permute.xlu0 %3799
      %3801 = vrot.lane.b32.xlu0 %v3728, 112
      %v3802 = vpop.permute.xlu0 %3801
      %3803 = vrot.lane.b32.xlu0 %v3729, 112
      %v3804 = vpop.permute.xlu0 %3803
      %3805 = vrot.lane.b32.xlu0 %v3730, 112
      %v3806 = vpop.permute.xlu0 %3805
      %3807 = vrot.lane.b32.xlu0 %v3731, 112
      %v3808 = vpop.permute.xlu0 %3807
      %3809 = vrot.lane.b32.xlu0 %v3732, 112
      %v3810 = vpop.permute.xlu0 %3809
      %3811 = vrot.lane.b32.xlu0 %v3733, 112
      %v3812 = vpop.permute.xlu0 %3811
      %3813 = vrot.lane.b32.xlu0 %v3734, 112
      %v3814 = vpop.permute.xlu0 %3813
      %3815 = vrot.lane.b32.xlu0 %v3735, 112
      %v3816 = vpop.permute.xlu0 %3815
      %3817 = vrot.lane.b32.xlu0 %v3736, 112
      %v3818 = vpop.permute.xlu0 %3817
      %3819 = vrot.lane.b32.xlu0 %v3737, 112
      %v3820 = vpop.permute.xlu0 %3819
      %3821 = vrot.lane.b32.xlu0 %v3738, 112
      %v3822 = vpop.permute.xlu0 %3821
      %3823 = vrot.lane.b32.xlu0 %v3739, 112
      %v3824 = vpop.permute.xlu0 %3823
      %3825 = vrot.lane.b32.xlu0 %v3740, 112
      %v3826 = vpop.permute.xlu0 %3825
      %3827 = vrot.lane.b32.xlu0 %v3741, 112
      %v3828 = vpop.permute.xlu0 %3827
      %3829 = vrot.lane.b32.xlu0 %v3742, 112
      %v3830 = vpop.permute.xlu0 %3829
      %3831 = vrot.lane.b32.xlu0 %v3743, 112
      %v3832 = vpop.permute.xlu0 %3831
      %3833 = vrot.lane.b32.xlu0 %v3744, 112
      %v3834 = vpop.permute.xlu0 %3833
      %3835 = vrot.lane.b32.xlu0 %v3745, 112
      %v3836 = vpop.permute.xlu0 %3835
      %3837 = vrot.lane.b32.xlu0 %v3746, 112
      %v3838 = vpop.permute.xlu0 %3837
      %3839 = vrot.lane.b32.xlu0 %v3747, 112
      %v3840 = vpop.permute.xlu0 %3839
      %3841 = vrot.lane.b32.xlu0 %v3748, 112
      %v3842 = vpop.permute.xlu0 %3841
      %3843 = vrot.lane.b32.xlu0 %v3749, 112
      %v3844 = vpop.permute.xlu0 %3843
      %3845 = vrot.lane.b32.xlu0 %v3750, 112
      %v3846 = vpop.permute.xlu0 %3845
      %vm3879 = vcmask 1048448
      %3880 = vst.msk [vmem:[#allocation4] sm:$0xff] %vm3879, %v3784
      %3881 = vst.msk [vmem:[#allocation4 + $0x10] sm:$0xff] %vm3879, %v3786
      %3882 = vst.msk [vmem:[#allocation4 + $0x20] sm:$0xff] %vm3879, %v3788
      %3883 = vst.msk [vmem:[#allocation4 + $0x30] sm:$0xff] %vm3879, %v3790
      %3884 = vst.msk [vmem:[#allocation4 + $0x40] sm:$0xff] %vm3879, %v3792
      %3885 = vst.msk [vmem:[#allocation4 + $0x50] sm:$0xff] %vm3879, %v3794
      %3886 = vst.msk [vmem:[#allocation4 + $0x60] sm:$0xff] %vm3879, %v3796
      %3887 = vst.msk [vmem:[#allocation4 + $0x70] sm:$0xff] %vm3879, %v3798
      %3888 = vst.msk [vmem:[#allocation4 + $0x80] sm:$0xff] %vm3879, %v3800
      %3889 = vst.msk [vmem:[#allocation4 + $0x90] sm:$0xff] %vm3879, %v3802
      %3890 = vst.msk [vmem:[#allocation4 + $0xa0] sm:$0xff] %vm3879, %v3804
      %3891 = vst.msk [vmem:[#allocation4 + $0xb0] sm:$0xff] %vm3879, %v3806
      %3892 = vst.msk [vmem:[#allocation4 + $0xc0] sm:$0xff] %vm3879, %v3808
      %3893 = vst.msk [vmem:[#allocation4 + $0xd0] sm:$0xff] %vm3879, %v3810
      %3894 = vst.msk [vmem:[#allocation4 + $0xe0] sm:$0xff] %vm3879, %v3812
      %3895 = vst.msk [vmem:[#allocation4 + $0xf0] sm:$0xff] %vm3879, %v3814
      %3896 = vst.msk [vmem:[#allocation4 + $0x100] sm:$0xff] %vm3879, %v3816
      %3897 = vst.msk [vmem:[#allocation4 + $0x110] sm:$0xff] %vm3879, %v3818
      %3898 = vst.msk [vmem:[#allocation4 + $0x120] sm:$0xff] %vm3879, %v3820
      %3899 = vst.msk [vmem:[#allocation4 + $0x130] sm:$0xff] %vm3879, %v3822
      %3900 = vst.msk [vmem:[#allocation4 + $0x140] sm:$0xff] %vm3879, %v3824
      %3901 = vst.msk [vmem:[#allocation4 + $0x150] sm:$0xff] %vm3879, %v3826
      %3902 = vst.msk [vmem:[#allocation4 + $0x160] sm:$0xff] %vm3879, %v3828
      %3903 = vst.msk [vmem:[#allocation4 + $0x170] sm:$0xff] %vm3879, %v3830
      %3904 = vst.msk [vmem:[#allocation4 + $0x180] sm:$0xff] %vm3879, %v3832
      %3905 = vst.msk [vmem:[#allocation4 + $0x190] sm:$0xff] %vm3879, %v3834
      %3906 = vst.msk [vmem:[#allocation4 + $0x1a0] sm:$0xff] %vm3879, %v3836
      %3907 = vst.msk [vmem:[#allocation4 + $0x1b0] sm:$0xff] %vm3879, %v3838
      %3908 = vst.msk [vmem:[#allocation4 + $0x1c0] sm:$0xff] %vm3879, %v3840
      %3909 = vst.msk [vmem:[#allocation4 + $0x1d0] sm:$0xff] %vm3879, %v3842
      %3910 = vst.msk [vmem:[#allocation4 + $0x1e0] sm:$0xff] %vm3879, %v3844
      %3911 = vst.msk [vmem:[#allocation4 + $0x1f0] sm:$0xff] %vm3879, %v3846
      %v3912 = vld [vmem:[%s3525 + $0x2] sm:$0xff]
      %v3913 = vld [vmem:[%s3525 + $0xa] sm:$0xff]
      %v3914 = vld [vmem:[%s3525 + $0x1a] sm:$0xff]
      %v3915 = vld [vmem:[%s3525 + $0x22] sm:$0xff]
      %v3916 = vld [vmem:[%s3525 + $0x32] sm:$0xff]
      %v3917 = vld [vmem:[%s3525 + $0x3a] sm:$0xff]
      %v3918 = vld [vmem:[%s3525 + $0x4a] sm:$0xff]
      %v3919 = vld [vmem:[%s3525 + $0x52] sm:$0xff]
      %v3920 = vld [vmem:[%s3525 + $0x62] sm:$0xff]
      %v3921 = vld [vmem:[%s3525 + $0x6a] sm:$0xff]
      %v3922 = vld [vmem:[%s3525 + $0x7a] sm:$0xff]
      %v3923 = vld [vmem:[%s3525 + $0x82] sm:$0xff]
      %v3924 = vld [vmem:[%s3525 + $0x92] sm:$0xff]
      %v3925 = vld [vmem:[%s3525 + $0x9a] sm:$0xff]
      %v3926 = vld [vmem:[%s3525 + $0xaa] sm:$0xff]
      %v3927 = vld [vmem:[%s3525 + $0xb2] sm:$0xff]
      %v3928 = vld [vmem:[%s3525 + $0xc2] sm:$0xff]
      %v3929 = vld [vmem:[%s3525 + $0xca] sm:$0xff]
      %v3930 = vld [vmem:[%s3525 + $0xda] sm:$0xff]
      %v3931 = vld [vmem:[%s3525 + $0xe2] sm:$0xff]
      %v3932 = vld [vmem:[%s3525 + $0xf2] sm:$0xff]
      %v3933 = vld [vmem:[%s3525 + $0xfa] sm:$0xff]
      %v3934 = vld [vmem:[%s3525 + $0x10a] sm:$0xff]
      %v3935 = vld [vmem:[%s3525 + $0x112] sm:$0xff]
      %v3936 = vld [vmem:[%s3525 + $0x122] sm:$0xff]
      %v3937 = vld [vmem:[%s3525 + $0x12a] sm:$0xff]
      %v3938 = vld [vmem:[%s3525 + $0x13a] sm:$0xff]
      %v3939 = vld [vmem:[%s3525 + $0x142] sm:$0xff]
      %v3940 = vld [vmem:[%s3525 + $0x152] sm:$0xff]
      %v3941 = vld [vmem:[%s3525 + $0x15a] sm:$0xff]
      %v3942 = vld [vmem:[%s3525 + $0x16a] sm:$0xff]
      %v3943 = vld [vmem:[%s3525 + $0x172] sm:$0xff]
      %3944 = vst.msk [vmem:[#allocation4 + $0x8] sm:$0xff] %vm279, %v3912
      %3945 = vst.msk [vmem:[#allocation4 + $0x18] sm:$0xff] %vm279, %v3913
      %3946 = vst.msk [vmem:[#allocation4 + $0x28] sm:$0xff] %vm279, %v3914
      %3947 = vst.msk [vmem:[#allocation4 + $0x38] sm:$0xff] %vm279, %v3915
      %3948 = vst.msk [vmem:[#allocation4 + $0x48] sm:$0xff] %vm279, %v3916
      %3949 = vst.msk [vmem:[#allocation4 + $0x58] sm:$0xff] %vm279, %v3917
      %3950 = vst.msk [vmem:[#allocation4 + $0x68] sm:$0xff] %vm279, %v3918
      %3951 = vst.msk [vmem:[#allocation4 + $0x78] sm:$0xff] %vm279, %v3919
      %3952 = vst.msk [vmem:[#allocation4 + $0x88] sm:$0xff] %vm279, %v3920
      %3953 = vst.msk [vmem:[#allocation4 + $0x98] sm:$0xff] %vm279, %v3921
      %3954 = vst.msk [vmem:[#allocation4 + $0xa8] sm:$0xff] %vm279, %v3922
      %3955 = vst.msk [vmem:[#allocation4 + $0xb8] sm:$0xff] %vm279, %v3923
      %3956 = vst.msk [vmem:[#allocation4 + $0xc8] sm:$0xff] %vm279, %v3924
      %3957 = vst.msk [vmem:[#allocation4 + $0xd8] sm:$0xff] %vm279, %v3925
      %3958 = vst.msk [vmem:[#allocation4 + $0xe8] sm:$0xff] %vm279, %v3926
      %3959 = vst.msk [vmem:[#allocation4 + $0xf8] sm:$0xff] %vm279, %v3927
      %3960 = vst.msk [vmem:[#allocation4 + $0x108] sm:$0xff] %vm279, %v3928
      %3961 = vst.msk [vmem:[#allocation4 + $0x118] sm:$0xff] %vm279, %v3929
      %3962 = vst.msk [vmem:[#allocation4 + $0x128] sm:$0xff] %vm279, %v3930
      %3963 = vst.msk [vmem:[#allocation4 + $0x138] sm:$0xff] %vm279, %v3931
      %3964 = vst.msk [vmem:[#allocation4 + $0x148] sm:$0xff] %vm279, %v3932
      %3965 = vst.msk [vmem:[#allocation4 + $0x158] sm:$0xff] %vm279, %v3933
      %3966 = vst.msk [vmem:[#allocation4 + $0x168] sm:$0xff] %vm279, %v3934
      %3967 = vst.msk [vmem:[#allocation4 + $0x178] sm:$0xff] %vm279, %v3935
      %3968 = vst.msk [vmem:[#allocation4 + $0x188] sm:$0xff] %vm279, %v3936
      %3969 = vst.msk [vmem:[#allocation4 + $0x198] sm:$0xff] %vm279, %v3937
      %3970 = vst.msk [vmem:[#allocation4 + $0x1a8] sm:$0xff] %vm279, %v3938
      %3971 = vst.msk [vmem:[#allocation4 + $0x1b8] sm:$0xff] %vm279, %v3939
      %3972 = vst.msk [vmem:[#allocation4 + $0x1c8] sm:$0xff] %vm279, %v3940
      %3973 = vst.msk [vmem:[#allocation4 + $0x1d8] sm:$0xff] %vm279, %v3941
      %3974 = vst.msk [vmem:[#allocation4 + $0x1e8] sm:$0xff] %vm279, %v3942
      %3975 = vst.msk [vmem:[#allocation4 + $0x1f8] sm:$0xff] %vm279, %v3943
      %v3976 = vld [vmem:[#allocation4] sm:$0xff]
      %v3977 = vld [vmem:[#allocation4 + $0x8] sm:$0xff]
      %v3978 = vld [vmem:[#allocation4 + $0x10] sm:$0xff]
      %v3979 = vld [vmem:[#allocation4 + $0x18] sm:$0xff]
      %v3980 = vld [vmem:[#allocation4 + $0x20] sm:$0xff]
      %v3981 = vld [vmem:[#allocation4 + $0x28] sm:$0xff]
      %v3982 = vld [vmem:[#allocation4 + $0x30] sm:$0xff]
      %v3983 = vld [vmem:[#allocation4 + $0x38] sm:$0xff]
      %v3984 = vld [vmem:[#allocation4 + $0x40] sm:$0xff]
      %v3985 = vld [vmem:[#allocation4 + $0x48] sm:$0xff]
      %v3986 = vld [vmem:[#allocation4 + $0x50] sm:$0xff]
      %v3987 = vld [vmem:[#allocation4 + $0x58] sm:$0xff]
      %v3988 = vld [vmem:[#allocation4 + $0x60] sm:$0xff]
      %v3989 = vld [vmem:[#allocation4 + $0x68] sm:$0xff]
      %v3990 = vld [vmem:[#allocation4 + $0x70] sm:$0xff]
      %v3991 = vld [vmem:[#allocation4 + $0x78] sm:$0xff]
      %v3992 = vld [vmem:[#allocation4 + $0x80] sm:$0xff]
      %v3993 = vld [vmem:[#allocation4 + $0x88] sm:$0xff]
      %v3994 = vld [vmem:[#allocation4 + $0x90] sm:$0xff]
      %v3995 = vld [vmem:[#allocation4 + $0x98] sm:$0xff]
      %v3996 = vld [vmem:[#allocation4 + $0xa0] sm:$0xff]
      %v3997 = vld [vmem:[#allocation4 + $0xa8] sm:$0xff]
      %v3998 = vld [vmem:[#allocation4 + $0xb0] sm:$0xff]
      %v3999 = vld [vmem:[#allocation4 + $0xb8] sm:$0xff]
      %v4000 = vld [vmem:[#allocation4 + $0xc0] sm:$0xff]
      %v4001 = vld [vmem:[#allocation4 + $0xc8] sm:$0xff]
      %v4002 = vld [vmem:[#allocation4 + $0xd0] sm:$0xff]
      %v4003 = vld [vmem:[#allocation4 + $0xd8] sm:$0xff]
      %v4004 = vld [vmem:[#allocation4 + $0xe0] sm:$0xff]
      %v4005 = vld [vmem:[#allocation4 + $0xe8] sm:$0xff]
      %v4006 = vld [vmem:[#allocation4 + $0xf0] sm:$0xff]
      %v4007 = vld [vmem:[#allocation4 + $0xf8] sm:$0xff]
      %v4008 = vld [vmem:[#allocation4 + $0x100] sm:$0xff]
      %v4009 = vld [vmem:[#allocation4 + $0x108] sm:$0xff]
      %v4010 = vld [vmem:[#allocation4 + $0x110] sm:$0xff]
      %v4011 = vld [vmem:[#allocation4 + $0x118] sm:$0xff]
      %v4012 = vld [vmem:[#allocation4 + $0x120] sm:$0xff]
      %v4013 = vld [vmem:[#allocation4 + $0x128] sm:$0xff]
      %v4014 = vld [vmem:[#allocation4 + $0x130] sm:$0xff]
      %v4015 = vld [vmem:[#allocation4 + $0x138] sm:$0xff]
      %v4016 = vld [vmem:[#allocation4 + $0x140] sm:$0xff]
      %v4017 = vld [vmem:[#allocation4 + $0x148] sm:$0xff]
      %v4018 = vld [vmem:[#allocation4 + $0x150] sm:$0xff]
      %v4019 = vld [vmem:[#allocation4 + $0x158] sm:$0xff]
      %v4020 = vld [vmem:[#allocation4 + $0x160] sm:$0xff]
      %v4021 = vld [vmem:[#allocation4 + $0x168] sm:$0xff]
      %v4022 = vld [vmem:[#allocation4 + $0x170] sm:$0xff]
      %v4023 = vld [vmem:[#allocation4 + $0x178] sm:$0xff]
      %v4024 = vld [vmem:[#allocation4 + $0x180] sm:$0xff]
      %v4025 = vld [vmem:[#allocation4 + $0x188] sm:$0xff]
      %v4026 = vld [vmem:[#allocation4 + $0x190] sm:$0xff]
      %v4027 = vld [vmem:[#allocation4 + $0x198] sm:$0xff]
      %v4028 = vld [vmem:[#allocation4 + $0x1a0] sm:$0xff]
      %v4029 = vld [vmem:[#allocation4 + $0x1a8] sm:$0xff]
      %v4030 = vld [vmem:[#allocation4 + $0x1b0] sm:$0xff]
      %v4031 = vld [vmem:[#allocation4 + $0x1b8] sm:$0xff]
      %v4032 = vld [vmem:[#allocation4 + $0x1c0] sm:$0xff]
      %v4033 = vld [vmem:[#allocation4 + $0x1c8] sm:$0xff]
      %v4034 = vld [vmem:[#allocation4 + $0x1d0] sm:$0xff]
      %v4035 = vld [vmem:[#allocation4 + $0x1d8] sm:$0xff]
      %v4036 = vld [vmem:[#allocation4 + $0x1e0] sm:$0xff]
      %v4037 = vld [vmem:[#allocation4 + $0x1e8] sm:$0xff]
      %v4038 = vld [vmem:[#allocation4 + $0x1f0] sm:$0xff]
      %v4039 = vld [vmem:[#allocation4 + $0x1f8] sm:$0xff]
      %v4040 = vlaneseq
      %v4041 = vshrl.u32 %v4040, 7
      %v4042 = vsub.s32 0, %v4041
      %v4043 = vrot.slane %v2495, %v4042
      %v4045 = vsel %vm279, %v3977, 0
      %v4048 = vsel %vm279, %v3979, 0
      %v4051 = vsel %vm279, %v3981, 0
      %v4054 = vsel %vm279, %v3983, 0
      %v4057 = vsel %vm279, %v3985, 0
      %v4060 = vsel %vm279, %v3987, 0
      %v4063 = vsel %vm279, %v3989, 0
      %v4066 = vsel %vm279, %v3991, 0
      %v4069 = vsel %vm279, %v3993, 0
      %v4072 = vsel %vm279, %v3995, 0
      %v4075 = vsel %vm279, %v3997, 0
      %v4078 = vsel %vm279, %v3999, 0
      %v4081 = vsel %vm279, %v4001, 0
      %v4084 = vsel %vm279, %v4003, 0
      %v4087 = vsel %vm279, %v4005, 0
      %v4090 = vsel %vm279, %v4007, 0
      %v4093 = vsel %vm279, %v4009, 0
      %v4096 = vsel %vm279, %v4011, 0
      %v4099 = vsel %vm279, %v4013, 0
      %v4102 = vsel %vm279, %v4015, 0
      %v4105 = vsel %vm279, %v4017, 0
      %v4108 = vsel %vm279, %v4019, 0
      %v4111 = vsel %vm279, %v4021, 0
      %v4114 = vsel %vm279, %v4023, 0
      %v4117 = vsel %vm279, %v4025, 0
      %v4120 = vsel %vm279, %v4027, 0
      %v4123 = vsel %vm279, %v4029, 0
      %v4126 = vsel %vm279, %v4031, 0
      %v4129 = vsel %vm279, %v4033, 0
      %v4132 = vsel %vm279, %v4035, 0
      %v4135 = vsel %vm279, %v4037, 0
      %v4138 = vsel %vm279, %v4039, 0
      %4140 = vmatprep.subr.mxu0 0.0
      %4141 = vmatpush1.msra.mxu0 %v2477
      %4142 = vmatprep.subr.mxu0 0.0
      %4143 = vmatpush1.msra.mxu0 %v2478
      %4144 = vmatprep.subr.mxu0 0.0
      %4145 = vmatpush1.msra.mxu0 %v2479
      %4146 = vmatprep.subr.mxu0 0.0
      %4147 = vmatpush1.msra.mxu0 %v2480
      %4148 = vmatprep.subr.mxu0 0.0
      %4149 = vmatpush1.msra.mxu0 %v2481
      %4150 = vmatprep.subr.mxu0 0.0
      %4151 = vmatpush1.msra.mxu0 %v2482
      %4152 = vmatprep.subr.mxu0 0.0
      %4153 = vmatpush1.msra.mxu0 %v2483
      %4154 = vmatprep.subr.mxu0 0.0
      %4155 = vmatpush1.msra.mxu0 %v2484
      %4156 = vmatprep.subr.mxu0 0.0
      %4157 = vmatpush1.msra.mxu0 %v2485
      %4158 = vmatprep.subr.mxu0 0.0
      %4159 = vmatpush1.msra.mxu0 %v2486
      %4160 = vmatprep.subr.mxu0 0.0
      %4161 = vmatpush1.msra.mxu0 %v2487
      %4162 = vmatprep.subr.mxu0 0.0
      %4163 = vmatpush1.msra.mxu0 %v2488
      %4164 = vmatprep.subr.mxu0 0.0
      %4165 = vmatpush1.msra.mxu0 %v2489
      %4166 = vmatprep.subr.mxu0 0.0
      %4167 = vmatpush1.msra.mxu0 %v2490
      %4168 = vmatprep.subr.mxu0 0.0
      %4169 = vmatpush1.msra.mxu0 %v2491
      %4170 = vmatprep.subr.mxu0 0.0
      %4171 = vmatpush1.msra.mxu0 %v2492
      %4172 = vmatprep.subr.mxu0 0.0
      %4173 = vmatpush1.msra.mxu0 %v2493
      %4174 = vmatprep.subr.mxu0 0.0
      %4175 = vmatpush1.msra.mxu0 %v2494
      %4176 = vmatprep.subr.mxu0 0.0
      %4177 = vmatpush1.msra.mxu0 0.0
      %4178 = vmatprep.subr.mxu0 0.0
      %4179 = vmatpush1.msra.mxu0 0.0
      %4180 = vmatprep.subr.mxu0 0.0
      %4181 = vmatpush1.msra.mxu0 0.0
      %4182 = vmatprep.subr.mxu0 0.0
      %4183 = vmatpush1.msra.mxu0 0.0
      %4184 = vmatprep.subr.mxu0 0.0
      %4185 = vmatpush1.msra.mxu0 0.0
      %4186 = vmatprep.subr.mxu0 0.0
      %4187 = vmatpush1.msra.mxu0 0.0
      %4188 = vmatprep.subr.mxu0 0.0
      %4189 = vmatpush1.msra.mxu0 0.0
      %4190 = vmatprep.subr.mxu0 0.0
      %4191 = vmatpush1.msra.mxu0 0.0
      %4192 = vmatprep.subr.mxu0 0.0
      %4193 = vmatpush1.msra.mxu0 0.0
      %4194 = vmatprep.subr.mxu0 0.0
      %4195 = vmatpush1.msra.mxu0 0.0
      %4196 = vmatprep.subr.mxu0 0.0
      %4197 = vmatpush1.msra.mxu0 0.0
      %4198 = vmatprep.subr.mxu0 0.0
      %4199 = vmatpush1.msra.mxu0 0.0
      %4200 = vmatprep.subr.mxu0 0.0
      %4201 = vmatpush1.msra.mxu0 0.0
      %4202 = vmatprep.subr.mxu0 0.0
      %4203 = vmatpush1.msra.mxu0 0.0
      %4204 = vmatprep.mubr.f32.mxu0 %v4045
      %4205 = vmatmul.mubr.f32.gmra.mrb[0].mxu0 %v3976
      %v4206 = vpop.f32.mrb[0].mxu0
      %v4207 = vadd.f32 %v4043, %v4206
      %v4208 = vpop.f32.mrb[0].mxu0
      %4209 = vmatprep.mubr.f32.mxu0 %v4048
      %4210 = vmatmul.mubr.f32.gmra.mrb[0].mxu0 %v3978
      %v4211 = vpop.f32.mrb[0].mxu0
      %v4212 = vadd.f32 %v4043, %v4211
      %v4213 = vpop.f32.mrb[0].mxu0
      %4214 = vmatprep.mubr.f32.mxu0 %v4051
      %4215 = vmatmul.mubr.f32.gmra.mrb[0].mxu0 %v3980
      %v4216 = vpop.f32.mrb[0].mxu0
      %v4217 = vadd.f32 %v4043, %v4216
      %v4218 = vpop.f32.mrb[0].mxu0
      %4219 = vmatprep.mubr.f32.mxu0 %v4054
      %4220 = vmatmul.mubr.f32.gmra.mrb[0].mxu0 %v3982
      %v4221 = vpop.f32.mrb[0].mxu0
      %v4222 = vadd.f32 %v4043, %v4221
      %v4223 = vpop.f32.mrb[0].mxu0
      %4224 = vmatprep.mubr.f32.mxu0 %v4057
      %4225 = vmatmul.mubr.f32.gmra.mrb[0].mxu0 %v3984
      %v4226 = vpop.f32.mrb[0].mxu0
      %v4227 = vadd.f32 %v4043, %v4226
      %v4228 = vpop.f32.mrb[0].mxu0
      %4229 = vmatprep.mubr.f32.mxu0 %v4060
      %4230 = vmatmul.mubr.f32.gmra.mrb[0].mxu0 %v3986
      %v4231 = vpop.f32.mrb[0].mxu0
      %v4232 = vadd.f32 %v4043, %v4231
      %v4233 = vpop.f32.mrb[0].mxu0
      %4234 = vmatprep.mubr.f32.mxu0 %v4063
      %4235 = vmatmul.mubr.f32.gmra.mrb[0].mxu0 %v3988
      %v4236 = vpop.f32.mrb[0].mxu0
      %v4237 = vadd.f32 %v4043, %v4236
      %v4238 = vpop.f32.mrb[0].mxu0
      %4239 = vmatprep.mubr.f32.mxu0 %v4066
      %4240 = vmatmul.mubr.f32.gmra.mrb[0].mxu0 %v3990
      %v4241 = vpop.f32.mrb[0].mxu0
      %v4242 = vadd.f32 %v4043, %v4241
      %v4243 = vpop.f32.mrb[0].mxu0
      %4244 = vmatprep.mubr.f32.mxu0 %v4069
      %4245 = vmatmul.mubr.f32.gmra.mrb[0].mxu0 %v3992
      %v4246 = vpop.f32.mrb[0].mxu0
      %v4247 = vadd.f32 %v4043, %v4246
      %v4248 = vpop.f32.mrb[0].mxu0
      %4249 = vmatprep.mubr.f32.mxu0 %v4072
      %4250 = vmatmul.mubr.f32.gmra.mrb[0].mxu0 %v3994
      %v4251 = vpop.f32.mrb[0].mxu0
      %v4252 = vadd.f32 %v4043, %v4251
      %v4253 = vpop.f32.mrb[0].mxu0
      %4254 = vmatprep.mubr.f32.mxu0 %v4075
      %4255 = vmatmul.mubr.f32.gmra.mrb[0].mxu0 %v3996
      %v4256 = vpop.f32.mrb[0].mxu0
      %v4257 = vadd.f32 %v4043, %v4256
      %v4258 = vpop.f32.mrb[0].mxu0
      %4259 = vmatprep.mubr.f32.mxu0 %v4078
      %4260 = vmatmul.mubr.f32.gmra.mrb[0].mxu0 %v3998
      %v4261 = vpop.f32.mrb[0].mxu0
      %v4262 = vadd.f32 %v4043, %v4261
      %v4263 = vpop.f32.mrb[0].mxu0
      %4264 = vmatprep.mubr.f32.mxu0 %v4081
      %4265 = vmatmul.mubr.f32.gmra.mrb[0].mxu0 %v4000
      %v4266 = vpop.f32.mrb[0].mxu0
      %v4267 = vadd.f32 %v4043, %v4266
      %v4268 = vpop.f32.mrb[0].mxu0
      %4269 = vmatprep.mubr.f32.mxu0 %v4084
      %4270 = vmatmul.mubr.f32.gmra.mrb[0].mxu0 %v4002
      %v4271 = vpop.f32.mrb[0].mxu0
      %v4272 = vadd.f32 %v4043, %v4271
      %v4273 = vpop.f32.mrb[0].mxu0
      %4274 = vmatprep.mubr.f32.mxu0 %v4087
      %4275 = vmatmul.mubr.f32.gmra.mrb[0].mxu0 %v4004
      %v4276 = vpop.f32.mrb[0].mxu0
      %v4277 = vadd.f32 %v4043, %v4276
      %v4278 = vpop.f32.mrb[0].mxu0
      %4279 = vmatprep.mubr.f32.mxu0 %v4090
      %4280 = vmatmul.mubr.f32.gmra.mrb[0].mxu0 %v4006
      %v4281 = vpop.f32.mrb[0].mxu0
      %v4282 = vadd.f32 %v4043, %v4281
      %v4283 = vpop.f32.mrb[0].mxu0
      %4284 = vmatprep.mubr.f32.mxu0 %v4093
      %4285 = vmatmul.mubr.f32.gmra.mrb[0].mxu0 %v4008
      %v4286 = vpop.f32.mrb[0].mxu0
      %v4287 = vadd.f32 %v4043, %v4286
      %v4288 = vpop.f32.mrb[0].mxu0
      %4289 = vmatprep.mubr.f32.mxu0 %v4096
      %4290 = vmatmul.mubr.f32.gmra.mrb[0].mxu0 %v4010
      %v4291 = vpop.f32.mrb[0].mxu0
      %v4292 = vadd.f32 %v4043, %v4291
      %v4293 = vpop.f32.mrb[0].mxu0
      %4294 = vmatprep.mubr.f32.mxu0 %v4099
      %4295 = vmatmul.mubr.f32.gmra.mrb[0].mxu0 %v4012
      %v4296 = vpop.f32.mrb[0].mxu0
      %v4297 = vadd.f32 %v4043, %v4296
      %v4298 = vpop.f32.mrb[0].mxu0
      %4299 = vmatprep.mubr.f32.mxu0 %v4102
      %4300 = vmatmul.mubr.f32.gmra.mrb[0].mxu0 %v4014
      %v4301 = vpop.f32.mrb[0].mxu0
      %v4302 = vadd.f32 %v4043, %v4301
      %v4303 = vpop.f32.mrb[0].mxu0
      %4304 = vmatprep.mubr.f32.mxu0 %v4105
      %4305 = vmatmul.mubr.f32.gmra.mrb[0].mxu0 %v4016
      %v4306 = vpop.f32.mrb[0].mxu0
      %v4307 = vadd.f32 %v4043, %v4306
      %v4308 = vpop.f32.mrb[0].mxu0
      %4309 = vmatprep.mubr.f32.mxu0 %v4108
      %4310 = vmatmul.mubr.f32.gmra.mrb[0].mxu0 %v4018
      %v4311 = vpop.f32.mrb[0].mxu0
      %v4312 = vadd.f32 %v4043, %v4311
      %v4313 = vpop.f32.mrb[0].mxu0
      %4314 = vmatprep.mubr.f32.mxu0 %v4111
      %4315 = vmatmul.mubr.f32.gmra.mrb[0].mxu0 %v4020
      %v4316 = vpop.f32.mrb[0].mxu0
      %v4317 = vadd.f32 %v4043, %v4316
      %v4318 = vpop.f32.mrb[0].mxu0
      %4319 = vmatprep.mubr.f32.mxu0 %v4114
      %4320 = vmatmul.mubr.f32.gmra.mrb[0].mxu0 %v4022
      %v4321 = vpop.f32.mrb[0].mxu0
      %v4322 = vadd.f32 %v4043, %v4321
      %v4323 = vpop.f32.mrb[0].mxu0
      %4324 = vmatprep.mubr.f32.mxu0 %v4117
      %4325 = vmatmul.mubr.f32.gmra.mrb[0].mxu0 %v4024
      %v4326 = vpop.f32.mrb[0].mxu0
      %v4327 = vadd.f32 %v4043, %v4326
      %v4328 = vpop.f32.mrb[0].mxu0
      %4329 = vmatprep.mubr.f32.mxu0 %v4120
      %4330 = vmatmul.mubr.f32.gmra.mrb[0].mxu0 %v4026
      %v4331 = vpop.f32.mrb[0].mxu0
      %v4332 = vadd.f32 %v4043, %v4331
      %v4333 = vpop.f32.mrb[0].mxu0
      %4334 = vmatprep.mubr.f32.mxu0 %v4123
      %4335 = vmatmul.mubr.f32.gmra.mrb[0].mxu0 %v4028
      %v4336 = vpop.f32.mrb[0].mxu0
      %v4337 = vadd.f32 %v4043, %v4336
      %v4338 = vpop.f32.mrb[0].mxu0
      %4339 = vmatprep.mubr.f32.mxu0 %v4126
      %4340 = vmatmul.mubr.f32.gmra.mrb[0].mxu0 %v4030
      %v4341 = vpop.f32.mrb[0].mxu0
      %v4342 = vadd.f32 %v4043, %v4341
      %v4343 = vpop.f32.mrb[0].mxu0
      %4344 = vmatprep.mubr.f32.mxu0 %v4129
      %4345 = vmatmul.mubr.f32.gmra.mrb[0].mxu0 %v4032
      %v4346 = vpop.f32.mrb[0].mxu0
      %v4347 = vadd.f32 %v4043, %v4346
      %v4348 = vpop.f32.mrb[0].mxu0
      %4349 = vmatprep.mubr.f32.mxu0 %v4132
      %4350 = vmatmul.mubr.f32.gmra.mrb[0].mxu0 %v4034
      %v4351 = vpop.f32.mrb[0].mxu0
      %v4352 = vadd.f32 %v4043, %v4351
      %v4353 = vpop.f32.mrb[0].mxu0
      %4354 = vmatprep.mubr.f32.mxu0 %v4135
      %4355 = vmatmul.mubr.f32.gmra.mrb[0].mxu0 %v4036
      %v4356 = vpop.f32.mrb[0].mxu0
      %v4357 = vadd.f32 %v4043, %v4356
      %v4358 = vpop.f32.mrb[0].mxu0
      %4359 = vmatprep.mubr.f32.mxu0 %v4138
      %4360 = vmatmul.mubr.f32.gmra.mrb[0].mxu0 %v4038
      %v4361 = vpop.f32.mrb[0].mxu0
      %v4362 = vadd.f32 %v4043, %v4361
      %v4363 = vpop.f32.mrb[0].mxu0
      %4364 = vdwg.mxu0
      %v4365 = vmax.f32 %v4207, 0.0
      %v4366 = vmax.f32 %v4212, 0.0
      %v4367 = vmax.f32 %v4217, 0.0
      %v4368 = vmax.f32 %v4222, 0.0
      %v4369 = vmax.f32 %v4227, 0.0
      %v4370 = vmax.f32 %v4232, 0.0
      %v4371 = vmax.f32 %v4237, 0.0
      %v4372 = vmax.f32 %v4242, 0.0
      %v4373 = vmax.f32 %v4247, 0.0
      %v4374 = vmax.f32 %v4252, 0.0
      %v4375 = vmax.f32 %v4257, 0.0
      %v4376 = vmax.f32 %v4262, 0.0
      %v4377 = vmax.f32 %v4267, 0.0
      %v4378 = vmax.f32 %v4272, 0.0
      %v4379 = vmax.f32 %v4277, 0.0
      %v4380 = vmax.f32 %v4282, 0.0
      %v4381 = vmax.f32 %v4287, 0.0
      %v4382 = vmax.f32 %v4292, 0.0
      %v4383 = vmax.f32 %v4297, 0.0
      %v4384 = vmax.f32 %v4302, 0.0
      %v4385 = vmax.f32 %v4307, 0.0
      %v4386 = vmax.f32 %v4312, 0.0
      %v4387 = vmax.f32 %v4317, 0.0
      %v4388 = vmax.f32 %v4322, 0.0
      %v4389 = vmax.f32 %v4327, 0.0
      %v4390 = vmax.f32 %v4332, 0.0
      %v4391 = vmax.f32 %v4337, 0.0
      %v4392 = vmax.f32 %v4342, 0.0
      %v4393 = vmax.f32 %v4347, 0.0
      %v4394 = vmax.f32 %v4352, 0.0
      %v4395 = vmax.f32 %v4357, 0.0
      %v4396 = vmax.f32 %v4362, 0.0
      %4397 = vst.msk [vmem:[%s400 + $0x1] sm:$0xff] %vm279, %v4365
      %4398 = vst.msk [vmem:[%s400 + $0x9] sm:$0xff] %vm279, %v4366
      %4399 = vst.msk [vmem:[%s400 + $0x19] sm:$0xff] %vm279, %v4367
      %4400 = vst.msk [vmem:[%s400 + $0x21] sm:$0xff] %vm279, %v4368
      %4401 = vst.msk [vmem:[%s400 + $0x31] sm:$0xff] %vm279, %v4369
      %4402 = vst.msk [vmem:[%s400 + $0x39] sm:$0xff] %vm279, %v4370
      %4403 = vst.msk [vmem:[%s400 + $0x49] sm:$0xff] %vm279, %v4371
      %4404 = vst.msk [vmem:[%s400 + $0x51] sm:$0xff] %vm279, %v4372
      %4405 = vst.msk [vmem:[%s400 + $0x61] sm:$0xff] %vm279, %v4373
      %4406 = vst.msk [vmem:[%s400 + $0x69] sm:$0xff] %vm279, %v4374
      %4407 = vst.msk [vmem:[%s400 + $0x79] sm:$0xff] %vm279, %v4375
      %4408 = vst.msk [vmem:[%s400 + $0x81] sm:$0xff] %vm279, %v4376
      %4409 = vst.msk [vmem:[%s400 + $0x91] sm:$0xff] %vm279, %v4377
      %4410 = vst.msk [vmem:[%s400 + $0x99] sm:$0xff] %vm279, %v4378
      %4411 = vst.msk [vmem:[%s400 + $0xa9] sm:$0xff] %vm279, %v4379
      %4412 = vst.msk [vmem:[%s400 + $0xb1] sm:$0xff] %vm279, %v4380
      %4413 = vst.msk [vmem:[%s400 + $0xc1] sm:$0xff] %vm279, %v4381
      %4414 = vst.msk [vmem:[%s400 + $0xc9] sm:$0xff] %vm279, %v4382
      %4415 = vst.msk [vmem:[%s400 + $0xd9] sm:$0xff] %vm279, %v4383
      %4416 = vst.msk [vmem:[%s400 + $0xe1] sm:$0xff] %vm279, %v4384
      %4417 = vst.msk [vmem:[%s400 + $0xf1] sm:$0xff] %vm279, %v4385
      %4418 = vst.msk [vmem:[%s400 + $0xf9] sm:$0xff] %vm279, %v4386
      %4419 = vst.msk [vmem:[%s400 + $0x109] sm:$0xff] %vm279, %v4387
      %4420 = vst.msk [vmem:[%s400 + $0x111] sm:$0xff] %vm279, %v4388
      %4421 = vst.msk [vmem:[%s400 + $0x121] sm:$0xff] %vm279, %v4389
      %4422 = vst.msk [vmem:[%s400 + $0x129] sm:$0xff] %vm279, %v4390
      %4423 = vst.msk [vmem:[%s400 + $0x139] sm:$0xff] %vm279, %v4391
      %4424 = vst.msk [vmem:[%s400 + $0x141] sm:$0xff] %vm279, %v4392
      %4425 = vst.msk [vmem:[%s400 + $0x151] sm:$0xff] %vm279, %v4393
      %4426 = vst.msk [vmem:[%s400 + $0x159] sm:$0xff] %vm279, %v4394
      %4427 = vst.msk [vmem:[%s400 + $0x169] sm:$0xff] %vm279, %v4395
      %4428 = vst.msk [vmem:[%s400 + $0x171] sm:$0xff] %vm279, %v4396
      %s4429 = scalar_lea.vmem %s3, 144
      %v4430 = vld [vmem:[%s4429] sm:$0xff]
      %v4431 = vld [vmem:[%s4429 + $0x8] sm:$0xff]
      %v4432 = vld [vmem:[%s4429 + $0x10] sm:$0xff]
      %v4433 = vld [vmem:[%s4429 + $0x18] sm:$0xff]
      %v4434 = vld [vmem:[%s4429 + $0x20] sm:$0xff]
      %v4435 = vld [vmem:[%s4429 + $0x28] sm:$0xff]
      %v4436 = vld [vmem:[%s4429 + $0x30] sm:$0xff]
      %v4437 = vld [vmem:[%s4429 + $0x38] sm:$0xff]
      %v4438 = vld [vmem:[%s4429 + $0x40] sm:$0xff]
      %v4439 = vld [vmem:[%s4429 + $0x48] sm:$0xff]
      %v4440 = vld [vmem:[%s4429 + $0x50] sm:$0xff]
      %v4441 = vld [vmem:[%s4429 + $0x58] sm:$0xff]
      %v4442 = vld [vmem:[%s4429 + $0x60] sm:$0xff]
      %v4443 = vld [vmem:[%s4429 + $0x68] sm:$0xff]
      %v4444 = vld [vmem:[%s4429 + $0x70] sm:$0xff]
      %v4445 = vld [vmem:[%s4429 + $0x78] sm:$0xff]
      %v4446 = vld [vmem:[%s4429 + $0x80] sm:$0xff]
      %v4447 = vld [vmem:[%s4429 + $0x88] sm:$0xff]
      %v4448 = vld [vmem:[%s4 + $0x1] sm:$0x1]
      %v4449 = vld [vmem:[#allocation2] sm:$0xff]
      %v4450 = vld [vmem:[#allocation2 + $0x8] sm:$0xff]
      %v4451 = vld [vmem:[#allocation2 + $0x18] sm:$0xff]
      %v4452 = vld [vmem:[#allocation2 + $0x20] sm:$0xff]
      %v4453 = vld [vmem:[#allocation2 + $0x30] sm:$0xff]
      %v4454 = vld [vmem:[#allocation2 + $0x38] sm:$0xff]
      %v4455 = vld [vmem:[#allocation2 + $0x48] sm:$0xff]
      %v4456 = vld [vmem:[#allocation2 + $0x50] sm:$0xff]
      %v4457 = vld [vmem:[#allocation2 + $0x60] sm:$0xff]
      %v4458 = vld [vmem:[#allocation2 + $0x68] sm:$0xff]
      %v4459 = vld [vmem:[#allocation2 + $0x78] sm:$0xff]
      %v4460 = vld [vmem:[#allocation2 + $0x80] sm:$0xff]
      %v4461 = vld [vmem:[#allocation2 + $0x90] sm:$0xff]
      %v4462 = vld [vmem:[#allocation2 + $0x98] sm:$0xff]
      %v4463 = vld [vmem:[#allocation2 + $0xa8] sm:$0xff]
      %v4464 = vld [vmem:[#allocation2 + $0xb0] sm:$0xff]
      %v4465 = vld [vmem:[#allocation2 + $0xc0] sm:$0xff]
      %v4466 = vld [vmem:[#allocation2 + $0xc8] sm:$0xff]
      %v4467 = vld [vmem:[#allocation2 + $0xd8] sm:$0xff]
      %v4468 = vld [vmem:[#allocation2 + $0xe0] sm:$0xff]
      %v4469 = vld [vmem:[#allocation2 + $0xf0] sm:$0xff]
      %v4470 = vld [vmem:[#allocation2 + $0xf8] sm:$0xff]
      %v4471 = vld [vmem:[#allocation2 + $0x108] sm:$0xff]
      %v4472 = vld [vmem:[#allocation2 + $0x110] sm:$0xff]
      %v4473 = vld [vmem:[#allocation2 + $0x120] sm:$0xff]
      %v4474 = vld [vmem:[#allocation2 + $0x128] sm:$0xff]
      %v4475 = vld [vmem:[#allocation2 + $0x138] sm:$0xff]
      %v4476 = vld [vmem:[#allocation2 + $0x140] sm:$0xff]
      %v4477 = vld [vmem:[#allocation2 + $0x150] sm:$0xff]
      %v4478 = vld [vmem:[#allocation2 + $0x158] sm:$0xff]
      %v4479 = vld [vmem:[#allocation2 + $0x168] sm:$0xff]
      %v4480 = vld [vmem:[#allocation2 + $0x170] sm:$0xff]
      %4481 = vst.msk [vmem:[#allocation4] sm:$0xff] %vm279, %v4449
      %4482 = vst.msk [vmem:[#allocation4 + $0x10] sm:$0xff] %vm279, %v4450
      %4483 = vst.msk [vmem:[#allocation4 + $0x20] sm:$0xff] %vm279, %v4451
      %4484 = vst.msk [vmem:[#allocation4 + $0x30] sm:$0xff] %vm279, %v4452
      %4485 = vst.msk [vmem:[#allocation4 + $0x40] sm:$0xff] %vm279, %v4453
      %4486 = vst.msk [vmem:[#allocation4 + $0x50] sm:$0xff] %vm279, %v4454
      %4487 = vst.msk [vmem:[#allocation4 + $0x60] sm:$0xff] %vm279, %v4455
      %4488 = vst.msk [vmem:[#allocation4 + $0x70] sm:$0xff] %vm279, %v4456
      %4489 = vst.msk [vmem:[#allocation4 + $0x80] sm:$0xff] %vm279, %v4457
      %4490 = vst.msk [vmem:[#allocation4 + $0x90] sm:$0xff] %vm279, %v4458
      %4491 = vst.msk [vmem:[#allocation4 + $0xa0] sm:$0xff] %vm279, %v4459
      %4492 = vst.msk [vmem:[#allocation4 + $0xb0] sm:$0xff] %vm279, %v4460
      %4493 = vst.msk [vmem:[#allocation4 + $0xc0] sm:$0xff] %vm279, %v4461
      %4494 = vst.msk [vmem:[#allocation4 + $0xd0] sm:$0xff] %vm279, %v4462
      %4495 = vst.msk [vmem:[#allocation4 + $0xe0] sm:$0xff] %vm279, %v4463
      %4496 = vst.msk [vmem:[#allocation4 + $0xf0] sm:$0xff] %vm279, %v4464
      %4497 = vst.msk [vmem:[#allocation4 + $0x100] sm:$0xff] %vm279, %v4465
      %4498 = vst.msk [vmem:[#allocation4 + $0x110] sm:$0xff] %vm279, %v4466
      %4499 = vst.msk [vmem:[#allocation4 + $0x120] sm:$0xff] %vm279, %v4467
      %4500 = vst.msk [vmem:[#allocation4 + $0x130] sm:$0xff] %vm279, %v4468
      %4501 = vst.msk [vmem:[#allocation4 + $0x140] sm:$0xff] %vm279, %v4469
      %4502 = vst.msk [vmem:[#allocation4 + $0x150] sm:$0xff] %vm279, %v4470
      %4503 = vst.msk [vmem:[#allocation4 + $0x160] sm:$0xff] %vm279, %v4471
      %4504 = vst.msk [vmem:[#allocation4 + $0x170] sm:$0xff] %vm279, %v4472
      %4505 = vst.msk [vmem:[#allocation4 + $0x180] sm:$0xff] %vm279, %v4473
      %4506 = vst.msk [vmem:[#allocation4 + $0x190] sm:$0xff] %vm279, %v4474
      %4507 = vst.msk [vmem:[#allocation4 + $0x1a0] sm:$0xff] %vm279, %v4475
      %4508 = vst.msk [vmem:[#allocation4 + $0x1b0] sm:$0xff] %vm279, %v4476
      %4509 = vst.msk [vmem:[#allocation4 + $0x1c0] sm:$0xff] %vm279, %v4477
      %4510 = vst.msk [vmem:[#allocation4 + $0x1d0] sm:$0xff] %vm279, %v4478
      %4511 = vst.msk [vmem:[#allocation4 + $0x1e0] sm:$0xff] %vm279, %v4479
      %4512 = vst.msk [vmem:[#allocation4 + $0x1f0] sm:$0xff] %vm279, %v4480
      %v4513 = vld [vmem:[#allocation2 + $0x1] sm:$0xff]
      %v4514 = vld [vmem:[#allocation2 + $0x9] sm:$0xff]
      %v4515 = vld [vmem:[#allocation2 + $0x19] sm:$0xff]
      %v4516 = vld [vmem:[#allocation2 + $0x21] sm:$0xff]
      %v4517 = vld [vmem:[#allocation2 + $0x31] sm:$0xff]
      %v4518 = vld [vmem:[#allocation2 + $0x39] sm:$0xff]
      %v4519 = vld [vmem:[#allocation2 + $0x49] sm:$0xff]
      %v4520 = vld [vmem:[#allocation2 + $0x51] sm:$0xff]
      %v4521 = vld [vmem:[#allocation2 + $0x61] sm:$0xff]
      %v4522 = vld [vmem:[#allocation2 + $0x69] sm:$0xff]
      %v4523 = vld [vmem:[#allocation2 + $0x79] sm:$0xff]
      %v4524 = vld [vmem:[#allocation2 + $0x81] sm:$0xff]
      %v4525 = vld [vmem:[#allocation2 + $0x91] sm:$0xff]
      %v4526 = vld [vmem:[#allocation2 + $0x99] sm:$0xff]
      %v4527 = vld [vmem:[#allocation2 + $0xa9] sm:$0xff]
      %v4528 = vld [vmem:[#allocation2 + $0xb1] sm:$0xff]
      %v4529 = vld [vmem:[#allocation2 + $0xc1] sm:$0xff]
      %v4530 = vld [vmem:[#allocation2 + $0xc9] sm:$0xff]
      %v4531 = vld [vmem:[#allocation2 + $0xd9] sm:$0xff]
      %v4532 = vld [vmem:[#allocation2 + $0xe1] sm:$0xff]
      %v4533 = vld [vmem:[#allocation2 + $0xf1] sm:$0xff]
      %v4534 = vld [vmem:[#allocation2 + $0xf9] sm:$0xff]
      %v4535 = vld [vmem:[#allocation2 + $0x109] sm:$0xff]
      %v4536 = vld [vmem:[#allocation2 + $0x111] sm:$0xff]
      %v4537 = vld [vmem:[#allocation2 + $0x121] sm:$0xff]
      %v4538 = vld [vmem:[#allocation2 + $0x129] sm:$0xff]
      %v4539 = vld [vmem:[#allocation2 + $0x139] sm:$0xff]
      %v4540 = vld [vmem:[#allocation2 + $0x141] sm:$0xff]
      %v4541 = vld [vmem:[#allocation2 + $0x151] sm:$0xff]
      %v4542 = vld [vmem:[#allocation2 + $0x159] sm:$0xff]
      %v4543 = vld [vmem:[#allocation2 + $0x169] sm:$0xff]
      %v4544 = vld [vmem:[#allocation2 + $0x171] sm:$0xff]
      %4577 = vrot.lane.b32.xlu0 %v4513, 16
      %v4578 = vpop.permute.xlu0 %4577
      %4579 = vrot.lane.b32.xlu0 %v4514, 16
      %v4580 = vpop.permute.xlu0 %4579
      %4581 = vrot.lane.b32.xlu0 %v4515, 16
      %v4582 = vpop.permute.xlu0 %4581
      %4583 = vrot.lane.b32.xlu0 %v4516, 16
      %v4584 = vpop.permute.xlu0 %4583
      %4585 = vrot.lane.b32.xlu0 %v4517, 16
      %v4586 = vpop.permute.xlu0 %4585
      %4587 = vrot.lane.b32.xlu0 %v4518, 16
      %v4588 = vpop.permute.xlu0 %4587
      %4589 = vrot.lane.b32.xlu0 %v4519, 16
      %v4590 = vpop.permute.xlu0 %4589
      %4591 = vrot.lane.b32.xlu0 %v4520, 16
      %v4592 = vpop.permute.xlu0 %4591
      %4593 = vrot.lane.b32.xlu0 %v4521, 16
      %v4594 = vpop.permute.xlu0 %4593
      %4595 = vrot.lane.b32.xlu0 %v4522, 16
      %v4596 = vpop.permute.xlu0 %4595
      %4597 = vrot.lane.b32.xlu0 %v4523, 16
      %v4598 = vpop.permute.xlu0 %4597
      %4599 = vrot.lane.b32.xlu0 %v4524, 16
      %v4600 = vpop.permute.xlu0 %4599
      %4601 = vrot.lane.b32.xlu0 %v4525, 16
      %v4602 = vpop.permute.xlu0 %4601
      %4603 = vrot.lane.b32.xlu0 %v4526, 16
      %v4604 = vpop.permute.xlu0 %4603
      %4605 = vrot.lane.b32.xlu0 %v4527, 16
      %v4606 = vpop.permute.xlu0 %4605
      %4607 = vrot.lane.b32.xlu0 %v4528, 16
      %v4608 = vpop.permute.xlu0 %4607
      %4609 = vrot.lane.b32.xlu0 %v4529, 16
      %v4610 = vpop.permute.xlu0 %4609
      %4611 = vrot.lane.b32.xlu0 %v4530, 16
      %v4612 = vpop.permute.xlu0 %4611
      %4613 = vrot.lane.b32.xlu0 %v4531, 16
      %v4614 = vpop.permute.xlu0 %4613
      %4615 = vrot.lane.b32.xlu0 %v4532, 16
      %v4616 = vpop.permute.xlu0 %4615
      %4617 = vrot.lane.b32.xlu0 %v4533, 16
      %v4618 = vpop.permute.xlu0 %4617
      %4619 = vrot.lane.b32.xlu0 %v4534, 16
      %v4620 = vpop.permute.xlu0 %4619
      %4621 = vrot.lane.b32.xlu0 %v4535, 16
      %v4622 = vpop.permute.xlu0 %4621
      %4623 = vrot.lane.b32.xlu0 %v4536, 16
      %v4624 = vpop.permute.xlu0 %4623
      %4625 = vrot.lane.b32.xlu0 %v4537, 16
      %v4626 = vpop.permute.xlu0 %4625
      %4627 = vrot.lane.b32.xlu0 %v4538, 16
      %v4628 = vpop.permute.xlu0 %4627
      %4629 = vrot.lane.b32.xlu0 %v4539, 16
      %v4630 = vpop.permute.xlu0 %4629
      %4631 = vrot.lane.b32.xlu0 %v4540, 16
      %v4632 = vpop.permute.xlu0 %4631
      %4633 = vrot.lane.b32.xlu0 %v4541, 16
      %v4634 = vpop.permute.xlu0 %4633
      %4635 = vrot.lane.b32.xlu0 %v4542, 16
      %v4636 = vpop.permute.xlu0 %4635
      %4637 = vrot.lane.b32.xlu0 %v4543, 16
      %v4638 = vpop.permute.xlu0 %4637
      %4639 = vrot.lane.b32.xlu0 %v4544, 16
      %v4640 = vpop.permute.xlu0 %4639
      %4673 = vst.msk [vmem:[#allocation4] sm:$0xff] %vm2720, %v4578
      %4674 = vst.msk [vmem:[#allocation4 + $0x10] sm:$0xff] %vm2720, %v4580
      %4675 = vst.msk [vmem:[#allocation4 + $0x20] sm:$0xff] %vm2720, %v4582
      %4676 = vst.msk [vmem:[#allocation4 + $0x30] sm:$0xff] %vm2720, %v4584
      %4677 = vst.msk [vmem:[#allocation4 + $0x40] sm:$0xff] %vm2720, %v4586
      %4678 = vst.msk [vmem:[#allocation4 + $0x50] sm:$0xff] %vm2720, %v4588
      %4679 = vst.msk [vmem:[#allocation4 + $0x60] sm:$0xff] %vm2720, %v4590
      %4680 = vst.msk [vmem:[#allocation4 + $0x70] sm:$0xff] %vm2720, %v4592
      %4681 = vst.msk [vmem:[#allocation4 + $0x80] sm:$0xff] %vm2720, %v4594
      %4682 = vst.msk [vmem:[#allocation4 + $0x90] sm:$0xff] %vm2720, %v4596
      %4683 = vst.msk [vmem:[#allocation4 + $0xa0] sm:$0xff] %vm2720, %v4598
      %4684 = vst.msk [vmem:[#allocation4 + $0xb0] sm:$0xff] %vm2720, %v4600
      %4685 = vst.msk [vmem:[#allocation4 + $0xc0] sm:$0xff] %vm2720, %v4602
      %4686 = vst.msk [vmem:[#allocation4 + $0xd0] sm:$0xff] %vm2720, %v4604
      %4687 = vst.msk [vmem:[#allocation4 + $0xe0] sm:$0xff] %vm2720, %v4606
      %4688 = vst.msk [vmem:[#allocation4 + $0xf0] sm:$0xff] %vm2720, %v4608
      %4689 = vst.msk [vmem:[#allocation4 + $0x100] sm:$0xff] %vm2720, %v4610
      %4690 = vst.msk [vmem:[#allocation4 + $0x110] sm:$0xff] %vm2720, %v4612
      %4691 = vst.msk [vmem:[#allocation4 + $0x120] sm:$0xff] %vm2720, %v4614
      %4692 = vst.msk [vmem:[#allocation4 + $0x130] sm:$0xff] %vm2720, %v4616
      %4693 = vst.msk [vmem:[#allocation4 + $0x140] sm:$0xff] %vm2720, %v4618
      %4694 = vst.msk [vmem:[#allocation4 + $0x150] sm:$0xff] %vm2720, %v4620
      %4695 = vst.msk [vmem:[#allocation4 + $0x160] sm:$0xff] %vm2720, %v4622
      %4696 = vst.msk [vmem:[#allocation4 + $0x170] sm:$0xff] %vm2720, %v4624
      %4697 = vst.msk [vmem:[#allocation4 + $0x180] sm:$0xff] %vm2720, %v4626
      %4698 = vst.msk [vmem:[#allocation4 + $0x190] sm:$0xff] %vm2720, %v4628
      %4699 = vst.msk [vmem:[#allocation4 + $0x1a0] sm:$0xff] %vm2720, %v4630
      %4700 = vst.msk [vmem:[#allocation4 + $0x1b0] sm:$0xff] %vm2720, %v4632
      %4701 = vst.msk [vmem:[#allocation4 + $0x1c0] sm:$0xff] %vm2720, %v4634
      %4702 = vst.msk [vmem:[#allocation4 + $0x1d0] sm:$0xff] %vm2720, %v4636
      %4703 = vst.msk [vmem:[#allocation4 + $0x1e0] sm:$0xff] %vm2720, %v4638
      %4704 = vst.msk [vmem:[#allocation4 + $0x1f0] sm:$0xff] %vm2720, %v4640
      %v4705 = vld [vmem:[#allocation2 + $0x2] sm:$0xff]
      %v4706 = vld [vmem:[#allocation2 + $0xa] sm:$0xff]
      %v4707 = vld [vmem:[#allocation2 + $0x1a] sm:$0xff]
      %v4708 = vld [vmem:[#allocation2 + $0x22] sm:$0xff]
      %v4709 = vld [vmem:[#allocation2 + $0x32] sm:$0xff]
      %v4710 = vld [vmem:[#allocation2 + $0x3a] sm:$0xff]
      %v4711 = vld [vmem:[#allocation2 + $0x4a] sm:$0xff]
      %v4712 = vld [vmem:[#allocation2 + $0x52] sm:$0xff]
      %v4713 = vld [vmem:[#allocation2 + $0x62] sm:$0xff]
      %v4714 = vld [vmem:[#allocation2 + $0x6a] sm:$0xff]
      %v4715 = vld [vmem:[#allocation2 + $0x7a] sm:$0xff]
      %v4716 = vld [vmem:[#allocation2 + $0x82] sm:$0xff]
      %v4717 = vld [vmem:[#allocation2 + $0x92] sm:$0xff]
      %v4718 = vld [vmem:[#allocation2 + $0x9a] sm:$0xff]
      %v4719 = vld [vmem:[#allocation2 + $0xaa] sm:$0xff]
      %v4720 = vld [vmem:[#allocation2 + $0xb2] sm:$0xff]
      %v4721 = vld [vmem:[#allocation2 + $0xc2] sm:$0xff]
      %v4722 = vld [vmem:[#allocation2 + $0xca] sm:$0xff]
      %v4723 = vld [vmem:[#allocation2 + $0xda] sm:$0xff]
      %v4724 = vld [vmem:[#allocation2 + $0xe2] sm:$0xff]
      %v4725 = vld [vmem:[#allocation2 + $0xf2] sm:$0xff]
      %v4726 = vld [vmem:[#allocation2 + $0xfa] sm:$0xff]
      %v4727 = vld [vmem:[#allocation2 + $0x10a] sm:$0xff]
      %v4728 = vld [vmem:[#allocation2 + $0x112] sm:$0xff]
      %v4729 = vld [vmem:[#allocation2 + $0x122] sm:$0xff]
      %v4730 = vld [vmem:[#allocation2 + $0x12a] sm:$0xff]
      %v4731 = vld [vmem:[#allocation2 + $0x13a] sm:$0xff]
      %v4732 = vld [vmem:[#allocation2 + $0x142] sm:$0xff]
      %v4733 = vld [vmem:[#allocation2 + $0x152] sm:$0xff]
      %v4734 = vld [vmem:[#allocation2 + $0x15a] sm:$0xff]
      %v4735 = vld [vmem:[#allocation2 + $0x16a] sm:$0xff]
      %v4736 = vld [vmem:[#allocation2 + $0x172] sm:$0xff]
      %4769 = vrot.lane.b32.xlu0 %v4705, 32
      %v4770 = vpop.permute.xlu0 %4769
      %4771 = vrot.lane.b32.xlu0 %v4706, 32
      %v4772 = vpop.permute.xlu0 %4771
      %4773 = vrot.lane.b32.xlu0 %v4707, 32
      %v4774 = vpop.permute.xlu0 %4773
      %4775 = vrot.lane.b32.xlu0 %v4708, 32
      %v4776 = vpop.permute.xlu0 %4775
      %4777 = vrot.lane.b32.xlu0 %v4709, 32
      %v4778 = vpop.permute.xlu0 %4777
      %4779 = vrot.lane.b32.xlu0 %v4710, 32
      %v4780 = vpop.permute.xlu0 %4779
      %4781 = vrot.lane.b32.xlu0 %v4711, 32
      %v4782 = vpop.permute.xlu0 %4781
      %4783 = vrot.lane.b32.xlu0 %v4712, 32
      %v4784 = vpop.permute.xlu0 %4783
      %4785 = vrot.lane.b32.xlu0 %v4713, 32
      %v4786 = vpop.permute.xlu0 %4785
      %4787 = vrot.lane.b32.xlu0 %v4714, 32
      %v4788 = vpop.permute.xlu0 %4787
      %4789 = vrot.lane.b32.xlu0 %v4715, 32
      %v4790 = vpop.permute.xlu0 %4789
      %4791 = vrot.lane.b32.xlu0 %v4716, 32
      %v4792 = vpop.permute.xlu0 %4791
      %4793 = vrot.lane.b32.xlu0 %v4717, 32
      %v4794 = vpop.permute.xlu0 %4793
      %4795 = vrot.lane.b32.xlu0 %v4718, 32
      %v4796 = vpop.permute.xlu0 %4795
      %4797 = vrot.lane.b32.xlu0 %v4719, 32
      %v4798 = vpop.permute.xlu0 %4797
      %4799 = vrot.lane.b32.xlu0 %v4720, 32
      %v4800 = vpop.permute.xlu0 %4799
      %4801 = vrot.lane.b32.xlu0 %v4721, 32
      %v4802 = vpop.permute.xlu0 %4801
      %4803 = vrot.lane.b32.xlu0 %v4722, 32
      %v4804 = vpop.permute.xlu0 %4803
      %4805 = vrot.lane.b32.xlu0 %v4723, 32
      %v4806 = vpop.permute.xlu0 %4805
      %4807 = vrot.lane.b32.xlu0 %v4724, 32
      %v4808 = vpop.permute.xlu0 %4807
      %4809 = vrot.lane.b32.xlu0 %v4725, 32
      %v4810 = vpop.permute.xlu0 %4809
      %4811 = vrot.lane.b32.xlu0 %v4726, 32
      %v4812 = vpop.permute.xlu0 %4811
      %4813 = vrot.lane.b32.xlu0 %v4727, 32
      %v4814 = vpop.permute.xlu0 %4813
      %4815 = vrot.lane.b32.xlu0 %v4728, 32
      %v4816 = vpop.permute.xlu0 %4815
      %4817 = vrot.lane.b32.xlu0 %v4729, 32
      %v4818 = vpop.permute.xlu0 %4817
      %4819 = vrot.lane.b32.xlu0 %v4730, 32
      %v4820 = vpop.permute.xlu0 %4819
      %4821 = vrot.lane.b32.xlu0 %v4731, 32
      %v4822 = vpop.permute.xlu0 %4821
      %4823 = vrot.lane.b32.xlu0 %v4732, 32
      %v4824 = vpop.permute.xlu0 %4823
      %4825 = vrot.lane.b32.xlu0 %v4733, 32
      %v4826 = vpop.permute.xlu0 %4825
      %4827 = vrot.lane.b32.xlu0 %v4734, 32
      %v4828 = vpop.permute.xlu0 %4827
      %4829 = vrot.lane.b32.xlu0 %v4735, 32
      %v4830 = vpop.permute.xlu0 %4829
      %4831 = vrot.lane.b32.xlu0 %v4736, 32
      %v4832 = vpop.permute.xlu0 %4831
      %4865 = vst.msk [vmem:[#allocation4] sm:$0xff] %vm2913, %v4770
      %4866 = vst.msk [vmem:[#allocation4 + $0x10] sm:$0xff] %vm2913, %v4772
      %4867 = vst.msk [vmem:[#allocation4 + $0x20] sm:$0xff] %vm2913, %v4774
      %4868 = vst.msk [vmem:[#allocation4 + $0x30] sm:$0xff] %vm2913, %v4776
      %4869 = vst.msk [vmem:[#allocation4 + $0x40] sm:$0xff] %vm2913, %v4778
      %4870 = vst.msk [vmem:[#allocation4 + $0x50] sm:$0xff] %vm2913, %v4780
      %4871 = vst.msk [vmem:[#allocation4 + $0x60] sm:$0xff] %vm2913, %v4782
      %4872 = vst.msk [vmem:[#allocation4 + $0x70] sm:$0xff] %vm2913, %v4784
      %4873 = vst.msk [vmem:[#allocation4 + $0x80] sm:$0xff] %vm2913, %v4786
      %4874 = vst.msk [vmem:[#allocation4 + $0x90] sm:$0xff] %vm2913, %v4788
      %4875 = vst.msk [vmem:[#allocation4 + $0xa0] sm:$0xff] %vm2913, %v4790
      %4876 = vst.msk [vmem:[#allocation4 + $0xb0] sm:$0xff] %vm2913, %v4792
      %4877 = vst.msk [vmem:[#allocation4 + $0xc0] sm:$0xff] %vm2913, %v4794
      %4878 = vst.msk [vmem:[#allocation4 + $0xd0] sm:$0xff] %vm2913, %v4796
      %4879 = vst.msk [vmem:[#allocation4 + $0xe0] sm:$0xff] %vm2913, %v4798
      %4880 = vst.msk [vmem:[#allocation4 + $0xf0] sm:$0xff] %vm2913, %v4800
      %4881 = vst.msk [vmem:[#allocation4 + $0x100] sm:$0xff] %vm2913, %v4802
      %4882 = vst.msk [vmem:[#allocation4 + $0x110] sm:$0xff] %vm2913, %v4804
      %4883 = vst.msk [vmem:[#allocation4 + $0x120] sm:$0xff] %vm2913, %v4806
      %4884 = vst.msk [vmem:[#allocation4 + $0x130] sm:$0xff] %vm2913, %v4808
      %4885 = vst.msk [vmem:[#allocation4 + $0x140] sm:$0xff] %vm2913, %v4810
      %4886 = vst.msk [vmem:[#allocation4 + $0x150] sm:$0xff] %vm2913, %v4812
      %4887 = vst.msk [vmem:[#allocation4 + $0x160] sm:$0xff] %vm2913, %v4814
      %4888 = vst.msk [vmem:[#allocation4 + $0x170] sm:$0xff] %vm2913, %v4816
      %4889 = vst.msk [vmem:[#allocation4 + $0x180] sm:$0xff] %vm2913, %v4818
      %4890 = vst.msk [vmem:[#allocation4 + $0x190] sm:$0xff] %vm2913, %v4820
      %4891 = vst.msk [vmem:[#allocation4 + $0x1a0] sm:$0xff] %vm2913, %v4822
      %4892 = vst.msk [vmem:[#allocation4 + $0x1b0] sm:$0xff] %vm2913, %v4824
      %4893 = vst.msk [vmem:[#allocation4 + $0x1c0] sm:$0xff] %vm2913, %v4826
      %4894 = vst.msk [vmem:[#allocation4 + $0x1d0] sm:$0xff] %vm2913, %v4828
      %4895 = vst.msk [vmem:[#allocation4 + $0x1e0] sm:$0xff] %vm2913, %v4830
      %4896 = vst.msk [vmem:[#allocation4 + $0x1f0] sm:$0xff] %vm2913, %v4832
      %v4897 = vld [vmem:[%s400] sm:$0xff]
      %v4898 = vld [vmem:[%s400 + $0x8] sm:$0xff]
      %v4899 = vld [vmem:[%s400 + $0x18] sm:$0xff]
      %v4900 = vld [vmem:[%s400 + $0x20] sm:$0xff]
      %v4901 = vld [vmem:[%s400 + $0x30] sm:$0xff]
      %v4902 = vld [vmem:[%s400 + $0x38] sm:$0xff]
      %v4903 = vld [vmem:[%s400 + $0x48] sm:$0xff]
      %v4904 = vld [vmem:[%s400 + $0x50] sm:$0xff]
      %v4905 = vld [vmem:[%s400 + $0x60] sm:$0xff]
      %v4906 = vld [vmem:[%s400 + $0x68] sm:$0xff]
      %v4907 = vld [vmem:[%s400 + $0x78] sm:$0xff]
      %v4908 = vld [vmem:[%s400 + $0x80] sm:$0xff]
      %v4909 = vld [vmem:[%s400 + $0x90] sm:$0xff]
      %v4910 = vld [vmem:[%s400 + $0x98] sm:$0xff]
      %v4911 = vld [vmem:[%s400 + $0xa8] sm:$0xff]
      %v4912 = vld [vmem:[%s400 + $0xb0] sm:$0xff]
      %v4913 = vld [vmem:[%s400 + $0xc0] sm:$0xff]
      %v4914 = vld [vmem:[%s400 + $0xc8] sm:$0xff]
      %v4915 = vld [vmem:[%s400 + $0xd8] sm:$0xff]
      %v4916 = vld [vmem:[%s400 + $0xe0] sm:$0xff]
      %v4917 = vld [vmem:[%s400 + $0xf0] sm:$0xff]
      %v4918 = vld [vmem:[%s400 + $0xf8] sm:$0xff]
      %v4919 = vld [vmem:[%s400 + $0x108] sm:$0xff]
      %v4920 = vld [vmem:[%s400 + $0x110] sm:$0xff]
      %v4921 = vld [vmem:[%s400 + $0x120] sm:$0xff]
      %v4922 = vld [vmem:[%s400 + $0x128] sm:$0xff]
      %v4923 = vld [vmem:[%s400 + $0x138] sm:$0xff]
      %v4924 = vld [vmem:[%s400 + $0x140] sm:$0xff]
      %v4925 = vld [vmem:[%s400 + $0x150] sm:$0xff]
      %v4926 = vld [vmem:[%s400 + $0x158] sm:$0xff]
      %v4927 = vld [vmem:[%s400 + $0x168] sm:$0xff]
      %v4928 = vld [vmem:[%s400 + $0x170] sm:$0xff]
      %4961 = vrot.lane.b32.xlu0 %v4897, 48
      %v4962 = vpop.permute.xlu0 %4961
      %4963 = vrot.lane.b32.xlu0 %v4898, 48
      %v4964 = vpop.permute.xlu0 %4963
      %4965 = vrot.lane.b32.xlu0 %v4899, 48
      %v4966 = vpop.permute.xlu0 %4965
      %4967 = vrot.lane.b32.xlu0 %v4900, 48
      %v4968 = vpop.permute.xlu0 %4967
      %4969 = vrot.lane.b32.xlu0 %v4901, 48
      %v4970 = vpop.permute.xlu0 %4969
      %4971 = vrot.lane.b32.xlu0 %v4902, 48
      %v4972 = vpop.permute.xlu0 %4971
      %4973 = vrot.lane.b32.xlu0 %v4903, 48
      %v4974 = vpop.permute.xlu0 %4973
      %4975 = vrot.lane.b32.xlu0 %v4904, 48
      %v4976 = vpop.permute.xlu0 %4975
      %4977 = vrot.lane.b32.xlu0 %v4905, 48
      %v4978 = vpop.permute.xlu0 %4977
      %4979 = vrot.lane.b32.xlu0 %v4906, 48
      %v4980 = vpop.permute.xlu0 %4979
      %4981 = vrot.lane.b32.xlu0 %v4907, 48
      %v4982 = vpop.permute.xlu0 %4981
      %4983 = vrot.lane.b32.xlu0 %v4908, 48
      %v4984 = vpop.permute.xlu0 %4983
      %4985 = vrot.lane.b32.xlu0 %v4909, 48
      %v4986 = vpop.permute.xlu0 %4985
      %4987 = vrot.lane.b32.xlu0 %v4910, 48
      %v4988 = vpop.permute.xlu0 %4987
      %4989 = vrot.lane.b32.xlu0 %v4911, 48
      %v4990 = vpop.permute.xlu0 %4989
      %4991 = vrot.lane.b32.xlu0 %v4912, 48
      %v4992 = vpop.permute.xlu0 %4991
      %4993 = vrot.lane.b32.xlu0 %v4913, 48
      %v4994 = vpop.permute.xlu0 %4993
      %4995 = vrot.lane.b32.xlu0 %v4914, 48
      %v4996 = vpop.permute.xlu0 %4995
      %4997 = vrot.lane.b32.xlu0 %v4915, 48
      %v4998 = vpop.permute.xlu0 %4997
      %4999 = vrot.lane.b32.xlu0 %v4916, 48
      %v5000 = vpop.permute.xlu0 %4999
      %5001 = vrot.lane.b32.xlu0 %v4917, 48
      %v5002 = vpop.permute.xlu0 %5001
      %5003 = vrot.lane.b32.xlu0 %v4918, 48
      %v5004 = vpop.permute.xlu0 %5003
      %5005 = vrot.lane.b32.xlu0 %v4919, 48
      %v5006 = vpop.permute.xlu0 %5005
      %5007 = vrot.lane.b32.xlu0 %v4920, 48
      %v5008 = vpop.permute.xlu0 %5007
      %5009 = vrot.lane.b32.xlu0 %v4921, 48
      %v5010 = vpop.permute.xlu0 %5009
      %5011 = vrot.lane.b32.xlu0 %v4922, 48
      %v5012 = vpop.permute.xlu0 %5011
      %5013 = vrot.lane.b32.xlu0 %v4923, 48
      %v5014 = vpop.permute.xlu0 %5013
      %5015 = vrot.lane.b32.xlu0 %v4924, 48
      %v5016 = vpop.permute.xlu0 %5015
      %5017 = vrot.lane.b32.xlu0 %v4925, 48
      %v5018 = vpop.permute.xlu0 %5017
      %5019 = vrot.lane.b32.xlu0 %v4926, 48
      %v5020 = vpop.permute.xlu0 %5019
      %5021 = vrot.lane.b32.xlu0 %v4927, 48
      %v5022 = vpop.permute.xlu0 %5021
      %5023 = vrot.lane.b32.xlu0 %v4928, 48
      %v5024 = vpop.permute.xlu0 %5023
      %5057 = vst.msk [vmem:[#allocation4] sm:$0xff] %vm3106, %v4962
      %5058 = vst.msk [vmem:[#allocation4 + $0x10] sm:$0xff] %vm3106, %v4964
      %5059 = vst.msk [vmem:[#allocation4 + $0x20] sm:$0xff] %vm3106, %v4966
      %5060 = vst.msk [vmem:[#allocation4 + $0x30] sm:$0xff] %vm3106, %v4968
      %5061 = vst.msk [vmem:[#allocation4 + $0x40] sm:$0xff] %vm3106, %v4970
      %5062 = vst.msk [vmem:[#allocation4 + $0x50] sm:$0xff] %vm3106, %v4972
      %5063 = vst.msk [vmem:[#allocation4 + $0x60] sm:$0xff] %vm3106, %v4974
      %5064 = vst.msk [vmem:[#allocation4 + $0x70] sm:$0xff] %vm3106, %v4976
      %5065 = vst.msk [vmem:[#allocation4 + $0x80] sm:$0xff] %vm3106, %v4978
      %5066 = vst.msk [vmem:[#allocation4 + $0x90] sm:$0xff] %vm3106, %v4980
      %5067 = vst.msk [vmem:[#allocation4 + $0xa0] sm:$0xff] %vm3106, %v4982
      %5068 = vst.msk [vmem:[#allocation4 + $0xb0] sm:$0xff] %vm3106, %v4984
      %5069 = vst.msk [vmem:[#allocation4 + $0xc0] sm:$0xff] %vm3106, %v4986
      %5070 = vst.msk [vmem:[#allocation4 + $0xd0] sm:$0xff] %vm3106, %v4988
      %5071 = vst.msk [vmem:[#allocation4 + $0xe0] sm:$0xff] %vm3106, %v4990
      %5072 = vst.msk [vmem:[#allocation4 + $0xf0] sm:$0xff] %vm3106, %v4992
      %5073 = vst.msk [vmem:[#allocation4 + $0x100] sm:$0xff] %vm3106, %v4994
      %5074 = vst.msk [vmem:[#allocation4 + $0x110] sm:$0xff] %vm3106, %v4996
      %5075 = vst.msk [vmem:[#allocation4 + $0x120] sm:$0xff] %vm3106, %v4998
      %5076 = vst.msk [vmem:[#allocation4 + $0x130] sm:$0xff] %vm3106, %v5000
      %5077 = vst.msk [vmem:[#allocation4 + $0x140] sm:$0xff] %vm3106, %v5002
      %5078 = vst.msk [vmem:[#allocation4 + $0x150] sm:$0xff] %vm3106, %v5004
      %5079 = vst.msk [vmem:[#allocation4 + $0x160] sm:$0xff] %vm3106, %v5006
      %5080 = vst.msk [vmem:[#allocation4 + $0x170] sm:$0xff] %vm3106, %v5008
      %5081 = vst.msk [vmem:[#allocation4 + $0x180] sm:$0xff] %vm3106, %v5010
      %5082 = vst.msk [vmem:[#allocation4 + $0x190] sm:$0xff] %vm3106, %v5012
      %5083 = vst.msk [vmem:[#allocation4 + $0x1a0] sm:$0xff] %vm3106, %v5014
      %5084 = vst.msk [vmem:[#allocation4 + $0x1b0] sm:$0xff] %vm3106, %v5016
      %5085 = vst.msk [vmem:[#allocation4 + $0x1c0] sm:$0xff] %vm3106, %v5018
      %5086 = vst.msk [vmem:[#allocation4 + $0x1d0] sm:$0xff] %vm3106, %v5020
      %5087 = vst.msk [vmem:[#allocation4 + $0x1e0] sm:$0xff] %vm3106, %v5022
      %5088 = vst.msk [vmem:[#allocation4 + $0x1f0] sm:$0xff] %vm3106, %v5024
      %v5089 = vld [vmem:[%s400 + $0x1] sm:$0xff]
      %v5090 = vld [vmem:[%s400 + $0x9] sm:$0xff]
      %v5091 = vld [vmem:[%s400 + $0x19] sm:$0xff]
      %v5092 = vld [vmem:[%s400 + $0x21] sm:$0xff]
      %v5093 = vld [vmem:[%s400 + $0x31] sm:$0xff]
      %v5094 = vld [vmem:[%s400 + $0x39] sm:$0xff]
      %v5095 = vld [vmem:[%s400 + $0x49] sm:$0xff]
      %v5096 = vld [vmem:[%s400 + $0x51] sm:$0xff]
      %v5097 = vld [vmem:[%s400 + $0x61] sm:$0xff]
      %v5098 = vld [vmem:[%s400 + $0x69] sm:$0xff]
      %v5099 = vld [vmem:[%s400 + $0x79] sm:$0xff]
      %v5100 = vld [vmem:[%s400 + $0x81] sm:$0xff]
      %v5101 = vld [vmem:[%s400 + $0x91] sm:$0xff]
      %v5102 = vld [vmem:[%s400 + $0x99] sm:$0xff]
      %v5103 = vld [vmem:[%s400 + $0xa9] sm:$0xff]
      %v5104 = vld [vmem:[%s400 + $0xb1] sm:$0xff]
      %v5105 = vld [vmem:[%s400 + $0xc1] sm:$0xff]
      %v5106 = vld [vmem:[%s400 + $0xc9] sm:$0xff]
      %v5107 = vld [vmem:[%s400 + $0xd9] sm:$0xff]
      %v5108 = vld [vmem:[%s400 + $0xe1] sm:$0xff]
      %v5109 = vld [vmem:[%s400 + $0xf1] sm:$0xff]
      %v5110 = vld [vmem:[%s400 + $0xf9] sm:$0xff]
      %v5111 = vld [vmem:[%s400 + $0x109] sm:$0xff]
      %v5112 = vld [vmem:[%s400 + $0x111] sm:$0xff]
      %v5113 = vld [vmem:[%s400 + $0x121] sm:$0xff]
      %v5114 = vld [vmem:[%s400 + $0x129] sm:$0xff]
      %v5115 = vld [vmem:[%s400 + $0x139] sm:$0xff]
      %v5116 = vld [vmem:[%s400 + $0x141] sm:$0xff]
      %v5117 = vld [vmem:[%s400 + $0x151] sm:$0xff]
      %v5118 = vld [vmem:[%s400 + $0x159] sm:$0xff]
      %v5119 = vld [vmem:[%s400 + $0x169] sm:$0xff]
      %v5120 = vld [vmem:[%s400 + $0x171] sm:$0xff]
      %5153 = vrot.lane.b32.xlu0 %v5089, 64
      %v5154 = vpop.permute.xlu0 %5153
      %5155 = vrot.lane.b32.xlu0 %v5090, 64
      %v5156 = vpop.permute.xlu0 %5155
      %5157 = vrot.lane.b32.xlu0 %v5091, 64
      %v5158 = vpop.permute.xlu0 %5157
      %5159 = vrot.lane.b32.xlu0 %v5092, 64
      %v5160 = vpop.permute.xlu0 %5159
      %5161 = vrot.lane.b32.xlu0 %v5093, 64
      %v5162 = vpop.permute.xlu0 %5161
      %5163 = vrot.lane.b32.xlu0 %v5094, 64
      %v5164 = vpop.permute.xlu0 %5163
      %5165 = vrot.lane.b32.xlu0 %v5095, 64
      %v5166 = vpop.permute.xlu0 %5165
      %5167 = vrot.lane.b32.xlu0 %v5096, 64
      %v5168 = vpop.permute.xlu0 %5167
      %5169 = vrot.lane.b32.xlu0 %v5097, 64
      %v5170 = vpop.permute.xlu0 %5169
      %5171 = vrot.lane.b32.xlu0 %v5098, 64
      %v5172 = vpop.permute.xlu0 %5171
      %5173 = vrot.lane.b32.xlu0 %v5099, 64
      %v5174 = vpop.permute.xlu0 %5173
      %5175 = vrot.lane.b32.xlu0 %v5100, 64
      %v5176 = vpop.permute.xlu0 %5175
      %5177 = vrot.lane.b32.xlu0 %v5101, 64
      %v5178 = vpop.permute.xlu0 %5177
      %5179 = vrot.lane.b32.xlu0 %v5102, 64
      %v5180 = vpop.permute.xlu0 %5179
      %5181 = vrot.lane.b32.xlu0 %v5103, 64
      %v5182 = vpop.permute.xlu0 %5181
      %5183 = vrot.lane.b32.xlu0 %v5104, 64
      %v5184 = vpop.permute.xlu0 %5183
      %5185 = vrot.lane.b32.xlu0 %v5105, 64
      %v5186 = vpop.permute.xlu0 %5185
      %5187 = vrot.lane.b32.xlu0 %v5106, 64
      %v5188 = vpop.permute.xlu0 %5187
      %5189 = vrot.lane.b32.xlu0 %v5107, 64
      %v5190 = vpop.permute.xlu0 %5189
      %5191 = vrot.lane.b32.xlu0 %v5108, 64
      %v5192 = vpop.permute.xlu0 %5191
      %5193 = vrot.lane.b32.xlu0 %v5109, 64
      %v5194 = vpop.permute.xlu0 %5193
      %5195 = vrot.lane.b32.xlu0 %v5110, 64
      %v5196 = vpop.permute.xlu0 %5195
      %5197 = vrot.lane.b32.xlu0 %v5111, 64
      %v5198 = vpop.permute.xlu0 %5197
      %5199 = vrot.lane.b32.xlu0 %v5112, 64
      %v5200 = vpop.permute.xlu0 %5199
      %5201 = vrot.lane.b32.xlu0 %v5113, 64
      %v5202 = vpop.permute.xlu0 %5201
      %5203 = vrot.lane.b32.xlu0 %v5114, 64
      %v5204 = vpop.permute.xlu0 %5203
      %5205 = vrot.lane.b32.xlu0 %v5115, 64
      %v5206 = vpop.permute.xlu0 %5205
      %5207 = vrot.lane.b32.xlu0 %v5116, 64
      %v5208 = vpop.permute.xlu0 %5207
      %5209 = vrot.lane.b32.xlu0 %v5117, 64
      %v5210 = vpop.permute.xlu0 %5209
      %5211 = vrot.lane.b32.xlu0 %v5118, 64
      %v5212 = vpop.permute.xlu0 %5211
      %5213 = vrot.lane.b32.xlu0 %v5119, 64
      %v5214 = vpop.permute.xlu0 %5213
      %5215 = vrot.lane.b32.xlu0 %v5120, 64
      %v5216 = vpop.permute.xlu0 %5215
      %5249 = vst.msk [vmem:[#allocation4] sm:$0xff] %vm3299, %v5154
      %5250 = vst.msk [vmem:[#allocation4 + $0x10] sm:$0xff] %vm3299, %v5156
      %5251 = vst.msk [vmem:[#allocation4 + $0x20] sm:$0xff] %vm3299, %v5158
      %5252 = vst.msk [vmem:[#allocation4 + $0x30] sm:$0xff] %vm3299, %v5160
      %5253 = vst.msk [vmem:[#allocation4 + $0x40] sm:$0xff] %vm3299, %v5162
      %5254 = vst.msk [vmem:[#allocation4 + $0x50] sm:$0xff] %vm3299, %v5164
      %5255 = vst.msk [vmem:[#allocation4 + $0x60] sm:$0xff] %vm3299, %v5166
      %5256 = vst.msk [vmem:[#allocation4 + $0x70] sm:$0xff] %vm3299, %v5168
      %5257 = vst.msk [vmem:[#allocation4 + $0x80] sm:$0xff] %vm3299, %v5170
      %5258 = vst.msk [vmem:[#allocation4 + $0x90] sm:$0xff] %vm3299, %v5172
      %5259 = vst.msk [vmem:[#allocation4 + $0xa0] sm:$0xff] %vm3299, %v5174
      %5260 = vst.msk [vmem:[#allocation4 + $0xb0] sm:$0xff] %vm3299, %v5176
      %5261 = vst.msk [vmem:[#allocation4 + $0xc0] sm:$0xff] %vm3299, %v5178
      %5262 = vst.msk [vmem:[#allocation4 + $0xd0] sm:$0xff] %vm3299, %v5180
      %5263 = vst.msk [vmem:[#allocation4 + $0xe0] sm:$0xff] %vm3299, %v5182
      %5264 = vst.msk [vmem:[#allocation4 + $0xf0] sm:$0xff] %vm3299, %v5184
      %5265 = vst.msk [vmem:[#allocation4 + $0x100] sm:$0xff] %vm3299, %v5186
      %5266 = vst.msk [vmem:[#allocation4 + $0x110] sm:$0xff] %vm3299, %v5188
      %5267 = vst.msk [vmem:[#allocation4 + $0x120] sm:$0xff] %vm3299, %v5190
      %5268 = vst.msk [vmem:[#allocation4 + $0x130] sm:$0xff] %vm3299, %v5192
      %5269 = vst.msk [vmem:[#allocation4 + $0x140] sm:$0xff] %vm3299, %v5194
      %5270 = vst.msk [vmem:[#allocation4 + $0x150] sm:$0xff] %vm3299, %v5196
      %5271 = vst.msk [vmem:[#allocation4 + $0x160] sm:$0xff] %vm3299, %v5198
      %5272 = vst.msk [vmem:[#allocation4 + $0x170] sm:$0xff] %vm3299, %v5200
      %5273 = vst.msk [vmem:[#allocation4 + $0x180] sm:$0xff] %vm3299, %v5202
      %5274 = vst.msk [vmem:[#allocation4 + $0x190] sm:$0xff] %vm3299, %v5204
      %5275 = vst.msk [vmem:[#allocation4 + $0x1a0] sm:$0xff] %vm3299, %v5206
      %5276 = vst.msk [vmem:[#allocation4 + $0x1b0] sm:$0xff] %vm3299, %v5208
      %5277 = vst.msk [vmem:[#allocation4 + $0x1c0] sm:$0xff] %vm3299, %v5210
      %5278 = vst.msk [vmem:[#allocation4 + $0x1d0] sm:$0xff] %vm3299, %v5212
      %5279 = vst.msk [vmem:[#allocation4 + $0x1e0] sm:$0xff] %vm3299, %v5214
      %5280 = vst.msk [vmem:[#allocation4 + $0x1f0] sm:$0xff] %vm3299, %v5216
      %v5281 = vld [vmem:[%s400 + $0x2] sm:$0xff]
      %v5282 = vld [vmem:[%s400 + $0xa] sm:$0xff]
      %v5283 = vld [vmem:[%s400 + $0x1a] sm:$0xff]
      %v5284 = vld [vmem:[%s400 + $0x22] sm:$0xff]
      %v5285 = vld [vmem:[%s400 + $0x32] sm:$0xff]
      %v5286 = vld [vmem:[%s400 + $0x3a] sm:$0xff]
      %v5287 = vld [vmem:[%s400 + $0x4a] sm:$0xff]
      %v5288 = vld [vmem:[%s400 + $0x52] sm:$0xff]
      %v5289 = vld [vmem:[%s400 + $0x62] sm:$0xff]
      %v5290 = vld [vmem:[%s400 + $0x6a] sm:$0xff]
      %v5291 = vld [vmem:[%s400 + $0x7a] sm:$0xff]
      %v5292 = vld [vmem:[%s400 + $0x82] sm:$0xff]
      %v5293 = vld [vmem:[%s400 + $0x92] sm:$0xff]
      %v5294 = vld [vmem:[%s400 + $0x9a] sm:$0xff]
      %v5295 = vld [vmem:[%s400 + $0xaa] sm:$0xff]
      %v5296 = vld [vmem:[%s400 + $0xb2] sm:$0xff]
      %v5297 = vld [vmem:[%s400 + $0xc2] sm:$0xff]
      %v5298 = vld [vmem:[%s400 + $0xca] sm:$0xff]
      %v5299 = vld [vmem:[%s400 + $0xda] sm:$0xff]
      %v5300 = vld [vmem:[%s400 + $0xe2] sm:$0xff]
      %v5301 = vld [vmem:[%s400 + $0xf2] sm:$0xff]
      %v5302 = vld [vmem:[%s400 + $0xfa] sm:$0xff]
      %v5303 = vld [vmem:[%s400 + $0x10a] sm:$0xff]
      %v5304 = vld [vmem:[%s400 + $0x112] sm:$0xff]
      %v5305 = vld [vmem:[%s400 + $0x122] sm:$0xff]
      %v5306 = vld [vmem:[%s400 + $0x12a] sm:$0xff]
      %v5307 = vld [vmem:[%s400 + $0x13a] sm:$0xff]
      %v5308 = vld [vmem:[%s400 + $0x142] sm:$0xff]
      %v5309 = vld [vmem:[%s400 + $0x152] sm:$0xff]
      %v5310 = vld [vmem:[%s400 + $0x15a] sm:$0xff]
      %v5311 = vld [vmem:[%s400 + $0x16a] sm:$0xff]
      %v5312 = vld [vmem:[%s400 + $0x172] sm:$0xff]
      %5345 = vrot.lane.b32.xlu0 %v5281, 80
      %v5346 = vpop.permute.xlu0 %5345
      %5347 = vrot.lane.b32.xlu0 %v5282, 80
      %v5348 = vpop.permute.xlu0 %5347
      %5349 = vrot.lane.b32.xlu0 %v5283, 80
      %v5350 = vpop.permute.xlu0 %5349
      %5351 = vrot.lane.b32.xlu0 %v5284, 80
      %v5352 = vpop.permute.xlu0 %5351
      %5353 = vrot.lane.b32.xlu0 %v5285, 80
      %v5354 = vpop.permute.xlu0 %5353
      %5355 = vrot.lane.b32.xlu0 %v5286, 80
      %v5356 = vpop.permute.xlu0 %5355
      %5357 = vrot.lane.b32.xlu0 %v5287, 80
      %v5358 = vpop.permute.xlu0 %5357
      %5359 = vrot.lane.b32.xlu0 %v5288, 80
      %v5360 = vpop.permute.xlu0 %5359
      %5361 = vrot.lane.b32.xlu0 %v5289, 80
      %v5362 = vpop.permute.xlu0 %5361
      %5363 = vrot.lane.b32.xlu0 %v5290, 80
      %v5364 = vpop.permute.xlu0 %5363
      %5365 = vrot.lane.b32.xlu0 %v5291, 80
      %v5366 = vpop.permute.xlu0 %5365
      %5367 = vrot.lane.b32.xlu0 %v5292, 80
      %v5368 = vpop.permute.xlu0 %5367
      %5369 = vrot.lane.b32.xlu0 %v5293, 80
      %v5370 = vpop.permute.xlu0 %5369
      %5371 = vrot.lane.b32.xlu0 %v5294, 80
      %v5372 = vpop.permute.xlu0 %5371
      %5373 = vrot.lane.b32.xlu0 %v5295, 80
      %v5374 = vpop.permute.xlu0 %5373
      %5375 = vrot.lane.b32.xlu0 %v5296, 80
      %v5376 = vpop.permute.xlu0 %5375
      %5377 = vrot.lane.b32.xlu0 %v5297, 80
      %v5378 = vpop.permute.xlu0 %5377
      %5379 = vrot.lane.b32.xlu0 %v5298, 80
      %v5380 = vpop.permute.xlu0 %5379
      %5381 = vrot.lane.b32.xlu0 %v5299, 80
      %v5382 = vpop.permute.xlu0 %5381
      %5383 = vrot.lane.b32.xlu0 %v5300, 80
      %v5384 = vpop.permute.xlu0 %5383
      %5385 = vrot.lane.b32.xlu0 %v5301, 80
      %v5386 = vpop.permute.xlu0 %5385
      %5387 = vrot.lane.b32.xlu0 %v5302, 80
      %v5388 = vpop.permute.xlu0 %5387
      %5389 = vrot.lane.b32.xlu0 %v5303, 80
      %v5390 = vpop.permute.xlu0 %5389
      %5391 = vrot.lane.b32.xlu0 %v5304, 80
      %v5392 = vpop.permute.xlu0 %5391
      %5393 = vrot.lane.b32.xlu0 %v5305, 80
      %v5394 = vpop.permute.xlu0 %5393
      %5395 = vrot.lane.b32.xlu0 %v5306, 80
      %v5396 = vpop.permute.xlu0 %5395
      %5397 = vrot.lane.b32.xlu0 %v5307, 80
      %v5398 = vpop.permute.xlu0 %5397
      %5399 = vrot.lane.b32.xlu0 %v5308, 80
      %v5400 = vpop.permute.xlu0 %5399
      %5401 = vrot.lane.b32.xlu0 %v5309, 80
      %v5402 = vpop.permute.xlu0 %5401
      %5403 = vrot.lane.b32.xlu0 %v5310, 80
      %v5404 = vpop.permute.xlu0 %5403
      %5405 = vrot.lane.b32.xlu0 %v5311, 80
      %v5406 = vpop.permute.xlu0 %5405
      %5407 = vrot.lane.b32.xlu0 %v5312, 80
      %v5408 = vpop.permute.xlu0 %5407
      %5441 = vst.msk [vmem:[#allocation4] sm:$0xff] %vm3492, %v5346
      %5442 = vst.msk [vmem:[#allocation4 + $0x10] sm:$0xff] %vm3492, %v5348
      %5443 = vst.msk [vmem:[#allocation4 + $0x20] sm:$0xff] %vm3492, %v5350
      %5444 = vst.msk [vmem:[#allocation4 + $0x30] sm:$0xff] %vm3492, %v5352
      %5445 = vst.msk [vmem:[#allocation4 + $0x40] sm:$0xff] %vm3492, %v5354
      %5446 = vst.msk [vmem:[#allocation4 + $0x50] sm:$0xff] %vm3492, %v5356
      %5447 = vst.msk [vmem:[#allocation4 + $0x60] sm:$0xff] %vm3492, %v5358
      %5448 = vst.msk [vmem:[#allocation4 + $0x70] sm:$0xff] %vm3492, %v5360
      %5449 = vst.msk [vmem:[#allocation4 + $0x80] sm:$0xff] %vm3492, %v5362
      %5450 = vst.msk [vmem:[#allocation4 + $0x90] sm:$0xff] %vm3492, %v5364
      %5451 = vst.msk [vmem:[#allocation4 + $0xa0] sm:$0xff] %vm3492, %v5366
      %5452 = vst.msk [vmem:[#allocation4 + $0xb0] sm:$0xff] %vm3492, %v5368
      %5453 = vst.msk [vmem:[#allocation4 + $0xc0] sm:$0xff] %vm3492, %v5370
      %5454 = vst.msk [vmem:[#allocation4 + $0xd0] sm:$0xff] %vm3492, %v5372
      %5455 = vst.msk [vmem:[#allocation4 + $0xe0] sm:$0xff] %vm3492, %v5374
      %5456 = vst.msk [vmem:[#allocation4 + $0xf0] sm:$0xff] %vm3492, %v5376
      %5457 = vst.msk [vmem:[#allocation4 + $0x100] sm:$0xff] %vm3492, %v5378
      %5458 = vst.msk [vmem:[#allocation4 + $0x110] sm:$0xff] %vm3492, %v5380
      %5459 = vst.msk [vmem:[#allocation4 + $0x120] sm:$0xff] %vm3492, %v5382
      %5460 = vst.msk [vmem:[#allocation4 + $0x130] sm:$0xff] %vm3492, %v5384
      %5461 = vst.msk [vmem:[#allocation4 + $0x140] sm:$0xff] %vm3492, %v5386
      %5462 = vst.msk [vmem:[#allocation4 + $0x150] sm:$0xff] %vm3492, %v5388
      %5463 = vst.msk [vmem:[#allocation4 + $0x160] sm:$0xff] %vm3492, %v5390
      %5464 = vst.msk [vmem:[#allocation4 + $0x170] sm:$0xff] %vm3492, %v5392
      %5465 = vst.msk [vmem:[#allocation4 + $0x180] sm:$0xff] %vm3492, %v5394
      %5466 = vst.msk [vmem:[#allocation4 + $0x190] sm:$0xff] %vm3492, %v5396
      %5467 = vst.msk [vmem:[#allocation4 + $0x1a0] sm:$0xff] %vm3492, %v5398
      %5468 = vst.msk [vmem:[#allocation4 + $0x1b0] sm:$0xff] %vm3492, %v5400
      %5469 = vst.msk [vmem:[#allocation4 + $0x1c0] sm:$0xff] %vm3492, %v5402
      %5470 = vst.msk [vmem:[#allocation4 + $0x1d0] sm:$0xff] %vm3492, %v5404
      %5471 = vst.msk [vmem:[#allocation4 + $0x1e0] sm:$0xff] %vm3492, %v5406
      %5472 = vst.msk [vmem:[#allocation4 + $0x1f0] sm:$0xff] %vm3492, %v5408
      %v5473 = vld [vmem:[%s1468] sm:$0xff]
      %v5474 = vld [vmem:[%s1468 + $0x8] sm:$0xff]
      %v5475 = vld [vmem:[%s1468 + $0x18] sm:$0xff]
      %v5476 = vld [vmem:[%s1468 + $0x20] sm:$0xff]
      %v5477 = vld [vmem:[%s1468 + $0x30] sm:$0xff]
      %v5478 = vld [vmem:[%s1468 + $0x38] sm:$0xff]
      %v5479 = vld [vmem:[%s1468 + $0x48] sm:$0xff]
      %v5480 = vld [vmem:[%s1468 + $0x50] sm:$0xff]
      %v5481 = vld [vmem:[%s1468 + $0x60] sm:$0xff]
      %v5482 = vld [vmem:[%s1468 + $0x68] sm:$0xff]
      %v5483 = vld [vmem:[%s1468 + $0x78] sm:$0xff]
      %v5484 = vld [vmem:[%s1468 + $0x80] sm:$0xff]
      %v5485 = vld [vmem:[%s1468 + $0x90] sm:$0xff]
      %v5486 = vld [vmem:[%s1468 + $0x98] sm:$0xff]
      %v5487 = vld [vmem:[%s1468 + $0xa8] sm:$0xff]
      %v5488 = vld [vmem:[%s1468 + $0xb0] sm:$0xff]
      %v5489 = vld [vmem:[%s1468 + $0xc0] sm:$0xff]
      %v5490 = vld [vmem:[%s1468 + $0xc8] sm:$0xff]
      %v5491 = vld [vmem:[%s1468 + $0xd8] sm:$0xff]
      %v5492 = vld [vmem:[%s1468 + $0xe0] sm:$0xff]
      %v5493 = vld [vmem:[%s1468 + $0xf0] sm:$0xff]
      %v5494 = vld [vmem:[%s1468 + $0xf8] sm:$0xff]
      %v5495 = vld [vmem:[%s1468 + $0x108] sm:$0xff]
      %v5496 = vld [vmem:[%s1468 + $0x110] sm:$0xff]
      %v5497 = vld [vmem:[%s1468 + $0x120] sm:$0xff]
      %v5498 = vld [vmem:[%s1468 + $0x128] sm:$0xff]
      %v5499 = vld [vmem:[%s1468 + $0x138] sm:$0xff]
      %v5500 = vld [vmem:[%s1468 + $0x140] sm:$0xff]
      %v5501 = vld [vmem:[%s1468 + $0x150] sm:$0xff]
      %v5502 = vld [vmem:[%s1468 + $0x158] sm:$0xff]
      %v5503 = vld [vmem:[%s1468 + $0x168] sm:$0xff]
      %v5504 = vld [vmem:[%s1468 + $0x170] sm:$0xff]
      %5537 = vrot.lane.b32.xlu0 %v5473, 96
      %v5538 = vpop.permute.xlu0 %5537
      %5539 = vrot.lane.b32.xlu0 %v5474, 96
      %v5540 = vpop.permute.xlu0 %5539
      %5541 = vrot.lane.b32.xlu0 %v5475, 96
      %v5542 = vpop.permute.xlu0 %5541
      %5543 = vrot.lane.b32.xlu0 %v5476, 96
      %v5544 = vpop.permute.xlu0 %5543
      %5545 = vrot.lane.b32.xlu0 %v5477, 96
      %v5546 = vpop.permute.xlu0 %5545
      %5547 = vrot.lane.b32.xlu0 %v5478, 96
      %v5548 = vpop.permute.xlu0 %5547
      %5549 = vrot.lane.b32.xlu0 %v5479, 96
      %v5550 = vpop.permute.xlu0 %5549
      %5551 = vrot.lane.b32.xlu0 %v5480, 96
      %v5552 = vpop.permute.xlu0 %5551
      %5553 = vrot.lane.b32.xlu0 %v5481, 96
      %v5554 = vpop.permute.xlu0 %5553
      %5555 = vrot.lane.b32.xlu0 %v5482, 96
      %v5556 = vpop.permute.xlu0 %5555
      %5557 = vrot.lane.b32.xlu0 %v5483, 96
      %v5558 = vpop.permute.xlu0 %5557
      %5559 = vrot.lane.b32.xlu0 %v5484, 96
      %v5560 = vpop.permute.xlu0 %5559
      %5561 = vrot.lane.b32.xlu0 %v5485, 96
      %v5562 = vpop.permute.xlu0 %5561
      %5563 = vrot.lane.b32.xlu0 %v5486, 96
      %v5564 = vpop.permute.xlu0 %5563
      %5565 = vrot.lane.b32.xlu0 %v5487, 96
      %v5566 = vpop.permute.xlu0 %5565
      %5567 = vrot.lane.b32.xlu0 %v5488, 96
      %v5568 = vpop.permute.xlu0 %5567
      %5569 = vrot.lane.b32.xlu0 %v5489, 96
      %v5570 = vpop.permute.xlu0 %5569
      %5571 = vrot.lane.b32.xlu0 %v5490, 96
      %v5572 = vpop.permute.xlu0 %5571
      %5573 = vrot.lane.b32.xlu0 %v5491, 96
      %v5574 = vpop.permute.xlu0 %5573
      %5575 = vrot.lane.b32.xlu0 %v5492, 96
      %v5576 = vpop.permute.xlu0 %5575
      %5577 = vrot.lane.b32.xlu0 %v5493, 96
      %v5578 = vpop.permute.xlu0 %5577
      %5579 = vrot.lane.b32.xlu0 %v5494, 96
      %v5580 = vpop.permute.xlu0 %5579
      %5581 = vrot.lane.b32.xlu0 %v5495, 96
      %v5582 = vpop.permute.xlu0 %5581
      %5583 = vrot.lane.b32.xlu0 %v5496, 96
      %v5584 = vpop.permute.xlu0 %5583
      %5585 = vrot.lane.b32.xlu0 %v5497, 96
      %v5586 = vpop.permute.xlu0 %5585
      %5587 = vrot.lane.b32.xlu0 %v5498, 96
      %v5588 = vpop.permute.xlu0 %5587
      %5589 = vrot.lane.b32.xlu0 %v5499, 96
      %v5590 = vpop.permute.xlu0 %5589
      %5591 = vrot.lane.b32.xlu0 %v5500, 96
      %v5592 = vpop.permute.xlu0 %5591
      %5593 = vrot.lane.b32.xlu0 %v5501, 96
      %v5594 = vpop.permute.xlu0 %5593
      %5595 = vrot.lane.b32.xlu0 %v5502, 96
      %v5596 = vpop.permute.xlu0 %5595
      %5597 = vrot.lane.b32.xlu0 %v5503, 96
      %v5598 = vpop.permute.xlu0 %5597
      %5599 = vrot.lane.b32.xlu0 %v5504, 96
      %v5600 = vpop.permute.xlu0 %5599
      %5633 = vst.msk [vmem:[#allocation4] sm:$0xff] %vm3686, %v5538
      %5634 = vst.msk [vmem:[#allocation4 + $0x10] sm:$0xff] %vm3686, %v5540
      %5635 = vst.msk [vmem:[#allocation4 + $0x20] sm:$0xff] %vm3686, %v5542
      %5636 = vst.msk [vmem:[#allocation4 + $0x30] sm:$0xff] %vm3686, %v5544
      %5637 = vst.msk [vmem:[#allocation4 + $0x40] sm:$0xff] %vm3686, %v5546
      %5638 = vst.msk [vmem:[#allocation4 + $0x50] sm:$0xff] %vm3686, %v5548
      %5639 = vst.msk [vmem:[#allocation4 + $0x60] sm:$0xff] %vm3686, %v5550
      %5640 = vst.msk [vmem:[#allocation4 + $0x70] sm:$0xff] %vm3686, %v5552
      %5641 = vst.msk [vmem:[#allocation4 + $0x80] sm:$0xff] %vm3686, %v5554
      %5642 = vst.msk [vmem:[#allocation4 + $0x90] sm:$0xff] %vm3686, %v5556
      %5643 = vst.msk [vmem:[#allocation4 + $0xa0] sm:$0xff] %vm3686, %v5558
      %5644 = vst.msk [vmem:[#allocation4 + $0xb0] sm:$0xff] %vm3686, %v5560
      %5645 = vst.msk [vmem:[#allocation4 + $0xc0] sm:$0xff] %vm3686, %v5562
      %5646 = vst.msk [vmem:[#allocation4 + $0xd0] sm:$0xff] %vm3686, %v5564
      %5647 = vst.msk [vmem:[#allocation4 + $0xe0] sm:$0xff] %vm3686, %v5566
      %5648 = vst.msk [vmem:[#allocation4 + $0xf0] sm:$0xff] %vm3686, %v5568
      %5649 = vst.msk [vmem:[#allocation4 + $0x100] sm:$0xff] %vm3686, %v5570
      %5650 = vst.msk [vmem:[#allocation4 + $0x110] sm:$0xff] %vm3686, %v5572
      %5651 = vst.msk [vmem:[#allocation4 + $0x120] sm:$0xff] %vm3686, %v5574
      %5652 = vst.msk [vmem:[#allocation4 + $0x130] sm:$0xff] %vm3686, %v5576
      %5653 = vst.msk [vmem:[#allocation4 + $0x140] sm:$0xff] %vm3686, %v5578
      %5654 = vst.msk [vmem:[#allocation4 + $0x150] sm:$0xff] %vm3686, %v5580
      %5655 = vst.msk [vmem:[#allocation4 + $0x160] sm:$0xff] %vm3686, %v5582
      %5656 = vst.msk [vmem:[#allocation4 + $0x170] sm:$0xff] %vm3686, %v5584
      %5657 = vst.msk [vmem:[#allocation4 + $0x180] sm:$0xff] %vm3686, %v5586
      %5658 = vst.msk [vmem:[#allocation4 + $0x190] sm:$0xff] %vm3686, %v5588
      %5659 = vst.msk [vmem:[#allocation4 + $0x1a0] sm:$0xff] %vm3686, %v5590
      %5660 = vst.msk [vmem:[#allocation4 + $0x1b0] sm:$0xff] %vm3686, %v5592
      %5661 = vst.msk [vmem:[#allocation4 + $0x1c0] sm:$0xff] %vm3686, %v5594
      %5662 = vst.msk [vmem:[#allocation4 + $0x1d0] sm:$0xff] %vm3686, %v5596
      %5663 = vst.msk [vmem:[#allocation4 + $0x1e0] sm:$0xff] %vm3686, %v5598
      %5664 = vst.msk [vmem:[#allocation4 + $0x1f0] sm:$0xff] %vm3686, %v5600
      %v5665 = vld [vmem:[%s1468 + $0x1] sm:$0xff]
      %v5666 = vld [vmem:[%s1468 + $0x9] sm:$0xff]
      %v5667 = vld [vmem:[%s1468 + $0x19] sm:$0xff]
      %v5668 = vld [vmem:[%s1468 + $0x21] sm:$0xff]
      %v5669 = vld [vmem:[%s1468 + $0x31] sm:$0xff]
      %v5670 = vld [vmem:[%s1468 + $0x39] sm:$0xff]
      %v5671 = vld [vmem:[%s1468 + $0x49] sm:$0xff]
      %v5672 = vld [vmem:[%s1468 + $0x51] sm:$0xff]
      %v5673 = vld [vmem:[%s1468 + $0x61] sm:$0xff]
      %v5674 = vld [vmem:[%s1468 + $0x69] sm:$0xff]
      %v5675 = vld [vmem:[%s1468 + $0x79] sm:$0xff]
      %v5676 = vld [vmem:[%s1468 + $0x81] sm:$0xff]
      %v5677 = vld [vmem:[%s1468 + $0x91] sm:$0xff]
      %v5678 = vld [vmem:[%s1468 + $0x99] sm:$0xff]
      %v5679 = vld [vmem:[%s1468 + $0xa9] sm:$0xff]
      %v5680 = vld [vmem:[%s1468 + $0xb1] sm:$0xff]
      %v5681 = vld [vmem:[%s1468 + $0xc1] sm:$0xff]
      %v5682 = vld [vmem:[%s1468 + $0xc9] sm:$0xff]
      %v5683 = vld [vmem:[%s1468 + $0xd9] sm:$0xff]
      %v5684 = vld [vmem:[%s1468 + $0xe1] sm:$0xff]
      %v5685 = vld [vmem:[%s1468 + $0xf1] sm:$0xff]
      %v5686 = vld [vmem:[%s1468 + $0xf9] sm:$0xff]
      %v5687 = vld [vmem:[%s1468 + $0x109] sm:$0xff]
      %v5688 = vld [vmem:[%s1468 + $0x111] sm:$0xff]
      %v5689 = vld [vmem:[%s1468 + $0x121] sm:$0xff]
      %v5690 = vld [vmem:[%s1468 + $0x129] sm:$0xff]
      %v5691 = vld [vmem:[%s1468 + $0x139] sm:$0xff]
      %v5692 = vld [vmem:[%s1468 + $0x141] sm:$0xff]
      %v5693 = vld [vmem:[%s1468 + $0x151] sm:$0xff]
      %v5694 = vld [vmem:[%s1468 + $0x159] sm:$0xff]
      %v5695 = vld [vmem:[%s1468 + $0x169] sm:$0xff]
      %v5696 = vld [vmem:[%s1468 + $0x171] sm:$0xff]
      %5729 = vrot.lane.b32.xlu0 %v5665, 112
      %v5730 = vpop.permute.xlu0 %5729
      %5731 = vrot.lane.b32.xlu0 %v5666, 112
      %v5732 = vpop.permute.xlu0 %5731
      %5733 = vrot.lane.b32.xlu0 %v5667, 112
      %v5734 = vpop.permute.xlu0 %5733
      %5735 = vrot.lane.b32.xlu0 %v5668, 112
      %v5736 = vpop.permute.xlu0 %5735
      %5737 = vrot.lane.b32.xlu0 %v5669, 112
      %v5738 = vpop.permute.xlu0 %5737
      %5739 = vrot.lane.b32.xlu0 %v5670, 112
      %v5740 = vpop.permute.xlu0 %5739
      %5741 = vrot.lane.b32.xlu0 %v5671, 112
      %v5742 = vpop.permute.xlu0 %5741
      %5743 = vrot.lane.b32.xlu0 %v5672, 112
      %v5744 = vpop.permute.xlu0 %5743
      %5745 = vrot.lane.b32.xlu0 %v5673, 112
      %v5746 = vpop.permute.xlu0 %5745
      %5747 = vrot.lane.b32.xlu0 %v5674, 112
      %v5748 = vpop.permute.xlu0 %5747
      %5749 = vrot.lane.b32.xlu0 %v5675, 112
      %v5750 = vpop.permute.xlu0 %5749
      %5751 = vrot.lane.b32.xlu0 %v5676, 112
      %v5752 = vpop.permute.xlu0 %5751
      %5753 = vrot.lane.b32.xlu0 %v5677, 112
      %v5754 = vpop.permute.xlu0 %5753
      %5755 = vrot.lane.b32.xlu0 %v5678, 112
      %v5756 = vpop.permute.xlu0 %5755
      %5757 = vrot.lane.b32.xlu0 %v5679, 112
      %v5758 = vpop.permute.xlu0 %5757
      %5759 = vrot.lane.b32.xlu0 %v5680, 112
      %v5760 = vpop.permute.xlu0 %5759
      %5761 = vrot.lane.b32.xlu0 %v5681, 112
      %v5762 = vpop.permute.xlu0 %5761
      %5763 = vrot.lane.b32.xlu0 %v5682, 112
      %v5764 = vpop.permute.xlu0 %5763
      %5765 = vrot.lane.b32.xlu0 %v5683, 112
      %v5766 = vpop.permute.xlu0 %5765
      %5767 = vrot.lane.b32.xlu0 %v5684, 112
      %v5768 = vpop.permute.xlu0 %5767
      %5769 = vrot.lane.b32.xlu0 %v5685, 112
      %v5770 = vpop.permute.xlu0 %5769
      %5771 = vrot.lane.b32.xlu0 %v5686, 112
      %v5772 = vpop.permute.xlu0 %5771
      %5773 = vrot.lane.b32.xlu0 %v5687, 112
      %v5774 = vpop.permute.xlu0 %5773
      %5775 = vrot.lane.b32.xlu0 %v5688, 112
      %v5776 = vpop.permute.xlu0 %5775
      %5777 = vrot.lane.b32.xlu0 %v5689, 112
      %v5778 = vpop.permute.xlu0 %5777
      %5779 = vrot.lane.b32.xlu0 %v5690, 112
      %v5780 = vpop.permute.xlu0 %5779
      %5781 = vrot.lane.b32.xlu0 %v5691, 112
      %v5782 = vpop.permute.xlu0 %5781
      %5783 = vrot.lane.b32.xlu0 %v5692, 112
      %v5784 = vpop.permute.xlu0 %5783
      %5785 = vrot.lane.b32.xlu0 %v5693, 112
      %v5786 = vpop.permute.xlu0 %5785
      %5787 = vrot.lane.b32.xlu0 %v5694, 112
      %v5788 = vpop.permute.xlu0 %5787
      %5789 = vrot.lane.b32.xlu0 %v5695, 112
      %v5790 = vpop.permute.xlu0 %5789
      %5791 = vrot.lane.b32.xlu0 %v5696, 112
      %v5792 = vpop.permute.xlu0 %5791
      %5825 = vst.msk [vmem:[#allocation4] sm:$0xff] %vm3879, %v5730
      %5826 = vst.msk [vmem:[#allocation4 + $0x10] sm:$0xff] %vm3879, %v5732
      %5827 = vst.msk [vmem:[#allocation4 + $0x20] sm:$0xff] %vm3879, %v5734
      %5828 = vst.msk [vmem:[#allocation4 + $0x30] sm:$0xff] %vm3879, %v5736
      %5829 = vst.msk [vmem:[#allocation4 + $0x40] sm:$0xff] %vm3879, %v5738
      %5830 = vst.msk [vmem:[#allocation4 + $0x50] sm:$0xff] %vm3879, %v5740
      %5831 = vst.msk [vmem:[#allocation4 + $0x60] sm:$0xff] %vm3879, %v5742
      %5832 = vst.msk [vmem:[#allocation4 + $0x70] sm:$0xff] %vm3879, %v5744
      %5833 = vst.msk [vmem:[#allocation4 + $0x80] sm:$0xff] %vm3879, %v5746
      %5834 = vst.msk [vmem:[#allocation4 + $0x90] sm:$0xff] %vm3879, %v5748
      %5835 = vst.msk [vmem:[#allocation4 + $0xa0] sm:$0xff] %vm3879, %v5750
      %5836 = vst.msk [vmem:[#allocation4 + $0xb0] sm:$0xff] %vm3879, %v5752
      %5837 = vst.msk [vmem:[#allocation4 + $0xc0] sm:$0xff] %vm3879, %v5754
      %5838 = vst.msk [vmem:[#allocation4 + $0xd0] sm:$0xff] %vm3879, %v5756
      %5839 = vst.msk [vmem:[#allocation4 + $0xe0] sm:$0xff] %vm3879, %v5758
      %5840 = vst.msk [vmem:[#allocation4 + $0xf0] sm:$0xff] %vm3879, %v5760
      %5841 = vst.msk [vmem:[#allocation4 + $0x100] sm:$0xff] %vm3879, %v5762
      %5842 = vst.msk [vmem:[#allocation4 + $0x110] sm:$0xff] %vm3879, %v5764
      %5843 = vst.msk [vmem:[#allocation4 + $0x120] sm:$0xff] %vm3879, %v5766
      %5844 = vst.msk [vmem:[#allocation4 + $0x130] sm:$0xff] %vm3879, %v5768
      %5845 = vst.msk [vmem:[#allocation4 + $0x140] sm:$0xff] %vm3879, %v5770
      %5846 = vst.msk [vmem:[#allocation4 + $0x150] sm:$0xff] %vm3879, %v5772
      %5847 = vst.msk [vmem:[#allocation4 + $0x160] sm:$0xff] %vm3879, %v5774
      %5848 = vst.msk [vmem:[#allocation4 + $0x170] sm:$0xff] %vm3879, %v5776
      %5849 = vst.msk [vmem:[#allocation4 + $0x180] sm:$0xff] %vm3879, %v5778
      %5850 = vst.msk [vmem:[#allocation4 + $0x190] sm:$0xff] %vm3879, %v5780
      %5851 = vst.msk [vmem:[#allocation4 + $0x1a0] sm:$0xff] %vm3879, %v5782
      %5852 = vst.msk [vmem:[#allocation4 + $0x1b0] sm:$0xff] %vm3879, %v5784
      %5853 = vst.msk [vmem:[#allocation4 + $0x1c0] sm:$0xff] %vm3879, %v5786
      %5854 = vst.msk [vmem:[#allocation4 + $0x1d0] sm:$0xff] %vm3879, %v5788
      %5855 = vst.msk [vmem:[#allocation4 + $0x1e0] sm:$0xff] %vm3879, %v5790
      %5856 = vst.msk [vmem:[#allocation4 + $0x1f0] sm:$0xff] %vm3879, %v5792
      %v5857 = vld [vmem:[%s1468 + $0x2] sm:$0xff]
      %v5858 = vld [vmem:[%s1468 + $0xa] sm:$0xff]
      %v5859 = vld [vmem:[%s1468 + $0x1a] sm:$0xff]
      %v5860 = vld [vmem:[%s1468 + $0x22] sm:$0xff]
      %v5861 = vld [vmem:[%s1468 + $0x32] sm:$0xff]
      %v5862 = vld [vmem:[%s1468 + $0x3a] sm:$0xff]
      %v5863 = vld [vmem:[%s1468 + $0x4a] sm:$0xff]
      %v5864 = vld [vmem:[%s1468 + $0x52] sm:$0xff]
      %v5865 = vld [vmem:[%s1468 + $0x62] sm:$0xff]
      %v5866 = vld [vmem:[%s1468 + $0x6a] sm:$0xff]
      %v5867 = vld [vmem:[%s1468 + $0x7a] sm:$0xff]
      %v5868 = vld [vmem:[%s1468 + $0x82] sm:$0xff]
      %v5869 = vld [vmem:[%s1468 + $0x92] sm:$0xff]
      %v5870 = vld [vmem:[%s1468 + $0x9a] sm:$0xff]
      %v5871 = vld [vmem:[%s1468 + $0xaa] sm:$0xff]
      %v5872 = vld [vmem:[%s1468 + $0xb2] sm:$0xff]
      %v5873 = vld [vmem:[%s1468 + $0xc2] sm:$0xff]
      %v5874 = vld [vmem:[%s1468 + $0xca] sm:$0xff]
      %v5875 = vld [vmem:[%s1468 + $0xda] sm:$0xff]
      %v5876 = vld [vmem:[%s1468 + $0xe2] sm:$0xff]
      %v5877 = vld [vmem:[%s1468 + $0xf2] sm:$0xff]
      %v5878 = vld [vmem:[%s1468 + $0xfa] sm:$0xff]
      %v5879 = vld [vmem:[%s1468 + $0x10a] sm:$0xff]
      %v5880 = vld [vmem:[%s1468 + $0x112] sm:$0xff]
      %v5881 = vld [vmem:[%s1468 + $0x122] sm:$0xff]
      %v5882 = vld [vmem:[%s1468 + $0x12a] sm:$0xff]
      %v5883 = vld [vmem:[%s1468 + $0x13a] sm:$0xff]
      %v5884 = vld [vmem:[%s1468 + $0x142] sm:$0xff]
      %v5885 = vld [vmem:[%s1468 + $0x152] sm:$0xff]
      %v5886 = vld [vmem:[%s1468 + $0x15a] sm:$0xff]
      %v5887 = vld [vmem:[%s1468 + $0x16a] sm:$0xff]
      %v5888 = vld [vmem:[%s1468 + $0x172] sm:$0xff]
      %5889 = vst.msk [vmem:[#allocation4 + $0x8] sm:$0xff] %vm279, %v5857
      %5890 = vst.msk [vmem:[#allocation4 + $0x18] sm:$0xff] %vm279, %v5858
      %5891 = vst.msk [vmem:[#allocation4 + $0x28] sm:$0xff] %vm279, %v5859
      %5892 = vst.msk [vmem:[#allocation4 + $0x38] sm:$0xff] %vm279, %v5860
      %5893 = vst.msk [vmem:[#allocation4 + $0x48] sm:$0xff] %vm279, %v5861
      %5894 = vst.msk [vmem:[#allocation4 + $0x58] sm:$0xff] %vm279, %v5862
      %5895 = vst.msk [vmem:[#allocation4 + $0x68] sm:$0xff] %vm279, %v5863
      %5896 = vst.msk [vmem:[#allocation4 + $0x78] sm:$0xff] %vm279, %v5864
      %5897 = vst.msk [vmem:[#allocation4 + $0x88] sm:$0xff] %vm279, %v5865
      %5898 = vst.msk [vmem:[#allocation4 + $0x98] sm:$0xff] %vm279, %v5866
      %5899 = vst.msk [vmem:[#allocation4 + $0xa8] sm:$0xff] %vm279, %v5867
      %5900 = vst.msk [vmem:[#allocation4 + $0xb8] sm:$0xff] %vm279, %v5868
      %5901 = vst.msk [vmem:[#allocation4 + $0xc8] sm:$0xff] %vm279, %v5869
      %5902 = vst.msk [vmem:[#allocation4 + $0xd8] sm:$0xff] %vm279, %v5870
      %5903 = vst.msk [vmem:[#allocation4 + $0xe8] sm:$0xff] %vm279, %v5871
      %5904 = vst.msk [vmem:[#allocation4 + $0xf8] sm:$0xff] %vm279, %v5872
      %5905 = vst.msk [vmem:[#allocation4 + $0x108] sm:$0xff] %vm279, %v5873
      %5906 = vst.msk [vmem:[#allocation4 + $0x118] sm:$0xff] %vm279, %v5874
      %5907 = vst.msk [vmem:[#allocation4 + $0x128] sm:$0xff] %vm279, %v5875
      %5908 = vst.msk [vmem:[#allocation4 + $0x138] sm:$0xff] %vm279, %v5876
      %5909 = vst.msk [vmem:[#allocation4 + $0x148] sm:$0xff] %vm279, %v5877
      %5910 = vst.msk [vmem:[#allocation4 + $0x158] sm:$0xff] %vm279, %v5878
      %5911 = vst.msk [vmem:[#allocation4 + $0x168] sm:$0xff] %vm279, %v5879
      %5912 = vst.msk [vmem:[#allocation4 + $0x178] sm:$0xff] %vm279, %v5880
      %5913 = vst.msk [vmem:[#allocation4 + $0x188] sm:$0xff] %vm279, %v5881
      %5914 = vst.msk [vmem:[#allocation4 + $0x198] sm:$0xff] %vm279, %v5882
      %5915 = vst.msk [vmem:[#allocation4 + $0x1a8] sm:$0xff] %vm279, %v5883
      %5916 = vst.msk [vmem:[#allocation4 + $0x1b8] sm:$0xff] %vm279, %v5884
      %5917 = vst.msk [vmem:[#allocation4 + $0x1c8] sm:$0xff] %vm279, %v5885
      %5918 = vst.msk [vmem:[#allocation4 + $0x1d8] sm:$0xff] %vm279, %v5886
      %5919 = vst.msk [vmem:[#allocation4 + $0x1e8] sm:$0xff] %vm279, %v5887
      %5920 = vst.msk [vmem:[#allocation4 + $0x1f8] sm:$0xff] %vm279, %v5888
      %v5921 = vld [vmem:[#allocation4] sm:$0xff]
      %v5922 = vld [vmem:[#allocation4 + $0x8] sm:$0xff]
      %v5923 = vld [vmem:[#allocation4 + $0x10] sm:$0xff]
      %v5924 = vld [vmem:[#allocation4 + $0x18] sm:$0xff]
      %v5925 = vld [vmem:[#allocation4 + $0x20] sm:$0xff]
      %v5926 = vld [vmem:[#allocation4 + $0x28] sm:$0xff]
      %v5927 = vld [vmem:[#allocation4 + $0x30] sm:$0xff]
      %v5928 = vld [vmem:[#allocation4 + $0x38] sm:$0xff]
      %v5929 = vld [vmem:[#allocation4 + $0x40] sm:$0xff]
      %v5930 = vld [vmem:[#allocation4 + $0x48] sm:$0xff]
      %v5931 = vld [vmem:[#allocation4 + $0x50] sm:$0xff]
      %v5932 = vld [vmem:[#allocation4 + $0x58] sm:$0xff]
      %v5933 = vld [vmem:[#allocation4 + $0x60] sm:$0xff]
      %v5934 = vld [vmem:[#allocation4 + $0x68] sm:$0xff]
      %v5935 = vld [vmem:[#allocation4 + $0x70] sm:$0xff]
      %v5936 = vld [vmem:[#allocation4 + $0x78] sm:$0xff]
      %v5937 = vld [vmem:[#allocation4 + $0x80] sm:$0xff]
      %v5938 = vld [vmem:[#allocation4 + $0x88] sm:$0xff]
      %v5939 = vld [vmem:[#allocation4 + $0x90] sm:$0xff]
      %v5940 = vld [vmem:[#allocation4 + $0x98] sm:$0xff]
      %v5941 = vld [vmem:[#allocation4 + $0xa0] sm:$0xff]
      %v5942 = vld [vmem:[#allocation4 + $0xa8] sm:$0xff]
      %v5943 = vld [vmem:[#allocation4 + $0xb0] sm:$0xff]
      %v5944 = vld [vmem:[#allocation4 + $0xb8] sm:$0xff]
      %v5945 = vld [vmem:[#allocation4 + $0xc0] sm:$0xff]
      %v5946 = vld [vmem:[#allocation4 + $0xc8] sm:$0xff]
      %v5947 = vld [vmem:[#allocation4 + $0xd0] sm:$0xff]
      %v5948 = vld [vmem:[#allocation4 + $0xd8] sm:$0xff]
      %v5949 = vld [vmem:[#allocation4 + $0xe0] sm:$0xff]
      %v5950 = vld [vmem:[#allocation4 + $0xe8] sm:$0xff]
      %v5951 = vld [vmem:[#allocation4 + $0xf0] sm:$0xff]
      %v5952 = vld [vmem:[#allocation4 + $0xf8] sm:$0xff]
      %v5953 = vld [vmem:[#allocation4 + $0x100] sm:$0xff]
      %v5954 = vld [vmem:[#allocation4 + $0x108] sm:$0xff]
      %v5955 = vld [vmem:[#allocation4 + $0x110] sm:$0xff]
      %v5956 = vld [vmem:[#allocation4 + $0x118] sm:$0xff]
      %v5957 = vld [vmem:[#allocation4 + $0x120] sm:$0xff]
      %v5958 = vld [vmem:[#allocation4 + $0x128] sm:$0xff]
      %v5959 = vld [vmem:[#allocation4 + $0x130] sm:$0xff]
      %v5960 = vld [vmem:[#allocation4 + $0x138] sm:$0xff]
      %v5961 = vld [vmem:[#allocation4 + $0x140] sm:$0xff]
      %v5962 = vld [vmem:[#allocation4 + $0x148] sm:$0xff]
      %v5963 = vld [vmem:[#allocation4 + $0x150] sm:$0xff]
      %v5964 = vld [vmem:[#allocation4 + $0x158] sm:$0xff]
      %v5965 = vld [vmem:[#allocation4 + $0x160] sm:$0xff]
      %v5966 = vld [vmem:[#allocation4 + $0x168] sm:$0xff]
      %v5967 = vld [vmem:[#allocation4 + $0x170] sm:$0xff]
      %v5968 = vld [vmem:[#allocation4 + $0x178] sm:$0xff]
      %v5969 = vld [vmem:[#allocation4 + $0x180] sm:$0xff]
      %v5970 = vld [vmem:[#allocation4 + $0x188] sm:$0xff]
      %v5971 = vld [vmem:[#allocation4 + $0x190] sm:$0xff]
      %v5972 = vld [vmem:[#allocation4 + $0x198] sm:$0xff]
      %v5973 = vld [vmem:[#allocation4 + $0x1a0] sm:$0xff]
      %v5974 = vld [vmem:[#allocation4 + $0x1a8] sm:$0xff]
      %v5975 = vld [vmem:[#allocation4 + $0x1b0] sm:$0xff]
      %v5976 = vld [vmem:[#allocation4 + $0x1b8] sm:$0xff]
      %v5977 = vld [vmem:[#allocation4 + $0x1c0] sm:$0xff]
      %v5978 = vld [vmem:[#allocation4 + $0x1c8] sm:$0xff]
      %v5979 = vld [vmem:[#allocation4 + $0x1d0] sm:$0xff]
      %v5980 = vld [vmem:[#allocation4 + $0x1d8] sm:$0xff]
      %v5981 = vld [vmem:[#allocation4 + $0x1e0] sm:$0xff]
      %v5982 = vld [vmem:[#allocation4 + $0x1e8] sm:$0xff]
      %v5983 = vld [vmem:[#allocation4 + $0x1f0] sm:$0xff]
      %v5984 = vld [vmem:[#allocation4 + $0x1f8] sm:$0xff]
      %v5985 = vlaneseq
      %v5986 = vshrl.u32 %v5985, 7
      %v5987 = vsub.s32 0, %v5986
      %v5988 = vrot.slane %v4448, %v5987
      %v5990 = vsel %vm279, %v5922, 0
      %v5993 = vsel %vm279, %v5924, 0
      %v5996 = vsel %vm279, %v5926, 0
      %v5999 = vsel %vm279, %v5928, 0
      %v6002 = vsel %vm279, %v5930, 0
      %v6005 = vsel %vm279, %v5932, 0
      %v6008 = vsel %vm279, %v5934, 0
      %v6011 = vsel %vm279, %v5936, 0
      %v6014 = vsel %vm279, %v5938, 0
      %v6017 = vsel %vm279, %v5940, 0
      %v6020 = vsel %vm279, %v5942, 0
      %v6023 = vsel %vm279, %v5944, 0
      %v6026 = vsel %vm279, %v5946, 0
      %v6029 = vsel %vm279, %v5948, 0
      %v6032 = vsel %vm279, %v5950, 0
      %v6035 = vsel %vm279, %v5952, 0
      %v6038 = vsel %vm279, %v5954, 0
      %v6041 = vsel %vm279, %v5956, 0
      %v6044 = vsel %vm279, %v5958, 0
      %v6047 = vsel %vm279, %v5960, 0
      %v6050 = vsel %vm279, %v5962, 0
      %v6053 = vsel %vm279, %v5964, 0
      %v6056 = vsel %vm279, %v5966, 0
      %v6059 = vsel %vm279, %v5968, 0
      %v6062 = vsel %vm279, %v5970, 0
      %v6065 = vsel %vm279, %v5972, 0
      %v6068 = vsel %vm279, %v5974, 0
      %v6071 = vsel %vm279, %v5976, 0
      %v6074 = vsel %vm279, %v5978, 0
      %v6077 = vsel %vm279, %v5980, 0
      %v6080 = vsel %vm279, %v5982, 0
      %v6083 = vsel %vm279, %v5984, 0
      %6085 = vmatprep.subr.mxu0 0.0
      %6086 = vmatpush1.msra.mxu0 %v4430
      %6087 = vmatprep.subr.mxu0 0.0
      %6088 = vmatpush1.msra.mxu0 %v4431
      %6089 = vmatprep.subr.mxu0 0.0
      %6090 = vmatpush1.msra.mxu0 %v4432
      %6091 = vmatprep.subr.mxu0 0.0
      %6092 = vmatpush1.msra.mxu0 %v4433
      %6093 = vmatprep.subr.mxu0 0.0
      %6094 = vmatpush1.msra.mxu0 %v4434
      %6095 = vmatprep.subr.mxu0 0.0
      %6096 = vmatpush1.msra.mxu0 %v4435
      %6097 = vmatprep.subr.mxu0 0.0
      %6098 = vmatpush1.msra.mxu0 %v4436
      %6099 = vmatprep.subr.mxu0 0.0
      %6100 = vmatpush1.msra.mxu0 %v4437
      %6101 = vmatprep.subr.mxu0 0.0
      %6102 = vmatpush1.msra.mxu0 %v4438
      %6103 = vmatprep.subr.mxu0 0.0
      %6104 = vmatpush1.msra.mxu0 %v4439
      %6105 = vmatprep.subr.mxu0 0.0
      %6106 = vmatpush1.msra.mxu0 %v4440
      %6107 = vmatprep.subr.mxu0 0.0
      %6108 = vmatpush1.msra.mxu0 %v4441
      %6109 = vmatprep.subr.mxu0 0.0
      %6110 = vmatpush1.msra.mxu0 %v4442
      %6111 = vmatprep.subr.mxu0 0.0
      %6112 = vmatpush1.msra.mxu0 %v4443
      %6113 = vmatprep.subr.mxu0 0.0
      %6114 = vmatpush1.msra.mxu0 %v4444
      %6115 = vmatprep.subr.mxu0 0.0
      %6116 = vmatpush1.msra.mxu0 %v4445
      %6117 = vmatprep.subr.mxu0 0.0
      %6118 = vmatpush1.msra.mxu0 %v4446
      %6119 = vmatprep.subr.mxu0 0.0
      %6120 = vmatpush1.msra.mxu0 %v4447
      %6121 = vmatprep.subr.mxu0 0.0
      %6122 = vmatpush1.msra.mxu0 0.0
      %6123 = vmatprep.subr.mxu0 0.0
      %6124 = vmatpush1.msra.mxu0 0.0
      %6125 = vmatprep.subr.mxu0 0.0
      %6126 = vmatpush1.msra.mxu0 0.0
      %6127 = vmatprep.subr.mxu0 0.0
      %6128 = vmatpush1.msra.mxu0 0.0
      %6129 = vmatprep.subr.mxu0 0.0
      %6130 = vmatpush1.msra.mxu0 0.0
      %6131 = vmatprep.subr.mxu0 0.0
      %6132 = vmatpush1.msra.mxu0 0.0
      %6133 = vmatprep.subr.mxu0 0.0
      %6134 = vmatpush1.msra.mxu0 0.0
      %6135 = vmatprep.subr.mxu0 0.0
      %6136 = vmatpush1.msra.mxu0 0.0
      %6137 = vmatprep.subr.mxu0 0.0
      %6138 = vmatpush1.msra.mxu0 0.0
      %6139 = vmatprep.subr.mxu0 0.0
      %6140 = vmatpush1.msra.mxu0 0.0
      %6141 = vmatprep.subr.mxu0 0.0
      %6142 = vmatpush1.msra.mxu0 0.0
      %6143 = vmatprep.subr.mxu0 0.0
      %6144 = vmatpush1.msra.mxu0 0.0
      %6145 = vmatprep.subr.mxu0 0.0
      %6146 = vmatpush1.msra.mxu0 0.0
      %6147 = vmatprep.subr.mxu0 0.0
      %6148 = vmatpush1.msra.mxu0 0.0
      %6149 = vmatprep.mubr.f32.mxu0 %v5990
      %6150 = vmatmul.mubr.f32.gmra.mrb[0].mxu0 %v5921
      %v6151 = vpop.f32.mrb[0].mxu0
      %v6152 = vadd.f32 %v5988, %v6151
      %v6153 = vpop.f32.mrb[0].mxu0
      %6154 = vmatprep.mubr.f32.mxu0 %v5993
      %6155 = vmatmul.mubr.f32.gmra.mrb[0].mxu0 %v5923
      %v6156 = vpop.f32.mrb[0].mxu0
      %v6157 = vadd.f32 %v5988, %v6156
      %v6158 = vpop.f32.mrb[0].mxu0
      %6159 = vmatprep.mubr.f32.mxu0 %v5996
      %6160 = vmatmul.mubr.f32.gmra.mrb[0].mxu0 %v5925
      %v6161 = vpop.f32.mrb[0].mxu0
      %v6162 = vadd.f32 %v5988, %v6161
      %v6163 = vpop.f32.mrb[0].mxu0
      %6164 = vmatprep.mubr.f32.mxu0 %v5999
      %6165 = vmatmul.mubr.f32.gmra.mrb[0].mxu0 %v5927
      %v6166 = vpop.f32.mrb[0].mxu0
      %v6167 = vadd.f32 %v5988, %v6166
      %v6168 = vpop.f32.mrb[0].mxu0
      %6169 = vmatprep.mubr.f32.mxu0 %v6002
      %6170 = vmatmul.mubr.f32.gmra.mrb[0].mxu0 %v5929
      %v6171 = vpop.f32.mrb[0].mxu0
      %v6172 = vadd.f32 %v5988, %v6171
      %v6173 = vpop.f32.mrb[0].mxu0
      %6174 = vmatprep.mubr.f32.mxu0 %v6005
      %6175 = vmatmul.mubr.f32.gmra.mrb[0].mxu0 %v5931
      %v6176 = vpop.f32.mrb[0].mxu0
      %v6177 = vadd.f32 %v5988, %v6176
      %v6178 = vpop.f32.mrb[0].mxu0
      %6179 = vmatprep.mubr.f32.mxu0 %v6008
      %6180 = vmatmul.mubr.f32.gmra.mrb[0].mxu0 %v5933
      %v6181 = vpop.f32.mrb[0].mxu0
      %v6182 = vadd.f32 %v5988, %v6181
      %v6183 = vpop.f32.mrb[0].mxu0
      %6184 = vmatprep.mubr.f32.mxu0 %v6011
      %6185 = vmatmul.mubr.f32.gmra.mrb[0].mxu0 %v5935
      %v6186 = vpop.f32.mrb[0].mxu0
      %v6187 = vadd.f32 %v5988, %v6186
      %v6188 = vpop.f32.mrb[0].mxu0
      %6189 = vmatprep.mubr.f32.mxu0 %v6014
      %6190 = vmatmul.mubr.f32.gmra.mrb[0].mxu0 %v5937
      %v6191 = vpop.f32.mrb[0].mxu0
      %v6192 = vadd.f32 %v5988, %v6191
      %v6193 = vpop.f32.mrb[0].mxu0
      %6194 = vmatprep.mubr.f32.mxu0 %v6017
      %6195 = vmatmul.mubr.f32.gmra.mrb[0].mxu0 %v5939
      %v6196 = vpop.f32.mrb[0].mxu0
      %v6197 = vadd.f32 %v5988, %v6196
      %v6198 = vpop.f32.mrb[0].mxu0
      %6199 = vmatprep.mubr.f32.mxu0 %v6020
      %6200 = vmatmul.mubr.f32.gmra.mrb[0].mxu0 %v5941
      %v6201 = vpop.f32.mrb[0].mxu0
      %v6202 = vadd.f32 %v5988, %v6201
      %v6203 = vpop.f32.mrb[0].mxu0
      %6204 = vmatprep.mubr.f32.mxu0 %v6023
      %6205 = vmatmul.mubr.f32.gmra.mrb[0].mxu0 %v5943
      %v6206 = vpop.f32.mrb[0].mxu0
      %v6207 = vadd.f32 %v5988, %v6206
      %v6208 = vpop.f32.mrb[0].mxu0
      %6209 = vmatprep.mubr.f32.mxu0 %v6026
      %6210 = vmatmul.mubr.f32.gmra.mrb[0].mxu0 %v5945
      %v6211 = vpop.f32.mrb[0].mxu0
      %v6212 = vadd.f32 %v5988, %v6211
      %v6213 = vpop.f32.mrb[0].mxu0
      %6214 = vmatprep.mubr.f32.mxu0 %v6029
      %6215 = vmatmul.mubr.f32.gmra.mrb[0].mxu0 %v5947
      %v6216 = vpop.f32.mrb[0].mxu0
      %v6217 = vadd.f32 %v5988, %v6216
      %v6218 = vpop.f32.mrb[0].mxu0
      %6219 = vmatprep.mubr.f32.mxu0 %v6032
      %6220 = vmatmul.mubr.f32.gmra.mrb[0].mxu0 %v5949
      %v6221 = vpop.f32.mrb[0].mxu0
      %v6222 = vadd.f32 %v5988, %v6221
      %v6223 = vpop.f32.mrb[0].mxu0
      %6224 = vmatprep.mubr.f32.mxu0 %v6035
      %6225 = vmatmul.mubr.f32.gmra.mrb[0].mxu0 %v5951
      %v6226 = vpop.f32.mrb[0].mxu0
      %v6227 = vadd.f32 %v5988, %v6226
      %v6228 = vpop.f32.mrb[0].mxu0
      %6229 = vmatprep.mubr.f32.mxu0 %v6038
      %6230 = vmatmul.mubr.f32.gmra.mrb[0].mxu0 %v5953
      %v6231 = vpop.f32.mrb[0].mxu0
      %v6232 = vadd.f32 %v5988, %v6231
      %v6233 = vpop.f32.mrb[0].mxu0
      %6234 = vmatprep.mubr.f32.mxu0 %v6041
      %6235 = vmatmul.mubr.f32.gmra.mrb[0].mxu0 %v5955
      %v6236 = vpop.f32.mrb[0].mxu0
      %v6237 = vadd.f32 %v5988, %v6236
      %v6238 = vpop.f32.mrb[0].mxu0
      %6239 = vmatprep.mubr.f32.mxu0 %v6044
      %6240 = vmatmul.mubr.f32.gmra.mrb[0].mxu0 %v5957
      %v6241 = vpop.f32.mrb[0].mxu0
      %v6242 = vadd.f32 %v5988, %v6241
      %v6243 = vpop.f32.mrb[0].mxu0
      %6244 = vmatprep.mubr.f32.mxu0 %v6047
      %6245 = vmatmul.mubr.f32.gmra.mrb[0].mxu0 %v5959
      %v6246 = vpop.f32.mrb[0].mxu0
      %v6247 = vadd.f32 %v5988, %v6246
      %v6248 = vpop.f32.mrb[0].mxu0
      %6249 = vmatprep.mubr.f32.mxu0 %v6050
      %6250 = vmatmul.mubr.f32.gmra.mrb[0].mxu0 %v5961
      %v6251 = vpop.f32.mrb[0].mxu0
      %v6252 = vadd.f32 %v5988, %v6251
      %v6253 = vpop.f32.mrb[0].mxu0
      %6254 = vmatprep.mubr.f32.mxu0 %v6053
      %6255 = vmatmul.mubr.f32.gmra.mrb[0].mxu0 %v5963
      %v6256 = vpop.f32.mrb[0].mxu0
      %v6257 = vadd.f32 %v5988, %v6256
      %v6258 = vpop.f32.mrb[0].mxu0
      %6259 = vmatprep.mubr.f32.mxu0 %v6056
      %6260 = vmatmul.mubr.f32.gmra.mrb[0].mxu0 %v5965
      %v6261 = vpop.f32.mrb[0].mxu0
      %v6262 = vadd.f32 %v5988, %v6261
      %v6263 = vpop.f32.mrb[0].mxu0
      %6264 = vmatprep.mubr.f32.mxu0 %v6059
      %6265 = vmatmul.mubr.f32.gmra.mrb[0].mxu0 %v5967
      %v6266 = vpop.f32.mrb[0].mxu0
      %v6267 = vadd.f32 %v5988, %v6266
      %v6268 = vpop.f32.mrb[0].mxu0
      %6269 = vmatprep.mubr.f32.mxu0 %v6062
      %6270 = vmatmul.mubr.f32.gmra.mrb[0].mxu0 %v5969
      %v6271 = vpop.f32.mrb[0].mxu0
      %v6272 = vadd.f32 %v5988, %v6271
      %v6273 = vpop.f32.mrb[0].mxu0
      %6274 = vmatprep.mubr.f32.mxu0 %v6065
      %6275 = vmatmul.mubr.f32.gmra.mrb[0].mxu0 %v5971
      %v6276 = vpop.f32.mrb[0].mxu0
      %v6277 = vadd.f32 %v5988, %v6276
      %v6278 = vpop.f32.mrb[0].mxu0
      %6279 = vmatprep.mubr.f32.mxu0 %v6068
      %6280 = vmatmul.mubr.f32.gmra.mrb[0].mxu0 %v5973
      %v6281 = vpop.f32.mrb[0].mxu0
      %v6282 = vadd.f32 %v5988, %v6281
      %v6283 = vpop.f32.mrb[0].mxu0
      %6284 = vmatprep.mubr.f32.mxu0 %v6071
      %6285 = vmatmul.mubr.f32.gmra.mrb[0].mxu0 %v5975
      %v6286 = vpop.f32.mrb[0].mxu0
      %v6287 = vadd.f32 %v5988, %v6286
      %v6288 = vpop.f32.mrb[0].mxu0
      %6289 = vmatprep.mubr.f32.mxu0 %v6074
      %6290 = vmatmul.mubr.f32.gmra.mrb[0].mxu0 %v5977
      %v6291 = vpop.f32.mrb[0].mxu0
      %v6292 = vadd.f32 %v5988, %v6291
      %v6293 = vpop.f32.mrb[0].mxu0
      %6294 = vmatprep.mubr.f32.mxu0 %v6077
      %6295 = vmatmul.mubr.f32.gmra.mrb[0].mxu0 %v5979
      %v6296 = vpop.f32.mrb[0].mxu0
      %v6297 = vadd.f32 %v5988, %v6296
      %v6298 = vpop.f32.mrb[0].mxu0
      %6299 = vmatprep.mubr.f32.mxu0 %v6080
      %6300 = vmatmul.mubr.f32.gmra.mrb[0].mxu0 %v5981
      %v6301 = vpop.f32.mrb[0].mxu0
      %v6302 = vadd.f32 %v5988, %v6301
      %v6303 = vpop.f32.mrb[0].mxu0
      %6304 = vmatprep.mubr.f32.mxu0 %v6083
      %6305 = vmatmul.mubr.f32.gmra.mrb[0].mxu0 %v5983
      %v6306 = vpop.f32.mrb[0].mxu0
      %v6307 = vadd.f32 %v5988, %v6306
      %v6308 = vpop.f32.mrb[0].mxu0
      %6309 = vdwg.mxu0
      %v6310 = vmax.f32 %v6152, 0.0
      %v6311 = vmax.f32 %v6157, 0.0
      %v6312 = vmax.f32 %v6162, 0.0
      %v6313 = vmax.f32 %v6167, 0.0
      %v6314 = vmax.f32 %v6172, 0.0
      %v6315 = vmax.f32 %v6177, 0.0
      %v6316 = vmax.f32 %v6182, 0.0
      %v6317 = vmax.f32 %v6187, 0.0
      %v6318 = vmax.f32 %v6192, 0.0
      %v6319 = vmax.f32 %v6197, 0.0
      %v6320 = vmax.f32 %v6202, 0.0
      %v6321 = vmax.f32 %v6207, 0.0
      %v6322 = vmax.f32 %v6212, 0.0
      %v6323 = vmax.f32 %v6217, 0.0
      %v6324 = vmax.f32 %v6222, 0.0
      %v6325 = vmax.f32 %v6227, 0.0
      %v6326 = vmax.f32 %v6232, 0.0
      %v6327 = vmax.f32 %v6237, 0.0
      %v6328 = vmax.f32 %v6242, 0.0
      %v6329 = vmax.f32 %v6247, 0.0
      %v6330 = vmax.f32 %v6252, 0.0
      %v6331 = vmax.f32 %v6257, 0.0
      %v6332 = vmax.f32 %v6262, 0.0
      %v6333 = vmax.f32 %v6267, 0.0
      %v6334 = vmax.f32 %v6272, 0.0
      %v6335 = vmax.f32 %v6277, 0.0
      %v6336 = vmax.f32 %v6282, 0.0
      %v6337 = vmax.f32 %v6287, 0.0
      %v6338 = vmax.f32 %v6292, 0.0
      %v6339 = vmax.f32 %v6297, 0.0
      %v6340 = vmax.f32 %v6302, 0.0
      %v6341 = vmax.f32 %v6307, 0.0
      %6342 = vst.msk [vmem:[%s2444 + $0x1] sm:$0xff] %vm279, %v6310
      %6343 = vst.msk [vmem:[%s2444 + $0x9] sm:$0xff] %vm279, %v6311
      %6344 = vst.msk [vmem:[%s2444 + $0x19] sm:$0xff] %vm279, %v6312
      %6345 = vst.msk [vmem:[%s2444 + $0x21] sm:$0xff] %vm279, %v6313
      %6346 = vst.msk [vmem:[%s2444 + $0x31] sm:$0xff] %vm279, %v6314
      %6347 = vst.msk [vmem:[%s2444 + $0x39] sm:$0xff] %vm279, %v6315
      %6348 = vst.msk [vmem:[%s2444 + $0x49] sm:$0xff] %vm279, %v6316
      %6349 = vst.msk [vmem:[%s2444 + $0x51] sm:$0xff] %vm279, %v6317
      %6350 = vst.msk [vmem:[%s2444 + $0x61] sm:$0xff] %vm279, %v6318
      %6351 = vst.msk [vmem:[%s2444 + $0x69] sm:$0xff] %vm279, %v6319
      %6352 = vst.msk [vmem:[%s2444 + $0x79] sm:$0xff] %vm279, %v6320
      %6353 = vst.msk [vmem:[%s2444 + $0x81] sm:$0xff] %vm279, %v6321
      %6354 = vst.msk [vmem:[%s2444 + $0x91] sm:$0xff] %vm279, %v6322
      %6355 = vst.msk [vmem:[%s2444 + $0x99] sm:$0xff] %vm279, %v6323
      %6356 = vst.msk [vmem:[%s2444 + $0xa9] sm:$0xff] %vm279, %v6324
      %6357 = vst.msk [vmem:[%s2444 + $0xb1] sm:$0xff] %vm279, %v6325
      %6358 = vst.msk [vmem:[%s2444 + $0xc1] sm:$0xff] %vm279, %v6326
      %6359 = vst.msk [vmem:[%s2444 + $0xc9] sm:$0xff] %vm279, %v6327
      %6360 = vst.msk [vmem:[%s2444 + $0xd9] sm:$0xff] %vm279, %v6328
      %6361 = vst.msk [vmem:[%s2444 + $0xe1] sm:$0xff] %vm279, %v6329
      %6362 = vst.msk [vmem:[%s2444 + $0xf1] sm:$0xff] %vm279, %v6330
      %6363 = vst.msk [vmem:[%s2444 + $0xf9] sm:$0xff] %vm279, %v6331
      %6364 = vst.msk [vmem:[%s2444 + $0x109] sm:$0xff] %vm279, %v6332
      %6365 = vst.msk [vmem:[%s2444 + $0x111] sm:$0xff] %vm279, %v6333
      %6366 = vst.msk [vmem:[%s2444 + $0x121] sm:$0xff] %vm279, %v6334
      %6367 = vst.msk [vmem:[%s2444 + $0x129] sm:$0xff] %vm279, %v6335
      %6368 = vst.msk [vmem:[%s2444 + $0x139] sm:$0xff] %vm279, %v6336
      %6369 = vst.msk [vmem:[%s2444 + $0x141] sm:$0xff] %vm279, %v6337
      %6370 = vst.msk [vmem:[%s2444 + $0x151] sm:$0xff] %vm279, %v6338
      %6371 = vst.msk [vmem:[%s2444 + $0x159] sm:$0xff] %vm279, %v6339
      %6372 = vst.msk [vmem:[%s2444 + $0x169] sm:$0xff] %vm279, %v6340
      %6373 = vst.msk [vmem:[%s2444 + $0x171] sm:$0xff] %vm279, %v6341
      %s6374 = scalar_lea.vmem %s3, 288
      %v6375 = vld [vmem:[%s6374] sm:$0xff]
      %v6376 = vld [vmem:[%s6374 + $0x8] sm:$0xff]
      %v6377 = vld [vmem:[%s6374 + $0x10] sm:$0xff]
      %v6378 = vld [vmem:[%s6374 + $0x18] sm:$0xff]
      %v6379 = vld [vmem:[%s6374 + $0x20] sm:$0xff]
      %v6380 = vld [vmem:[%s6374 + $0x28] sm:$0xff]
      %v6381 = vld [vmem:[%s6374 + $0x30] sm:$0xff]
      %v6382 = vld [vmem:[%s6374 + $0x38] sm:$0xff]
      %v6383 = vld [vmem:[%s6374 + $0x40] sm:$0xff]
      %v6384 = vld [vmem:[%s6374 + $0x48] sm:$0xff]
      %v6385 = vld [vmem:[%s6374 + $0x50] sm:$0xff]
      %v6386 = vld [vmem:[%s6374 + $0x58] sm:$0xff]
      %v6387 = vld [vmem:[%s6374 + $0x60] sm:$0xff]
      %v6388 = vld [vmem:[%s6374 + $0x68] sm:$0xff]
      %v6389 = vld [vmem:[%s6374 + $0x70] sm:$0xff]
      %v6390 = vld [vmem:[%s6374 + $0x78] sm:$0xff]
      %v6391 = vld [vmem:[%s6374 + $0x80] sm:$0xff]
      %v6392 = vld [vmem:[%s6374 + $0x88] sm:$0xff]
      %v6393 = vld [vmem:[%s4 + $0x2] sm:$0x1]
      %v6394 = vld [vmem:[#allocation3] sm:$0xff]
      %v6395 = vld [vmem:[#allocation3 + $0x8] sm:$0xff]
      %v6396 = vld [vmem:[#allocation3 + $0x18] sm:$0xff]
      %v6397 = vld [vmem:[#allocation3 + $0x20] sm:$0xff]
      %v6398 = vld [vmem:[#allocation3 + $0x30] sm:$0xff]
      %v6399 = vld [vmem:[#allocation3 + $0x38] sm:$0xff]
      %v6400 = vld [vmem:[#allocation3 + $0x48] sm:$0xff]
      %v6401 = vld [vmem:[#allocation3 + $0x50] sm:$0xff]
      %v6402 = vld [vmem:[#allocation3 + $0x60] sm:$0xff]
      %v6403 = vld [vmem:[#allocation3 + $0x68] sm:$0xff]
      %v6404 = vld [vmem:[#allocation3 + $0x78] sm:$0xff]
      %v6405 = vld [vmem:[#allocation3 + $0x80] sm:$0xff]
      %v6406 = vld [vmem:[#allocation3 + $0x90] sm:$0xff]
      %v6407 = vld [vmem:[#allocation3 + $0x98] sm:$0xff]
      %v6408 = vld [vmem:[#allocation3 + $0xa8] sm:$0xff]
      %v6409 = vld [vmem:[#allocation3 + $0xb0] sm:$0xff]
      %v6410 = vld [vmem:[#allocation3 + $0xc0] sm:$0xff]
      %v6411 = vld [vmem:[#allocation3 + $0xc8] sm:$0xff]
      %v6412 = vld [vmem:[#allocation3 + $0xd8] sm:$0xff]
      %v6413 = vld [vmem:[#allocation3 + $0xe0] sm:$0xff]
      %v6414 = vld [vmem:[#allocation3 + $0xf0] sm:$0xff]
      %v6415 = vld [vmem:[#allocation3 + $0xf8] sm:$0xff]
      %v6416 = vld [vmem:[#allocation3 + $0x108] sm:$0xff]
      %v6417 = vld [vmem:[#allocation3 + $0x110] sm:$0xff]
      %v6418 = vld [vmem:[#allocation3 + $0x120] sm:$0xff]
      %v6419 = vld [vmem:[#allocation3 + $0x128] sm:$0xff]
      %v6420 = vld [vmem:[#allocation3 + $0x138] sm:$0xff]
      %v6421 = vld [vmem:[#allocation3 + $0x140] sm:$0xff]
      %v6422 = vld [vmem:[#allocation3 + $0x150] sm:$0xff]
      %v6423 = vld [vmem:[#allocation3 + $0x158] sm:$0xff]
      %v6424 = vld [vmem:[#allocation3 + $0x168] sm:$0xff]
      %v6425 = vld [vmem:[#allocation3 + $0x170] sm:$0xff]
      %6426 = vst.msk [vmem:[#allocation4] sm:$0xff] %vm279, %v6394
      %6427 = vst.msk [vmem:[#allocation4 + $0x10] sm:$0xff] %vm279, %v6395
      %6428 = vst.msk [vmem:[#allocation4 + $0x20] sm:$0xff] %vm279, %v6396
      %6429 = vst.msk [vmem:[#allocation4 + $0x30] sm:$0xff] %vm279, %v6397
      %6430 = vst.msk [vmem:[#allocation4 + $0x40] sm:$0xff] %vm279, %v6398
      %6431 = vst.msk [vmem:[#allocation4 + $0x50] sm:$0xff] %vm279, %v6399
      %6432 = vst.msk [vmem:[#allocation4 + $0x60] sm:$0xff] %vm279, %v6400
      %6433 = vst.msk [vmem:[#allocation4 + $0x70] sm:$0xff] %vm279, %v6401
      %6434 = vst.msk [vmem:[#allocation4 + $0x80] sm:$0xff] %vm279, %v6402
      %6435 = vst.msk [vmem:[#allocation4 + $0x90] sm:$0xff] %vm279, %v6403
      %6436 = vst.msk [vmem:[#allocation4 + $0xa0] sm:$0xff] %vm279, %v6404
      %6437 = vst.msk [vmem:[#allocation4 + $0xb0] sm:$0xff] %vm279, %v6405
      %6438 = vst.msk [vmem:[#allocation4 + $0xc0] sm:$0xff] %vm279, %v6406
      %6439 = vst.msk [vmem:[#allocation4 + $0xd0] sm:$0xff] %vm279, %v6407
      %6440 = vst.msk [vmem:[#allocation4 + $0xe0] sm:$0xff] %vm279, %v6408
      %6441 = vst.msk [vmem:[#allocation4 + $0xf0] sm:$0xff] %vm279, %v6409
      %6442 = vst.msk [vmem:[#allocation4 + $0x100] sm:$0xff] %vm279, %v6410
      %6443 = vst.msk [vmem:[#allocation4 + $0x110] sm:$0xff] %vm279, %v6411
      %6444 = vst.msk [vmem:[#allocation4 + $0x120] sm:$0xff] %vm279, %v6412
      %6445 = vst.msk [vmem:[#allocation4 + $0x130] sm:$0xff] %vm279, %v6413
      %6446 = vst.msk [vmem:[#allocation4 + $0x140] sm:$0xff] %vm279, %v6414
      %6447 = vst.msk [vmem:[#allocation4 + $0x150] sm:$0xff] %vm279, %v6415
      %6448 = vst.msk [vmem:[#allocation4 + $0x160] sm:$0xff] %vm279, %v6416
      %6449 = vst.msk [vmem:[#allocation4 + $0x170] sm:$0xff] %vm279, %v6417
      %6450 = vst.msk [vmem:[#allocation4 + $0x180] sm:$0xff] %vm279, %v6418
      %6451 = vst.msk [vmem:[#allocation4 + $0x190] sm:$0xff] %vm279, %v6419
      %6452 = vst.msk [vmem:[#allocation4 + $0x1a0] sm:$0xff] %vm279, %v6420
      %6453 = vst.msk [vmem:[#allocation4 + $0x1b0] sm:$0xff] %vm279, %v6421
      %6454 = vst.msk [vmem:[#allocation4 + $0x1c0] sm:$0xff] %vm279, %v6422
      %6455 = vst.msk [vmem:[#allocation4 + $0x1d0] sm:$0xff] %vm279, %v6423
      %6456 = vst.msk [vmem:[#allocation4 + $0x1e0] sm:$0xff] %vm279, %v6424
      %6457 = vst.msk [vmem:[#allocation4 + $0x1f0] sm:$0xff] %vm279, %v6425
      %v6458 = vld [vmem:[#allocation3 + $0x1] sm:$0xff]
      %v6459 = vld [vmem:[#allocation3 + $0x9] sm:$0xff]
      %v6460 = vld [vmem:[#allocation3 + $0x19] sm:$0xff]
      %v6461 = vld [vmem:[#allocation3 + $0x21] sm:$0xff]
      %v6462 = vld [vmem:[#allocation3 + $0x31] sm:$0xff]
      %v6463 = vld [vmem:[#allocation3 + $0x39] sm:$0xff]
      %v6464 = vld [vmem:[#allocation3 + $0x49] sm:$0xff]
      %v6465 = vld [vmem:[#allocation3 + $0x51] sm:$0xff]
      %v6466 = vld [vmem:[#allocation3 + $0x61] sm:$0xff]
      %v6467 = vld [vmem:[#allocation3 + $0x69] sm:$0xff]
      %v6468 = vld [vmem:[#allocation3 + $0x79] sm:$0xff]
      %v6469 = vld [vmem:[#allocation3 + $0x81] sm:$0xff]
      %v6470 = vld [vmem:[#allocation3 + $0x91] sm:$0xff]
      %v6471 = vld [vmem:[#allocation3 + $0x99] sm:$0xff]
      %v6472 = vld [vmem:[#allocation3 + $0xa9] sm:$0xff]
      %v6473 = vld [vmem:[#allocation3 + $0xb1] sm:$0xff]
      %v6474 = vld [vmem:[#allocation3 + $0xc1] sm:$0xff]
      %v6475 = vld [vmem:[#allocation3 + $0xc9] sm:$0xff]
      %v6476 = vld [vmem:[#allocation3 + $0xd9] sm:$0xff]
      %v6477 = vld [vmem:[#allocation3 + $0xe1] sm:$0xff]
      %v6478 = vld [vmem:[#allocation3 + $0xf1] sm:$0xff]
      %v6479 = vld [vmem:[#allocation3 + $0xf9] sm:$0xff]
      %v6480 = vld [vmem:[#allocation3 + $0x109] sm:$0xff]
      %v6481 = vld [vmem:[#allocation3 + $0x111] sm:$0xff]
      %v6482 = vld [vmem:[#allocation3 + $0x121] sm:$0xff]
      %v6483 = vld [vmem:[#allocation3 + $0x129] sm:$0xff]
      %v6484 = vld [vmem:[#allocation3 + $0x139] sm:$0xff]
      %v6485 = vld [vmem:[#allocation3 + $0x141] sm:$0xff]
      %v6486 = vld [vmem:[#allocation3 + $0x151] sm:$0xff]
      %v6487 = vld [vmem:[#allocation3 + $0x159] sm:$0xff]
      %v6488 = vld [vmem:[#allocation3 + $0x169] sm:$0xff]
      %v6489 = vld [vmem:[#allocation3 + $0x171] sm:$0xff]
      %6522 = vrot.lane.b32.xlu0 %v6458, 16
      %v6523 = vpop.permute.xlu0 %6522
      %6524 = vrot.lane.b32.xlu0 %v6459, 16
      %v6525 = vpop.permute.xlu0 %6524
      %6526 = vrot.lane.b32.xlu0 %v6460, 16
      %v6527 = vpop.permute.xlu0 %6526
      %6528 = vrot.lane.b32.xlu0 %v6461, 16
      %v6529 = vpop.permute.xlu0 %6528
      %6530 = vrot.lane.b32.xlu0 %v6462, 16
      %v6531 = vpop.permute.xlu0 %6530
      %6532 = vrot.lane.b32.xlu0 %v6463, 16
      %v6533 = vpop.permute.xlu0 %6532
      %6534 = vrot.lane.b32.xlu0 %v6464, 16
      %v6535 = vpop.permute.xlu0 %6534
      %6536 = vrot.lane.b32.xlu0 %v6465, 16
      %v6537 = vpop.permute.xlu0 %6536
      %6538 = vrot.lane.b32.xlu0 %v6466, 16
      %v6539 = vpop.permute.xlu0 %6538
      %6540 = vrot.lane.b32.xlu0 %v6467, 16
      %v6541 = vpop.permute.xlu0 %6540
      %6542 = vrot.lane.b32.xlu0 %v6468, 16
      %v6543 = vpop.permute.xlu0 %6542
      %6544 = vrot.lane.b32.xlu0 %v6469, 16
      %v6545 = vpop.permute.xlu0 %6544
      %6546 = vrot.lane.b32.xlu0 %v6470, 16
      %v6547 = vpop.permute.xlu0 %6546
      %6548 = vrot.lane.b32.xlu0 %v6471, 16
      %v6549 = vpop.permute.xlu0 %6548
      %6550 = vrot.lane.b32.xlu0 %v6472, 16
      %v6551 = vpop.permute.xlu0 %6550
      %6552 = vrot.lane.b32.xlu0 %v6473, 16
      %v6553 = vpop.permute.xlu0 %6552
      %6554 = vrot.lane.b32.xlu0 %v6474, 16
      %v6555 = vpop.permute.xlu0 %6554
      %6556 = vrot.lane.b32.xlu0 %v6475, 16
      %v6557 = vpop.permute.xlu0 %6556
      %6558 = vrot.lane.b32.xlu0 %v6476, 16
      %v6559 = vpop.permute.xlu0 %6558
      %6560 = vrot.lane.b32.xlu0 %v6477, 16
      %v6561 = vpop.permute.xlu0 %6560
      %6562 = vrot.lane.b32.xlu0 %v6478, 16
      %v6563 = vpop.permute.xlu0 %6562
      %6564 = vrot.lane.b32.xlu0 %v6479, 16
      %v6565 = vpop.permute.xlu0 %6564
      %6566 = vrot.lane.b32.xlu0 %v6480, 16
      %v6567 = vpop.permute.xlu0 %6566
      %6568 = vrot.lane.b32.xlu0 %v6481, 16
      %v6569 = vpop.permute.xlu0 %6568
      %6570 = vrot.lane.b32.xlu0 %v6482, 16
      %v6571 = vpop.permute.xlu0 %6570
      %6572 = vrot.lane.b32.xlu0 %v6483, 16
      %v6573 = vpop.permute.xlu0 %6572
      %6574 = vrot.lane.b32.xlu0 %v6484, 16
      %v6575 = vpop.permute.xlu0 %6574
      %6576 = vrot.lane.b32.xlu0 %v6485, 16
      %v6577 = vpop.permute.xlu0 %6576
      %6578 = vrot.lane.b32.xlu0 %v6486, 16
      %v6579 = vpop.permute.xlu0 %6578
      %6580 = vrot.lane.b32.xlu0 %v6487, 16
      %v6581 = vpop.permute.xlu0 %6580
      %6582 = vrot.lane.b32.xlu0 %v6488, 16
      %v6583 = vpop.permute.xlu0 %6582
      %6584 = vrot.lane.b32.xlu0 %v6489, 16
      %v6585 = vpop.permute.xlu0 %6584
      %6618 = vst.msk [vmem:[#allocation4] sm:$0xff] %vm2720, %v6523
      %6619 = vst.msk [vmem:[#allocation4 + $0x10] sm:$0xff] %vm2720, %v6525
      %6620 = vst.msk [vmem:[#allocation4 + $0x20] sm:$0xff] %vm2720, %v6527
      %6621 = vst.msk [vmem:[#allocation4 + $0x30] sm:$0xff] %vm2720, %v6529
      %6622 = vst.msk [vmem:[#allocation4 + $0x40] sm:$0xff] %vm2720, %v6531
      %6623 = vst.msk [vmem:[#allocation4 + $0x50] sm:$0xff] %vm2720, %v6533
      %6624 = vst.msk [vmem:[#allocation4 + $0x60] sm:$0xff] %vm2720, %v6535
      %6625 = vst.msk [vmem:[#allocation4 + $0x70] sm:$0xff] %vm2720, %v6537
      %6626 = vst.msk [vmem:[#allocation4 + $0x80] sm:$0xff] %vm2720, %v6539
      %6627 = vst.msk [vmem:[#allocation4 + $0x90] sm:$0xff] %vm2720, %v6541
      %6628 = vst.msk [vmem:[#allocation4 + $0xa0] sm:$0xff] %vm2720, %v6543
      %6629 = vst.msk [vmem:[#allocation4 + $0xb0] sm:$0xff] %vm2720, %v6545
      %6630 = vst.msk [vmem:[#allocation4 + $0xc0] sm:$0xff] %vm2720, %v6547
      %6631 = vst.msk [vmem:[#allocation4 + $0xd0] sm:$0xff] %vm2720, %v6549
      %6632 = vst.msk [vmem:[#allocation4 + $0xe0] sm:$0xff] %vm2720, %v6551
      %6633 = vst.msk [vmem:[#allocation4 + $0xf0] sm:$0xff] %vm2720, %v6553
      %6634 = vst.msk [vmem:[#allocation4 + $0x100] sm:$0xff] %vm2720, %v6555
      %6635 = vst.msk [vmem:[#allocation4 + $0x110] sm:$0xff] %vm2720, %v6557
      %6636 = vst.msk [vmem:[#allocation4 + $0x120] sm:$0xff] %vm2720, %v6559
      %6637 = vst.msk [vmem:[#allocation4 + $0x130] sm:$0xff] %vm2720, %v6561
      %6638 = vst.msk [vmem:[#allocation4 + $0x140] sm:$0xff] %vm2720, %v6563
      %6639 = vst.msk [vmem:[#allocation4 + $0x150] sm:$0xff] %vm2720, %v6565
      %6640 = vst.msk [vmem:[#allocation4 + $0x160] sm:$0xff] %vm2720, %v6567
      %6641 = vst.msk [vmem:[#allocation4 + $0x170] sm:$0xff] %vm2720, %v6569
      %6642 = vst.msk [vmem:[#allocation4 + $0x180] sm:$0xff] %vm2720, %v6571
      %6643 = vst.msk [vmem:[#allocation4 + $0x190] sm:$0xff] %vm2720, %v6573
      %6644 = vst.msk [vmem:[#allocation4 + $0x1a0] sm:$0xff] %vm2720, %v6575
      %6645 = vst.msk [vmem:[#allocation4 + $0x1b0] sm:$0xff] %vm2720, %v6577
      %6646 = vst.msk [vmem:[#allocation4 + $0x1c0] sm:$0xff] %vm2720, %v6579
      %6647 = vst.msk [vmem:[#allocation4 + $0x1d0] sm:$0xff] %vm2720, %v6581
      %6648 = vst.msk [vmem:[#allocation4 + $0x1e0] sm:$0xff] %vm2720, %v6583
      %6649 = vst.msk [vmem:[#allocation4 + $0x1f0] sm:$0xff] %vm2720, %v6585
      %v6650 = vld [vmem:[#allocation3 + $0x2] sm:$0xff]
      %v6651 = vld [vmem:[#allocation3 + $0xa] sm:$0xff]
      %v6652 = vld [vmem:[#allocation3 + $0x1a] sm:$0xff]
      %v6653 = vld [vmem:[#allocation3 + $0x22] sm:$0xff]
      %v6654 = vld [vmem:[#allocation3 + $0x32] sm:$0xff]
      %v6655 = vld [vmem:[#allocation3 + $0x3a] sm:$0xff]
      %v6656 = vld [vmem:[#allocation3 + $0x4a] sm:$0xff]
      %v6657 = vld [vmem:[#allocation3 + $0x52] sm:$0xff]
      %v6658 = vld [vmem:[#allocation3 + $0x62] sm:$0xff]
      %v6659 = vld [vmem:[#allocation3 + $0x6a] sm:$0xff]
      %v6660 = vld [vmem:[#allocation3 + $0x7a] sm:$0xff]
      %v6661 = vld [vmem:[#allocation3 + $0x82] sm:$0xff]
      %v6662 = vld [vmem:[#allocation3 + $0x92] sm:$0xff]
      %v6663 = vld [vmem:[#allocation3 + $0x9a] sm:$0xff]
      %v6664 = vld [vmem:[#allocation3 + $0xaa] sm:$0xff]
      %v6665 = vld [vmem:[#allocation3 + $0xb2] sm:$0xff]
      %v6666 = vld [vmem:[#allocation3 + $0xc2] sm:$0xff]
      %v6667 = vld [vmem:[#allocation3 + $0xca] sm:$0xff]
      %v6668 = vld [vmem:[#allocation3 + $0xda] sm:$0xff]
      %v6669 = vld [vmem:[#allocation3 + $0xe2] sm:$0xff]
      %v6670 = vld [vmem:[#allocation3 + $0xf2] sm:$0xff]
      %v6671 = vld [vmem:[#allocation3 + $0xfa] sm:$0xff]
      %v6672 = vld [vmem:[#allocation3 + $0x10a] sm:$0xff]
      %v6673 = vld [vmem:[#allocation3 + $0x112] sm:$0xff]
      %v6674 = vld [vmem:[#allocation3 + $0x122] sm:$0xff]
      %v6675 = vld [vmem:[#allocation3 + $0x12a] sm:$0xff]
      %v6676 = vld [vmem:[#allocation3 + $0x13a] sm:$0xff]
      %v6677 = vld [vmem:[#allocation3 + $0x142] sm:$0xff]
      %v6678 = vld [vmem:[#allocation3 + $0x152] sm:$0xff]
      %v6679 = vld [vmem:[#allocation3 + $0x15a] sm:$0xff]
      %v6680 = vld [vmem:[#allocation3 + $0x16a] sm:$0xff]
      %v6681 = vld [vmem:[#allocation3 + $0x172] sm:$0xff]
      %6714 = vrot.lane.b32.xlu0 %v6650, 32
      %v6715 = vpop.permute.xlu0 %6714
      %6716 = vrot.lane.b32.xlu0 %v6651, 32
      %v6717 = vpop.permute.xlu0 %6716
      %6718 = vrot.lane.b32.xlu0 %v6652, 32
      %v6719 = vpop.permute.xlu0 %6718
      %6720 = vrot.lane.b32.xlu0 %v6653, 32
      %v6721 = vpop.permute.xlu0 %6720
      %6722 = vrot.lane.b32.xlu0 %v6654, 32
      %v6723 = vpop.permute.xlu0 %6722
      %6724 = vrot.lane.b32.xlu0 %v6655, 32
      %v6725 = vpop.permute.xlu0 %6724
      %6726 = vrot.lane.b32.xlu0 %v6656, 32
      %v6727 = vpop.permute.xlu0 %6726
      %6728 = vrot.lane.b32.xlu0 %v6657, 32
      %v6729 = vpop.permute.xlu0 %6728
      %6730 = vrot.lane.b32.xlu0 %v6658, 32
      %v6731 = vpop.permute.xlu0 %6730
      %6732 = vrot.lane.b32.xlu0 %v6659, 32
      %v6733 = vpop.permute.xlu0 %6732
      %6734 = vrot.lane.b32.xlu0 %v6660, 32
      %v6735 = vpop.permute.xlu0 %6734
      %6736 = vrot.lane.b32.xlu0 %v6661, 32
      %v6737 = vpop.permute.xlu0 %6736
      %6738 = vrot.lane.b32.xlu0 %v6662, 32
      %v6739 = vpop.permute.xlu0 %6738
      %6740 = vrot.lane.b32.xlu0 %v6663, 32
      %v6741 = vpop.permute.xlu0 %6740
      %6742 = vrot.lane.b32.xlu0 %v6664, 32
      %v6743 = vpop.permute.xlu0 %6742
      %6744 = vrot.lane.b32.xlu0 %v6665, 32
      %v6745 = vpop.permute.xlu0 %6744
      %6746 = vrot.lane.b32.xlu0 %v6666, 32
      %v6747 = vpop.permute.xlu0 %6746
      %6748 = vrot.lane.b32.xlu0 %v6667, 32
      %v6749 = vpop.permute.xlu0 %6748
      %6750 = vrot.lane.b32.xlu0 %v6668, 32
      %v6751 = vpop.permute.xlu0 %6750
      %6752 = vrot.lane.b32.xlu0 %v6669, 32
      %v6753 = vpop.permute.xlu0 %6752
      %6754 = vrot.lane.b32.xlu0 %v6670, 32
      %v6755 = vpop.permute.xlu0 %6754
      %6756 = vrot.lane.b32.xlu0 %v6671, 32
      %v6757 = vpop.permute.xlu0 %6756
      %6758 = vrot.lane.b32.xlu0 %v6672, 32
      %v6759 = vpop.permute.xlu0 %6758
      %6760 = vrot.lane.b32.xlu0 %v6673, 32
      %v6761 = vpop.permute.xlu0 %6760
      %6762 = vrot.lane.b32.xlu0 %v6674, 32
      %v6763 = vpop.permute.xlu0 %6762
      %6764 = vrot.lane.b32.xlu0 %v6675, 32
      %v6765 = vpop.permute.xlu0 %6764
      %6766 = vrot.lane.b32.xlu0 %v6676, 32
      %v6767 = vpop.permute.xlu0 %6766
      %6768 = vrot.lane.b32.xlu0 %v6677, 32
      %v6769 = vpop.permute.xlu0 %6768
      %6770 = vrot.lane.b32.xlu0 %v6678, 32
      %v6771 = vpop.permute.xlu0 %6770
      %6772 = vrot.lane.b32.xlu0 %v6679, 32
      %v6773 = vpop.permute.xlu0 %6772
      %6774 = vrot.lane.b32.xlu0 %v6680, 32
      %v6775 = vpop.permute.xlu0 %6774
      %6776 = vrot.lane.b32.xlu0 %v6681, 32
      %v6777 = vpop.permute.xlu0 %6776
      %6810 = vst.msk [vmem:[#allocation4] sm:$0xff] %vm2913, %v6715
      %6811 = vst.msk [vmem:[#allocation4 + $0x10] sm:$0xff] %vm2913, %v6717
      %6812 = vst.msk [vmem:[#allocation4 + $0x20] sm:$0xff] %vm2913, %v6719
      %6813 = vst.msk [vmem:[#allocation4 + $0x30] sm:$0xff] %vm2913, %v6721
      %6814 = vst.msk [vmem:[#allocation4 + $0x40] sm:$0xff] %vm2913, %v6723
      %6815 = vst.msk [vmem:[#allocation4 + $0x50] sm:$0xff] %vm2913, %v6725
      %6816 = vst.msk [vmem:[#allocation4 + $0x60] sm:$0xff] %vm2913, %v6727
      %6817 = vst.msk [vmem:[#allocation4 + $0x70] sm:$0xff] %vm2913, %v6729
      %6818 = vst.msk [vmem:[#allocation4 + $0x80] sm:$0xff] %vm2913, %v6731
      %6819 = vst.msk [vmem:[#allocation4 + $0x90] sm:$0xff] %vm2913, %v6733
      %6820 = vst.msk [vmem:[#allocation4 + $0xa0] sm:$0xff] %vm2913, %v6735
      %6821 = vst.msk [vmem:[#allocation4 + $0xb0] sm:$0xff] %vm2913, %v6737
      %6822 = vst.msk [vmem:[#allocation4 + $0xc0] sm:$0xff] %vm2913, %v6739
      %6823 = vst.msk [vmem:[#allocation4 + $0xd0] sm:$0xff] %vm2913, %v6741
      %6824 = vst.msk [vmem:[#allocation4 + $0xe0] sm:$0xff] %vm2913, %v6743
      %6825 = vst.msk [vmem:[#allocation4 + $0xf0] sm:$0xff] %vm2913, %v6745
      %6826 = vst.msk [vmem:[#allocation4 + $0x100] sm:$0xff] %vm2913, %v6747
      %6827 = vst.msk [vmem:[#allocation4 + $0x110] sm:$0xff] %vm2913, %v6749
      %6828 = vst.msk [vmem:[#allocation4 + $0x120] sm:$0xff] %vm2913, %v6751
      %6829 = vst.msk [vmem:[#allocation4 + $0x130] sm:$0xff] %vm2913, %v6753
      %6830 = vst.msk [vmem:[#allocation4 + $0x140] sm:$0xff] %vm2913, %v6755
      %6831 = vst.msk [vmem:[#allocation4 + $0x150] sm:$0xff] %vm2913, %v6757
      %6832 = vst.msk [vmem:[#allocation4 + $0x160] sm:$0xff] %vm2913, %v6759
      %6833 = vst.msk [vmem:[#allocation4 + $0x170] sm:$0xff] %vm2913, %v6761
      %6834 = vst.msk [vmem:[#allocation4 + $0x180] sm:$0xff] %vm2913, %v6763
      %6835 = vst.msk [vmem:[#allocation4 + $0x190] sm:$0xff] %vm2913, %v6765
      %6836 = vst.msk [vmem:[#allocation4 + $0x1a0] sm:$0xff] %vm2913, %v6767
      %6837 = vst.msk [vmem:[#allocation4 + $0x1b0] sm:$0xff] %vm2913, %v6769
      %6838 = vst.msk [vmem:[#allocation4 + $0x1c0] sm:$0xff] %vm2913, %v6771
      %6839 = vst.msk [vmem:[#allocation4 + $0x1d0] sm:$0xff] %vm2913, %v6773
      %6840 = vst.msk [vmem:[#allocation4 + $0x1e0] sm:$0xff] %vm2913, %v6775
      %6841 = vst.msk [vmem:[#allocation4 + $0x1f0] sm:$0xff] %vm2913, %v6777
      %v6842 = vld [vmem:[%s2444] sm:$0xff]
      %v6843 = vld [vmem:[%s2444 + $0x8] sm:$0xff]
      %v6844 = vld [vmem:[%s2444 + $0x18] sm:$0xff]
      %v6845 = vld [vmem:[%s2444 + $0x20] sm:$0xff]
      %v6846 = vld [vmem:[%s2444 + $0x30] sm:$0xff]
      %v6847 = vld [vmem:[%s2444 + $0x38] sm:$0xff]
      %v6848 = vld [vmem:[%s2444 + $0x48] sm:$0xff]
      %v6849 = vld [vmem:[%s2444 + $0x50] sm:$0xff]
      %v6850 = vld [vmem:[%s2444 + $0x60] sm:$0xff]
      %v6851 = vld [vmem:[%s2444 + $0x68] sm:$0xff]
      %v6852 = vld [vmem:[%s2444 + $0x78] sm:$0xff]
      %v6853 = vld [vmem:[%s2444 + $0x80] sm:$0xff]
      %v6854 = vld [vmem:[%s2444 + $0x90] sm:$0xff]
      %v6855 = vld [vmem:[%s2444 + $0x98] sm:$0xff]
      %v6856 = vld [vmem:[%s2444 + $0xa8] sm:$0xff]
      %v6857 = vld [vmem:[%s2444 + $0xb0] sm:$0xff]
      %v6858 = vld [vmem:[%s2444 + $0xc0] sm:$0xff]
      %v6859 = vld [vmem:[%s2444 + $0xc8] sm:$0xff]
      %v6860 = vld [vmem:[%s2444 + $0xd8] sm:$0xff]
      %v6861 = vld [vmem:[%s2444 + $0xe0] sm:$0xff]
      %v6862 = vld [vmem:[%s2444 + $0xf0] sm:$0xff]
      %v6863 = vld [vmem:[%s2444 + $0xf8] sm:$0xff]
      %v6864 = vld [vmem:[%s2444 + $0x108] sm:$0xff]
      %v6865 = vld [vmem:[%s2444 + $0x110] sm:$0xff]
      %v6866 = vld [vmem:[%s2444 + $0x120] sm:$0xff]
      %v6867 = vld [vmem:[%s2444 + $0x128] sm:$0xff]
      %v6868 = vld [vmem:[%s2444 + $0x138] sm:$0xff]
      %v6869 = vld [vmem:[%s2444 + $0x140] sm:$0xff]
      %v6870 = vld [vmem:[%s2444 + $0x150] sm:$0xff]
      %v6871 = vld [vmem:[%s2444 + $0x158] sm:$0xff]
      %v6872 = vld [vmem:[%s2444 + $0x168] sm:$0xff]
      %v6873 = vld [vmem:[%s2444 + $0x170] sm:$0xff]
      %6906 = vrot.lane.b32.xlu0 %v6842, 48
      %v6907 = vpop.permute.xlu0 %6906
      %6908 = vrot.lane.b32.xlu0 %v6843, 48
      %v6909 = vpop.permute.xlu0 %6908
      %6910 = vrot.lane.b32.xlu0 %v6844, 48
      %v6911 = vpop.permute.xlu0 %6910
      %6912 = vrot.lane.b32.xlu0 %v6845, 48
      %v6913 = vpop.permute.xlu0 %6912
      %6914 = vrot.lane.b32.xlu0 %v6846, 48
      %v6915 = vpop.permute.xlu0 %6914
      %6916 = vrot.lane.b32.xlu0 %v6847, 48
      %v6917 = vpop.permute.xlu0 %6916
      %6918 = vrot.lane.b32.xlu0 %v6848, 48
      %v6919 = vpop.permute.xlu0 %6918
      %6920 = vrot.lane.b32.xlu0 %v6849, 48
      %v6921 = vpop.permute.xlu0 %6920
      %6922 = vrot.lane.b32.xlu0 %v6850, 48
      %v6923 = vpop.permute.xlu0 %6922
      %6924 = vrot.lane.b32.xlu0 %v6851, 48
      %v6925 = vpop.permute.xlu0 %6924
      %6926 = vrot.lane.b32.xlu0 %v6852, 48
      %v6927 = vpop.permute.xlu0 %6926
      %6928 = vrot.lane.b32.xlu0 %v6853, 48
      %v6929 = vpop.permute.xlu0 %6928
      %6930 = vrot.lane.b32.xlu0 %v6854, 48
      %v6931 = vpop.permute.xlu0 %6930
      %6932 = vrot.lane.b32.xlu0 %v6855, 48
      %v6933 = vpop.permute.xlu0 %6932
      %6934 = vrot.lane.b32.xlu0 %v6856, 48
      %v6935 = vpop.permute.xlu0 %6934
      %6936 = vrot.lane.b32.xlu0 %v6857, 48
      %v6937 = vpop.permute.xlu0 %6936
      %6938 = vrot.lane.b32.xlu0 %v6858, 48
      %v6939 = vpop.permute.xlu0 %6938
      %6940 = vrot.lane.b32.xlu0 %v6859, 48
      %v6941 = vpop.permute.xlu0 %6940
      %6942 = vrot.lane.b32.xlu0 %v6860, 48
      %v6943 = vpop.permute.xlu0 %6942
      %6944 = vrot.lane.b32.xlu0 %v6861, 48
      %v6945 = vpop.permute.xlu0 %6944
      %6946 = vrot.lane.b32.xlu0 %v6862, 48
      %v6947 = vpop.permute.xlu0 %6946
      %6948 = vrot.lane.b32.xlu0 %v6863, 48
      %v6949 = vpop.permute.xlu0 %6948
      %6950 = vrot.lane.b32.xlu0 %v6864, 48
      %v6951 = vpop.permute.xlu0 %6950
      %6952 = vrot.lane.b32.xlu0 %v6865, 48
      %v6953 = vpop.permute.xlu0 %6952
      %6954 = vrot.lane.b32.xlu0 %v6866, 48
      %v6955 = vpop.permute.xlu0 %6954
      %6956 = vrot.lane.b32.xlu0 %v6867, 48
      %v6957 = vpop.permute.xlu0 %6956
      %6958 = vrot.lane.b32.xlu0 %v6868, 48
      %v6959 = vpop.permute.xlu0 %6958
      %6960 = vrot.lane.b32.xlu0 %v6869, 48
      %v6961 = vpop.permute.xlu0 %6960
      %6962 = vrot.lane.b32.xlu0 %v6870, 48
      %v6963 = vpop.permute.xlu0 %6962
      %6964 = vrot.lane.b32.xlu0 %v6871, 48
      %v6965 = vpop.permute.xlu0 %6964
      %6966 = vrot.lane.b32.xlu0 %v6872, 48
      %v6967 = vpop.permute.xlu0 %6966
      %6968 = vrot.lane.b32.xlu0 %v6873, 48
      %v6969 = vpop.permute.xlu0 %6968
      %7002 = vst.msk [vmem:[#allocation4] sm:$0xff] %vm3106, %v6907
      %7003 = vst.msk [vmem:[#allocation4 + $0x10] sm:$0xff] %vm3106, %v6909
      %7004 = vst.msk [vmem:[#allocation4 + $0x20] sm:$0xff] %vm3106, %v6911
      %7005 = vst.msk [vmem:[#allocation4 + $0x30] sm:$0xff] %vm3106, %v6913
      %7006 = vst.msk [vmem:[#allocation4 + $0x40] sm:$0xff] %vm3106, %v6915
      %7007 = vst.msk [vmem:[#allocation4 + $0x50] sm:$0xff] %vm3106, %v6917
      %7008 = vst.msk [vmem:[#allocation4 + $0x60] sm:$0xff] %vm3106, %v6919
      %7009 = vst.msk [vmem:[#allocation4 + $0x70] sm:$0xff] %vm3106, %v6921
      %7010 = vst.msk [vmem:[#allocation4 + $0x80] sm:$0xff] %vm3106, %v6923
      %7011 = vst.msk [vmem:[#allocation4 + $0x90] sm:$0xff] %vm3106, %v6925
      %7012 = vst.msk [vmem:[#allocation4 + $0xa0] sm:$0xff] %vm3106, %v6927
      %7013 = vst.msk [vmem:[#allocation4 + $0xb0] sm:$0xff] %vm3106, %v6929
      %7014 = vst.msk [vmem:[#allocation4 + $0xc0] sm:$0xff] %vm3106, %v6931
      %7015 = vst.msk [vmem:[#allocation4 + $0xd0] sm:$0xff] %vm3106, %v6933
      %7016 = vst.msk [vmem:[#allocation4 + $0xe0] sm:$0xff] %vm3106, %v6935
      %7017 = vst.msk [vmem:[#allocation4 + $0xf0] sm:$0xff] %vm3106, %v6937
      %7018 = vst.msk [vmem:[#allocation4 + $0x100] sm:$0xff] %vm3106, %v6939
      %7019 = vst.msk [vmem:[#allocation4 + $0x110] sm:$0xff] %vm3106, %v6941
      %7020 = vst.msk [vmem:[#allocation4 + $0x120] sm:$0xff] %vm3106, %v6943
      %7021 = vst.msk [vmem:[#allocation4 + $0x130] sm:$0xff] %vm3106, %v6945
      %7022 = vst.msk [vmem:[#allocation4 + $0x140] sm:$0xff] %vm3106, %v6947
      %7023 = vst.msk [vmem:[#allocation4 + $0x150] sm:$0xff] %vm3106, %v6949
      %7024 = vst.msk [vmem:[#allocation4 + $0x160] sm:$0xff] %vm3106, %v6951
      %7025 = vst.msk [vmem:[#allocation4 + $0x170] sm:$0xff] %vm3106, %v6953
      %7026 = vst.msk [vmem:[#allocation4 + $0x180] sm:$0xff] %vm3106, %v6955
      %7027 = vst.msk [vmem:[#allocation4 + $0x190] sm:$0xff] %vm3106, %v6957
      %7028 = vst.msk [vmem:[#allocation4 + $0x1a0] sm:$0xff] %vm3106, %v6959
      %7029 = vst.msk [vmem:[#allocation4 + $0x1b0] sm:$0xff] %vm3106, %v6961
      %7030 = vst.msk [vmem:[#allocation4 + $0x1c0] sm:$0xff] %vm3106, %v6963
      %7031 = vst.msk [vmem:[#allocation4 + $0x1d0] sm:$0xff] %vm3106, %v6965
      %7032 = vst.msk [vmem:[#allocation4 + $0x1e0] sm:$0xff] %vm3106, %v6967
      %7033 = vst.msk [vmem:[#allocation4 + $0x1f0] sm:$0xff] %vm3106, %v6969
      %v7034 = vld [vmem:[%s2444 + $0x1] sm:$0xff]
      %v7035 = vld [vmem:[%s2444 + $0x9] sm:$0xff]
      %v7036 = vld [vmem:[%s2444 + $0x19] sm:$0xff]
      %v7037 = vld [vmem:[%s2444 + $0x21] sm:$0xff]
      %v7038 = vld [vmem:[%s2444 + $0x31] sm:$0xff]
      %v7039 = vld [vmem:[%s2444 + $0x39] sm:$0xff]
      %v7040 = vld [vmem:[%s2444 + $0x49] sm:$0xff]
      %v7041 = vld [vmem:[%s2444 + $0x51] sm:$0xff]
      %v7042 = vld [vmem:[%s2444 + $0x61] sm:$0xff]
      %v7043 = vld [vmem:[%s2444 + $0x69] sm:$0xff]
      %v7044 = vld [vmem:[%s2444 + $0x79] sm:$0xff]
      %v7045 = vld [vmem:[%s2444 + $0x81] sm:$0xff]
      %v7046 = vld [vmem:[%s2444 + $0x91] sm:$0xff]
      %v7047 = vld [vmem:[%s2444 + $0x99] sm:$0xff]
      %v7048 = vld [vmem:[%s2444 + $0xa9] sm:$0xff]
      %v7049 = vld [vmem:[%s2444 + $0xb1] sm:$0xff]
      %v7050 = vld [vmem:[%s2444 + $0xc1] sm:$0xff]
      %v7051 = vld [vmem:[%s2444 + $0xc9] sm:$0xff]
      %v7052 = vld [vmem:[%s2444 + $0xd9] sm:$0xff]
      %v7053 = vld [vmem:[%s2444 + $0xe1] sm:$0xff]
      %v7054 = vld [vmem:[%s2444 + $0xf1] sm:$0xff]
      %v7055 = vld [vmem:[%s2444 + $0xf9] sm:$0xff]
      %v7056 = vld [vmem:[%s2444 + $0x109] sm:$0xff]
      %v7057 = vld [vmem:[%s2444 + $0x111] sm:$0xff]
      %v7058 = vld [vmem:[%s2444 + $0x121] sm:$0xff]
      %v7059 = vld [vmem:[%s2444 + $0x129] sm:$0xff]
      %v7060 = vld [vmem:[%s2444 + $0x139] sm:$0xff]
      %v7061 = vld [vmem:[%s2444 + $0x141] sm:$0xff]
      %v7062 = vld [vmem:[%s2444 + $0x151] sm:$0xff]
      %v7063 = vld [vmem:[%s2444 + $0x159] sm:$0xff]
      %v7064 = vld [vmem:[%s2444 + $0x169] sm:$0xff]
      %v7065 = vld [vmem:[%s2444 + $0x171] sm:$0xff]
      %7098 = vrot.lane.b32.xlu0 %v7034, 64
      %v7099 = vpop.permute.xlu0 %7098
      %7100 = vrot.lane.b32.xlu0 %v7035, 64
      %v7101 = vpop.permute.xlu0 %7100
      %7102 = vrot.lane.b32.xlu0 %v7036, 64
      %v7103 = vpop.permute.xlu0 %7102
      %7104 = vrot.lane.b32.xlu0 %v7037, 64
      %v7105 = vpop.permute.xlu0 %7104
      %7106 = vrot.lane.b32.xlu0 %v7038, 64
      %v7107 = vpop.permute.xlu0 %7106
      %7108 = vrot.lane.b32.xlu0 %v7039, 64
      %v7109 = vpop.permute.xlu0 %7108
      %7110 = vrot.lane.b32.xlu0 %v7040, 64
      %v7111 = vpop.permute.xlu0 %7110
      %7112 = vrot.lane.b32.xlu0 %v7041, 64
      %v7113 = vpop.permute.xlu0 %7112
      %7114 = vrot.lane.b32.xlu0 %v7042, 64
      %v7115 = vpop.permute.xlu0 %7114
      %7116 = vrot.lane.b32.xlu0 %v7043, 64
      %v7117 = vpop.permute.xlu0 %7116
      %7118 = vrot.lane.b32.xlu0 %v7044, 64
      %v7119 = vpop.permute.xlu0 %7118
      %7120 = vrot.lane.b32.xlu0 %v7045, 64
      %v7121 = vpop.permute.xlu0 %7120
      %7122 = vrot.lane.b32.xlu0 %v7046, 64
      %v7123 = vpop.permute.xlu0 %7122
      %7124 = vrot.lane.b32.xlu0 %v7047, 64
      %v7125 = vpop.permute.xlu0 %7124
      %7126 = vrot.lane.b32.xlu0 %v7048, 64
      %v7127 = vpop.permute.xlu0 %7126
      %7128 = vrot.lane.b32.xlu0 %v7049, 64
      %v7129 = vpop.permute.xlu0 %7128
      %7130 = vrot.lane.b32.xlu0 %v7050, 64
      %v7131 = vpop.permute.xlu0 %7130
      %7132 = vrot.lane.b32.xlu0 %v7051, 64
      %v7133 = vpop.permute.xlu0 %7132
      %7134 = vrot.lane.b32.xlu0 %v7052, 64
      %v7135 = vpop.permute.xlu0 %7134
      %7136 = vrot.lane.b32.xlu0 %v7053, 64
      %v7137 = vpop.permute.xlu0 %7136
      %7138 = vrot.lane.b32.xlu0 %v7054, 64
      %v7139 = vpop.permute.xlu0 %7138
      %7140 = vrot.lane.b32.xlu0 %v7055, 64
      %v7141 = vpop.permute.xlu0 %7140
      %7142 = vrot.lane.b32.xlu0 %v7056, 64
      %v7143 = vpop.permute.xlu0 %7142
      %7144 = vrot.lane.b32.xlu0 %v7057, 64
      %v7145 = vpop.permute.xlu0 %7144
      %7146 = vrot.lane.b32.xlu0 %v7058, 64
      %v7147 = vpop.permute.xlu0 %7146
      %7148 = vrot.lane.b32.xlu0 %v7059, 64
      %v7149 = vpop.permute.xlu0 %7148
      %7150 = vrot.lane.b32.xlu0 %v7060, 64
      %v7151 = vpop.permute.xlu0 %7150
      %7152 = vrot.lane.b32.xlu0 %v7061, 64
      %v7153 = vpop.permute.xlu0 %7152
      %7154 = vrot.lane.b32.xlu0 %v7062, 64
      %v7155 = vpop.permute.xlu0 %7154
      %7156 = vrot.lane.b32.xlu0 %v7063, 64
      %v7157 = vpop.permute.xlu0 %7156
      %7158 = vrot.lane.b32.xlu0 %v7064, 64
      %v7159 = vpop.permute.xlu0 %7158
      %7160 = vrot.lane.b32.xlu0 %v7065, 64
      %v7161 = vpop.permute.xlu0 %7160
      %7194 = vst.msk [vmem:[#allocation4] sm:$0xff] %vm3299, %v7099
      %7195 = vst.msk [vmem:[#allocation4 + $0x10] sm:$0xff] %vm3299, %v7101
      %7196 = vst.msk [vmem:[#allocation4 + $0x20] sm:$0xff] %vm3299, %v7103
      %7197 = vst.msk [vmem:[#allocation4 + $0x30] sm:$0xff] %vm3299, %v7105
      %7198 = vst.msk [vmem:[#allocation4 + $0x40] sm:$0xff] %vm3299, %v7107
      %7199 = vst.msk [vmem:[#allocation4 + $0x50] sm:$0xff] %vm3299, %v7109
      %7200 = vst.msk [vmem:[#allocation4 + $0x60] sm:$0xff] %vm3299, %v7111
      %7201 = vst.msk [vmem:[#allocation4 + $0x70] sm:$0xff] %vm3299, %v7113
      %7202 = vst.msk [vmem:[#allocation4 + $0x80] sm:$0xff] %vm3299, %v7115
      %7203 = vst.msk [vmem:[#allocation4 + $0x90] sm:$0xff] %vm3299, %v7117
      %7204 = vst.msk [vmem:[#allocation4 + $0xa0] sm:$0xff] %vm3299, %v7119
      %7205 = vst.msk [vmem:[#allocation4 + $0xb0] sm:$0xff] %vm3299, %v7121
      %7206 = vst.msk [vmem:[#allocation4 + $0xc0] sm:$0xff] %vm3299, %v7123
      %7207 = vst.msk [vmem:[#allocation4 + $0xd0] sm:$0xff] %vm3299, %v7125
      %7208 = vst.msk [vmem:[#allocation4 + $0xe0] sm:$0xff] %vm3299, %v7127
      %7209 = vst.msk [vmem:[#allocation4 + $0xf0] sm:$0xff] %vm3299, %v7129
      %7210 = vst.msk [vmem:[#allocation4 + $0x100] sm:$0xff] %vm3299, %v7131
      %7211 = vst.msk [vmem:[#allocation4 + $0x110] sm:$0xff] %vm3299, %v7133
      %7212 = vst.msk [vmem:[#allocation4 + $0x120] sm:$0xff] %vm3299, %v7135
      %7213 = vst.msk [vmem:[#allocation4 + $0x130] sm:$0xff] %vm3299, %v7137
      %7214 = vst.msk [vmem:[#allocation4 + $0x140] sm:$0xff] %vm3299, %v7139
      %7215 = vst.msk [vmem:[#allocation4 + $0x150] sm:$0xff] %vm3299, %v7141
      %7216 = vst.msk [vmem:[#allocation4 + $0x160] sm:$0xff] %vm3299, %v7143
      %7217 = vst.msk [vmem:[#allocation4 + $0x170] sm:$0xff] %vm3299, %v7145
      %7218 = vst.msk [vmem:[#allocation4 + $0x180] sm:$0xff] %vm3299, %v7147
      %7219 = vst.msk [vmem:[#allocation4 + $0x190] sm:$0xff] %vm3299, %v7149
      %7220 = vst.msk [vmem:[#allocation4 + $0x1a0] sm:$0xff] %vm3299, %v7151
      %7221 = vst.msk [vmem:[#allocation4 + $0x1b0] sm:$0xff] %vm3299, %v7153
      %7222 = vst.msk [vmem:[#allocation4 + $0x1c0] sm:$0xff] %vm3299, %v7155
      %7223 = vst.msk [vmem:[#allocation4 + $0x1d0] sm:$0xff] %vm3299, %v7157
      %7224 = vst.msk [vmem:[#allocation4 + $0x1e0] sm:$0xff] %vm3299, %v7159
      %7225 = vst.msk [vmem:[#allocation4 + $0x1f0] sm:$0xff] %vm3299, %v7161
      %v7226 = vld [vmem:[%s2444 + $0x2] sm:$0xff]
      %v7227 = vld [vmem:[%s2444 + $0xa] sm:$0xff]
      %v7228 = vld [vmem:[%s2444 + $0x1a] sm:$0xff]
      %v7229 = vld [vmem:[%s2444 + $0x22] sm:$0xff]
      %v7230 = vld [vmem:[%s2444 + $0x32] sm:$0xff]
      %v7231 = vld [vmem:[%s2444 + $0x3a] sm:$0xff]
      %v7232 = vld [vmem:[%s2444 + $0x4a] sm:$0xff]
      %v7233 = vld [vmem:[%s2444 + $0x52] sm:$0xff]
      %v7234 = vld [vmem:[%s2444 + $0x62] sm:$0xff]
      %v7235 = vld [vmem:[%s2444 + $0x6a] sm:$0xff]
      %v7236 = vld [vmem:[%s2444 + $0x7a] sm:$0xff]
      %v7237 = vld [vmem:[%s2444 + $0x82] sm:$0xff]
      %v7238 = vld [vmem:[%s2444 + $0x92] sm:$0xff]
      %v7239 = vld [vmem:[%s2444 + $0x9a] sm:$0xff]
      %v7240 = vld [vmem:[%s2444 + $0xaa] sm:$0xff]
      %v7241 = vld [vmem:[%s2444 + $0xb2] sm:$0xff]
      %v7242 = vld [vmem:[%s2444 + $0xc2] sm:$0xff]
      %v7243 = vld [vmem:[%s2444 + $0xca] sm:$0xff]
      %v7244 = vld [vmem:[%s2444 + $0xda] sm:$0xff]
      %v7245 = vld [vmem:[%s2444 + $0xe2] sm:$0xff]
      %v7246 = vld [vmem:[%s2444 + $0xf2] sm:$0xff]
      %v7247 = vld [vmem:[%s2444 + $0xfa] sm:$0xff]
      %v7248 = vld [vmem:[%s2444 + $0x10a] sm:$0xff]
      %v7249 = vld [vmem:[%s2444 + $0x112] sm:$0xff]
      %v7250 = vld [vmem:[%s2444 + $0x122] sm:$0xff]
      %v7251 = vld [vmem:[%s2444 + $0x12a] sm:$0xff]
      %v7252 = vld [vmem:[%s2444 + $0x13a] sm:$0xff]
      %v7253 = vld [vmem:[%s2444 + $0x142] sm:$0xff]
      %v7254 = vld [vmem:[%s2444 + $0x152] sm:$0xff]
      %v7255 = vld [vmem:[%s2444 + $0x15a] sm:$0xff]
      %v7256 = vld [vmem:[%s2444 + $0x16a] sm:$0xff]
      %v7257 = vld [vmem:[%s2444 + $0x172] sm:$0xff]
      %7290 = vrot.lane.b32.xlu0 %v7226, 80
      %v7291 = vpop.permute.xlu0 %7290
      %7292 = vrot.lane.b32.xlu0 %v7227, 80
      %v7293 = vpop.permute.xlu0 %7292
      %7294 = vrot.lane.b32.xlu0 %v7228, 80
      %v7295 = vpop.permute.xlu0 %7294
      %7296 = vrot.lane.b32.xlu0 %v7229, 80
      %v7297 = vpop.permute.xlu0 %7296
      %7298 = vrot.lane.b32.xlu0 %v7230, 80
      %v7299 = vpop.permute.xlu0 %7298
      %7300 = vrot.lane.b32.xlu0 %v7231, 80
      %v7301 = vpop.permute.xlu0 %7300
      %7302 = vrot.lane.b32.xlu0 %v7232, 80
      %v7303 = vpop.permute.xlu0 %7302
      %7304 = vrot.lane.b32.xlu0 %v7233, 80
      %v7305 = vpop.permute.xlu0 %7304
      %7306 = vrot.lane.b32.xlu0 %v7234, 80
      %v7307 = vpop.permute.xlu0 %7306
      %7308 = vrot.lane.b32.xlu0 %v7235, 80
      %v7309 = vpop.permute.xlu0 %7308
      %7310 = vrot.lane.b32.xlu0 %v7236, 80
      %v7311 = vpop.permute.xlu0 %7310
      %7312 = vrot.lane.b32.xlu0 %v7237, 80
      %v7313 = vpop.permute.xlu0 %7312
      %7314 = vrot.lane.b32.xlu0 %v7238, 80
      %v7315 = vpop.permute.xlu0 %7314
      %7316 = vrot.lane.b32.xlu0 %v7239, 80
      %v7317 = vpop.permute.xlu0 %7316
      %7318 = vrot.lane.b32.xlu0 %v7240, 80
      %v7319 = vpop.permute.xlu0 %7318
      %7320 = vrot.lane.b32.xlu0 %v7241, 80
      %v7321 = vpop.permute.xlu0 %7320
      %7322 = vrot.lane.b32.xlu0 %v7242, 80
      %v7323 = vpop.permute.xlu0 %7322
      %7324 = vrot.lane.b32.xlu0 %v7243, 80
      %v7325 = vpop.permute.xlu0 %7324
      %7326 = vrot.lane.b32.xlu0 %v7244, 80
      %v7327 = vpop.permute.xlu0 %7326
      %7328 = vrot.lane.b32.xlu0 %v7245, 80
      %v7329 = vpop.permute.xlu0 %7328
      %7330 = vrot.lane.b32.xlu0 %v7246, 80
      %v7331 = vpop.permute.xlu0 %7330
      %7332 = vrot.lane.b32.xlu0 %v7247, 80
      %v7333 = vpop.permute.xlu0 %7332
      %7334 = vrot.lane.b32.xlu0 %v7248, 80
      %v7335 = vpop.permute.xlu0 %7334
      %7336 = vrot.lane.b32.xlu0 %v7249, 80
      %v7337 = vpop.permute.xlu0 %7336
      %7338 = vrot.lane.b32.xlu0 %v7250, 80
      %v7339 = vpop.permute.xlu0 %7338
      %7340 = vrot.lane.b32.xlu0 %v7251, 80
      %v7341 = vpop.permute.xlu0 %7340
      %7342 = vrot.lane.b32.xlu0 %v7252, 80
      %v7343 = vpop.permute.xlu0 %7342
      %7344 = vrot.lane.b32.xlu0 %v7253, 80
      %v7345 = vpop.permute.xlu0 %7344
      %7346 = vrot.lane.b32.xlu0 %v7254, 80
      %v7347 = vpop.permute.xlu0 %7346
      %7348 = vrot.lane.b32.xlu0 %v7255, 80
      %v7349 = vpop.permute.xlu0 %7348
      %7350 = vrot.lane.b32.xlu0 %v7256, 80
      %v7351 = vpop.permute.xlu0 %7350
      %7352 = vrot.lane.b32.xlu0 %v7257, 80
      %v7353 = vpop.permute.xlu0 %7352
      %7386 = vst.msk [vmem:[#allocation4] sm:$0xff] %vm3492, %v7291
      %7387 = vst.msk [vmem:[#allocation4 + $0x10] sm:$0xff] %vm3492, %v7293
      %7388 = vst.msk [vmem:[#allocation4 + $0x20] sm:$0xff] %vm3492, %v7295
      %7389 = vst.msk [vmem:[#allocation4 + $0x30] sm:$0xff] %vm3492, %v7297
      %7390 = vst.msk [vmem:[#allocation4 + $0x40] sm:$0xff] %vm3492, %v7299
      %7391 = vst.msk [vmem:[#allocation4 + $0x50] sm:$0xff] %vm3492, %v7301
      %7392 = vst.msk [vmem:[#allocation4 + $0x60] sm:$0xff] %vm3492, %v7303
      %7393 = vst.msk [vmem:[#allocation4 + $0x70] sm:$0xff] %vm3492, %v7305
      %7394 = vst.msk [vmem:[#allocation4 + $0x80] sm:$0xff] %vm3492, %v7307
      %7395 = vst.msk [vmem:[#allocation4 + $0x90] sm:$0xff] %vm3492, %v7309
      %7396 = vst.msk [vmem:[#allocation4 + $0xa0] sm:$0xff] %vm3492, %v7311
      %7397 = vst.msk [vmem:[#allocation4 + $0xb0] sm:$0xff] %vm3492, %v7313
      %7398 = vst.msk [vmem:[#allocation4 + $0xc0] sm:$0xff] %vm3492, %v7315
      %7399 = vst.msk [vmem:[#allocation4 + $0xd0] sm:$0xff] %vm3492, %v7317
      %7400 = vst.msk [vmem:[#allocation4 + $0xe0] sm:$0xff] %vm3492, %v7319
      %7401 = vst.msk [vmem:[#allocation4 + $0xf0] sm:$0xff] %vm3492, %v7321
      %7402 = vst.msk [vmem:[#allocation4 + $0x100] sm:$0xff] %vm3492, %v7323
      %7403 = vst.msk [vmem:[#allocation4 + $0x110] sm:$0xff] %vm3492, %v7325
      %7404 = vst.msk [vmem:[#allocation4 + $0x120] sm:$0xff] %vm3492, %v7327
      %7405 = vst.msk [vmem:[#allocation4 + $0x130] sm:$0xff] %vm3492, %v7329
      %7406 = vst.msk [vmem:[#allocation4 + $0x140] sm:$0xff] %vm3492, %v7331
      %7407 = vst.msk [vmem:[#allocation4 + $0x150] sm:$0xff] %vm3492, %v7333
      %7408 = vst.msk [vmem:[#allocation4 + $0x160] sm:$0xff] %vm3492, %v7335
      %7409 = vst.msk [vmem:[#allocation4 + $0x170] sm:$0xff] %vm3492, %v7337
      %7410 = vst.msk [vmem:[#allocation4 + $0x180] sm:$0xff] %vm3492, %v7339
      %7411 = vst.msk [vmem:[#allocation4 + $0x190] sm:$0xff] %vm3492, %v7341
      %7412 = vst.msk [vmem:[#allocation4 + $0x1a0] sm:$0xff] %vm3492, %v7343
      %7413 = vst.msk [vmem:[#allocation4 + $0x1b0] sm:$0xff] %vm3492, %v7345
      %7414 = vst.msk [vmem:[#allocation4 + $0x1c0] sm:$0xff] %vm3492, %v7347
      %7415 = vst.msk [vmem:[#allocation4 + $0x1d0] sm:$0xff] %vm3492, %v7349
      %7416 = vst.msk [vmem:[#allocation4 + $0x1e0] sm:$0xff] %vm3492, %v7351
      %7417 = vst.msk [vmem:[#allocation4 + $0x1f0] sm:$0xff] %vm3492, %v7353
      %v7418 = vld [vmem:[%s3525] sm:$0xff]
      %v7419 = vld [vmem:[%s3525 + $0x8] sm:$0xff]
      %v7420 = vld [vmem:[%s3525 + $0x18] sm:$0xff]
      %v7421 = vld [vmem:[%s3525 + $0x20] sm:$0xff]
      %v7422 = vld [vmem:[%s3525 + $0x30] sm:$0xff]
      %v7423 = vld [vmem:[%s3525 + $0x38] sm:$0xff]
      %v7424 = vld [vmem:[%s3525 + $0x48] sm:$0xff]
      %v7425 = vld [vmem:[%s3525 + $0x50] sm:$0xff]
      %v7426 = vld [vmem:[%s3525 + $0x60] sm:$0xff]
      %v7427 = vld [vmem:[%s3525 + $0x68] sm:$0xff]
      %v7428 = vld [vmem:[%s3525 + $0x78] sm:$0xff]
      %v7429 = vld [vmem:[%s3525 + $0x80] sm:$0xff]
      %v7430 = vld [vmem:[%s3525 + $0x90] sm:$0xff]
      %v7431 = vld [vmem:[%s3525 + $0x98] sm:$0xff]
      %v7432 = vld [vmem:[%s3525 + $0xa8] sm:$0xff]
      %v7433 = vld [vmem:[%s3525 + $0xb0] sm:$0xff]
      %v7434 = vld [vmem:[%s3525 + $0xc0] sm:$0xff]
      %v7435 = vld [vmem:[%s3525 + $0xc8] sm:$0xff]
      %v7436 = vld [vmem:[%s3525 + $0xd8] sm:$0xff]
      %v7437 = vld [vmem:[%s3525 + $0xe0] sm:$0xff]
      %v7438 = vld [vmem:[%s3525 + $0xf0] sm:$0xff]
      %v7439 = vld [vmem:[%s3525 + $0xf8] sm:$0xff]
      %v7440 = vld [vmem:[%s3525 + $0x108] sm:$0xff]
      %v7441 = vld [vmem:[%s3525 + $0x110] sm:$0xff]
      %v7442 = vld [vmem:[%s3525 + $0x120] sm:$0xff]
      %v7443 = vld [vmem:[%s3525 + $0x128] sm:$0xff]
      %v7444 = vld [vmem:[%s3525 + $0x138] sm:$0xff]
      %v7445 = vld [vmem:[%s3525 + $0x140] sm:$0xff]
      %v7446 = vld [vmem:[%s3525 + $0x150] sm:$0xff]
      %v7447 = vld [vmem:[%s3525 + $0x158] sm:$0xff]
      %v7448 = vld [vmem:[%s3525 + $0x168] sm:$0xff]
      %v7449 = vld [vmem:[%s3525 + $0x170] sm:$0xff]
      %7482 = vrot.lane.b32.xlu0 %v7418, 96
      %v7483 = vpop.permute.xlu0 %7482
      %7484 = vrot.lane.b32.xlu0 %v7419, 96
      %v7485 = vpop.permute.xlu0 %7484
      %7486 = vrot.lane.b32.xlu0 %v7420, 96
      %v7487 = vpop.permute.xlu0 %7486
      %7488 = vrot.lane.b32.xlu0 %v7421, 96
      %v7489 = vpop.permute.xlu0 %7488
      %7490 = vrot.lane.b32.xlu0 %v7422, 96
      %v7491 = vpop.permute.xlu0 %7490
      %7492 = vrot.lane.b32.xlu0 %v7423, 96
      %v7493 = vpop.permute.xlu0 %7492
      %7494 = vrot.lane.b32.xlu0 %v7424, 96
      %v7495 = vpop.permute.xlu0 %7494
      %7496 = vrot.lane.b32.xlu0 %v7425, 96
      %v7497 = vpop.permute.xlu0 %7496
      %7498 = vrot.lane.b32.xlu0 %v7426, 96
      %v7499 = vpop.permute.xlu0 %7498
      %7500 = vrot.lane.b32.xlu0 %v7427, 96
      %v7501 = vpop.permute.xlu0 %7500
      %7502 = vrot.lane.b32.xlu0 %v7428, 96
      %v7503 = vpop.permute.xlu0 %7502
      %7504 = vrot.lane.b32.xlu0 %v7429, 96
      %v7505 = vpop.permute.xlu0 %7504
      %7506 = vrot.lane.b32.xlu0 %v7430, 96
      %v7507 = vpop.permute.xlu0 %7506
      %7508 = vrot.lane.b32.xlu0 %v7431, 96
      %v7509 = vpop.permute.xlu0 %7508
      %7510 = vrot.lane.b32.xlu0 %v7432, 96
      %v7511 = vpop.permute.xlu0 %7510
      %7512 = vrot.lane.b32.xlu0 %v7433, 96
      %v7513 = vpop.permute.xlu0 %7512
      %7514 = vrot.lane.b32.xlu0 %v7434, 96
      %v7515 = vpop.permute.xlu0 %7514
      %7516 = vrot.lane.b32.xlu0 %v7435, 96
      %v7517 = vpop.permute.xlu0 %7516
      %7518 = vrot.lane.b32.xlu0 %v7436, 96
      %v7519 = vpop.permute.xlu0 %7518
      %7520 = vrot.lane.b32.xlu0 %v7437, 96
      %v7521 = vpop.permute.xlu0 %7520
      %7522 = vrot.lane.b32.xlu0 %v7438, 96
      %v7523 = vpop.permute.xlu0 %7522
      %7524 = vrot.lane.b32.xlu0 %v7439, 96
      %v7525 = vpop.permute.xlu0 %7524
      %7526 = vrot.lane.b32.xlu0 %v7440, 96
      %v7527 = vpop.permute.xlu0 %7526
      %7528 = vrot.lane.b32.xlu0 %v7441, 96
      %v7529 = vpop.permute.xlu0 %7528
      %7530 = vrot.lane.b32.xlu0 %v7442, 96
      %v7531 = vpop.permute.xlu0 %7530
      %7532 = vrot.lane.b32.xlu0 %v7443, 96
      %v7533 = vpop.permute.xlu0 %7532
      %7534 = vrot.lane.b32.xlu0 %v7444, 96
      %v7535 = vpop.permute.xlu0 %7534
      %7536 = vrot.lane.b32.xlu0 %v7445, 96
      %v7537 = vpop.permute.xlu0 %7536
      %7538 = vrot.lane.b32.xlu0 %v7446, 96
      %v7539 = vpop.permute.xlu0 %7538
      %7540 = vrot.lane.b32.xlu0 %v7447, 96
      %v7541 = vpop.permute.xlu0 %7540
      %7542 = vrot.lane.b32.xlu0 %v7448, 96
      %v7543 = vpop.permute.xlu0 %7542
      %7544 = vrot.lane.b32.xlu0 %v7449, 96
      %v7545 = vpop.permute.xlu0 %7544
      %7578 = vst.msk [vmem:[#allocation4] sm:$0xff] %vm3686, %v7483
      %7579 = vst.msk [vmem:[#allocation4 + $0x10] sm:$0xff] %vm3686, %v7485
      %7580 = vst.msk [vmem:[#allocation4 + $0x20] sm:$0xff] %vm3686, %v7487
      %7581 = vst.msk [vmem:[#allocation4 + $0x30] sm:$0xff] %vm3686, %v7489
      %7582 = vst.msk [vmem:[#allocation4 + $0x40] sm:$0xff] %vm3686, %v7491
      %7583 = vst.msk [vmem:[#allocation4 + $0x50] sm:$0xff] %vm3686, %v7493
      %7584 = vst.msk [vmem:[#allocation4 + $0x60] sm:$0xff] %vm3686, %v7495
      %7585 = vst.msk [vmem:[#allocation4 + $0x70] sm:$0xff] %vm3686, %v7497
      %7586 = vst.msk [vmem:[#allocation4 + $0x80] sm:$0xff] %vm3686, %v7499
      %7587 = vst.msk [vmem:[#allocation4 + $0x90] sm:$0xff] %vm3686, %v7501
      %7588 = vst.msk [vmem:[#allocation4 + $0xa0] sm:$0xff] %vm3686, %v7503
      %7589 = vst.msk [vmem:[#allocation4 + $0xb0] sm:$0xff] %vm3686, %v7505
      %7590 = vst.msk [vmem:[#allocation4 + $0xc0] sm:$0xff] %vm3686, %v7507
      %7591 = vst.msk [vmem:[#allocation4 + $0xd0] sm:$0xff] %vm3686, %v7509
      %7592 = vst.msk [vmem:[#allocation4 + $0xe0] sm:$0xff] %vm3686, %v7511
      %7593 = vst.msk [vmem:[#allocation4 + $0xf0] sm:$0xff] %vm3686, %v7513
      %7594 = vst.msk [vmem:[#allocation4 + $0x100] sm:$0xff] %vm3686, %v7515
      %7595 = vst.msk [vmem:[#allocation4 + $0x110] sm:$0xff] %vm3686, %v7517
      %7596 = vst.msk [vmem:[#allocation4 + $0x120] sm:$0xff] %vm3686, %v7519
      %7597 = vst.msk [vmem:[#allocation4 + $0x130] sm:$0xff] %vm3686, %v7521
      %7598 = vst.msk [vmem:[#allocation4 + $0x140] sm:$0xff] %vm3686, %v7523
      %7599 = vst.msk [vmem:[#allocation4 + $0x150] sm:$0xff] %vm3686, %v7525
      %7600 = vst.msk [vmem:[#allocation4 + $0x160] sm:$0xff] %vm3686, %v7527
      %7601 = vst.msk [vmem:[#allocation4 + $0x170] sm:$0xff] %vm3686, %v7529
      %7602 = vst.msk [vmem:[#allocation4 + $0x180] sm:$0xff] %vm3686, %v7531
      %7603 = vst.msk [vmem:[#allocation4 + $0x190] sm:$0xff] %vm3686, %v7533
      %7604 = vst.msk [vmem:[#allocation4 + $0x1a0] sm:$0xff] %vm3686, %v7535
      %7605 = vst.msk [vmem:[#allocation4 + $0x1b0] sm:$0xff] %vm3686, %v7537
      %7606 = vst.msk [vmem:[#allocation4 + $0x1c0] sm:$0xff] %vm3686, %v7539
      %7607 = vst.msk [vmem:[#allocation4 + $0x1d0] sm:$0xff] %vm3686, %v7541
      %7608 = vst.msk [vmem:[#allocation4 + $0x1e0] sm:$0xff] %vm3686, %v7543
      %7609 = vst.msk [vmem:[#allocation4 + $0x1f0] sm:$0xff] %vm3686, %v7545
      %v7610 = vld [vmem:[%s3525 + $0x1] sm:$0xff]
      %v7611 = vld [vmem:[%s3525 + $0x9] sm:$0xff]
      %v7612 = vld [vmem:[%s3525 + $0x19] sm:$0xff]
      %v7613 = vld [vmem:[%s3525 + $0x21] sm:$0xff]
      %v7614 = vld [vmem:[%s3525 + $0x31] sm:$0xff]
      %v7615 = vld [vmem:[%s3525 + $0x39] sm:$0xff]
      %v7616 = vld [vmem:[%s3525 + $0x49] sm:$0xff]
      %v7617 = vld [vmem:[%s3525 + $0x51] sm:$0xff]
      %v7618 = vld [vmem:[%s3525 + $0x61] sm:$0xff]
      %v7619 = vld [vmem:[%s3525 + $0x69] sm:$0xff]
      %v7620 = vld [vmem:[%s3525 + $0x79] sm:$0xff]
      %v7621 = vld [vmem:[%s3525 + $0x81] sm:$0xff]
      %v7622 = vld [vmem:[%s3525 + $0x91] sm:$0xff]
      %v7623 = vld [vmem:[%s3525 + $0x99] sm:$0xff]
      %v7624 = vld [vmem:[%s3525 + $0xa9] sm:$0xff]
      %v7625 = vld [vmem:[%s3525 + $0xb1] sm:$0xff]
      %v7626 = vld [vmem:[%s3525 + $0xc1] sm:$0xff]
      %v7627 = vld [vmem:[%s3525 + $0xc9] sm:$0xff]
      %v7628 = vld [vmem:[%s3525 + $0xd9] sm:$0xff]
      %v7629 = vld [vmem:[%s3525 + $0xe1] sm:$0xff]
      %v7630 = vld [vmem:[%s3525 + $0xf1] sm:$0xff]
      %v7631 = vld [vmem:[%s3525 + $0xf9] sm:$0xff]
      %v7632 = vld [vmem:[%s3525 + $0x109] sm:$0xff]
      %v7633 = vld [vmem:[%s3525 + $0x111] sm:$0xff]
      %v7634 = vld [vmem:[%s3525 + $0x121] sm:$0xff]
      %v7635 = vld [vmem:[%s3525 + $0x129] sm:$0xff]
      %v7636 = vld [vmem:[%s3525 + $0x139] sm:$0xff]
      %v7637 = vld [vmem:[%s3525 + $0x141] sm:$0xff]
      %v7638 = vld [vmem:[%s3525 + $0x151] sm:$0xff]
      %v7639 = vld [vmem:[%s3525 + $0x159] sm:$0xff]
      %v7640 = vld [vmem:[%s3525 + $0x169] sm:$0xff]
      %v7641 = vld [vmem:[%s3525 + $0x171] sm:$0xff]
      %7674 = vrot.lane.b32.xlu0 %v7610, 112
      %v7675 = vpop.permute.xlu0 %7674
      %7676 = vrot.lane.b32.xlu0 %v7611, 112
      %v7677 = vpop.permute.xlu0 %7676
      %7678 = vrot.lane.b32.xlu0 %v7612, 112
      %v7679 = vpop.permute.xlu0 %7678
      %7680 = vrot.lane.b32.xlu0 %v7613, 112
      %v7681 = vpop.permute.xlu0 %7680
      %7682 = vrot.lane.b32.xlu0 %v7614, 112
      %v7683 = vpop.permute.xlu0 %7682
      %7684 = vrot.lane.b32.xlu0 %v7615, 112
      %v7685 = vpop.permute.xlu0 %7684
      %7686 = vrot.lane.b32.xlu0 %v7616, 112
      %v7687 = vpop.permute.xlu0 %7686
      %7688 = vrot.lane.b32.xlu0 %v7617, 112
      %v7689 = vpop.permute.xlu0 %7688
      %7690 = vrot.lane.b32.xlu0 %v7618, 112
      %v7691 = vpop.permute.xlu0 %7690
      %7692 = vrot.lane.b32.xlu0 %v7619, 112
      %v7693 = vpop.permute.xlu0 %7692
      %7694 = vrot.lane.b32.xlu0 %v7620, 112
      %v7695 = vpop.permute.xlu0 %7694
      %7696 = vrot.lane.b32.xlu0 %v7621, 112
      %v7697 = vpop.permute.xlu0 %7696
      %7698 = vrot.lane.b32.xlu0 %v7622, 112
      %v7699 = vpop.permute.xlu0 %7698
      %7700 = vrot.lane.b32.xlu0 %v7623, 112
      %v7701 = vpop.permute.xlu0 %7700
      %7702 = vrot.lane.b32.xlu0 %v7624, 112
      %v7703 = vpop.permute.xlu0 %7702
      %7704 = vrot.lane.b32.xlu0 %v7625, 112
      %v7705 = vpop.permute.xlu0 %7704
      %7706 = vrot.lane.b32.xlu0 %v7626, 112
      %v7707 = vpop.permute.xlu0 %7706
      %7708 = vrot.lane.b32.xlu0 %v7627, 112
      %v7709 = vpop.permute.xlu0 %7708
      %7710 = vrot.lane.b32.xlu0 %v7628, 112
      %v7711 = vpop.permute.xlu0 %7710
      %7712 = vrot.lane.b32.xlu0 %v7629, 112
      %v7713 = vpop.permute.xlu0 %7712
      %7714 = vrot.lane.b32.xlu0 %v7630, 112
      %v7715 = vpop.permute.xlu0 %7714
      %7716 = vrot.lane.b32.xlu0 %v7631, 112
      %v7717 = vpop.permute.xlu0 %7716
      %7718 = vrot.lane.b32.xlu0 %v7632, 112
      %v7719 = vpop.permute.xlu0 %7718
      %7720 = vrot.lane.b32.xlu0 %v7633, 112
      %v7721 = vpop.permute.xlu0 %7720
      %7722 = vrot.lane.b32.xlu0 %v7634, 112
      %v7723 = vpop.permute.xlu0 %7722
      %7724 = vrot.lane.b32.xlu0 %v7635, 112
      %v7725 = vpop.permute.xlu0 %7724
      %7726 = vrot.lane.b32.xlu0 %v7636, 112
      %v7727 = vpop.permute.xlu0 %7726
      %7728 = vrot.lane.b32.xlu0 %v7637, 112
      %v7729 = vpop.permute.xlu0 %7728
      %7730 = vrot.lane.b32.xlu0 %v7638, 112
      %v7731 = vpop.permute.xlu0 %7730
      %7732 = vrot.lane.b32.xlu0 %v7639, 112
      %v7733 = vpop.permute.xlu0 %7732
      %7734 = vrot.lane.b32.xlu0 %v7640, 112
      %v7735 = vpop.permute.xlu0 %7734
      %7736 = vrot.lane.b32.xlu0 %v7641, 112
      %v7737 = vpop.permute.xlu0 %7736
      %7770 = vst.msk [vmem:[#allocation4] sm:$0xff] %vm3879, %v7675
      %7771 = vst.msk [vmem:[#allocation4 + $0x10] sm:$0xff] %vm3879, %v7677
      %7772 = vst.msk [vmem:[#allocation4 + $0x20] sm:$0xff] %vm3879, %v7679
      %7773 = vst.msk [vmem:[#allocation4 + $0x30] sm:$0xff] %vm3879, %v7681
      %7774 = vst.msk [vmem:[#allocation4 + $0x40] sm:$0xff] %vm3879, %v7683
      %7775 = vst.msk [vmem:[#allocation4 + $0x50] sm:$0xff] %vm3879, %v7685
      %7776 = vst.msk [vmem:[#allocation4 + $0x60] sm:$0xff] %vm3879, %v7687
      %7777 = vst.msk [vmem:[#allocation4 + $0x70] sm:$0xff] %vm3879, %v7689
      %7778 = vst.msk [vmem:[#allocation4 + $0x80] sm:$0xff] %vm3879, %v7691
      %7779 = vst.msk [vmem:[#allocation4 + $0x90] sm:$0xff] %vm3879, %v7693
      %7780 = vst.msk [vmem:[#allocation4 + $0xa0] sm:$0xff] %vm3879, %v7695
      %7781 = vst.msk [vmem:[#allocation4 + $0xb0] sm:$0xff] %vm3879, %v7697
      %7782 = vst.msk [vmem:[#allocation4 + $0xc0] sm:$0xff] %vm3879, %v7699
      %7783 = vst.msk [vmem:[#allocation4 + $0xd0] sm:$0xff] %vm3879, %v7701
      %7784 = vst.msk [vmem:[#allocation4 + $0xe0] sm:$0xff] %vm3879, %v7703
      %7785 = vst.msk [vmem:[#allocation4 + $0xf0] sm:$0xff] %vm3879, %v7705
      %7786 = vst.msk [vmem:[#allocation4 + $0x100] sm:$0xff] %vm3879, %v7707
      %7787 = vst.msk [vmem:[#allocation4 + $0x110] sm:$0xff] %vm3879, %v7709
      %7788 = vst.msk [vmem:[#allocation4 + $0x120] sm:$0xff] %vm3879, %v7711
      %7789 = vst.msk [vmem:[#allocation4 + $0x130] sm:$0xff] %vm3879, %v7713
      %7790 = vst.msk [vmem:[#allocation4 + $0x140] sm:$0xff] %vm3879, %v7715
      %7791 = vst.msk [vmem:[#allocation4 + $0x150] sm:$0xff] %vm3879, %v7717
      %7792 = vst.msk [vmem:[#allocation4 + $0x160] sm:$0xff] %vm3879, %v7719
      %7793 = vst.msk [vmem:[#allocation4 + $0x170] sm:$0xff] %vm3879, %v7721
      %7794 = vst.msk [vmem:[#allocation4 + $0x180] sm:$0xff] %vm3879, %v7723
      %7795 = vst.msk [vmem:[#allocation4 + $0x190] sm:$0xff] %vm3879, %v7725
      %7796 = vst.msk [vmem:[#allocation4 + $0x1a0] sm:$0xff] %vm3879, %v7727
      %7797 = vst.msk [vmem:[#allocation4 + $0x1b0] sm:$0xff] %vm3879, %v7729
      %7798 = vst.msk [vmem:[#allocation4 + $0x1c0] sm:$0xff] %vm3879, %v7731
      %7799 = vst.msk [vmem:[#allocation4 + $0x1d0] sm:$0xff] %vm3879, %v7733
      %7800 = vst.msk [vmem:[#allocation4 + $0x1e0] sm:$0xff] %vm3879, %v7735
      %7801 = vst.msk [vmem:[#allocation4 + $0x1f0] sm:$0xff] %vm3879, %v7737
      %v7802 = vld [vmem:[%s3525 + $0x2] sm:$0xff]
      %v7803 = vld [vmem:[%s3525 + $0xa] sm:$0xff]
      %v7804 = vld [vmem:[%s3525 + $0x1a] sm:$0xff]
      %v7805 = vld [vmem:[%s3525 + $0x22] sm:$0xff]
      %v7806 = vld [vmem:[%s3525 + $0x32] sm:$0xff]
      %v7807 = vld [vmem:[%s3525 + $0x3a] sm:$0xff]
      %v7808 = vld [vmem:[%s3525 + $0x4a] sm:$0xff]
      %v7809 = vld [vmem:[%s3525 + $0x52] sm:$0xff]
      %v7810 = vld [vmem:[%s3525 + $0x62] sm:$0xff]
      %v7811 = vld [vmem:[%s3525 + $0x6a] sm:$0xff]
      %v7812 = vld [vmem:[%s3525 + $0x7a] sm:$0xff]
      %v7813 = vld [vmem:[%s3525 + $0x82] sm:$0xff]
      %v7814 = vld [vmem:[%s3525 + $0x92] sm:$0xff]
      %v7815 = vld [vmem:[%s3525 + $0x9a] sm:$0xff]
      %v7816 = vld [vmem:[%s3525 + $0xaa] sm:$0xff]
      %v7817 = vld [vmem:[%s3525 + $0xb2] sm:$0xff]
      %v7818 = vld [vmem:[%s3525 + $0xc2] sm:$0xff]
      %v7819 = vld [vmem:[%s3525 + $0xca] sm:$0xff]
      %v7820 = vld [vmem:[%s3525 + $0xda] sm:$0xff]
      %v7821 = vld [vmem:[%s3525 + $0xe2] sm:$0xff]
      %v7822 = vld [vmem:[%s3525 + $0xf2] sm:$0xff]
      %v7823 = vld [vmem:[%s3525 + $0xfa] sm:$0xff]
      %v7824 = vld [vmem:[%s3525 + $0x10a] sm:$0xff]
      %v7825 = vld [vmem:[%s3525 + $0x112] sm:$0xff]
      %v7826 = vld [vmem:[%s3525 + $0x122] sm:$0xff]
      %v7827 = vld [vmem:[%s3525 + $0x12a] sm:$0xff]
      %v7828 = vld [vmem:[%s3525 + $0x13a] sm:$0xff]
      %v7829 = vld [vmem:[%s3525 + $0x142] sm:$0xff]
      %v7830 = vld [vmem:[%s3525 + $0x152] sm:$0xff]
      %v7831 = vld [vmem:[%s3525 + $0x15a] sm:$0xff]
      %v7832 = vld [vmem:[%s3525 + $0x16a] sm:$0xff]
      %v7833 = vld [vmem:[%s3525 + $0x172] sm:$0xff]
      %7834 = vst.msk [vmem:[#allocation4 + $0x8] sm:$0xff] %vm279, %v7802
      %7835 = vst.msk [vmem:[#allocation4 + $0x18] sm:$0xff] %vm279, %v7803
      %7836 = vst.msk [vmem:[#allocation4 + $0x28] sm:$0xff] %vm279, %v7804
      %7837 = vst.msk [vmem:[#allocation4 + $0x38] sm:$0xff] %vm279, %v7805
      %7838 = vst.msk [vmem:[#allocation4 + $0x48] sm:$0xff] %vm279, %v7806
      %7839 = vst.msk [vmem:[#allocation4 + $0x58] sm:$0xff] %vm279, %v7807
      %7840 = vst.msk [vmem:[#allocation4 + $0x68] sm:$0xff] %vm279, %v7808
      %7841 = vst.msk [vmem:[#allocation4 + $0x78] sm:$0xff] %vm279, %v7809
      %7842 = vst.msk [vmem:[#allocation4 + $0x88] sm:$0xff] %vm279, %v7810
      %7843 = vst.msk [vmem:[#allocation4 + $0x98] sm:$0xff] %vm279, %v7811
      %7844 = vst.msk [vmem:[#allocation4 + $0xa8] sm:$0xff] %vm279, %v7812
      %7845 = vst.msk [vmem:[#allocation4 + $0xb8] sm:$0xff] %vm279, %v7813
      %7846 = vst.msk [vmem:[#allocation4 + $0xc8] sm:$0xff] %vm279, %v7814
      %7847 = vst.msk [vmem:[#allocation4 + $0xd8] sm:$0xff] %vm279, %v7815
      %7848 = vst.msk [vmem:[#allocation4 + $0xe8] sm:$0xff] %vm279, %v7816
      %7849 = vst.msk [vmem:[#allocation4 + $0xf8] sm:$0xff] %vm279, %v7817
      %7850 = vst.msk [vmem:[#allocation4 + $0x108] sm:$0xff] %vm279, %v7818
      %7851 = vst.msk [vmem:[#allocation4 + $0x118] sm:$0xff] %vm279, %v7819
      %7852 = vst.msk [vmem:[#allocation4 + $0x128] sm:$0xff] %vm279, %v7820
      %7853 = vst.msk [vmem:[#allocation4 + $0x138] sm:$0xff] %vm279, %v7821
      %7854 = vst.msk [vmem:[#allocation4 + $0x148] sm:$0xff] %vm279, %v7822
      %7855 = vst.msk [vmem:[#allocation4 + $0x158] sm:$0xff] %vm279, %v7823
      %7856 = vst.msk [vmem:[#allocation4 + $0x168] sm:$0xff] %vm279, %v7824
      %7857 = vst.msk [vmem:[#allocation4 + $0x178] sm:$0xff] %vm279, %v7825
      %7858 = vst.msk [vmem:[#allocation4 + $0x188] sm:$0xff] %vm279, %v7826
      %7859 = vst.msk [vmem:[#allocation4 + $0x198] sm:$0xff] %vm279, %v7827
      %7860 = vst.msk [vmem:[#allocation4 + $0x1a8] sm:$0xff] %vm279, %v7828
      %7861 = vst.msk [vmem:[#allocation4 + $0x1b8] sm:$0xff] %vm279, %v7829
      %7862 = vst.msk [vmem:[#allocation4 + $0x1c8] sm:$0xff] %vm279, %v7830
      %7863 = vst.msk [vmem:[#allocation4 + $0x1d8] sm:$0xff] %vm279, %v7831
      %7864 = vst.msk [vmem:[#allocation4 + $0x1e8] sm:$0xff] %vm279, %v7832
      %7865 = vst.msk [vmem:[#allocation4 + $0x1f8] sm:$0xff] %vm279, %v7833
      %v7866 = vld [vmem:[#allocation4] sm:$0xff]
      %v7867 = vld [vmem:[#allocation4 + $0x8] sm:$0xff]
      %v7868 = vld [vmem:[#allocation4 + $0x10] sm:$0xff]
      %v7869 = vld [vmem:[#allocation4 + $0x18] sm:$0xff]
      %v7870 = vld [vmem:[#allocation4 + $0x20] sm:$0xff]
      %v7871 = vld [vmem:[#allocation4 + $0x28] sm:$0xff]
      %v7872 = vld [vmem:[#allocation4 + $0x30] sm:$0xff]
      %v7873 = vld [vmem:[#allocation4 + $0x38] sm:$0xff]
      %v7874 = vld [vmem:[#allocation4 + $0x40] sm:$0xff]
      %v7875 = vld [vmem:[#allocation4 + $0x48] sm:$0xff]
      %v7876 = vld [vmem:[#allocation4 + $0x50] sm:$0xff]
      %v7877 = vld [vmem:[#allocation4 + $0x58] sm:$0xff]
      %v7878 = vld [vmem:[#allocation4 + $0x60] sm:$0xff]
      %v7879 = vld [vmem:[#allocation4 + $0x68] sm:$0xff]
      %v7880 = vld [vmem:[#allocation4 + $0x70] sm:$0xff]
      %v7881 = vld [vmem:[#allocation4 + $0x78] sm:$0xff]
      %v7882 = vld [vmem:[#allocation4 + $0x80] sm:$0xff]
      %v7883 = vld [vmem:[#allocation4 + $0x88] sm:$0xff]
      %v7884 = vld [vmem:[#allocation4 + $0x90] sm:$0xff]
      %v7885 = vld [vmem:[#allocation4 + $0x98] sm:$0xff]
      %v7886 = vld [vmem:[#allocation4 + $0xa0] sm:$0xff]
      %v7887 = vld [vmem:[#allocation4 + $0xa8] sm:$0xff]
      %v7888 = vld [vmem:[#allocation4 + $0xb0] sm:$0xff]
      %v7889 = vld [vmem:[#allocation4 + $0xb8] sm:$0xff]
      %v7890 = vld [vmem:[#allocation4 + $0xc0] sm:$0xff]
      %v7891 = vld [vmem:[#allocation4 + $0xc8] sm:$0xff]
      %v7892 = vld [vmem:[#allocation4 + $0xd0] sm:$0xff]
      %v7893 = vld [vmem:[#allocation4 + $0xd8] sm:$0xff]
      %v7894 = vld [vmem:[#allocation4 + $0xe0] sm:$0xff]
      %v7895 = vld [vmem:[#allocation4 + $0xe8] sm:$0xff]
      %v7896 = vld [vmem:[#allocation4 + $0xf0] sm:$0xff]
      %v7897 = vld [vmem:[#allocation4 + $0xf8] sm:$0xff]
      %v7898 = vld [vmem:[#allocation4 + $0x100] sm:$0xff]
      %v7899 = vld [vmem:[#allocation4 + $0x108] sm:$0xff]
      %v7900 = vld [vmem:[#allocation4 + $0x110] sm:$0xff]
      %v7901 = vld [vmem:[#allocation4 + $0x118] sm:$0xff]
      %v7902 = vld [vmem:[#allocation4 + $0x120] sm:$0xff]
      %v7903 = vld [vmem:[#allocation4 + $0x128] sm:$0xff]
      %v7904 = vld [vmem:[#allocation4 + $0x130] sm:$0xff]
      %v7905 = vld [vmem:[#allocation4 + $0x138] sm:$0xff]
      %v7906 = vld [vmem:[#allocation4 + $0x140] sm:$0xff]
      %v7907 = vld [vmem:[#allocation4 + $0x148] sm:$0xff]
      %v7908 = vld [vmem:[#allocation4 + $0x150] sm:$0xff]
      %v7909 = vld [vmem:[#allocation4 + $0x158] sm:$0xff]
      %v7910 = vld [vmem:[#allocation4 + $0x160] sm:$0xff]
      %v7911 = vld [vmem:[#allocation4 + $0x168] sm:$0xff]
      %v7912 = vld [vmem:[#allocation4 + $0x170] sm:$0xff]
      %v7913 = vld [vmem:[#allocation4 + $0x178] sm:$0xff]
      %v7914 = vld [vmem:[#allocation4 + $0x180] sm:$0xff]
      %v7915 = vld [vmem:[#allocation4 + $0x188] sm:$0xff]
      %v7916 = vld [vmem:[#allocation4 + $0x190] sm:$0xff]
      %v7917 = vld [vmem:[#allocation4 + $0x198] sm:$0xff]
      %v7918 = vld [vmem:[#allocation4 + $0x1a0] sm:$0xff]
      %v7919 = vld [vmem:[#allocation4 + $0x1a8] sm:$0xff]
      %v7920 = vld [vmem:[#allocation4 + $0x1b0] sm:$0xff]
      %v7921 = vld [vmem:[#allocation4 + $0x1b8] sm:$0xff]
      %v7922 = vld [vmem:[#allocation4 + $0x1c0] sm:$0xff]
      %v7923 = vld [vmem:[#allocation4 + $0x1c8] sm:$0xff]
      %v7924 = vld [vmem:[#allocation4 + $0x1d0] sm:$0xff]
      %v7925 = vld [vmem:[#allocation4 + $0x1d8] sm:$0xff]
      %v7926 = vld [vmem:[#allocation4 + $0x1e0] sm:$0xff]
      %v7927 = vld [vmem:[#allocation4 + $0x1e8] sm:$0xff]
      %v7928 = vld [vmem:[#allocation4 + $0x1f0] sm:$0xff]
      %v7929 = vld [vmem:[#allocation4 + $0x1f8] sm:$0xff]
      %v7930 = vlaneseq
      %v7931 = vshrl.u32 %v7930, 7
      %v7932 = vsub.s32 0, %v7931
      %v7933 = vrot.slane %v6393, %v7932
      %v7935 = vsel %vm279, %v7867, 0
      %v7938 = vsel %vm279, %v7869, 0
      %v7941 = vsel %vm279, %v7871, 0
      %v7944 = vsel %vm279, %v7873, 0
      %v7947 = vsel %vm279, %v7875, 0
      %v7950 = vsel %vm279, %v7877, 0
      %v7953 = vsel %vm279, %v7879, 0
      %v7956 = vsel %vm279, %v7881, 0
      %v7959 = vsel %vm279, %v7883, 0
      %v7962 = vsel %vm279, %v7885, 0
      %v7965 = vsel %vm279, %v7887, 0
      %v7968 = vsel %vm279, %v7889, 0
      %v7971 = vsel %vm279, %v7891, 0
      %v7974 = vsel %vm279, %v7893, 0
      %v7977 = vsel %vm279, %v7895, 0
      %v7980 = vsel %vm279, %v7897, 0
      %v7983 = vsel %vm279, %v7899, 0
      %v7986 = vsel %vm279, %v7901, 0
      %v7989 = vsel %vm279, %v7903, 0
      %v7992 = vsel %vm279, %v7905, 0
      %v7995 = vsel %vm279, %v7907, 0
      %v7998 = vsel %vm279, %v7909, 0
      %v8001 = vsel %vm279, %v7911, 0
      %v8004 = vsel %vm279, %v7913, 0
      %v8007 = vsel %vm279, %v7915, 0
      %v8010 = vsel %vm279, %v7917, 0
      %v8013 = vsel %vm279, %v7919, 0
      %v8016 = vsel %vm279, %v7921, 0
      %v8019 = vsel %vm279, %v7923, 0
      %v8022 = vsel %vm279, %v7925, 0
      %v8025 = vsel %vm279, %v7927, 0
      %v8028 = vsel %vm279, %v7929, 0
      %8030 = vmatprep.subr.mxu0 0.0
      %8031 = vmatpush1.msra.mxu0 %v6375
      %8032 = vmatprep.subr.mxu0 0.0
      %8033 = vmatpush1.msra.mxu0 %v6376
      %8034 = vmatprep.subr.mxu0 0.0
      %8035 = vmatpush1.msra.mxu0 %v6377
      %8036 = vmatprep.subr.mxu0 0.0
      %8037 = vmatpush1.msra.mxu0 %v6378
      %8038 = vmatprep.subr.mxu0 0.0
      %8039 = vmatpush1.msra.mxu0 %v6379
      %8040 = vmatprep.subr.mxu0 0.0
      %8041 = vmatpush1.msra.mxu0 %v6380
      %8042 = vmatprep.subr.mxu0 0.0
      %8043 = vmatpush1.msra.mxu0 %v6381
      %8044 = vmatprep.subr.mxu0 0.0
      %8045 = vmatpush1.msra.mxu0 %v6382
      %8046 = vmatprep.subr.mxu0 0.0
      %8047 = vmatpush1.msra.mxu0 %v6383
      %8048 = vmatprep.subr.mxu0 0.0
      %8049 = vmatpush1.msra.mxu0 %v6384
      %8050 = vmatprep.subr.mxu0 0.0
      %8051 = vmatpush1.msra.mxu0 %v6385
      %8052 = vmatprep.subr.mxu0 0.0
      %8053 = vmatpush1.msra.mxu0 %v6386
      %8054 = vmatprep.subr.mxu0 0.0
      %8055 = vmatpush1.msra.mxu0 %v6387
      %8056 = vmatprep.subr.mxu0 0.0
      %8057 = vmatpush1.msra.mxu0 %v6388
      %8058 = vmatprep.subr.mxu0 0.0
      %8059 = vmatpush1.msra.mxu0 %v6389
      %8060 = vmatprep.subr.mxu0 0.0
      %8061 = vmatpush1.msra.mxu0 %v6390
      %8062 = vmatprep.subr.mxu0 0.0
      %8063 = vmatpush1.msra.mxu0 %v6391
      %8064 = vmatprep.subr.mxu0 0.0
      %8065 = vmatpush1.msra.mxu0 %v6392
      %8066 = vmatprep.subr.mxu0 0.0
      %8067 = vmatpush1.msra.mxu0 0.0
      %8068 = vmatprep.subr.mxu0 0.0
      %8069 = vmatpush1.msra.mxu0 0.0
      %8070 = vmatprep.subr.mxu0 0.0
      %8071 = vmatpush1.msra.mxu0 0.0
      %8072 = vmatprep.subr.mxu0 0.0
      %8073 = vmatpush1.msra.mxu0 0.0
      %8074 = vmatprep.subr.mxu0 0.0
      %8075 = vmatpush1.msra.mxu0 0.0
      %8076 = vmatprep.subr.mxu0 0.0
      %8077 = vmatpush1.msra.mxu0 0.0
      %8078 = vmatprep.subr.mxu0 0.0
      %8079 = vmatpush1.msra.mxu0 0.0
      %8080 = vmatprep.subr.mxu0 0.0
      %8081 = vmatpush1.msra.mxu0 0.0
      %8082 = vmatprep.subr.mxu0 0.0
      %8083 = vmatpush1.msra.mxu0 0.0
      %8084 = vmatprep.subr.mxu0 0.0
      %8085 = vmatpush1.msra.mxu0 0.0
      %8086 = vmatprep.subr.mxu0 0.0
      %8087 = vmatpush1.msra.mxu0 0.0
      %8088 = vmatprep.subr.mxu0 0.0
      %8089 = vmatpush1.msra.mxu0 0.0
      %8090 = vmatprep.subr.mxu0 0.0
      %8091 = vmatpush1.msra.mxu0 0.0
      %8092 = vmatprep.subr.mxu0 0.0
      %8093 = vmatpush1.msra.mxu0 0.0
      %8094 = vmatprep.mubr.f32.mxu0 %v7935
      %8095 = vmatmul.mubr.f32.gmra.mrb[0].mxu0 %v7866
      %v8096 = vpop.f32.mrb[0].mxu0
      %v8097 = vadd.f32 %v7933, %v8096
      %v8098 = vpop.f32.mrb[0].mxu0
      %8099 = vmatprep.mubr.f32.mxu0 %v7938
      %8100 = vmatmul.mubr.f32.gmra.mrb[0].mxu0 %v7868
      %v8101 = vpop.f32.mrb[0].mxu0
      %v8102 = vadd.f32 %v7933, %v8101
      %v8103 = vpop.f32.mrb[0].mxu0
      %8104 = vmatprep.mubr.f32.mxu0 %v7941
      %8105 = vmatmul.mubr.f32.gmra.mrb[0].mxu0 %v7870
      %v8106 = vpop.f32.mrb[0].mxu0
      %v8107 = vadd.f32 %v7933, %v8106
      %v8108 = vpop.f32.mrb[0].mxu0
      %8109 = vmatprep.mubr.f32.mxu0 %v7944
      %8110 = vmatmul.mubr.f32.gmra.mrb[0].mxu0 %v7872
      %v8111 = vpop.f32.mrb[0].mxu0
      %v8112 = vadd.f32 %v7933, %v8111
      %v8113 = vpop.f32.mrb[0].mxu0
      %8114 = vmatprep.mubr.f32.mxu0 %v7947
      %8115 = vmatmul.mubr.f32.gmra.mrb[0].mxu0 %v7874
      %v8116 = vpop.f32.mrb[0].mxu0
      %v8117 = vadd.f32 %v7933, %v8116
      %v8118 = vpop.f32.mrb[0].mxu0
      %8119 = vmatprep.mubr.f32.mxu0 %v7950
      %8120 = vmatmul.mubr.f32.gmra.mrb[0].mxu0 %v7876
      %v8121 = vpop.f32.mrb[0].mxu0
      %v8122 = vadd.f32 %v7933, %v8121
      %v8123 = vpop.f32.mrb[0].mxu0
      %8124 = vmatprep.mubr.f32.mxu0 %v7953
      %8125 = vmatmul.mubr.f32.gmra.mrb[0].mxu0 %v7878
      %v8126 = vpop.f32.mrb[0].mxu0
      %v8127 = vadd.f32 %v7933, %v8126
      %v8128 = vpop.f32.mrb[0].mxu0
      %8129 = vmatprep.mubr.f32.mxu0 %v7956
      %8130 = vmatmul.mubr.f32.gmra.mrb[0].mxu0 %v7880
      %v8131 = vpop.f32.mrb[0].mxu0
      %v8132 = vadd.f32 %v7933, %v8131
      %v8133 = vpop.f32.mrb[0].mxu0
      %8134 = vmatprep.mubr.f32.mxu0 %v7959
      %8135 = vmatmul.mubr.f32.gmra.mrb[0].mxu0 %v7882
      %v8136 = vpop.f32.mrb[0].mxu0
      %v8137 = vadd.f32 %v7933, %v8136
      %v8138 = vpop.f32.mrb[0].mxu0
      %8139 = vmatprep.mubr.f32.mxu0 %v7962
      %8140 = vmatmul.mubr.f32.gmra.mrb[0].mxu0 %v7884
      %v8141 = vpop.f32.mrb[0].mxu0
      %v8142 = vadd.f32 %v7933, %v8141
      %v8143 = vpop.f32.mrb[0].mxu0
      %8144 = vmatprep.mubr.f32.mxu0 %v7965
      %8145 = vmatmul.mubr.f32.gmra.mrb[0].mxu0 %v7886
      %v8146 = vpop.f32.mrb[0].mxu0
      %v8147 = vadd.f32 %v7933, %v8146
      %v8148 = vpop.f32.mrb[0].mxu0
      %8149 = vmatprep.mubr.f32.mxu0 %v7968
      %8150 = vmatmul.mubr.f32.gmra.mrb[0].mxu0 %v7888
      %v8151 = vpop.f32.mrb[0].mxu0
      %v8152 = vadd.f32 %v7933, %v8151
      %v8153 = vpop.f32.mrb[0].mxu0
      %8154 = vmatprep.mubr.f32.mxu0 %v7971
      %8155 = vmatmul.mubr.f32.gmra.mrb[0].mxu0 %v7890
      %v8156 = vpop.f32.mrb[0].mxu0
      %v8157 = vadd.f32 %v7933, %v8156
      %v8158 = vpop.f32.mrb[0].mxu0
      %8159 = vmatprep.mubr.f32.mxu0 %v7974
      %8160 = vmatmul.mubr.f32.gmra.mrb[0].mxu0 %v7892
      %v8161 = vpop.f32.mrb[0].mxu0
      %v8162 = vadd.f32 %v7933, %v8161
      %v8163 = vpop.f32.mrb[0].mxu0
      %8164 = vmatprep.mubr.f32.mxu0 %v7977
      %8165 = vmatmul.mubr.f32.gmra.mrb[0].mxu0 %v7894
      %v8166 = vpop.f32.mrb[0].mxu0
      %v8167 = vadd.f32 %v7933, %v8166
      %v8168 = vpop.f32.mrb[0].mxu0
      %8169 = vmatprep.mubr.f32.mxu0 %v7980
      %8170 = vmatmul.mubr.f32.gmra.mrb[0].mxu0 %v7896
      %v8171 = vpop.f32.mrb[0].mxu0
      %v8172 = vadd.f32 %v7933, %v8171
      %v8173 = vpop.f32.mrb[0].mxu0
      %8174 = vmatprep.mubr.f32.mxu0 %v7983
      %8175 = vmatmul.mubr.f32.gmra.mrb[0].mxu0 %v7898
      %v8176 = vpop.f32.mrb[0].mxu0
      %v8177 = vadd.f32 %v7933, %v8176
      %v8178 = vpop.f32.mrb[0].mxu0
      %8179 = vmatprep.mubr.f32.mxu0 %v7986
      %8180 = vmatmul.mubr.f32.gmra.mrb[0].mxu0 %v7900
      %v8181 = vpop.f32.mrb[0].mxu0
      %v8182 = vadd.f32 %v7933, %v8181
      %v8183 = vpop.f32.mrb[0].mxu0
      %8184 = vmatprep.mubr.f32.mxu0 %v7989
      %8185 = vmatmul.mubr.f32.gmra.mrb[0].mxu0 %v7902
      %v8186 = vpop.f32.mrb[0].mxu0
      %v8187 = vadd.f32 %v7933, %v8186
      %v8188 = vpop.f32.mrb[0].mxu0
      %8189 = vmatprep.mubr.f32.mxu0 %v7992
      %8190 = vmatmul.mubr.f32.gmra.mrb[0].mxu0 %v7904
      %v8191 = vpop.f32.mrb[0].mxu0
      %v8192 = vadd.f32 %v7933, %v8191
      %v8193 = vpop.f32.mrb[0].mxu0
      %8194 = vmatprep.mubr.f32.mxu0 %v7995
      %8195 = vmatmul.mubr.f32.gmra.mrb[0].mxu0 %v7906
      %v8196 = vpop.f32.mrb[0].mxu0
      %v8197 = vadd.f32 %v7933, %v8196
      %v8198 = vpop.f32.mrb[0].mxu0
      %8199 = vmatprep.mubr.f32.mxu0 %v7998
      %8200 = vmatmul.mubr.f32.gmra.mrb[0].mxu0 %v7908
      %v8201 = vpop.f32.mrb[0].mxu0
      %v8202 = vadd.f32 %v7933, %v8201
      %v8203 = vpop.f32.mrb[0].mxu0
      %8204 = vmatprep.mubr.f32.mxu0 %v8001
      %8205 = vmatmul.mubr.f32.gmra.mrb[0].mxu0 %v7910
      %v8206 = vpop.f32.mrb[0].mxu0
      %v8207 = vadd.f32 %v7933, %v8206
      %v8208 = vpop.f32.mrb[0].mxu0
      %8209 = vmatprep.mubr.f32.mxu0 %v8004
      %8210 = vmatmul.mubr.f32.gmra.mrb[0].mxu0 %v7912
      %v8211 = vpop.f32.mrb[0].mxu0
      %v8212 = vadd.f32 %v7933, %v8211
      %v8213 = vpop.f32.mrb[0].mxu0
      %8214 = vmatprep.mubr.f32.mxu0 %v8007
      %8215 = vmatmul.mubr.f32.gmra.mrb[0].mxu0 %v7914
      %v8216 = vpop.f32.mrb[0].mxu0
      %v8217 = vadd.f32 %v7933, %v8216
      %v8218 = vpop.f32.mrb[0].mxu0
      %8219 = vmatprep.mubr.f32.mxu0 %v8010
      %8220 = vmatmul.mubr.f32.gmra.mrb[0].mxu0 %v7916
      %v8221 = vpop.f32.mrb[0].mxu0
      %v8222 = vadd.f32 %v7933, %v8221
      %v8223 = vpop.f32.mrb[0].mxu0
      %8224 = vmatprep.mubr.f32.mxu0 %v8013
      %8225 = vmatmul.mubr.f32.gmra.mrb[0].mxu0 %v7918
      %v8226 = vpop.f32.mrb[0].mxu0
      %v8227 = vadd.f32 %v7933, %v8226
      %v8228 = vpop.f32.mrb[0].mxu0
      %8229 = vmatprep.mubr.f32.mxu0 %v8016
      %8230 = vmatmul.mubr.f32.gmra.mrb[0].mxu0 %v7920
      %v8231 = vpop.f32.mrb[0].mxu0
      %v8232 = vadd.f32 %v7933, %v8231
      %v8233 = vpop.f32.mrb[0].mxu0
      %8234 = vmatprep.mubr.f32.mxu0 %v8019
      %8235 = vmatmul.mubr.f32.gmra.mrb[0].mxu0 %v7922
      %v8236 = vpop.f32.mrb[0].mxu0
      %v8237 = vadd.f32 %v7933, %v8236
      %v8238 = vpop.f32.mrb[0].mxu0
      %8239 = vmatprep.mubr.f32.mxu0 %v8022
      %8240 = vmatmul.mubr.f32.gmra.mrb[0].mxu0 %v7924
      %v8241 = vpop.f32.mrb[0].mxu0
      %v8242 = vadd.f32 %v7933, %v8241
      %v8243 = vpop.f32.mrb[0].mxu0
      %8244 = vmatprep.mubr.f32.mxu0 %v8025
      %8245 = vmatmul.mubr.f32.gmra.mrb[0].mxu0 %v7926
      %v8246 = vpop.f32.mrb[0].mxu0
      %v8247 = vadd.f32 %v7933, %v8246
      %v8248 = vpop.f32.mrb[0].mxu0
      %8249 = vmatprep.mubr.f32.mxu0 %v8028
      %8250 = vmatmul.mubr.f32.gmra.mrb[0].mxu0 %v7928
      %v8251 = vpop.f32.mrb[0].mxu0
      %v8252 = vadd.f32 %v7933, %v8251
      %v8253 = vpop.f32.mrb[0].mxu0
      %8254 = vdwg.mxu0
      %v8255 = vmax.f32 %v8097, 0.0
      %v8256 = vmax.f32 %v8102, 0.0
      %v8257 = vmax.f32 %v8107, 0.0
      %v8258 = vmax.f32 %v8112, 0.0
      %v8259 = vmax.f32 %v8117, 0.0
      %v8260 = vmax.f32 %v8122, 0.0
      %v8261 = vmax.f32 %v8127, 0.0
      %v8262 = vmax.f32 %v8132, 0.0
      %v8263 = vmax.f32 %v8137, 0.0
      %v8264 = vmax.f32 %v8142, 0.0
      %v8265 = vmax.f32 %v8147, 0.0
      %v8266 = vmax.f32 %v8152, 0.0
      %v8267 = vmax.f32 %v8157, 0.0
      %v8268 = vmax.f32 %v8162, 0.0
      %v8269 = vmax.f32 %v8167, 0.0
      %v8270 = vmax.f32 %v8172, 0.0
      %v8271 = vmax.f32 %v8177, 0.0
      %v8272 = vmax.f32 %v8182, 0.0
      %v8273 = vmax.f32 %v8187, 0.0
      %v8274 = vmax.f32 %v8192, 0.0
      %v8275 = vmax.f32 %v8197, 0.0
      %v8276 = vmax.f32 %v8202, 0.0
      %v8277 = vmax.f32 %v8207, 0.0
      %v8278 = vmax.f32 %v8212, 0.0
      %v8279 = vmax.f32 %v8217, 0.0
      %v8280 = vmax.f32 %v8222, 0.0
      %v8281 = vmax.f32 %v8227, 0.0
      %v8282 = vmax.f32 %v8232, 0.0
      %v8283 = vmax.f32 %v8237, 0.0
      %v8284 = vmax.f32 %v8242, 0.0
      %v8285 = vmax.f32 %v8247, 0.0
      %v8286 = vmax.f32 %v8252, 0.0
      %8287 = vst.msk [vmem:[%s400 + $0x1] sm:$0xff] %vm279, %v8255
      %8288 = vst.msk [vmem:[%s400 + $0x9] sm:$0xff] %vm279, %v8256
      %8289 = vst.msk [vmem:[%s400 + $0x19] sm:$0xff] %vm279, %v8257
      %8290 = vst.msk [vmem:[%s400 + $0x21] sm:$0xff] %vm279, %v8258
      %8291 = vst.msk [vmem:[%s400 + $0x31] sm:$0xff] %vm279, %v8259
      %8292 = vst.msk [vmem:[%s400 + $0x39] sm:$0xff] %vm279, %v8260
      %8293 = vst.msk [vmem:[%s400 + $0x49] sm:$0xff] %vm279, %v8261
      %8294 = vst.msk [vmem:[%s400 + $0x51] sm:$0xff] %vm279, %v8262
      %8295 = vst.msk [vmem:[%s400 + $0x61] sm:$0xff] %vm279, %v8263
      %8296 = vst.msk [vmem:[%s400 + $0x69] sm:$0xff] %vm279, %v8264
      %8297 = vst.msk [vmem:[%s400 + $0x79] sm:$0xff] %vm279, %v8265
      %8298 = vst.msk [vmem:[%s400 + $0x81] sm:$0xff] %vm279, %v8266
      %8299 = vst.msk [vmem:[%s400 + $0x91] sm:$0xff] %vm279, %v8267
      %8300 = vst.msk [vmem:[%s400 + $0x99] sm:$0xff] %vm279, %v8268
      %8301 = vst.msk [vmem:[%s400 + $0xa9] sm:$0xff] %vm279, %v8269
      %8302 = vst.msk [vmem:[%s400 + $0xb1] sm:$0xff] %vm279, %v8270
      %8303 = vst.msk [vmem:[%s400 + $0xc1] sm:$0xff] %vm279, %v8271
      %8304 = vst.msk [vmem:[%s400 + $0xc9] sm:$0xff] %vm279, %v8272
      %8305 = vst.msk [vmem:[%s400 + $0xd9] sm:$0xff] %vm279, %v8273
      %8306 = vst.msk [vmem:[%s400 + $0xe1] sm:$0xff] %vm279, %v8274
      %8307 = vst.msk [vmem:[%s400 + $0xf1] sm:$0xff] %vm279, %v8275
      %8308 = vst.msk [vmem:[%s400 + $0xf9] sm:$0xff] %vm279, %v8276
      %8309 = vst.msk [vmem:[%s400 + $0x109] sm:$0xff] %vm279, %v8277
      %8310 = vst.msk [vmem:[%s400 + $0x111] sm:$0xff] %vm279, %v8278
      %8311 = vst.msk [vmem:[%s400 + $0x121] sm:$0xff] %vm279, %v8279
      %8312 = vst.msk [vmem:[%s400 + $0x129] sm:$0xff] %vm279, %v8280
      %8313 = vst.msk [vmem:[%s400 + $0x139] sm:$0xff] %vm279, %v8281
      %8314 = vst.msk [vmem:[%s400 + $0x141] sm:$0xff] %vm279, %v8282
      %8315 = vst.msk [vmem:[%s400 + $0x151] sm:$0xff] %vm279, %v8283
      %8316 = vst.msk [vmem:[%s400 + $0x159] sm:$0xff] %vm279, %v8284
      %8317 = vst.msk [vmem:[%s400 + $0x169] sm:$0xff] %vm279, %v8285
      %8318 = vst.msk [vmem:[%s400 + $0x171] sm:$0xff] %vm279, %v8286
      %v8319 = vld [vmem:[%s5] sm:$0xff]
      %v8320 = vld [vmem:[%s5 + $0x8] sm:$0xff]
      %v8321 = vld [vmem:[%s5 + $0x10] sm:$0xff]
      %v8322 = vld [vmem:[%s5 + $0x18] sm:$0xff]
      %v8323 = vld [vmem:[%s5 + $0x20] sm:$0xff]
      %v8324 = vld [vmem:[%s5 + $0x28] sm:$0xff]
      %v8325 = vld [vmem:[%s5 + $0x30] sm:$0xff]
      %v8326 = vld [vmem:[%s5 + $0x38] sm:$0xff]
      %v8327 = vld [vmem:[%s5 + $0x40] sm:$0xff]
      %v8328 = vld [vmem:[%s5 + $0x48] sm:$0xff]
      %v8329 = vld [vmem:[%s5 + $0x50] sm:$0xff]
      %v8330 = vld [vmem:[%s5 + $0x58] sm:$0xff]
      %v8331 = vld [vmem:[%s5 + $0x60] sm:$0xff]
      %v8332 = vld [vmem:[%s5 + $0x68] sm:$0xff]
      %v8333 = vld [vmem:[%s5 + $0x70] sm:$0xff]
      %v8334 = vld [vmem:[%s5 + $0x78] sm:$0xff]
      %v8335 = vld [vmem:[%s5 + $0x80] sm:$0xff]
      %v8336 = vld [vmem:[%s5 + $0x88] sm:$0xff]
      %v8337 = vld [vmem:[%s6] sm:$0x1]
      %v8338 = vld [vmem:[#allocation2] sm:$0xff]
      %v8339 = vld [vmem:[#allocation2 + $0x8] sm:$0xff]
      %v8340 = vld [vmem:[#allocation2 + $0x18] sm:$0xff]
      %v8341 = vld [vmem:[#allocation2 + $0x20] sm:$0xff]
      %v8342 = vld [vmem:[#allocation2 + $0x30] sm:$0xff]
      %v8343 = vld [vmem:[#allocation2 + $0x38] sm:$0xff]
      %v8344 = vld [vmem:[#allocation2 + $0x48] sm:$0xff]
      %v8345 = vld [vmem:[#allocation2 + $0x50] sm:$0xff]
      %v8346 = vld [vmem:[#allocation2 + $0x60] sm:$0xff]
      %v8347 = vld [vmem:[#allocation2 + $0x68] sm:$0xff]
      %v8348 = vld [vmem:[#allocation2 + $0x78] sm:$0xff]
      %v8349 = vld [vmem:[#allocation2 + $0x80] sm:$0xff]
      %v8350 = vld [vmem:[#allocation2 + $0x90] sm:$0xff]
      %v8351 = vld [vmem:[#allocation2 + $0x98] sm:$0xff]
      %v8352 = vld [vmem:[#allocation2 + $0xa8] sm:$0xff]
      %v8353 = vld [vmem:[#allocation2 + $0xb0] sm:$0xff]
      %v8354 = vld [vmem:[#allocation2 + $0xc0] sm:$0xff]
      %v8355 = vld [vmem:[#allocation2 + $0xc8] sm:$0xff]
      %v8356 = vld [vmem:[#allocation2 + $0xd8] sm:$0xff]
      %v8357 = vld [vmem:[#allocation2 + $0xe0] sm:$0xff]
      %v8358 = vld [vmem:[#allocation2 + $0xf0] sm:$0xff]
      %v8359 = vld [vmem:[#allocation2 + $0xf8] sm:$0xff]
      %v8360 = vld [vmem:[#allocation2 + $0x108] sm:$0xff]
      %v8361 = vld [vmem:[#allocation2 + $0x110] sm:$0xff]
      %v8362 = vld [vmem:[#allocation2 + $0x120] sm:$0xff]
      %v8363 = vld [vmem:[#allocation2 + $0x128] sm:$0xff]
      %v8364 = vld [vmem:[#allocation2 + $0x138] sm:$0xff]
      %v8365 = vld [vmem:[#allocation2 + $0x140] sm:$0xff]
      %v8366 = vld [vmem:[#allocation2 + $0x150] sm:$0xff]
      %v8367 = vld [vmem:[#allocation2 + $0x158] sm:$0xff]
      %v8368 = vld [vmem:[#allocation2 + $0x168] sm:$0xff]
      %v8369 = vld [vmem:[#allocation2 + $0x170] sm:$0xff]
      %8370 = vst.msk [vmem:[#allocation4] sm:$0xff] %vm279, %v8338
      %8371 = vst.msk [vmem:[#allocation4 + $0x10] sm:$0xff] %vm279, %v8339
      %8372 = vst.msk [vmem:[#allocation4 + $0x20] sm:$0xff] %vm279, %v8340
      %8373 = vst.msk [vmem:[#allocation4 + $0x30] sm:$0xff] %vm279, %v8341
      %8374 = vst.msk [vmem:[#allocation4 + $0x40] sm:$0xff] %vm279, %v8342
      %8375 = vst.msk [vmem:[#allocation4 + $0x50] sm:$0xff] %vm279, %v8343
      %8376 = vst.msk [vmem:[#allocation4 + $0x60] sm:$0xff] %vm279, %v8344
      %8377 = vst.msk [vmem:[#allocation4 + $0x70] sm:$0xff] %vm279, %v8345
      %8378 = vst.msk [vmem:[#allocation4 + $0x80] sm:$0xff] %vm279, %v8346
      %8379 = vst.msk [vmem:[#allocation4 + $0x90] sm:$0xff] %vm279, %v8347
      %8380 = vst.msk [vmem:[#allocation4 + $0xa0] sm:$0xff] %vm279, %v8348
      %8381 = vst.msk [vmem:[#allocation4 + $0xb0] sm:$0xff] %vm279, %v8349
      %8382 = vst.msk [vmem:[#allocation4 + $0xc0] sm:$0xff] %vm279, %v8350
      %8383 = vst.msk [vmem:[#allocation4 + $0xd0] sm:$0xff] %vm279, %v8351
      %8384 = vst.msk [vmem:[#allocation4 + $0xe0] sm:$0xff] %vm279, %v8352
      %8385 = vst.msk [vmem:[#allocation4 + $0xf0] sm:$0xff] %vm279, %v8353
      %8386 = vst.msk [vmem:[#allocation4 + $0x100] sm:$0xff] %vm279, %v8354
      %8387 = vst.msk [vmem:[#allocation4 + $0x110] sm:$0xff] %vm279, %v8355
      %8388 = vst.msk [vmem:[#allocation4 + $0x120] sm:$0xff] %vm279, %v8356
      %8389 = vst.msk [vmem:[#allocation4 + $0x130] sm:$0xff] %vm279, %v8357
      %8390 = vst.msk [vmem:[#allocation4 + $0x140] sm:$0xff] %vm279, %v8358
      %8391 = vst.msk [vmem:[#allocation4 + $0x150] sm:$0xff] %vm279, %v8359
      %8392 = vst.msk [vmem:[#allocation4 + $0x160] sm:$0xff] %vm279, %v8360
      %8393 = vst.msk [vmem:[#allocation4 + $0x170] sm:$0xff] %vm279, %v8361
      %8394 = vst.msk [vmem:[#allocation4 + $0x180] sm:$0xff] %vm279, %v8362
      %8395 = vst.msk [vmem:[#allocation4 + $0x190] sm:$0xff] %vm279, %v8363
      %8396 = vst.msk [vmem:[#allocation4 + $0x1a0] sm:$0xff] %vm279, %v8364
      %8397 = vst.msk [vmem:[#allocation4 + $0x1b0] sm:$0xff] %vm279, %v8365
      %8398 = vst.msk [vmem:[#allocation4 + $0x1c0] sm:$0xff] %vm279, %v8366
      %8399 = vst.msk [vmem:[#allocation4 + $0x1d0] sm:$0xff] %vm279, %v8367
      %8400 = vst.msk [vmem:[#allocation4 + $0x1e0] sm:$0xff] %vm279, %v8368
      %8401 = vst.msk [vmem:[#allocation4 + $0x1f0] sm:$0xff] %vm279, %v8369
      %v8402 = vld [vmem:[#allocation2 + $0x1] sm:$0xff]
      %v8403 = vld [vmem:[#allocation2 + $0x9] sm:$0xff]
      %v8404 = vld [vmem:[#allocation2 + $0x19] sm:$0xff]
      %v8405 = vld [vmem:[#allocation2 + $0x21] sm:$0xff]
      %v8406 = vld [vmem:[#allocation2 + $0x31] sm:$0xff]
      %v8407 = vld [vmem:[#allocation2 + $0x39] sm:$0xff]
      %v8408 = vld [vmem:[#allocation2 + $0x49] sm:$0xff]
      %v8409 = vld [vmem:[#allocation2 + $0x51] sm:$0xff]
      %v8410 = vld [vmem:[#allocation2 + $0x61] sm:$0xff]
      %v8411 = vld [vmem:[#allocation2 + $0x69] sm:$0xff]
      %v8412 = vld [vmem:[#allocation2 + $0x79] sm:$0xff]
      %v8413 = vld [vmem:[#allocation2 + $0x81] sm:$0xff]
      %v8414 = vld [vmem:[#allocation2 + $0x91] sm:$0xff]
      %v8415 = vld [vmem:[#allocation2 + $0x99] sm:$0xff]
      %v8416 = vld [vmem:[#allocation2 + $0xa9] sm:$0xff]
      %v8417 = vld [vmem:[#allocation2 + $0xb1] sm:$0xff]
      %v8418 = vld [vmem:[#allocation2 + $0xc1] sm:$0xff]
      %v8419 = vld [vmem:[#allocation2 + $0xc9] sm:$0xff]
      %v8420 = vld [vmem:[#allocation2 + $0xd9] sm:$0xff]
      %v8421 = vld [vmem:[#allocation2 + $0xe1] sm:$0xff]
      %v8422 = vld [vmem:[#allocation2 + $0xf1] sm:$0xff]
      %v8423 = vld [vmem:[#allocation2 + $0xf9] sm:$0xff]
      %v8424 = vld [vmem:[#allocation2 + $0x109] sm:$0xff]
      %v8425 = vld [vmem:[#allocation2 + $0x111] sm:$0xff]
      %v8426 = vld [vmem:[#allocation2 + $0x121] sm:$0xff]
      %v8427 = vld [vmem:[#allocation2 + $0x129] sm:$0xff]
      %v8428 = vld [vmem:[#allocation2 + $0x139] sm:$0xff]
      %v8429 = vld [vmem:[#allocation2 + $0x141] sm:$0xff]
      %v8430 = vld [vmem:[#allocation2 + $0x151] sm:$0xff]
      %v8431 = vld [vmem:[#allocation2 + $0x159] sm:$0xff]
      %v8432 = vld [vmem:[#allocation2 + $0x169] sm:$0xff]
      %v8433 = vld [vmem:[#allocation2 + $0x171] sm:$0xff]
      %8466 = vrot.lane.b32.xlu0 %v8402, 16
      %v8467 = vpop.permute.xlu0 %8466
      %8468 = vrot.lane.b32.xlu0 %v8403, 16
      %v8469 = vpop.permute.xlu0 %8468
      %8470 = vrot.lane.b32.xlu0 %v8404, 16
      %v8471 = vpop.permute.xlu0 %8470
      %8472 = vrot.lane.b32.xlu0 %v8405, 16
      %v8473 = vpop.permute.xlu0 %8472
      %8474 = vrot.lane.b32.xlu0 %v8406, 16
      %v8475 = vpop.permute.xlu0 %8474
      %8476 = vrot.lane.b32.xlu0 %v8407, 16
      %v8477 = vpop.permute.xlu0 %8476
      %8478 = vrot.lane.b32.xlu0 %v8408, 16
      %v8479 = vpop.permute.xlu0 %8478
      %8480 = vrot.lane.b32.xlu0 %v8409, 16
      %v8481 = vpop.permute.xlu0 %8480
      %8482 = vrot.lane.b32.xlu0 %v8410, 16
      %v8483 = vpop.permute.xlu0 %8482
      %8484 = vrot.lane.b32.xlu0 %v8411, 16
      %v8485 = vpop.permute.xlu0 %8484
      %8486 = vrot.lane.b32.xlu0 %v8412, 16
      %v8487 = vpop.permute.xlu0 %8486
      %8488 = vrot.lane.b32.xlu0 %v8413, 16
      %v8489 = vpop.permute.xlu0 %8488
      %8490 = vrot.lane.b32.xlu0 %v8414, 16
      %v8491 = vpop.permute.xlu0 %8490
      %8492 = vrot.lane.b32.xlu0 %v8415, 16
      %v8493 = vpop.permute.xlu0 %8492
      %8494 = vrot.lane.b32.xlu0 %v8416, 16
      %v8495 = vpop.permute.xlu0 %8494
      %8496 = vrot.lane.b32.xlu0 %v8417, 16
      %v8497 = vpop.permute.xlu0 %8496
      %8498 = vrot.lane.b32.xlu0 %v8418, 16
      %v8499 = vpop.permute.xlu0 %8498
      %8500 = vrot.lane.b32.xlu0 %v8419, 16
      %v8501 = vpop.permute.xlu0 %8500
      %8502 = vrot.lane.b32.xlu0 %v8420, 16
      %v8503 = vpop.permute.xlu0 %8502
      %8504 = vrot.lane.b32.xlu0 %v8421, 16
      %v8505 = vpop.permute.xlu0 %8504
      %8506 = vrot.lane.b32.xlu0 %v8422, 16
      %v8507 = vpop.permute.xlu0 %8506
      %8508 = vrot.lane.b32.xlu0 %v8423, 16
      %v8509 = vpop.permute.xlu0 %8508
      %8510 = vrot.lane.b32.xlu0 %v8424, 16
      %v8511 = vpop.permute.xlu0 %8510
      %8512 = vrot.lane.b32.xlu0 %v8425, 16
      %v8513 = vpop.permute.xlu0 %8512
      %8514 = vrot.lane.b32.xlu0 %v8426, 16
      %v8515 = vpop.permute.xlu0 %8514
      %8516 = vrot.lane.b32.xlu0 %v8427, 16
      %v8517 = vpop.permute.xlu0 %8516
      %8518 = vrot.lane.b32.xlu0 %v8428, 16
      %v8519 = vpop.permute.xlu0 %8518
      %8520 = vrot.lane.b32.xlu0 %v8429, 16
      %v8521 = vpop.permute.xlu0 %8520
      %8522 = vrot.lane.b32.xlu0 %v8430, 16
      %v8523 = vpop.permute.xlu0 %8522
      %8524 = vrot.lane.b32.xlu0 %v8431, 16
      %v8525 = vpop.permute.xlu0 %8524
      %8526 = vrot.lane.b32.xlu0 %v8432, 16
      %v8527 = vpop.permute.xlu0 %8526
      %8528 = vrot.lane.b32.xlu0 %v8433, 16
      %v8529 = vpop.permute.xlu0 %8528
      %8562 = vst.msk [vmem:[#allocation4] sm:$0xff] %vm2720, %v8467
      %8563 = vst.msk [vmem:[#allocation4 + $0x10] sm:$0xff] %vm2720, %v8469
      %8564 = vst.msk [vmem:[#allocation4 + $0x20] sm:$0xff] %vm2720, %v8471
      %8565 = vst.msk [vmem:[#allocation4 + $0x30] sm:$0xff] %vm2720, %v8473
      %8566 = vst.msk [vmem:[#allocation4 + $0x40] sm:$0xff] %vm2720, %v8475
      %8567 = vst.msk [vmem:[#allocation4 + $0x50] sm:$0xff] %vm2720, %v8477
      %8568 = vst.msk [vmem:[#allocation4 + $0x60] sm:$0xff] %vm2720, %v8479
      %8569 = vst.msk [vmem:[#allocation4 + $0x70] sm:$0xff] %vm2720, %v8481
      %8570 = vst.msk [vmem:[#allocation4 + $0x80] sm:$0xff] %vm2720, %v8483
      %8571 = vst.msk [vmem:[#allocation4 + $0x90] sm:$0xff] %vm2720, %v8485
      %8572 = vst.msk [vmem:[#allocation4 + $0xa0] sm:$0xff] %vm2720, %v8487
      %8573 = vst.msk [vmem:[#allocation4 + $0xb0] sm:$0xff] %vm2720, %v8489
      %8574 = vst.msk [vmem:[#allocation4 + $0xc0] sm:$0xff] %vm2720, %v8491
      %8575 = vst.msk [vmem:[#allocation4 + $0xd0] sm:$0xff] %vm2720, %v8493
      %8576 = vst.msk [vmem:[#allocation4 + $0xe0] sm:$0xff] %vm2720, %v8495
      %8577 = vst.msk [vmem:[#allocation4 + $0xf0] sm:$0xff] %vm2720, %v8497
      %8578 = vst.msk [vmem:[#allocation4 + $0x100] sm:$0xff] %vm2720, %v8499
      %8579 = vst.msk [vmem:[#allocation4 + $0x110] sm:$0xff] %vm2720, %v8501
      %8580 = vst.msk [vmem:[#allocation4 + $0x120] sm:$0xff] %vm2720, %v8503
      %8581 = vst.msk [vmem:[#allocation4 + $0x130] sm:$0xff] %vm2720, %v8505
      %8582 = vst.msk [vmem:[#allocation4 + $0x140] sm:$0xff] %vm2720, %v8507
      %8583 = vst.msk [vmem:[#allocation4 + $0x150] sm:$0xff] %vm2720, %v8509
      %8584 = vst.msk [vmem:[#allocation4 + $0x160] sm:$0xff] %vm2720, %v8511
      %8585 = vst.msk [vmem:[#allocation4 + $0x170] sm:$0xff] %vm2720, %v8513
      %8586 = vst.msk [vmem:[#allocation4 + $0x180] sm:$0xff] %vm2720, %v8515
      %8587 = vst.msk [vmem:[#allocation4 + $0x190] sm:$0xff] %vm2720, %v8517
      %8588 = vst.msk [vmem:[#allocation4 + $0x1a0] sm:$0xff] %vm2720, %v8519
      %8589 = vst.msk [vmem:[#allocation4 + $0x1b0] sm:$0xff] %vm2720, %v8521
      %8590 = vst.msk [vmem:[#allocation4 + $0x1c0] sm:$0xff] %vm2720, %v8523
      %8591 = vst.msk [vmem:[#allocation4 + $0x1d0] sm:$0xff] %vm2720, %v8525
      %8592 = vst.msk [vmem:[#allocation4 + $0x1e0] sm:$0xff] %vm2720, %v8527
      %8593 = vst.msk [vmem:[#allocation4 + $0x1f0] sm:$0xff] %vm2720, %v8529
      %v8594 = vld [vmem:[#allocation2 + $0x2] sm:$0xff]
      %v8595 = vld [vmem:[#allocation2 + $0xa] sm:$0xff]
      %v8596 = vld [vmem:[#allocation2 + $0x1a] sm:$0xff]
      %v8597 = vld [vmem:[#allocation2 + $0x22] sm:$0xff]
      %v8598 = vld [vmem:[#allocation2 + $0x32] sm:$0xff]
      %v8599 = vld [vmem:[#allocation2 + $0x3a] sm:$0xff]
      %v8600 = vld [vmem:[#allocation2 + $0x4a] sm:$0xff]
      %v8601 = vld [vmem:[#allocation2 + $0x52] sm:$0xff]
      %v8602 = vld [vmem:[#allocation2 + $0x62] sm:$0xff]
      %v8603 = vld [vmem:[#allocation2 + $0x6a] sm:$0xff]
      %v8604 = vld [vmem:[#allocation2 + $0x7a] sm:$0xff]
      %v8605 = vld [vmem:[#allocation2 + $0x82] sm:$0xff]
      %v8606 = vld [vmem:[#allocation2 + $0x92] sm:$0xff]
      %v8607 = vld [vmem:[#allocation2 + $0x9a] sm:$0xff]
      %v8608 = vld [vmem:[#allocation2 + $0xaa] sm:$0xff]
      %v8609 = vld [vmem:[#allocation2 + $0xb2] sm:$0xff]
      %v8610 = vld [vmem:[#allocation2 + $0xc2] sm:$0xff]
      %v8611 = vld [vmem:[#allocation2 + $0xca] sm:$0xff]
      %v8612 = vld [vmem:[#allocation2 + $0xda] sm:$0xff]
      %v8613 = vld [vmem:[#allocation2 + $0xe2] sm:$0xff]
      %v8614 = vld [vmem:[#allocation2 + $0xf2] sm:$0xff]
      %v8615 = vld [vmem:[#allocation2 + $0xfa] sm:$0xff]
      %v8616 = vld [vmem:[#allocation2 + $0x10a] sm:$0xff]
      %v8617 = vld [vmem:[#allocation2 + $0x112] sm:$0xff]
      %v8618 = vld [vmem:[#allocation2 + $0x122] sm:$0xff]
      %v8619 = vld [vmem:[#allocation2 + $0x12a] sm:$0xff]
      %v8620 = vld [vmem:[#allocation2 + $0x13a] sm:$0xff]
      %v8621 = vld [vmem:[#allocation2 + $0x142] sm:$0xff]
      %v8622 = vld [vmem:[#allocation2 + $0x152] sm:$0xff]
      %v8623 = vld [vmem:[#allocation2 + $0x15a] sm:$0xff]
      %v8624 = vld [vmem:[#allocation2 + $0x16a] sm:$0xff]
      %v8625 = vld [vmem:[#allocation2 + $0x172] sm:$0xff]
      %8658 = vrot.lane.b32.xlu0 %v8594, 32
      %v8659 = vpop.permute.xlu0 %8658
      %8660 = vrot.lane.b32.xlu0 %v8595, 32
      %v8661 = vpop.permute.xlu0 %8660
      %8662 = vrot.lane.b32.xlu0 %v8596, 32
      %v8663 = vpop.permute.xlu0 %8662
      %8664 = vrot.lane.b32.xlu0 %v8597, 32
      %v8665 = vpop.permute.xlu0 %8664
      %8666 = vrot.lane.b32.xlu0 %v8598, 32
      %v8667 = vpop.permute.xlu0 %8666
      %8668 = vrot.lane.b32.xlu0 %v8599, 32
      %v8669 = vpop.permute.xlu0 %8668
      %8670 = vrot.lane.b32.xlu0 %v8600, 32
      %v8671 = vpop.permute.xlu0 %8670
      %8672 = vrot.lane.b32.xlu0 %v8601, 32
      %v8673 = vpop.permute.xlu0 %8672
      %8674 = vrot.lane.b32.xlu0 %v8602, 32
      %v8675 = vpop.permute.xlu0 %8674
      %8676 = vrot.lane.b32.xlu0 %v8603, 32
      %v8677 = vpop.permute.xlu0 %8676
      %8678 = vrot.lane.b32.xlu0 %v8604, 32
      %v8679 = vpop.permute.xlu0 %8678
      %8680 = vrot.lane.b32.xlu0 %v8605, 32
      %v8681 = vpop.permute.xlu0 %8680
      %8682 = vrot.lane.b32.xlu0 %v8606, 32
      %v8683 = vpop.permute.xlu0 %8682
      %8684 = vrot.lane.b32.xlu0 %v8607, 32
      %v8685 = vpop.permute.xlu0 %8684
      %8686 = vrot.lane.b32.xlu0 %v8608, 32
      %v8687 = vpop.permute.xlu0 %8686
      %8688 = vrot.lane.b32.xlu0 %v8609, 32
      %v8689 = vpop.permute.xlu0 %8688
      %8690 = vrot.lane.b32.xlu0 %v8610, 32
      %v8691 = vpop.permute.xlu0 %8690
      %8692 = vrot.lane.b32.xlu0 %v8611, 32
      %v8693 = vpop.permute.xlu0 %8692
      %8694 = vrot.lane.b32.xlu0 %v8612, 32
      %v8695 = vpop.permute.xlu0 %8694
      %8696 = vrot.lane.b32.xlu0 %v8613, 32
      %v8697 = vpop.permute.xlu0 %8696
      %8698 = vrot.lane.b32.xlu0 %v8614, 32
      %v8699 = vpop.permute.xlu0 %8698
      %8700 = vrot.lane.b32.xlu0 %v8615, 32
      %v8701 = vpop.permute.xlu0 %8700
      %8702 = vrot.lane.b32.xlu0 %v8616, 32
      %v8703 = vpop.permute.xlu0 %8702
      %8704 = vrot.lane.b32.xlu0 %v8617, 32
      %v8705 = vpop.permute.xlu0 %8704
      %8706 = vrot.lane.b32.xlu0 %v8618, 32
      %v8707 = vpop.permute.xlu0 %8706
      %8708 = vrot.lane.b32.xlu0 %v8619, 32
      %v8709 = vpop.permute.xlu0 %8708
      %8710 = vrot.lane.b32.xlu0 %v8620, 32
      %v8711 = vpop.permute.xlu0 %8710
      %8712 = vrot.lane.b32.xlu0 %v8621, 32
      %v8713 = vpop.permute.xlu0 %8712
      %8714 = vrot.lane.b32.xlu0 %v8622, 32
      %v8715 = vpop.permute.xlu0 %8714
      %8716 = vrot.lane.b32.xlu0 %v8623, 32
      %v8717 = vpop.permute.xlu0 %8716
      %8718 = vrot.lane.b32.xlu0 %v8624, 32
      %v8719 = vpop.permute.xlu0 %8718
      %8720 = vrot.lane.b32.xlu0 %v8625, 32
      %v8721 = vpop.permute.xlu0 %8720
      %8754 = vst.msk [vmem:[#allocation4] sm:$0xff] %vm2913, %v8659
      %8755 = vst.msk [vmem:[#allocation4 + $0x10] sm:$0xff] %vm2913, %v8661
      %8756 = vst.msk [vmem:[#allocation4 + $0x20] sm:$0xff] %vm2913, %v8663
      %8757 = vst.msk [vmem:[#allocation4 + $0x30] sm:$0xff] %vm2913, %v8665
      %8758 = vst.msk [vmem:[#allocation4 + $0x40] sm:$0xff] %vm2913, %v8667
      %8759 = vst.msk [vmem:[#allocation4 + $0x50] sm:$0xff] %vm2913, %v8669
      %8760 = vst.msk [vmem:[#allocation4 + $0x60] sm:$0xff] %vm2913, %v8671
      %8761 = vst.msk [vmem:[#allocation4 + $0x70] sm:$0xff] %vm2913, %v8673
      %8762 = vst.msk [vmem:[#allocation4 + $0x80] sm:$0xff] %vm2913, %v8675
      %8763 = vst.msk [vmem:[#allocation4 + $0x90] sm:$0xff] %vm2913, %v8677
      %8764 = vst.msk [vmem:[#allocation4 + $0xa0] sm:$0xff] %vm2913, %v8679
      %8765 = vst.msk [vmem:[#allocation4 + $0xb0] sm:$0xff] %vm2913, %v8681
      %8766 = vst.msk [vmem:[#allocation4 + $0xc0] sm:$0xff] %vm2913, %v8683
      %8767 = vst.msk [vmem:[#allocation4 + $0xd0] sm:$0xff] %vm2913, %v8685
      %8768 = vst.msk [vmem:[#allocation4 + $0xe0] sm:$0xff] %vm2913, %v8687
      %8769 = vst.msk [vmem:[#allocation4 + $0xf0] sm:$0xff] %vm2913, %v8689
      %8770 = vst.msk [vmem:[#allocation4 + $0x100] sm:$0xff] %vm2913, %v8691
      %8771 = vst.msk [vmem:[#allocation4 + $0x110] sm:$0xff] %vm2913, %v8693
      %8772 = vst.msk [vmem:[#allocation4 + $0x120] sm:$0xff] %vm2913, %v8695
      %8773 = vst.msk [vmem:[#allocation4 + $0x130] sm:$0xff] %vm2913, %v8697
      %8774 = vst.msk [vmem:[#allocation4 + $0x140] sm:$0xff] %vm2913, %v8699
      %8775 = vst.msk [vmem:[#allocation4 + $0x150] sm:$0xff] %vm2913, %v8701
      %8776 = vst.msk [vmem:[#allocation4 + $0x160] sm:$0xff] %vm2913, %v8703
      %8777 = vst.msk [vmem:[#allocation4 + $0x170] sm:$0xff] %vm2913, %v8705
      %8778 = vst.msk [vmem:[#allocation4 + $0x180] sm:$0xff] %vm2913, %v8707
      %8779 = vst.msk [vmem:[#allocation4 + $0x190] sm:$0xff] %vm2913, %v8709
      %8780 = vst.msk [vmem:[#allocation4 + $0x1a0] sm:$0xff] %vm2913, %v8711
      %8781 = vst.msk [vmem:[#allocation4 + $0x1b0] sm:$0xff] %vm2913, %v8713
      %8782 = vst.msk [vmem:[#allocation4 + $0x1c0] sm:$0xff] %vm2913, %v8715
      %8783 = vst.msk [vmem:[#allocation4 + $0x1d0] sm:$0xff] %vm2913, %v8717
      %8784 = vst.msk [vmem:[#allocation4 + $0x1e0] sm:$0xff] %vm2913, %v8719
      %8785 = vst.msk [vmem:[#allocation4 + $0x1f0] sm:$0xff] %vm2913, %v8721
      %v8786 = vld [vmem:[%s400] sm:$0xff]
      %v8787 = vld [vmem:[%s400 + $0x8] sm:$0xff]
      %v8788 = vld [vmem:[%s400 + $0x18] sm:$0xff]
      %v8789 = vld [vmem:[%s400 + $0x20] sm:$0xff]
      %v8790 = vld [vmem:[%s400 + $0x30] sm:$0xff]
      %v8791 = vld [vmem:[%s400 + $0x38] sm:$0xff]
      %v8792 = vld [vmem:[%s400 + $0x48] sm:$0xff]
      %v8793 = vld [vmem:[%s400 + $0x50] sm:$0xff]
      %v8794 = vld [vmem:[%s400 + $0x60] sm:$0xff]
      %v8795 = vld [vmem:[%s400 + $0x68] sm:$0xff]
      %v8796 = vld [vmem:[%s400 + $0x78] sm:$0xff]
      %v8797 = vld [vmem:[%s400 + $0x80] sm:$0xff]
      %v8798 = vld [vmem:[%s400 + $0x90] sm:$0xff]
      %v8799 = vld [vmem:[%s400 + $0x98] sm:$0xff]
      %v8800 = vld [vmem:[%s400 + $0xa8] sm:$0xff]
      %v8801 = vld [vmem:[%s400 + $0xb0] sm:$0xff]
      %v8802 = vld [vmem:[%s400 + $0xc0] sm:$0xff]
      %v8803 = vld [vmem:[%s400 + $0xc8] sm:$0xff]
      %v8804 = vld [vmem:[%s400 + $0xd8] sm:$0xff]
      %v8805 = vld [vmem:[%s400 + $0xe0] sm:$0xff]
      %v8806 = vld [vmem:[%s400 + $0xf0] sm:$0xff]
      %v8807 = vld [vmem:[%s400 + $0xf8] sm:$0xff]
      %v8808 = vld [vmem:[%s400 + $0x108] sm:$0xff]
      %v8809 = vld [vmem:[%s400 + $0x110] sm:$0xff]
      %v8810 = vld [vmem:[%s400 + $0x120] sm:$0xff]
      %v8811 = vld [vmem:[%s400 + $0x128] sm:$0xff]
      %v8812 = vld [vmem:[%s400 + $0x138] sm:$0xff]
      %v8813 = vld [vmem:[%s400 + $0x140] sm:$0xff]
      %v8814 = vld [vmem:[%s400 + $0x150] sm:$0xff]
      %v8815 = vld [vmem:[%s400 + $0x158] sm:$0xff]
      %v8816 = vld [vmem:[%s400 + $0x168] sm:$0xff]
      %v8817 = vld [vmem:[%s400 + $0x170] sm:$0xff]
      %8850 = vrot.lane.b32.xlu0 %v8786, 48
      %v8851 = vpop.permute.xlu0 %8850
      %8852 = vrot.lane.b32.xlu0 %v8787, 48
      %v8853 = vpop.permute.xlu0 %8852
      %8854 = vrot.lane.b32.xlu0 %v8788, 48
      %v8855 = vpop.permute.xlu0 %8854
      %8856 = vrot.lane.b32.xlu0 %v8789, 48
      %v8857 = vpop.permute.xlu0 %8856
      %8858 = vrot.lane.b32.xlu0 %v8790, 48
      %v8859 = vpop.permute.xlu0 %8858
      %8860 = vrot.lane.b32.xlu0 %v8791, 48
      %v8861 = vpop.permute.xlu0 %8860
      %8862 = vrot.lane.b32.xlu0 %v8792, 48
      %v8863 = vpop.permute.xlu0 %8862
      %8864 = vrot.lane.b32.xlu0 %v8793, 48
      %v8865 = vpop.permute.xlu0 %8864
      %8866 = vrot.lane.b32.xlu0 %v8794, 48
      %v8867 = vpop.permute.xlu0 %8866
      %8868 = vrot.lane.b32.xlu0 %v8795, 48
      %v8869 = vpop.permute.xlu0 %8868
      %8870 = vrot.lane.b32.xlu0 %v8796, 48
      %v8871 = vpop.permute.xlu0 %8870
      %8872 = vrot.lane.b32.xlu0 %v8797, 48
      %v8873 = vpop.permute.xlu0 %8872
      %8874 = vrot.lane.b32.xlu0 %v8798, 48
      %v8875 = vpop.permute.xlu0 %8874
      %8876 = vrot.lane.b32.xlu0 %v8799, 48
      %v8877 = vpop.permute.xlu0 %8876
      %8878 = vrot.lane.b32.xlu0 %v8800, 48
      %v8879 = vpop.permute.xlu0 %8878
      %8880 = vrot.lane.b32.xlu0 %v8801, 48
      %v8881 = vpop.permute.xlu0 %8880
      %8882 = vrot.lane.b32.xlu0 %v8802, 48
      %v8883 = vpop.permute.xlu0 %8882
      %8884 = vrot.lane.b32.xlu0 %v8803, 48
      %v8885 = vpop.permute.xlu0 %8884
      %8886 = vrot.lane.b32.xlu0 %v8804, 48
      %v8887 = vpop.permute.xlu0 %8886
      %8888 = vrot.lane.b32.xlu0 %v8805, 48
      %v8889 = vpop.permute.xlu0 %8888
      %8890 = vrot.lane.b32.xlu0 %v8806, 48
      %v8891 = vpop.permute.xlu0 %8890
      %8892 = vrot.lane.b32.xlu0 %v8807, 48
      %v8893 = vpop.permute.xlu0 %8892
      %8894 = vrot.lane.b32.xlu0 %v8808, 48
      %v8895 = vpop.permute.xlu0 %8894
      %8896 = vrot.lane.b32.xlu0 %v8809, 48
      %v8897 = vpop.permute.xlu0 %8896
      %8898 = vrot.lane.b32.xlu0 %v8810, 48
      %v8899 = vpop.permute.xlu0 %8898
      %8900 = vrot.lane.b32.xlu0 %v8811, 48
      %v8901 = vpop.permute.xlu0 %8900
      %8902 = vrot.lane.b32.xlu0 %v8812, 48
      %v8903 = vpop.permute.xlu0 %8902
      %8904 = vrot.lane.b32.xlu0 %v8813, 48
      %v8905 = vpop.permute.xlu0 %8904
      %8906 = vrot.lane.b32.xlu0 %v8814, 48
      %v8907 = vpop.permute.xlu0 %8906
      %8908 = vrot.lane.b32.xlu0 %v8815, 48
      %v8909 = vpop.permute.xlu0 %8908
      %8910 = vrot.lane.b32.xlu0 %v8816, 48
      %v8911 = vpop.permute.xlu0 %8910
      %8912 = vrot.lane.b32.xlu0 %v8817, 48
      %v8913 = vpop.permute.xlu0 %8912
      %8946 = vst.msk [vmem:[#allocation4] sm:$0xff] %vm3106, %v8851
      %8947 = vst.msk [vmem:[#allocation4 + $0x10] sm:$0xff] %vm3106, %v8853
      %8948 = vst.msk [vmem:[#allocation4 + $0x20] sm:$0xff] %vm3106, %v8855
      %8949 = vst.msk [vmem:[#allocation4 + $0x30] sm:$0xff] %vm3106, %v8857
      %8950 = vst.msk [vmem:[#allocation4 + $0x40] sm:$0xff] %vm3106, %v8859
      %8951 = vst.msk [vmem:[#allocation4 + $0x50] sm:$0xff] %vm3106, %v8861
      %8952 = vst.msk [vmem:[#allocation4 + $0x60] sm:$0xff] %vm3106, %v8863
      %8953 = vst.msk [vmem:[#allocation4 + $0x70] sm:$0xff] %vm3106, %v8865
      %8954 = vst.msk [vmem:[#allocation4 + $0x80] sm:$0xff] %vm3106, %v8867
      %8955 = vst.msk [vmem:[#allocation4 + $0x90] sm:$0xff] %vm3106, %v8869
      %8956 = vst.msk [vmem:[#allocation4 + $0xa0] sm:$0xff] %vm3106, %v8871
      %8957 = vst.msk [vmem:[#allocation4 + $0xb0] sm:$0xff] %vm3106, %v8873
      %8958 = vst.msk [vmem:[#allocation4 + $0xc0] sm:$0xff] %vm3106, %v8875
      %8959 = vst.msk [vmem:[#allocation4 + $0xd0] sm:$0xff] %vm3106, %v8877
      %8960 = vst.msk [vmem:[#allocation4 + $0xe0] sm:$0xff] %vm3106, %v8879
      %8961 = vst.msk [vmem:[#allocation4 + $0xf0] sm:$0xff] %vm3106, %v8881
      %8962 = vst.msk [vmem:[#allocation4 + $0x100] sm:$0xff] %vm3106, %v8883
      %8963 = vst.msk [vmem:[#allocation4 + $0x110] sm:$0xff] %vm3106, %v8885
      %8964 = vst.msk [vmem:[#allocation4 + $0x120] sm:$0xff] %vm3106, %v8887
      %8965 = vst.msk [vmem:[#allocation4 + $0x130] sm:$0xff] %vm3106, %v8889
      %8966 = vst.msk [vmem:[#allocation4 + $0x140] sm:$0xff] %vm3106, %v8891
      %8967 = vst.msk [vmem:[#allocation4 + $0x150] sm:$0xff] %vm3106, %v8893
      %8968 = vst.msk [vmem:[#allocation4 + $0x160] sm:$0xff] %vm3106, %v8895
      %8969 = vst.msk [vmem:[#allocation4 + $0x170] sm:$0xff] %vm3106, %v8897
      %8970 = vst.msk [vmem:[#allocation4 + $0x180] sm:$0xff] %vm3106, %v8899
      %8971 = vst.msk [vmem:[#allocation4 + $0x190] sm:$0xff] %vm3106, %v8901
      %8972 = vst.msk [vmem:[#allocation4 + $0x1a0] sm:$0xff] %vm3106, %v8903
      %8973 = vst.msk [vmem:[#allocation4 + $0x1b0] sm:$0xff] %vm3106, %v8905
      %8974 = vst.msk [vmem:[#allocation4 + $0x1c0] sm:$0xff] %vm3106, %v8907
      %8975 = vst.msk [vmem:[#allocation4 + $0x1d0] sm:$0xff] %vm3106, %v8909
      %8976 = vst.msk [vmem:[#allocation4 + $0x1e0] sm:$0xff] %vm3106, %v8911
      %8977 = vst.msk [vmem:[#allocation4 + $0x1f0] sm:$0xff] %vm3106, %v8913
      %v8978 = vld [vmem:[%s400 + $0x1] sm:$0xff]
      %v8979 = vld [vmem:[%s400 + $0x9] sm:$0xff]
      %v8980 = vld [vmem:[%s400 + $0x19] sm:$0xff]
      %v8981 = vld [vmem:[%s400 + $0x21] sm:$0xff]
      %v8982 = vld [vmem:[%s400 + $0x31] sm:$0xff]
      %v8983 = vld [vmem:[%s400 + $0x39] sm:$0xff]
      %v8984 = vld [vmem:[%s400 + $0x49] sm:$0xff]
      %v8985 = vld [vmem:[%s400 + $0x51] sm:$0xff]
      %v8986 = vld [vmem:[%s400 + $0x61] sm:$0xff]
      %v8987 = vld [vmem:[%s400 + $0x69] sm:$0xff]
      %v8988 = vld [vmem:[%s400 + $0x79] sm:$0xff]
      %v8989 = vld [vmem:[%s400 + $0x81] sm:$0xff]
      %v8990 = vld [vmem:[%s400 + $0x91] sm:$0xff]
      %v8991 = vld [vmem:[%s400 + $0x99] sm:$0xff]
      %v8992 = vld [vmem:[%s400 + $0xa9] sm:$0xff]
      %v8993 = vld [vmem:[%s400 + $0xb1] sm:$0xff]
      %v8994 = vld [vmem:[%s400 + $0xc1] sm:$0xff]
      %v8995 = vld [vmem:[%s400 + $0xc9] sm:$0xff]
      %v8996 = vld [vmem:[%s400 + $0xd9] sm:$0xff]
      %v8997 = vld [vmem:[%s400 + $0xe1] sm:$0xff]
      %v8998 = vld [vmem:[%s400 + $0xf1] sm:$0xff]
      %v8999 = vld [vmem:[%s400 + $0xf9] sm:$0xff]
      %v9000 = vld [vmem:[%s400 + $0x109] sm:$0xff]
      %v9001 = vld [vmem:[%s400 + $0x111] sm:$0xff]
      %v9002 = vld [vmem:[%s400 + $0x121] sm:$0xff]
      %v9003 = vld [vmem:[%s400 + $0x129] sm:$0xff]
      %v9004 = vld [vmem:[%s400 + $0x139] sm:$0xff]
      %v9005 = vld [vmem:[%s400 + $0x141] sm:$0xff]
      %v9006 = vld [vmem:[%s400 + $0x151] sm:$0xff]
      %v9007 = vld [vmem:[%s400 + $0x159] sm:$0xff]
      %v9008 = vld [vmem:[%s400 + $0x169] sm:$0xff]
      %v9009 = vld [vmem:[%s400 + $0x171] sm:$0xff]
      %9042 = vrot.lane.b32.xlu0 %v8978, 64
      %v9043 = vpop.permute.xlu0 %9042
      %9044 = vrot.lane.b32.xlu0 %v8979, 64
      %v9045 = vpop.permute.xlu0 %9044
      %9046 = vrot.lane.b32.xlu0 %v8980, 64
      %v9047 = vpop.permute.xlu0 %9046
      %9048 = vrot.lane.b32.xlu0 %v8981, 64
      %v9049 = vpop.permute.xlu0 %9048
      %9050 = vrot.lane.b32.xlu0 %v8982, 64
      %v9051 = vpop.permute.xlu0 %9050
      %9052 = vrot.lane.b32.xlu0 %v8983, 64
      %v9053 = vpop.permute.xlu0 %9052
      %9054 = vrot.lane.b32.xlu0 %v8984, 64
      %v9055 = vpop.permute.xlu0 %9054
      %9056 = vrot.lane.b32.xlu0 %v8985, 64
      %v9057 = vpop.permute.xlu0 %9056
      %9058 = vrot.lane.b32.xlu0 %v8986, 64
      %v9059 = vpop.permute.xlu0 %9058
      %9060 = vrot.lane.b32.xlu0 %v8987, 64
      %v9061 = vpop.permute.xlu0 %9060
      %9062 = vrot.lane.b32.xlu0 %v8988, 64
      %v9063 = vpop.permute.xlu0 %9062
      %9064 = vrot.lane.b32.xlu0 %v8989, 64
      %v9065 = vpop.permute.xlu0 %9064
      %9066 = vrot.lane.b32.xlu0 %v8990, 64
      %v9067 = vpop.permute.xlu0 %9066
      %9068 = vrot.lane.b32.xlu0 %v8991, 64
      %v9069 = vpop.permute.xlu0 %9068
      %9070 = vrot.lane.b32.xlu0 %v8992, 64
      %v9071 = vpop.permute.xlu0 %9070
      %9072 = vrot.lane.b32.xlu0 %v8993, 64
      %v9073 = vpop.permute.xlu0 %9072
      %9074 = vrot.lane.b32.xlu0 %v8994, 64
      %v9075 = vpop.permute.xlu0 %9074
      %9076 = vrot.lane.b32.xlu0 %v8995, 64
      %v9077 = vpop.permute.xlu0 %9076
      %9078 = vrot.lane.b32.xlu0 %v8996, 64
      %v9079 = vpop.permute.xlu0 %9078
      %9080 = vrot.lane.b32.xlu0 %v8997, 64
      %v9081 = vpop.permute.xlu0 %9080
      %9082 = vrot.lane.b32.xlu0 %v8998, 64
      %v9083 = vpop.permute.xlu0 %9082
      %9084 = vrot.lane.b32.xlu0 %v8999, 64
      %v9085 = vpop.permute.xlu0 %9084
      %9086 = vrot.lane.b32.xlu0 %v9000, 64
      %v9087 = vpop.permute.xlu0 %9086
      %9088 = vrot.lane.b32.xlu0 %v9001, 64
      %v9089 = vpop.permute.xlu0 %9088
      %9090 = vrot.lane.b32.xlu0 %v9002, 64
      %v9091 = vpop.permute.xlu0 %9090
      %9092 = vrot.lane.b32.xlu0 %v9003, 64
      %v9093 = vpop.permute.xlu0 %9092
      %9094 = vrot.lane.b32.xlu0 %v9004, 64
      %v9095 = vpop.permute.xlu0 %9094
      %9096 = vrot.lane.b32.xlu0 %v9005, 64
      %v9097 = vpop.permute.xlu0 %9096
      %9098 = vrot.lane.b32.xlu0 %v9006, 64
      %v9099 = vpop.permute.xlu0 %9098
      %9100 = vrot.lane.b32.xlu0 %v9007, 64
      %v9101 = vpop.permute.xlu0 %9100
      %9102 = vrot.lane.b32.xlu0 %v9008, 64
      %v9103 = vpop.permute.xlu0 %9102
      %9104 = vrot.lane.b32.xlu0 %v9009, 64
      %v9105 = vpop.permute.xlu0 %9104
      %9138 = vst.msk [vmem:[#allocation4] sm:$0xff] %vm3299, %v9043
      %9139 = vst.msk [vmem:[#allocation4 + $0x10] sm:$0xff] %vm3299, %v9045
      %9140 = vst.msk [vmem:[#allocation4 + $0x20] sm:$0xff] %vm3299, %v9047
      %9141 = vst.msk [vmem:[#allocation4 + $0x30] sm:$0xff] %vm3299, %v9049
      %9142 = vst.msk [vmem:[#allocation4 + $0x40] sm:$0xff] %vm3299, %v9051
      %9143 = vst.msk [vmem:[#allocation4 + $0x50] sm:$0xff] %vm3299, %v9053
      %9144 = vst.msk [vmem:[#allocation4 + $0x60] sm:$0xff] %vm3299, %v9055
      %9145 = vst.msk [vmem:[#allocation4 + $0x70] sm:$0xff] %vm3299, %v9057
      %9146 = vst.msk [vmem:[#allocation4 + $0x80] sm:$0xff] %vm3299, %v9059
      %9147 = vst.msk [vmem:[#allocation4 + $0x90] sm:$0xff] %vm3299, %v9061
      %9148 = vst.msk [vmem:[#allocation4 + $0xa0] sm:$0xff] %vm3299, %v9063
      %9149 = vst.msk [vmem:[#allocation4 + $0xb0] sm:$0xff] %vm3299, %v9065
      %9150 = vst.msk [vmem:[#allocation4 + $0xc0] sm:$0xff] %vm3299, %v9067
      %9151 = vst.msk [vmem:[#allocation4 + $0xd0] sm:$0xff] %vm3299, %v9069
      %9152 = vst.msk [vmem:[#allocation4 + $0xe0] sm:$0xff] %vm3299, %v9071
      %9153 = vst.msk [vmem:[#allocation4 + $0xf0] sm:$0xff] %vm3299, %v9073
      %9154 = vst.msk [vmem:[#allocation4 + $0x100] sm:$0xff] %vm3299, %v9075
      %9155 = vst.msk [vmem:[#allocation4 + $0x110] sm:$0xff] %vm3299, %v9077
      %9156 = vst.msk [vmem:[#allocation4 + $0x120] sm:$0xff] %vm3299, %v9079
      %9157 = vst.msk [vmem:[#allocation4 + $0x130] sm:$0xff] %vm3299, %v9081
      %9158 = vst.msk [vmem:[#allocation4 + $0x140] sm:$0xff] %vm3299, %v9083
      %9159 = vst.msk [vmem:[#allocation4 + $0x150] sm:$0xff] %vm3299, %v9085
      %9160 = vst.msk [vmem:[#allocation4 + $0x160] sm:$0xff] %vm3299, %v9087
      %9161 = vst.msk [vmem:[#allocation4 + $0x170] sm:$0xff] %vm3299, %v9089
      %9162 = vst.msk [vmem:[#allocation4 + $0x180] sm:$0xff] %vm3299, %v9091
      %9163 = vst.msk [vmem:[#allocation4 + $0x190] sm:$0xff] %vm3299, %v9093
      %9164 = vst.msk [vmem:[#allocation4 + $0x1a0] sm:$0xff] %vm3299, %v9095
      %9165 = vst.msk [vmem:[#allocation4 + $0x1b0] sm:$0xff] %vm3299, %v9097
      %9166 = vst.msk [vmem:[#allocation4 + $0x1c0] sm:$0xff] %vm3299, %v9099
      %9167 = vst.msk [vmem:[#allocation4 + $0x1d0] sm:$0xff] %vm3299, %v9101
      %9168 = vst.msk [vmem:[#allocation4 + $0x1e0] sm:$0xff] %vm3299, %v9103
      %9169 = vst.msk [vmem:[#allocation4 + $0x1f0] sm:$0xff] %vm3299, %v9105
      %v9170 = vld [vmem:[%s400 + $0x2] sm:$0xff]
      %v9171 = vld [vmem:[%s400 + $0xa] sm:$0xff]
      %v9172 = vld [vmem:[%s400 + $0x1a] sm:$0xff]
      %v9173 = vld [vmem:[%s400 + $0x22] sm:$0xff]
      %v9174 = vld [vmem:[%s400 + $0x32] sm:$0xff]
      %v9175 = vld [vmem:[%s400 + $0x3a] sm:$0xff]
      %v9176 = vld [vmem:[%s400 + $0x4a] sm:$0xff]
      %v9177 = vld [vmem:[%s400 + $0x52] sm:$0xff]
      %v9178 = vld [vmem:[%s400 + $0x62] sm:$0xff]
      %v9179 = vld [vmem:[%s400 + $0x6a] sm:$0xff]
      %v9180 = vld [vmem:[%s400 + $0x7a] sm:$0xff]
      %v9181 = vld [vmem:[%s400 + $0x82] sm:$0xff]
      %v9182 = vld [vmem:[%s400 + $0x92] sm:$0xff]
      %v9183 = vld [vmem:[%s400 + $0x9a] sm:$0xff]
      %v9184 = vld [vmem:[%s400 + $0xaa] sm:$0xff]
      %v9185 = vld [vmem:[%s400 + $0xb2] sm:$0xff]
      %v9186 = vld [vmem:[%s400 + $0xc2] sm:$0xff]
      %v9187 = vld [vmem:[%s400 + $0xca] sm:$0xff]
      %v9188 = vld [vmem:[%s400 + $0xda] sm:$0xff]
      %v9189 = vld [vmem:[%s400 + $0xe2] sm:$0xff]
      %v9190 = vld [vmem:[%s400 + $0xf2] sm:$0xff]
      %v9191 = vld [vmem:[%s400 + $0xfa] sm:$0xff]
      %v9192 = vld [vmem:[%s400 + $0x10a] sm:$0xff]
      %v9193 = vld [vmem:[%s400 + $0x112] sm:$0xff]
      %v9194 = vld [vmem:[%s400 + $0x122] sm:$0xff]
      %v9195 = vld [vmem:[%s400 + $0x12a] sm:$0xff]
      %v9196 = vld [vmem:[%s400 + $0x13a] sm:$0xff]
      %v9197 = vld [vmem:[%s400 + $0x142] sm:$0xff]
      %v9198 = vld [vmem:[%s400 + $0x152] sm:$0xff]
      %v9199 = vld [vmem:[%s400 + $0x15a] sm:$0xff]
      %v9200 = vld [vmem:[%s400 + $0x16a] sm:$0xff]
      %v9201 = vld [vmem:[%s400 + $0x172] sm:$0xff]
      %9234 = vrot.lane.b32.xlu0 %v9170, 80
      %v9235 = vpop.permute.xlu0 %9234
      %9236 = vrot.lane.b32.xlu0 %v9171, 80
      %v9237 = vpop.permute.xlu0 %9236
      %9238 = vrot.lane.b32.xlu0 %v9172, 80
      %v9239 = vpop.permute.xlu0 %9238
      %9240 = vrot.lane.b32.xlu0 %v9173, 80
      %v9241 = vpop.permute.xlu0 %9240
      %9242 = vrot.lane.b32.xlu0 %v9174, 80
      %v9243 = vpop.permute.xlu0 %9242
      %9244 = vrot.lane.b32.xlu0 %v9175, 80
      %v9245 = vpop.permute.xlu0 %9244
      %9246 = vrot.lane.b32.xlu0 %v9176, 80
      %v9247 = vpop.permute.xlu0 %9246
      %9248 = vrot.lane.b32.xlu0 %v9177, 80
      %v9249 = vpop.permute.xlu0 %9248
      %9250 = vrot.lane.b32.xlu0 %v9178, 80
      %v9251 = vpop.permute.xlu0 %9250
      %9252 = vrot.lane.b32.xlu0 %v9179, 80
      %v9253 = vpop.permute.xlu0 %9252
      %9254 = vrot.lane.b32.xlu0 %v9180, 80
      %v9255 = vpop.permute.xlu0 %9254
      %9256 = vrot.lane.b32.xlu0 %v9181, 80
      %v9257 = vpop.permute.xlu0 %9256
      %9258 = vrot.lane.b32.xlu0 %v9182, 80
      %v9259 = vpop.permute.xlu0 %9258
      %9260 = vrot.lane.b32.xlu0 %v9183, 80
      %v9261 = vpop.permute.xlu0 %9260
      %9262 = vrot.lane.b32.xlu0 %v9184, 80
      %v9263 = vpop.permute.xlu0 %9262
      %9264 = vrot.lane.b32.xlu0 %v9185, 80
      %v9265 = vpop.permute.xlu0 %9264
      %9266 = vrot.lane.b32.xlu0 %v9186, 80
      %v9267 = vpop.permute.xlu0 %9266
      %9268 = vrot.lane.b32.xlu0 %v9187, 80
      %v9269 = vpop.permute.xlu0 %9268
      %9270 = vrot.lane.b32.xlu0 %v9188, 80
      %v9271 = vpop.permute.xlu0 %9270
      %9272 = vrot.lane.b32.xlu0 %v9189, 80
      %v9273 = vpop.permute.xlu0 %9272
      %9274 = vrot.lane.b32.xlu0 %v9190, 80
      %v9275 = vpop.permute.xlu0 %9274
      %9276 = vrot.lane.b32.xlu0 %v9191, 80
      %v9277 = vpop.permute.xlu0 %9276
      %9278 = vrot.lane.b32.xlu0 %v9192, 80
      %v9279 = vpop.permute.xlu0 %9278
      %9280 = vrot.lane.b32.xlu0 %v9193, 80
      %v9281 = vpop.permute.xlu0 %9280
      %9282 = vrot.lane.b32.xlu0 %v9194, 80
      %v9283 = vpop.permute.xlu0 %9282
      %9284 = vrot.lane.b32.xlu0 %v9195, 80
      %v9285 = vpop.permute.xlu0 %9284
      %9286 = vrot.lane.b32.xlu0 %v9196, 80
      %v9287 = vpop.permute.xlu0 %9286
      %9288 = vrot.lane.b32.xlu0 %v9197, 80
      %v9289 = vpop.permute.xlu0 %9288
      %9290 = vrot.lane.b32.xlu0 %v9198, 80
      %v9291 = vpop.permute.xlu0 %9290
      %9292 = vrot.lane.b32.xlu0 %v9199, 80
      %v9293 = vpop.permute.xlu0 %9292
      %9294 = vrot.lane.b32.xlu0 %v9200, 80
      %v9295 = vpop.permute.xlu0 %9294
      %9296 = vrot.lane.b32.xlu0 %v9201, 80
      %v9297 = vpop.permute.xlu0 %9296
      %9330 = vst.msk [vmem:[#allocation4] sm:$0xff] %vm3492, %v9235
      %9331 = vst.msk [vmem:[#allocation4 + $0x10] sm:$0xff] %vm3492, %v9237
      %9332 = vst.msk [vmem:[#allocation4 + $0x20] sm:$0xff] %vm3492, %v9239
      %9333 = vst.msk [vmem:[#allocation4 + $0x30] sm:$0xff] %vm3492, %v9241
      %9334 = vst.msk [vmem:[#allocation4 + $0x40] sm:$0xff] %vm3492, %v9243
      %9335 = vst.msk [vmem:[#allocation4 + $0x50] sm:$0xff] %vm3492, %v9245
      %9336 = vst.msk [vmem:[#allocation4 + $0x60] sm:$0xff] %vm3492, %v9247
      %9337 = vst.msk [vmem:[#allocation4 + $0x70] sm:$0xff] %vm3492, %v9249
      %9338 = vst.msk [vmem:[#allocation4 + $0x80] sm:$0xff] %vm3492, %v9251
      %9339 = vst.msk [vmem:[#allocation4 + $0x90] sm:$0xff] %vm3492, %v9253
      %9340 = vst.msk [vmem:[#allocation4 + $0xa0] sm:$0xff] %vm3492, %v9255
      %9341 = vst.msk [vmem:[#allocation4 + $0xb0] sm:$0xff] %vm3492, %v9257
      %9342 = vst.msk [vmem:[#allocation4 + $0xc0] sm:$0xff] %vm3492, %v9259
      %9343 = vst.msk [vmem:[#allocation4 + $0xd0] sm:$0xff] %vm3492, %v9261
      %9344 = vst.msk [vmem:[#allocation4 + $0xe0] sm:$0xff] %vm3492, %v9263
      %9345 = vst.msk [vmem:[#allocation4 + $0xf0] sm:$0xff] %vm3492, %v9265
      %9346 = vst.msk [vmem:[#allocation4 + $0x100] sm:$0xff] %vm3492, %v9267
      %9347 = vst.msk [vmem:[#allocation4 + $0x110] sm:$0xff] %vm3492, %v9269
      %9348 = vst.msk [vmem:[#allocation4 + $0x120] sm:$0xff] %vm3492, %v9271
      %9349 = vst.msk [vmem:[#allocation4 + $0x130] sm:$0xff] %vm3492, %v9273
      %9350 = vst.msk [vmem:[#allocation4 + $0x140] sm:$0xff] %vm3492, %v9275
      %9351 = vst.msk [vmem:[#allocation4 + $0x150] sm:$0xff] %vm3492, %v9277
      %9352 = vst.msk [vmem:[#allocation4 + $0x160] sm:$0xff] %vm3492, %v9279
      %9353 = vst.msk [vmem:[#allocation4 + $0x170] sm:$0xff] %vm3492, %v9281
      %9354 = vst.msk [vmem:[#allocation4 + $0x180] sm:$0xff] %vm3492, %v9283
      %9355 = vst.msk [vmem:[#allocation4 + $0x190] sm:$0xff] %vm3492, %v9285
      %9356 = vst.msk [vmem:[#allocation4 + $0x1a0] sm:$0xff] %vm3492, %v9287
      %9357 = vst.msk [vmem:[#allocation4 + $0x1b0] sm:$0xff] %vm3492, %v9289
      %9358 = vst.msk [vmem:[#allocation4 + $0x1c0] sm:$0xff] %vm3492, %v9291
      %9359 = vst.msk [vmem:[#allocation4 + $0x1d0] sm:$0xff] %vm3492, %v9293
      %9360 = vst.msk [vmem:[#allocation4 + $0x1e0] sm:$0xff] %vm3492, %v9295
      %9361 = vst.msk [vmem:[#allocation4 + $0x1f0] sm:$0xff] %vm3492, %v9297
      %v9362 = vld [vmem:[%s1468] sm:$0xff]
      %v9363 = vld [vmem:[%s1468 + $0x8] sm:$0xff]
      %v9364 = vld [vmem:[%s1468 + $0x18] sm:$0xff]
      %v9365 = vld [vmem:[%s1468 + $0x20] sm:$0xff]
      %v9366 = vld [vmem:[%s1468 + $0x30] sm:$0xff]
      %v9367 = vld [vmem:[%s1468 + $0x38] sm:$0xff]
      %v9368 = vld [vmem:[%s1468 + $0x48] sm:$0xff]
      %v9369 = vld [vmem:[%s1468 + $0x50] sm:$0xff]
      %v9370 = vld [vmem:[%s1468 + $0x60] sm:$0xff]
      %v9371 = vld [vmem:[%s1468 + $0x68] sm:$0xff]
      %v9372 = vld [vmem:[%s1468 + $0x78] sm:$0xff]
      %v9373 = vld [vmem:[%s1468 + $0x80] sm:$0xff]
      %v9374 = vld [vmem:[%s1468 + $0x90] sm:$0xff]
      %v9375 = vld [vmem:[%s1468 + $0x98] sm:$0xff]
      %v9376 = vld [vmem:[%s1468 + $0xa8] sm:$0xff]
      %v9377 = vld [vmem:[%s1468 + $0xb0] sm:$0xff]
      %v9378 = vld [vmem:[%s1468 + $0xc0] sm:$0xff]
      %v9379 = vld [vmem:[%s1468 + $0xc8] sm:$0xff]
      %v9380 = vld [vmem:[%s1468 + $0xd8] sm:$0xff]
      %v9381 = vld [vmem:[%s1468 + $0xe0] sm:$0xff]
      %v9382 = vld [vmem:[%s1468 + $0xf0] sm:$0xff]
      %v9383 = vld [vmem:[%s1468 + $0xf8] sm:$0xff]
      %v9384 = vld [vmem:[%s1468 + $0x108] sm:$0xff]
      %v9385 = vld [vmem:[%s1468 + $0x110] sm:$0xff]
      %v9386 = vld [vmem:[%s1468 + $0x120] sm:$0xff]
      %v9387 = vld [vmem:[%s1468 + $0x128] sm:$0xff]
      %v9388 = vld [vmem:[%s1468 + $0x138] sm:$0xff]
      %v9389 = vld [vmem:[%s1468 + $0x140] sm:$0xff]
      %v9390 = vld [vmem:[%s1468 + $0x150] sm:$0xff]
      %v9391 = vld [vmem:[%s1468 + $0x158] sm:$0xff]
      %v9392 = vld [vmem:[%s1468 + $0x168] sm:$0xff]
      %v9393 = vld [vmem:[%s1468 + $0x170] sm:$0xff]
      %9426 = vrot.lane.b32.xlu0 %v9362, 96
      %v9427 = vpop.permute.xlu0 %9426
      %9428 = vrot.lane.b32.xlu0 %v9363, 96
      %v9429 = vpop.permute.xlu0 %9428
      %9430 = vrot.lane.b32.xlu0 %v9364, 96
      %v9431 = vpop.permute.xlu0 %9430
      %9432 = vrot.lane.b32.xlu0 %v9365, 96
      %v9433 = vpop.permute.xlu0 %9432
      %9434 = vrot.lane.b32.xlu0 %v9366, 96
      %v9435 = vpop.permute.xlu0 %9434
      %9436 = vrot.lane.b32.xlu0 %v9367, 96
      %v9437 = vpop.permute.xlu0 %9436
      %9438 = vrot.lane.b32.xlu0 %v9368, 96
      %v9439 = vpop.permute.xlu0 %9438
      %9440 = vrot.lane.b32.xlu0 %v9369, 96
      %v9441 = vpop.permute.xlu0 %9440
      %9442 = vrot.lane.b32.xlu0 %v9370, 96
      %v9443 = vpop.permute.xlu0 %9442
      %9444 = vrot.lane.b32.xlu0 %v9371, 96
      %v9445 = vpop.permute.xlu0 %9444
      %9446 = vrot.lane.b32.xlu0 %v9372, 96
      %v9447 = vpop.permute.xlu0 %9446
      %9448 = vrot.lane.b32.xlu0 %v9373, 96
      %v9449 = vpop.permute.xlu0 %9448
      %9450 = vrot.lane.b32.xlu0 %v9374, 96
      %v9451 = vpop.permute.xlu0 %9450
      %9452 = vrot.lane.b32.xlu0 %v9375, 96
      %v9453 = vpop.permute.xlu0 %9452
      %9454 = vrot.lane.b32.xlu0 %v9376, 96
      %v9455 = vpop.permute.xlu0 %9454
      %9456 = vrot.lane.b32.xlu0 %v9377, 96
      %v9457 = vpop.permute.xlu0 %9456
      %9458 = vrot.lane.b32.xlu0 %v9378, 96
      %v9459 = vpop.permute.xlu0 %9458
      %9460 = vrot.lane.b32.xlu0 %v9379, 96
      %v9461 = vpop.permute.xlu0 %9460
      %9462 = vrot.lane.b32.xlu0 %v9380, 96
      %v9463 = vpop.permute.xlu0 %9462
      %9464 = vrot.lane.b32.xlu0 %v9381, 96
      %v9465 = vpop.permute.xlu0 %9464
      %9466 = vrot.lane.b32.xlu0 %v9382, 96
      %v9467 = vpop.permute.xlu0 %9466
      %9468 = vrot.lane.b32.xlu0 %v9383, 96
      %v9469 = vpop.permute.xlu0 %9468
      %9470 = vrot.lane.b32.xlu0 %v9384, 96
      %v9471 = vpop.permute.xlu0 %9470
      %9472 = vrot.lane.b32.xlu0 %v9385, 96
      %v9473 = vpop.permute.xlu0 %9472
      %9474 = vrot.lane.b32.xlu0 %v9386, 96
      %v9475 = vpop.permute.xlu0 %9474
      %9476 = vrot.lane.b32.xlu0 %v9387, 96
      %v9477 = vpop.permute.xlu0 %9476
      %9478 = vrot.lane.b32.xlu0 %v9388, 96
      %v9479 = vpop.permute.xlu0 %9478
      %9480 = vrot.lane.b32.xlu0 %v9389, 96
      %v9481 = vpop.permute.xlu0 %9480
      %9482 = vrot.lane.b32.xlu0 %v9390, 96
      %v9483 = vpop.permute.xlu0 %9482
      %9484 = vrot.lane.b32.xlu0 %v9391, 96
      %v9485 = vpop.permute.xlu0 %9484
      %9486 = vrot.lane.b32.xlu0 %v9392, 96
      %v9487 = vpop.permute.xlu0 %9486
      %9488 = vrot.lane.b32.xlu0 %v9393, 96
      %v9489 = vpop.permute.xlu0 %9488
      %9522 = vst.msk [vmem:[#allocation4] sm:$0xff] %vm3686, %v9427
      %9523 = vst.msk [vmem:[#allocation4 + $0x10] sm:$0xff] %vm3686, %v9429
      %9524 = vst.msk [vmem:[#allocation4 + $0x20] sm:$0xff] %vm3686, %v9431
      %9525 = vst.msk [vmem:[#allocation4 + $0x30] sm:$0xff] %vm3686, %v9433
      %9526 = vst.msk [vmem:[#allocation4 + $0x40] sm:$0xff] %vm3686, %v9435
      %9527 = vst.msk [vmem:[#allocation4 + $0x50] sm:$0xff] %vm3686, %v9437
      %9528 = vst.msk [vmem:[#allocation4 + $0x60] sm:$0xff] %vm3686, %v9439
      %9529 = vst.msk [vmem:[#allocation4 + $0x70] sm:$0xff] %vm3686, %v9441
      %9530 = vst.msk [vmem:[#allocation4 + $0x80] sm:$0xff] %vm3686, %v9443
      %9531 = vst.msk [vmem:[#allocation4 + $0x90] sm:$0xff] %vm3686, %v9445
      %9532 = vst.msk [vmem:[#allocation4 + $0xa0] sm:$0xff] %vm3686, %v9447
      %9533 = vst.msk [vmem:[#allocation4 + $0xb0] sm:$0xff] %vm3686, %v9449
      %9534 = vst.msk [vmem:[#allocation4 + $0xc0] sm:$0xff] %vm3686, %v9451
      %9535 = vst.msk [vmem:[#allocation4 + $0xd0] sm:$0xff] %vm3686, %v9453
      %9536 = vst.msk [vmem:[#allocation4 + $0xe0] sm:$0xff] %vm3686, %v9455
      %9537 = vst.msk [vmem:[#allocation4 + $0xf0] sm:$0xff] %vm3686, %v9457
      %9538 = vst.msk [vmem:[#allocation4 + $0x100] sm:$0xff] %vm3686, %v9459
      %9539 = vst.msk [vmem:[#allocation4 + $0x110] sm:$0xff] %vm3686, %v9461
      %9540 = vst.msk [vmem:[#allocation4 + $0x120] sm:$0xff] %vm3686, %v9463
      %9541 = vst.msk [vmem:[#allocation4 + $0x130] sm:$0xff] %vm3686, %v9465
      %9542 = vst.msk [vmem:[#allocation4 + $0x140] sm:$0xff] %vm3686, %v9467
      %9543 = vst.msk [vmem:[#allocation4 + $0x150] sm:$0xff] %vm3686, %v9469
      %9544 = vst.msk [vmem:[#allocation4 + $0x160] sm:$0xff] %vm3686, %v9471
      %9545 = vst.msk [vmem:[#allocation4 + $0x170] sm:$0xff] %vm3686, %v9473
      %9546 = vst.msk [vmem:[#allocation4 + $0x180] sm:$0xff] %vm3686, %v9475
      %9547 = vst.msk [vmem:[#allocation4 + $0x190] sm:$0xff] %vm3686, %v9477
      %9548 = vst.msk [vmem:[#allocation4 + $0x1a0] sm:$0xff] %vm3686, %v9479
      %9549 = vst.msk [vmem:[#allocation4 + $0x1b0] sm:$0xff] %vm3686, %v9481
      %9550 = vst.msk [vmem:[#allocation4 + $0x1c0] sm:$0xff] %vm3686, %v9483
      %9551 = vst.msk [vmem:[#allocation4 + $0x1d0] sm:$0xff] %vm3686, %v9485
      %9552 = vst.msk [vmem:[#allocation4 + $0x1e0] sm:$0xff] %vm3686, %v9487
      %9553 = vst.msk [vmem:[#allocation4 + $0x1f0] sm:$0xff] %vm3686, %v9489
      %v9554 = vld [vmem:[%s1468 + $0x1] sm:$0xff]
      %v9555 = vld [vmem:[%s1468 + $0x9] sm:$0xff]
      %v9556 = vld [vmem:[%s1468 + $0x19] sm:$0xff]
      %v9557 = vld [vmem:[%s1468 + $0x21] sm:$0xff]
      %v9558 = vld [vmem:[%s1468 + $0x31] sm:$0xff]
      %v9559 = vld [vmem:[%s1468 + $0x39] sm:$0xff]
      %v9560 = vld [vmem:[%s1468 + $0x49] sm:$0xff]
      %v9561 = vld [vmem:[%s1468 + $0x51] sm:$0xff]
      %v9562 = vld [vmem:[%s1468 + $0x61] sm:$0xff]
      %v9563 = vld [vmem:[%s1468 + $0x69] sm:$0xff]
      %v9564 = vld [vmem:[%s1468 + $0x79] sm:$0xff]
      %v9565 = vld [vmem:[%s1468 + $0x81] sm:$0xff]
      %v9566 = vld [vmem:[%s1468 + $0x91] sm:$0xff]
      %v9567 = vld [vmem:[%s1468 + $0x99] sm:$0xff]
      %v9568 = vld [vmem:[%s1468 + $0xa9] sm:$0xff]
      %v9569 = vld [vmem:[%s1468 + $0xb1] sm:$0xff]
      %v9570 = vld [vmem:[%s1468 + $0xc1] sm:$0xff]
      %v9571 = vld [vmem:[%s1468 + $0xc9] sm:$0xff]
      %v9572 = vld [vmem:[%s1468 + $0xd9] sm:$0xff]
      %v9573 = vld [vmem:[%s1468 + $0xe1] sm:$0xff]
      %v9574 = vld [vmem:[%s1468 + $0xf1] sm:$0xff]
      %v9575 = vld [vmem:[%s1468 + $0xf9] sm:$0xff]
      %v9576 = vld [vmem:[%s1468 + $0x109] sm:$0xff]
      %v9577 = vld [vmem:[%s1468 + $0x111] sm:$0xff]
      %v9578 = vld [vmem:[%s1468 + $0x121] sm:$0xff]
      %v9579 = vld [vmem:[%s1468 + $0x129] sm:$0xff]
      %v9580 = vld [vmem:[%s1468 + $0x139] sm:$0xff]
      %v9581 = vld [vmem:[%s1468 + $0x141] sm:$0xff]
      %v9582 = vld [vmem:[%s1468 + $0x151] sm:$0xff]
      %v9583 = vld [vmem:[%s1468 + $0x159] sm:$0xff]
      %v9584 = vld [vmem:[%s1468 + $0x169] sm:$0xff]
      %v9585 = vld [vmem:[%s1468 + $0x171] sm:$0xff]
      %9618 = vrot.lane.b32.xlu0 %v9554, 112
      %v9619 = vpop.permute.xlu0 %9618
      %9620 = vrot.lane.b32.xlu0 %v9555, 112
      %v9621 = vpop.permute.xlu0 %9620
      %9622 = vrot.lane.b32.xlu0 %v9556, 112
      %v9623 = vpop.permute.xlu0 %9622
      %9624 = vrot.lane.b32.xlu0 %v9557, 112
      %v9625 = vpop.permute.xlu0 %9624
      %9626 = vrot.lane.b32.xlu0 %v9558, 112
      %v9627 = vpop.permute.xlu0 %9626
      %9628 = vrot.lane.b32.xlu0 %v9559, 112
      %v9629 = vpop.permute.xlu0 %9628
      %9630 = vrot.lane.b32.xlu0 %v9560, 112
      %v9631 = vpop.permute.xlu0 %9630
      %9632 = vrot.lane.b32.xlu0 %v9561, 112
      %v9633 = vpop.permute.xlu0 %9632
      %9634 = vrot.lane.b32.xlu0 %v9562, 112
      %v9635 = vpop.permute.xlu0 %9634
      %9636 = vrot.lane.b32.xlu0 %v9563, 112
      %v9637 = vpop.permute.xlu0 %9636
      %9638 = vrot.lane.b32.xlu0 %v9564, 112
      %v9639 = vpop.permute.xlu0 %9638
      %9640 = vrot.lane.b32.xlu0 %v9565, 112
      %v9641 = vpop.permute.xlu0 %9640
      %9642 = vrot.lane.b32.xlu0 %v9566, 112
      %v9643 = vpop.permute.xlu0 %9642
      %9644 = vrot.lane.b32.xlu0 %v9567, 112
      %v9645 = vpop.permute.xlu0 %9644
      %9646 = vrot.lane.b32.xlu0 %v9568, 112
      %v9647 = vpop.permute.xlu0 %9646
      %9648 = vrot.lane.b32.xlu0 %v9569, 112
      %v9649 = vpop.permute.xlu0 %9648
      %9650 = vrot.lane.b32.xlu0 %v9570, 112
      %v9651 = vpop.permute.xlu0 %9650
      %9652 = vrot.lane.b32.xlu0 %v9571, 112
      %v9653 = vpop.permute.xlu0 %9652
      %9654 = vrot.lane.b32.xlu0 %v9572, 112
      %v9655 = vpop.permute.xlu0 %9654
      %9656 = vrot.lane.b32.xlu0 %v9573, 112
      %v9657 = vpop.permute.xlu0 %9656
      %9658 = vrot.lane.b32.xlu0 %v9574, 112
      %v9659 = vpop.permute.xlu0 %9658
      %9660 = vrot.lane.b32.xlu0 %v9575, 112
      %v9661 = vpop.permute.xlu0 %9660
      %9662 = vrot.lane.b32.xlu0 %v9576, 112
      %v9663 = vpop.permute.xlu0 %9662
      %9664 = vrot.lane.b32.xlu0 %v9577, 112
      %v9665 = vpop.permute.xlu0 %9664
      %9666 = vrot.lane.b32.xlu0 %v9578, 112
      %v9667 = vpop.permute.xlu0 %9666
      %9668 = vrot.lane.b32.xlu0 %v9579, 112
      %v9669 = vpop.permute.xlu0 %9668
      %9670 = vrot.lane.b32.xlu0 %v9580, 112
      %v9671 = vpop.permute.xlu0 %9670
      %9672 = vrot.lane.b32.xlu0 %v9581, 112
      %v9673 = vpop.permute.xlu0 %9672
      %9674 = vrot.lane.b32.xlu0 %v9582, 112
      %v9675 = vpop.permute.xlu0 %9674
      %9676 = vrot.lane.b32.xlu0 %v9583, 112
      %v9677 = vpop.permute.xlu0 %9676
      %9678 = vrot.lane.b32.xlu0 %v9584, 112
      %v9679 = vpop.permute.xlu0 %9678
      %9680 = vrot.lane.b32.xlu0 %v9585, 112
      %v9681 = vpop.permute.xlu0 %9680
      %9714 = vst.msk [vmem:[#allocation4] sm:$0xff] %vm3879, %v9619
      %9715 = vst.msk [vmem:[#allocation4 + $0x10] sm:$0xff] %vm3879, %v9621
      %9716 = vst.msk [vmem:[#allocation4 + $0x20] sm:$0xff] %vm3879, %v9623
      %9717 = vst.msk [vmem:[#allocation4 + $0x30] sm:$0xff] %vm3879, %v9625
      %9718 = vst.msk [vmem:[#allocation4 + $0x40] sm:$0xff] %vm3879, %v9627
      %9719 = vst.msk [vmem:[#allocation4 + $0x50] sm:$0xff] %vm3879, %v9629
      %9720 = vst.msk [vmem:[#allocation4 + $0x60] sm:$0xff] %vm3879, %v9631
      %9721 = vst.msk [vmem:[#allocation4 + $0x70] sm:$0xff] %vm3879, %v9633
      %9722 = vst.msk [vmem:[#allocation4 + $0x80] sm:$0xff] %vm3879, %v9635
      %9723 = vst.msk [vmem:[#allocation4 + $0x90] sm:$0xff] %vm3879, %v9637
      %9724 = vst.msk [vmem:[#allocation4 + $0xa0] sm:$0xff] %vm3879, %v9639
      %9725 = vst.msk [vmem:[#allocation4 + $0xb0] sm:$0xff] %vm3879, %v9641
      %9726 = vst.msk [vmem:[#allocation4 + $0xc0] sm:$0xff] %vm3879, %v9643
      %9727 = vst.msk [vmem:[#allocation4 + $0xd0] sm:$0xff] %vm3879, %v9645
      %9728 = vst.msk [vmem:[#allocation4 + $0xe0] sm:$0xff] %vm3879, %v9647
      %9729 = vst.msk [vmem:[#allocation4 + $0xf0] sm:$0xff] %vm3879, %v9649
      %9730 = vst.msk [vmem:[#allocation4 + $0x100] sm:$0xff] %vm3879, %v9651
      %9731 = vst.msk [vmem:[#allocation4 + $0x110] sm:$0xff] %vm3879, %v9653
      %9732 = vst.msk [vmem:[#allocation4 + $0x120] sm:$0xff] %vm3879, %v9655
      %9733 = vst.msk [vmem:[#allocation4 + $0x130] sm:$0xff] %vm3879, %v9657
      %9734 = vst.msk [vmem:[#allocation4 + $0x140] sm:$0xff] %vm3879, %v9659
      %9735 = vst.msk [vmem:[#allocation4 + $0x150] sm:$0xff] %vm3879, %v9661
      %9736 = vst.msk [vmem:[#allocation4 + $0x160] sm:$0xff] %vm3879, %v9663
      %9737 = vst.msk [vmem:[#allocation4 + $0x170] sm:$0xff] %vm3879, %v9665
      %9738 = vst.msk [vmem:[#allocation4 + $0x180] sm:$0xff] %vm3879, %v9667
      %9739 = vst.msk [vmem:[#allocation4 + $0x190] sm:$0xff] %vm3879, %v9669
      %9740 = vst.msk [vmem:[#allocation4 + $0x1a0] sm:$0xff] %vm3879, %v9671
      %9741 = vst.msk [vmem:[#allocation4 + $0x1b0] sm:$0xff] %vm3879, %v9673
      %9742 = vst.msk [vmem:[#allocation4 + $0x1c0] sm:$0xff] %vm3879, %v9675
      %9743 = vst.msk [vmem:[#allocation4 + $0x1d0] sm:$0xff] %vm3879, %v9677
      %9744 = vst.msk [vmem:[#allocation4 + $0x1e0] sm:$0xff] %vm3879, %v9679
      %9745 = vst.msk [vmem:[#allocation4 + $0x1f0] sm:$0xff] %vm3879, %v9681
      %v9746 = vld [vmem:[%s1468 + $0x2] sm:$0xff]
      %v9747 = vld [vmem:[%s1468 + $0xa] sm:$0xff]
      %v9748 = vld [vmem:[%s1468 + $0x1a] sm:$0xff]
      %v9749 = vld [vmem:[%s1468 + $0x22] sm:$0xff]
      %v9750 = vld [vmem:[%s1468 + $0x32] sm:$0xff]
      %v9751 = vld [vmem:[%s1468 + $0x3a] sm:$0xff]
      %v9752 = vld [vmem:[%s1468 + $0x4a] sm:$0xff]
      %v9753 = vld [vmem:[%s1468 + $0x52] sm:$0xff]
      %v9754 = vld [vmem:[%s1468 + $0x62] sm:$0xff]
      %v9755 = vld [vmem:[%s1468 + $0x6a] sm:$0xff]
      %v9756 = vld [vmem:[%s1468 + $0x7a] sm:$0xff]
      %v9757 = vld [vmem:[%s1468 + $0x82] sm:$0xff]
      %v9758 = vld [vmem:[%s1468 + $0x92] sm:$0xff]
      %v9759 = vld [vmem:[%s1468 + $0x9a] sm:$0xff]
      %v9760 = vld [vmem:[%s1468 + $0xaa] sm:$0xff]
      %v9761 = vld [vmem:[%s1468 + $0xb2] sm:$0xff]
      %v9762 = vld [vmem:[%s1468 + $0xc2] sm:$0xff]
      %v9763 = vld [vmem:[%s1468 + $0xca] sm:$0xff]
      %v9764 = vld [vmem:[%s1468 + $0xda] sm:$0xff]
      %v9765 = vld [vmem:[%s1468 + $0xe2] sm:$0xff]
      %v9766 = vld [vmem:[%s1468 + $0xf2] sm:$0xff]
      %v9767 = vld [vmem:[%s1468 + $0xfa] sm:$0xff]
      %v9768 = vld [vmem:[%s1468 + $0x10a] sm:$0xff]
      %v9769 = vld [vmem:[%s1468 + $0x112] sm:$0xff]
      %v9770 = vld [vmem:[%s1468 + $0x122] sm:$0xff]
      %v9771 = vld [vmem:[%s1468 + $0x12a] sm:$0xff]
      %v9772 = vld [vmem:[%s1468 + $0x13a] sm:$0xff]
      %v9773 = vld [vmem:[%s1468 + $0x142] sm:$0xff]
      %v9774 = vld [vmem:[%s1468 + $0x152] sm:$0xff]
      %v9775 = vld [vmem:[%s1468 + $0x15a] sm:$0xff]
      %v9776 = vld [vmem:[%s1468 + $0x16a] sm:$0xff]
      %v9777 = vld [vmem:[%s1468 + $0x172] sm:$0xff]
      %9778 = vst.msk [vmem:[#allocation4 + $0x8] sm:$0xff] %vm279, %v9746
      %9779 = vst.msk [vmem:[#allocation4 + $0x18] sm:$0xff] %vm279, %v9747
      %9780 = vst.msk [vmem:[#allocation4 + $0x28] sm:$0xff] %vm279, %v9748
      %9781 = vst.msk [vmem:[#allocation4 + $0x38] sm:$0xff] %vm279, %v9749
      %9782 = vst.msk [vmem:[#allocation4 + $0x48] sm:$0xff] %vm279, %v9750
      %9783 = vst.msk [vmem:[#allocation4 + $0x58] sm:$0xff] %vm279, %v9751
      %9784 = vst.msk [vmem:[#allocation4 + $0x68] sm:$0xff] %vm279, %v9752
      %9785 = vst.msk [vmem:[#allocation4 + $0x78] sm:$0xff] %vm279, %v9753
      %9786 = vst.msk [vmem:[#allocation4 + $0x88] sm:$0xff] %vm279, %v9754
      %9787 = vst.msk [vmem:[#allocation4 + $0x98] sm:$0xff] %vm279, %v9755
      %9788 = vst.msk [vmem:[#allocation4 + $0xa8] sm:$0xff] %vm279, %v9756
      %9789 = vst.msk [vmem:[#allocation4 + $0xb8] sm:$0xff] %vm279, %v9757
      %9790 = vst.msk [vmem:[#allocation4 + $0xc8] sm:$0xff] %vm279, %v9758
      %9791 = vst.msk [vmem:[#allocation4 + $0xd8] sm:$0xff] %vm279, %v9759
      %9792 = vst.msk [vmem:[#allocation4 + $0xe8] sm:$0xff] %vm279, %v9760
      %9793 = vst.msk [vmem:[#allocation4 + $0xf8] sm:$0xff] %vm279, %v9761
      %9794 = vst.msk [vmem:[#allocation4 + $0x108] sm:$0xff] %vm279, %v9762
      %9795 = vst.msk [vmem:[#allocation4 + $0x118] sm:$0xff] %vm279, %v9763
      %9796 = vst.msk [vmem:[#allocation4 + $0x128] sm:$0xff] %vm279, %v9764
      %9797 = vst.msk [vmem:[#allocation4 + $0x138] sm:$0xff] %vm279, %v9765
      %9798 = vst.msk [vmem:[#allocation4 + $0x148] sm:$0xff] %vm279, %v9766
      %9799 = vst.msk [vmem:[#allocation4 + $0x158] sm:$0xff] %vm279, %v9767
      %9800 = vst.msk [vmem:[#allocation4 + $0x168] sm:$0xff] %vm279, %v9768
      %9801 = vst.msk [vmem:[#allocation4 + $0x178] sm:$0xff] %vm279, %v9769
      %9802 = vst.msk [vmem:[#allocation4 + $0x188] sm:$0xff] %vm279, %v9770
      %9803 = vst.msk [vmem:[#allocation4 + $0x198] sm:$0xff] %vm279, %v9771
      %9804 = vst.msk [vmem:[#allocation4 + $0x1a8] sm:$0xff] %vm279, %v9772
      %9805 = vst.msk [vmem:[#allocation4 + $0x1b8] sm:$0xff] %vm279, %v9773
      %9806 = vst.msk [vmem:[#allocation4 + $0x1c8] sm:$0xff] %vm279, %v9774
      %9807 = vst.msk [vmem:[#allocation4 + $0x1d8] sm:$0xff] %vm279, %v9775
      %9808 = vst.msk [vmem:[#allocation4 + $0x1e8] sm:$0xff] %vm279, %v9776
      %9809 = vst.msk [vmem:[#allocation4 + $0x1f8] sm:$0xff] %vm279, %v9777
      %v9810 = vld [vmem:[#allocation4] sm:$0xff]
      %v9811 = vld [vmem:[#allocation4 + $0x8] sm:$0xff]
      %v9812 = vld [vmem:[#allocation4 + $0x10] sm:$0xff]
      %v9813 = vld [vmem:[#allocation4 + $0x18] sm:$0xff]
      %v9814 = vld [vmem:[#allocation4 + $0x20] sm:$0xff]
      %v9815 = vld [vmem:[#allocation4 + $0x28] sm:$0xff]
      %v9816 = vld [vmem:[#allocation4 + $0x30] sm:$0xff]
      %v9817 = vld [vmem:[#allocation4 + $0x38] sm:$0xff]
      %v9818 = vld [vmem:[#allocation4 + $0x40] sm:$0xff]
      %v9819 = vld [vmem:[#allocation4 + $0x48] sm:$0xff]
      %v9820 = vld [vmem:[#allocation4 + $0x50] sm:$0xff]
      %v9821 = vld [vmem:[#allocation4 + $0x58] sm:$0xff]
      %v9822 = vld [vmem:[#allocation4 + $0x60] sm:$0xff]
      %v9823 = vld [vmem:[#allocation4 + $0x68] sm:$0xff]
      %v9824 = vld [vmem:[#allocation4 + $0x70] sm:$0xff]
      %v9825 = vld [vmem:[#allocation4 + $0x78] sm:$0xff]
      %v9826 = vld [vmem:[#allocation4 + $0x80] sm:$0xff]
      %v9827 = vld [vmem:[#allocation4 + $0x88] sm:$0xff]
      %v9828 = vld [vmem:[#allocation4 + $0x90] sm:$0xff]
      %v9829 = vld [vmem:[#allocation4 + $0x98] sm:$0xff]
      %v9830 = vld [vmem:[#allocation4 + $0xa0] sm:$0xff]
      %v9831 = vld [vmem:[#allocation4 + $0xa8] sm:$0xff]
      %v9832 = vld [vmem:[#allocation4 + $0xb0] sm:$0xff]
      %v9833 = vld [vmem:[#allocation4 + $0xb8] sm:$0xff]
      %v9834 = vld [vmem:[#allocation4 + $0xc0] sm:$0xff]
      %v9835 = vld [vmem:[#allocation4 + $0xc8] sm:$0xff]
      %v9836 = vld [vmem:[#allocation4 + $0xd0] sm:$0xff]
      %v9837 = vld [vmem:[#allocation4 + $0xd8] sm:$0xff]
      %v9838 = vld [vmem:[#allocation4 + $0xe0] sm:$0xff]
      %v9839 = vld [vmem:[#allocation4 + $0xe8] sm:$0xff]
      %v9840 = vld [vmem:[#allocation4 + $0xf0] sm:$0xff]
      %v9841 = vld [vmem:[#allocation4 + $0xf8] sm:$0xff]
      %v9842 = vld [vmem:[#allocation4 + $0x100] sm:$0xff]
      %v9843 = vld [vmem:[#allocation4 + $0x108] sm:$0xff]
      %v9844 = vld [vmem:[#allocation4 + $0x110] sm:$0xff]
      %v9845 = vld [vmem:[#allocation4 + $0x118] sm:$0xff]
      %v9846 = vld [vmem:[#allocation4 + $0x120] sm:$0xff]
      %v9847 = vld [vmem:[#allocation4 + $0x128] sm:$0xff]
      %v9848 = vld [vmem:[#allocation4 + $0x130] sm:$0xff]
      %v9849 = vld [vmem:[#allocation4 + $0x138] sm:$0xff]
      %v9850 = vld [vmem:[#allocation4 + $0x140] sm:$0xff]
      %v9851 = vld [vmem:[#allocation4 + $0x148] sm:$0xff]
      %v9852 = vld [vmem:[#allocation4 + $0x150] sm:$0xff]
      %v9853 = vld [vmem:[#allocation4 + $0x158] sm:$0xff]
      %v9854 = vld [vmem:[#allocation4 + $0x160] sm:$0xff]
      %v9855 = vld [vmem:[#allocation4 + $0x168] sm:$0xff]
      %v9856 = vld [vmem:[#allocation4 + $0x170] sm:$0xff]
      %v9857 = vld [vmem:[#allocation4 + $0x178] sm:$0xff]
      %v9858 = vld [vmem:[#allocation4 + $0x180] sm:$0xff]
      %v9859 = vld [vmem:[#allocation4 + $0x188] sm:$0xff]
      %v9860 = vld [vmem:[#allocation4 + $0x190] sm:$0xff]
      %v9861 = vld [vmem:[#allocation4 + $0x198] sm:$0xff]
      %v9862 = vld [vmem:[#allocation4 + $0x1a0] sm:$0xff]
      %v9863 = vld [vmem:[#allocation4 + $0x1a8] sm:$0xff]
      %v9864 = vld [vmem:[#allocation4 + $0x1b0] sm:$0xff]
      %v9865 = vld [vmem:[#allocation4 + $0x1b8] sm:$0xff]
      %v9866 = vld [vmem:[#allocation4 + $0x1c0] sm:$0xff]
      %v9867 = vld [vmem:[#allocation4 + $0x1c8] sm:$0xff]
      %v9868 = vld [vmem:[#allocation4 + $0x1d0] sm:$0xff]
      %v9869 = vld [vmem:[#allocation4 + $0x1d8] sm:$0xff]
      %v9870 = vld [vmem:[#allocation4 + $0x1e0] sm:$0xff]
      %v9871 = vld [vmem:[#allocation4 + $0x1e8] sm:$0xff]
      %v9872 = vld [vmem:[#allocation4 + $0x1f0] sm:$0xff]
      %v9873 = vld [vmem:[#allocation4 + $0x1f8] sm:$0xff]
      %v9875 = vlaneseq
      %v9876 = vshrl.u32 %v9875, 7
      %v9877 = vsub.s32 0, %v9876
      %v9878 = vrot.slane %v8337, %v9877
      %v9881 = vsel %vm279, %v9811, 0
      %v9884 = vsel %vm279, %v9813, 0
      %v9887 = vsel %vm279, %v9815, 0
      %v9890 = vsel %vm279, %v9817, 0
      %v9893 = vsel %vm279, %v9819, 0
      %v9896 = vsel %vm279, %v9821, 0
      %v9899 = vsel %vm279, %v9823, 0
      %v9902 = vsel %vm279, %v9825, 0
      %v9905 = vsel %vm279, %v9827, 0
      %v9908 = vsel %vm279, %v9829, 0
      %v9911 = vsel %vm279, %v9831, 0
      %v9914 = vsel %vm279, %v9833, 0
      %v9917 = vsel %vm279, %v9835, 0
      %v9920 = vsel %vm279, %v9837, 0
      %v9923 = vsel %vm279, %v9839, 0
      %v9926 = vsel %vm279, %v9841, 0
      %v9929 = vsel %vm279, %v9843, 0
      %v9932 = vsel %vm279, %v9845, 0
      %v9935 = vsel %vm279, %v9847, 0
      %v9938 = vsel %vm279, %v9849, 0
      %v9941 = vsel %vm279, %v9851, 0
      %v9944 = vsel %vm279, %v9853, 0
      %v9947 = vsel %vm279, %v9855, 0
      %v9950 = vsel %vm279, %v9857, 0
      %v9953 = vsel %vm279, %v9859, 0
      %v9956 = vsel %vm279, %v9861, 0
      %v9959 = vsel %vm279, %v9863, 0
      %v9962 = vsel %vm279, %v9865, 0
      %v9965 = vsel %vm279, %v9867, 0
      %v9968 = vsel %vm279, %v9869, 0
      %v9971 = vsel %vm279, %v9871, 0
      %v9974 = vsel %vm279, %v9873, 0
      %9976 = vmatprep.subr.mxu0 0.0
      %9977 = vmatpush1.msra.mxu0 %v8319
      %9978 = vmatprep.subr.mxu0 0.0
      %9979 = vmatpush1.msra.mxu0 %v8320
      %9980 = vmatprep.subr.mxu0 0.0
      %9981 = vmatpush1.msra.mxu0 %v8321
      %9982 = vmatprep.subr.mxu0 0.0
      %9983 = vmatpush1.msra.mxu0 %v8322
      %9984 = vmatprep.subr.mxu0 0.0
      %9985 = vmatpush1.msra.mxu0 %v8323
      %9986 = vmatprep.subr.mxu0 0.0
      %9987 = vmatpush1.msra.mxu0 %v8324
      %9988 = vmatprep.subr.mxu0 0.0
      %9989 = vmatpush1.msra.mxu0 %v8325
      %9990 = vmatprep.subr.mxu0 0.0
      %9991 = vmatpush1.msra.mxu0 %v8326
      %9992 = vmatprep.subr.mxu0 0.0
      %9993 = vmatpush1.msra.mxu0 %v8327
      %9994 = vmatprep.subr.mxu0 0.0
      %9995 = vmatpush1.msra.mxu0 %v8328
      %9996 = vmatprep.subr.mxu0 0.0
      %9997 = vmatpush1.msra.mxu0 %v8329
      %9998 = vmatprep.subr.mxu0 0.0
      %9999 = vmatpush1.msra.mxu0 %v8330
      %10000 = vmatprep.subr.mxu0 0.0
      %10001 = vmatpush1.msra.mxu0 %v8331
      %10002 = vmatprep.subr.mxu0 0.0
      %10003 = vmatpush1.msra.mxu0 %v8332
      %10004 = vmatprep.subr.mxu0 0.0
      %10005 = vmatpush1.msra.mxu0 %v8333
      %10006 = vmatprep.subr.mxu0 0.0
      %10007 = vmatpush1.msra.mxu0 %v8334
      %10008 = vmatprep.subr.mxu0 0.0
      %10009 = vmatpush1.msra.mxu0 %v8335
      %10010 = vmatprep.subr.mxu0 0.0
      %10011 = vmatpush1.msra.mxu0 %v8336
      %10012 = vmatprep.subr.mxu0 0.0
      %10013 = vmatpush1.msra.mxu0 0.0
      %10014 = vmatprep.subr.mxu0 0.0
      %10015 = vmatpush1.msra.mxu0 0.0
      %10016 = vmatprep.subr.mxu0 0.0
      %10017 = vmatpush1.msra.mxu0 0.0
      %10018 = vmatprep.subr.mxu0 0.0
      %10019 = vmatpush1.msra.mxu0 0.0
      %10020 = vmatprep.subr.mxu0 0.0
      %10021 = vmatpush1.msra.mxu0 0.0
      %10022 = vmatprep.subr.mxu0 0.0
      %10023 = vmatpush1.msra.mxu0 0.0
      %10024 = vmatprep.subr.mxu0 0.0
      %10025 = vmatpush1.msra.mxu0 0.0
      %10026 = vmatprep.subr.mxu0 0.0
      %10027 = vmatpush1.msra.mxu0 0.0
      %10028 = vmatprep.subr.mxu0 0.0
      %10029 = vmatpush1.msra.mxu0 0.0
      %10030 = vmatprep.subr.mxu0 0.0
      %10031 = vmatpush1.msra.mxu0 0.0
      %10032 = vmatprep.subr.mxu0 0.0
      %10033 = vmatpush1.msra.mxu0 0.0
      %10034 = vmatprep.subr.mxu0 0.0
      %10035 = vmatpush1.msra.mxu0 0.0
      %10036 = vmatprep.subr.mxu0 0.0
      %10037 = vmatpush1.msra.mxu0 0.0
      %10038 = vmatprep.subr.mxu0 0.0
      %10039 = vmatpush1.msra.mxu0 0.0
      %10040 = vmatprep.mubr.f32.mxu0 %v9881
      %10041 = vmatmul.mubr.f32.gmra.mrb[0].mxu0 %v9810
      %v10042 = vpop.f32.mrb[0].mxu0
      %v10043 = vadd.f32 %v9878, %v10042
      %v10044 = vpop.f32.mrb[0].mxu0
      %10045 = vmatprep.mubr.f32.mxu0 %v9884
      %10046 = vmatmul.mubr.f32.gmra.mrb[0].mxu0 %v9812
      %v10047 = vpop.f32.mrb[0].mxu0
      %v10048 = vadd.f32 %v9878, %v10047
      %v10049 = vpop.f32.mrb[0].mxu0
      %10050 = vmatprep.mubr.f32.mxu0 %v9887
      %10051 = vmatmul.mubr.f32.gmra.mrb[0].mxu0 %v9814
      %v10052 = vpop.f32.mrb[0].mxu0
      %v10053 = vadd.f32 %v9878, %v10052
      %v10054 = vpop.f32.mrb[0].mxu0
      %10055 = vmatprep.mubr.f32.mxu0 %v9890
      %10056 = vmatmul.mubr.f32.gmra.mrb[0].mxu0 %v9816
      %v10057 = vpop.f32.mrb[0].mxu0
      %v10058 = vadd.f32 %v9878, %v10057
      %v10059 = vpop.f32.mrb[0].mxu0
      %10060 = vmatprep.mubr.f32.mxu0 %v9893
      %10061 = vmatmul.mubr.f32.gmra.mrb[0].mxu0 %v9818
      %v10062 = vpop.f32.mrb[0].mxu0
      %v10063 = vadd.f32 %v9878, %v10062
      %v10064 = vpop.f32.mrb[0].mxu0
      %10065 = vmatprep.mubr.f32.mxu0 %v9896
      %10066 = vmatmul.mubr.f32.gmra.mrb[0].mxu0 %v9820
      %v10067 = vpop.f32.mrb[0].mxu0
      %v10068 = vadd.f32 %v9878, %v10067
      %v10069 = vpop.f32.mrb[0].mxu0
      %10070 = vmatprep.mubr.f32.mxu0 %v9899
      %10071 = vmatmul.mubr.f32.gmra.mrb[0].mxu0 %v9822
      %v10072 = vpop.f32.mrb[0].mxu0
      %v10073 = vadd.f32 %v9878, %v10072
      %v10074 = vpop.f32.mrb[0].mxu0
      %10075 = vmatprep.mubr.f32.mxu0 %v9902
      %10076 = vmatmul.mubr.f32.gmra.mrb[0].mxu0 %v9824
      %v10077 = vpop.f32.mrb[0].mxu0
      %v10078 = vadd.f32 %v9878, %v10077
      %v10079 = vpop.f32.mrb[0].mxu0
      %10080 = vmatprep.mubr.f32.mxu0 %v9905
      %10081 = vmatmul.mubr.f32.gmra.mrb[0].mxu0 %v9826
      %v10082 = vpop.f32.mrb[0].mxu0
      %v10083 = vadd.f32 %v9878, %v10082
      %v10084 = vpop.f32.mrb[0].mxu0
      %10085 = vmatprep.mubr.f32.mxu0 %v9908
      %10086 = vmatmul.mubr.f32.gmra.mrb[0].mxu0 %v9828
      %v10087 = vpop.f32.mrb[0].mxu0
      %v10088 = vadd.f32 %v9878, %v10087
      %v10089 = vpop.f32.mrb[0].mxu0
      %10090 = vmatprep.mubr.f32.mxu0 %v9911
      %10091 = vmatmul.mubr.f32.gmra.mrb[0].mxu0 %v9830
      %v10092 = vpop.f32.mrb[0].mxu0
      %v10093 = vadd.f32 %v9878, %v10092
      %v10094 = vpop.f32.mrb[0].mxu0
      %10095 = vmatprep.mubr.f32.mxu0 %v9914
      %10096 = vmatmul.mubr.f32.gmra.mrb[0].mxu0 %v9832
      %v10097 = vpop.f32.mrb[0].mxu0
      %v10098 = vadd.f32 %v9878, %v10097
      %v10099 = vpop.f32.mrb[0].mxu0
      %10100 = vmatprep.mubr.f32.mxu0 %v9917
      %10101 = vmatmul.mubr.f32.gmra.mrb[0].mxu0 %v9834
      %v10102 = vpop.f32.mrb[0].mxu0
      %v10103 = vadd.f32 %v9878, %v10102
      %v10104 = vpop.f32.mrb[0].mxu0
      %10105 = vmatprep.mubr.f32.mxu0 %v9920
      %10106 = vmatmul.mubr.f32.gmra.mrb[0].mxu0 %v9836
      %v10107 = vpop.f32.mrb[0].mxu0
      %v10108 = vadd.f32 %v9878, %v10107
      %v10109 = vpop.f32.mrb[0].mxu0
      %10110 = vmatprep.mubr.f32.mxu0 %v9923
      %10111 = vmatmul.mubr.f32.gmra.mrb[0].mxu0 %v9838
      %v10112 = vpop.f32.mrb[0].mxu0
      %v10113 = vadd.f32 %v9878, %v10112
      %v10114 = vpop.f32.mrb[0].mxu0
      %10115 = vmatprep.mubr.f32.mxu0 %v9926
      %10116 = vmatmul.mubr.f32.gmra.mrb[0].mxu0 %v9840
      %v10117 = vpop.f32.mrb[0].mxu0
      %v10118 = vadd.f32 %v9878, %v10117
      %v10119 = vpop.f32.mrb[0].mxu0
      %10120 = vmatprep.mubr.f32.mxu0 %v9929
      %10121 = vmatmul.mubr.f32.gmra.mrb[0].mxu0 %v9842
      %v10122 = vpop.f32.mrb[0].mxu0
      %v10123 = vadd.f32 %v9878, %v10122
      %v10124 = vpop.f32.mrb[0].mxu0
      %10125 = vmatprep.mubr.f32.mxu0 %v9932
      %10126 = vmatmul.mubr.f32.gmra.mrb[0].mxu0 %v9844
      %v10127 = vpop.f32.mrb[0].mxu0
      %v10128 = vadd.f32 %v9878, %v10127
      %v10129 = vpop.f32.mrb[0].mxu0
      %10130 = vmatprep.mubr.f32.mxu0 %v9935
      %10131 = vmatmul.mubr.f32.gmra.mrb[0].mxu0 %v9846
      %v10132 = vpop.f32.mrb[0].mxu0
      %v10133 = vadd.f32 %v9878, %v10132
      %v10134 = vpop.f32.mrb[0].mxu0
      %10135 = vmatprep.mubr.f32.mxu0 %v9938
      %10136 = vmatmul.mubr.f32.gmra.mrb[0].mxu0 %v9848
      %v10137 = vpop.f32.mrb[0].mxu0
      %v10138 = vadd.f32 %v9878, %v10137
      %v10139 = vpop.f32.mrb[0].mxu0
      %10140 = vmatprep.mubr.f32.mxu0 %v9941
      %10141 = vmatmul.mubr.f32.gmra.mrb[0].mxu0 %v9850
      %v10142 = vpop.f32.mrb[0].mxu0
      %v10143 = vadd.f32 %v9878, %v10142
      %v10144 = vpop.f32.mrb[0].mxu0
      %10145 = vmatprep.mubr.f32.mxu0 %v9944
      %10146 = vmatmul.mubr.f32.gmra.mrb[0].mxu0 %v9852
      %v10147 = vpop.f32.mrb[0].mxu0
      %v10148 = vadd.f32 %v9878, %v10147
      %v10149 = vpop.f32.mrb[0].mxu0
      %10150 = vmatprep.mubr.f32.mxu0 %v9947
      %10151 = vmatmul.mubr.f32.gmra.mrb[0].mxu0 %v9854
      %v10152 = vpop.f32.mrb[0].mxu0
      %v10153 = vadd.f32 %v9878, %v10152
      %v10154 = vpop.f32.mrb[0].mxu0
      %10155 = vmatprep.mubr.f32.mxu0 %v9950
      %10156 = vmatmul.mubr.f32.gmra.mrb[0].mxu0 %v9856
      %v10157 = vpop.f32.mrb[0].mxu0
      %v10158 = vadd.f32 %v9878, %v10157
      %v10159 = vpop.f32.mrb[0].mxu0
      %10160 = vmatprep.mubr.f32.mxu0 %v9953
      %10161 = vmatmul.mubr.f32.gmra.mrb[0].mxu0 %v9858
      %v10162 = vpop.f32.mrb[0].mxu0
      %v10163 = vadd.f32 %v9878, %v10162
      %v10164 = vpop.f32.mrb[0].mxu0
      %10165 = vmatprep.mubr.f32.mxu0 %v9956
      %10166 = vmatmul.mubr.f32.gmra.mrb[0].mxu0 %v9860
      %v10167 = vpop.f32.mrb[0].mxu0
      %v10168 = vadd.f32 %v9878, %v10167
      %v10169 = vpop.f32.mrb[0].mxu0
      %10170 = vmatprep.mubr.f32.mxu0 %v9959
      %10171 = vmatmul.mubr.f32.gmra.mrb[0].mxu0 %v9862
      %v10172 = vpop.f32.mrb[0].mxu0
      %v10173 = vadd.f32 %v9878, %v10172
      %v10174 = vpop.f32.mrb[0].mxu0
      %10175 = vmatprep.mubr.f32.mxu0 %v9962
      %10176 = vmatmul.mubr.f32.gmra.mrb[0].mxu0 %v9864
      %v10177 = vpop.f32.mrb[0].mxu0
      %v10178 = vadd.f32 %v9878, %v10177
      %v10179 = vpop.f32.mrb[0].mxu0
      %10180 = vmatprep.mubr.f32.mxu0 %v9965
      %10181 = vmatmul.mubr.f32.gmra.mrb[0].mxu0 %v9866
      %v10182 = vpop.f32.mrb[0].mxu0
      %v10183 = vadd.f32 %v9878, %v10182
      %v10184 = vpop.f32.mrb[0].mxu0
      %10185 = vmatprep.mubr.f32.mxu0 %v9968
      %10186 = vmatmul.mubr.f32.gmra.mrb[0].mxu0 %v9868
      %v10187 = vpop.f32.mrb[0].mxu0
      %v10188 = vadd.f32 %v9878, %v10187
      %v10189 = vpop.f32.mrb[0].mxu0
      %10190 = vmatprep.mubr.f32.mxu0 %v9971
      %10191 = vmatmul.mubr.f32.gmra.mrb[0].mxu0 %v9870
      %v10192 = vpop.f32.mrb[0].mxu0
      %v10193 = vadd.f32 %v9878, %v10192
      %v10194 = vpop.f32.mrb[0].mxu0
      %10195 = vmatprep.mubr.f32.mxu0 %v9974
      %10196 = vmatmul.mubr.f32.gmra.mrb[0].mxu0 %v9872
      %v10197 = vpop.f32.mrb[0].mxu0
      %v10198 = vadd.f32 %v9878, %v10197
      %v10199 = vpop.f32.mrb[0].mxu0
      %10200 = vdwg.mxu0
      %v10201 = vld [vmem:[%s273] sm:$0xff]
      %v10202 = vld [vmem:[%s273 + $0x8] sm:$0xff]
      %v10203 = vld [vmem:[%s273 + $0x10] sm:$0xff]
      %v10204 = vld [vmem:[%s273 + $0x18] sm:$0xff]
      %v10205 = vld [vmem:[%s273 + $0x20] sm:$0xff]
      %v10206 = vld [vmem:[%s273 + $0x28] sm:$0xff]
      %v10207 = vld [vmem:[%s273 + $0x30] sm:$0xff]
      %v10208 = vld [vmem:[%s273 + $0x38] sm:$0xff]
      %v10209 = vld [vmem:[%s273 + $0x40] sm:$0xff]
      %v10210 = vld [vmem:[%s273 + $0x48] sm:$0xff]
      %v10211 = vld [vmem:[%s273 + $0x50] sm:$0xff]
      %v10212 = vld [vmem:[%s273 + $0x58] sm:$0xff]
      %v10213 = vld [vmem:[%s273 + $0x60] sm:$0xff]
      %v10214 = vld [vmem:[%s273 + $0x68] sm:$0xff]
      %v10215 = vld [vmem:[%s273 + $0x70] sm:$0xff]
      %v10216 = vld [vmem:[%s273 + $0x78] sm:$0xff]
      %v10217 = vld [vmem:[%s273 + $0x80] sm:$0xff]
      %v10218 = vld [vmem:[%s273 + $0x88] sm:$0xff]
      %v10219 = vld [vmem:[%s273 + $0x90] sm:$0xff]
      %v10220 = vld [vmem:[%s273 + $0x98] sm:$0xff]
      %v10221 = vld [vmem:[%s273 + $0xa0] sm:$0xff]
      %v10222 = vld [vmem:[%s273 + $0xa8] sm:$0xff]
      %v10223 = vld [vmem:[%s273 + $0xb0] sm:$0xff]
      %v10224 = vld [vmem:[%s273 + $0xb8] sm:$0xff]
      %v10225 = vld [vmem:[%s273 + $0xc0] sm:$0xff]
      %v10226 = vld [vmem:[%s273 + $0xc8] sm:$0xff]
      %v10227 = vld [vmem:[%s273 + $0xd0] sm:$0xff]
      %v10228 = vld [vmem:[%s273 + $0xd8] sm:$0xff]
      %v10229 = vld [vmem:[%s273 + $0xe0] sm:$0xff]
      %v10230 = vld [vmem:[%s273 + $0xe8] sm:$0xff]
      %v10231 = vld [vmem:[%s273 + $0xf0] sm:$0xff]
      %v10232 = vld [vmem:[%s273 + $0xf8] sm:$0xff]
      %v10233 = vadd.f32 %v10043, %v10201
      %v10234 = vadd.f32 %v10048, %v10202
      %v10235 = vadd.f32 %v10053, %v10203
      %v10236 = vadd.f32 %v10058, %v10204
      %v10237 = vadd.f32 %v10063, %v10205
      %v10238 = vadd.f32 %v10068, %v10206
      %v10239 = vadd.f32 %v10073, %v10207
      %v10240 = vadd.f32 %v10078, %v10208
      %v10241 = vadd.f32 %v10083, %v10209
      %v10242 = vadd.f32 %v10088, %v10210
      %v10243 = vadd.f32 %v10093, %v10211
      %v10244 = vadd.f32 %v10098, %v10212
      %v10245 = vadd.f32 %v10103, %v10213
      %v10246 = vadd.f32 %v10108, %v10214
      %v10247 = vadd.f32 %v10113, %v10215
      %v10248 = vadd.f32 %v10118, %v10216
      %v10249 = vadd.f32 %v10123, %v10217
      %v10250 = vadd.f32 %v10128, %v10218
      %v10251 = vadd.f32 %v10133, %v10219
      %v10252 = vadd.f32 %v10138, %v10220
      %v10253 = vadd.f32 %v10143, %v10221
      %v10254 = vadd.f32 %v10148, %v10222
      %v10255 = vadd.f32 %v10153, %v10223
      %v10256 = vadd.f32 %v10158, %v10224
      %v10257 = vadd.f32 %v10163, %v10225
      %v10258 = vadd.f32 %v10168, %v10226
      %v10259 = vadd.f32 %v10173, %v10227
      %v10260 = vadd.f32 %v10178, %v10228
      %v10261 = vadd.f32 %v10183, %v10229
      %v10262 = vadd.f32 %v10188, %v10230
      %v10263 = vadd.f32 %v10193, %v10231
      %v10264 = vadd.f32 %v10198, %v10232
      %10265 = vst.msk [vmem:[%s278] sm:$0xff] %vm401, %v10233
      %10266 = vst.msk [vmem:[%s278 + $0x8] sm:$0xff] %vm401, %v10234
      %10267 = vst.msk [vmem:[%s278 + $0x10] sm:$0xff] %vm401, %v10235
      %10268 = vst.msk [vmem:[%s278 + $0x18] sm:$0xff] %vm401, %v10236
      %10269 = vst.msk [vmem:[%s278 + $0x20] sm:$0xff] %vm401, %v10237
      %10270 = vst.msk [vmem:[%s278 + $0x28] sm:$0xff] %vm401, %v10238
      %10271 = vst.msk [vmem:[%s278 + $0x30] sm:$0xff] %vm401, %v10239
      %10272 = vst.msk [vmem:[%s278 + $0x38] sm:$0xff] %vm401, %v10240
      %10273 = vst.msk [vmem:[%s278 + $0x40] sm:$0xff] %vm401, %v10241
      %10274 = vst.msk [vmem:[%s278 + $0x48] sm:$0xff] %vm401, %v10242
      %10275 = vst.msk [vmem:[%s278 + $0x50] sm:$0xff] %vm401, %v10243
      %10276 = vst.msk [vmem:[%s278 + $0x58] sm:$0xff] %vm401, %v10244
      %10277 = vst.msk [vmem:[%s278 + $0x60] sm:$0xff] %vm401, %v10245
      %10278 = vst.msk [vmem:[%s278 + $0x68] sm:$0xff] %vm401, %v10246
      %10279 = vst.msk [vmem:[%s278 + $0x70] sm:$0xff] %vm401, %v10247
      %10280 = vst.msk [vmem:[%s278 + $0x78] sm:$0xff] %vm401, %v10248
      %10281 = vst.msk [vmem:[%s278 + $0x80] sm:$0xff] %vm401, %v10249
      %10282 = vst.msk [vmem:[%s278 + $0x88] sm:$0xff] %vm401, %v10250
      %10283 = vst.msk [vmem:[%s278 + $0x90] sm:$0xff] %vm401, %v10251
      %10284 = vst.msk [vmem:[%s278 + $0x98] sm:$0xff] %vm401, %v10252
      %10285 = vst.msk [vmem:[%s278 + $0xa0] sm:$0xff] %vm401, %v10253
      %10286 = vst.msk [vmem:[%s278 + $0xa8] sm:$0xff] %vm401, %v10254
      %10287 = vst.msk [vmem:[%s278 + $0xb0] sm:$0xff] %vm401, %v10255
      %10288 = vst.msk [vmem:[%s278 + $0xb8] sm:$0xff] %vm401, %v10256
      %10289 = vst.msk [vmem:[%s278 + $0xc0] sm:$0xff] %vm401, %v10257
      %10290 = vst.msk [vmem:[%s278 + $0xc8] sm:$0xff] %vm401, %v10258
      %10291 = vst.msk [vmem:[%s278 + $0xd0] sm:$0xff] %vm401, %v10259
      %10292 = vst.msk [vmem:[%s278 + $0xd8] sm:$0xff] %vm401, %v10260
      %10293 = vst.msk [vmem:[%s278 + $0xe0] sm:$0xff] %vm401, %v10261
      %10294 = vst.msk [vmem:[%s278 + $0xe8] sm:$0xff] %vm401, %v10262
      %10295 = vst.msk [vmem:[%s278 + $0xf0] sm:$0xff] %vm401, %v10263
      %10296 = vst.msk [vmem:[%s278 + $0xf8] sm:$0xff] %vm401, %v10264
      %p10297 = scmp.lt.s32.totalorder %s18, 1
      %s10298 = scalar_select %p10297, %s18, 1
      %s10299 = smul.addr %s10298, 32
      %s10300 = smul.addr %s10299, 8
      %s10301 = scalar_lea.vmem %s7, %s10300
      // Predicated region
      $region49: #{tpu_custom_call.1} parent=47 // pred_check
        %p10302 = pneg %p188
      $region50: #{tpu_custom_call.1} parent=47 // pred_check_branch
        %10304 = sbr.rel (%p10302) target = $region52
      $region51: #{tpu_custom_call.1} parent=47 // pred_region
        _
      $region52: #{tpu_custom_call.1} parent=47 // pred_fallthru
        _
    $region48: #{tpu_custom_call.1} parent=5 // pred_fallthru
      _
    %p10305 = scmp.le.s32.totalorder 2, %s13
    // Predicated region
    $region53: #{tpu_custom_call.1} parent=5 // pred_check
      %p10306 = pneg %p10305
    $region54: #{tpu_custom_call.1} parent=5 // pred_check_branch
      %10308 = sbr.rel (%p10306) target = $region56
    $region55: #{tpu_custom_call.1} parent=5 // pred_region
      %s10309 = ssub.s32 %s13, 2
      // Predicated region
      $region57: #{tpu_custom_call.1} parent=55 // pred_check
        %p10310 = pneg %p194
      $region58: #{tpu_custom_call.1} parent=55 // pred_check_branch
        %10312 = sbr.rel (%p10310) target = $region60
      $region59: #{tpu_custom_call.1} parent=55 // pred_region
        %p10313 = scmp.lt.s32.totalorder %s19, 1
        %s10314 = scalar_select %p10313, %s19, 1
        %s10315 = smul.addr %s10314, 32
        %s10316 = smul.addr %s10315, 8
        %s10317 = scalar_lea.vmem %s7, %s10316
      $region60: #{tpu_custom_call.1} parent=55 // pred_fallthru
        _
    $region56: #{tpu_custom_call.1} parent=5 // pred_fallthru
      _
  $region6: #{tpu_custom_call.1} parent=0 // loop_footer
    %s17 = sadd.s32 1, %s13
  $region7: #{tpu_custom_call.1} parent=0 // loop_footer_branch
    %12 = sbr.rel target = $region3
  $region8: #{tpu_custom_call.1} parent=0 // loop_exit
    _

</llo_original>
